<compile_context>
chip_gen: v6e
topology: v6e:2x2x1
jax: 0.10.0
libtpu: 0.0.40
codegen_flags: <defaults>
</compile_context>

<pallas_src>
import functools

import jax
import jax.numpy as jnp
from jax import lax
from jax.experimental import pallas as pl
from jax.experimental.pallas import tpu as pltpu


def _pick_cout_tile(cout):
    # Lane-dense Cout tiles at real WRN widths (multiples of 128 => unmasked
    # vst, and <=256 keeps weight blocks inside v7x's 64 MiB VMEM with double
    # buffering).  Toy widths fall back to the full (tiny) Cout.
    if cout % 256 == 0:
        return 256
    if cout % 128 == 0:
        return 128
    return cout


# ---------------------------- stride-1 conv kernel ---------------------------

def _make_conv_s1_kernel(H, W, Cin, Tco, has_residual, has_shortcut):
    """One image x one Cout tile:  xb = relu(x*scale+bias);
    out = conv3x3(xb, stride=1, pad=1) [+ residual];  sc = conv1x1(xb)."""
    Hp, Wp = H + 2, W + 2
    HW = H * W

    def kernel(*refs):
        it = iter(refs)
        x_ref = next(it)                               # (1, H, W, Cin)
        scale_ref = next(it)                           # (1, Cin) f32
        bias_ref = next(it)                            # (1, Cin) f32
        w_ref = next(it)                               # (3, 3, Cin, Tco) bf16
        wsc_ref = next(it) if has_shortcut else None   # (Cin, Tco) bf16
        r_ref = next(it) if has_residual else None     # (1, HW, Tco)
        o_ref = next(it)                               # (1, HW, Tco) bf16
        sc_ref = next(it) if has_shortcut else None    # (1, HW, Tco) bf16
        xb_ref = next(it)                              # VMEM (Hp, Wp, Cin) bf16

        j = pl.program_id(1)                           # Cout-tile index

        # BN + ReLU once per image (Cout tile 0); scratch persists across the
        # "arbitrary" Cout axis.  Halo handled by zeroing the 4 strips.
        @pl.when(j == 0)
        def _():
            zrow = jnp.zeros((1, Wp, Cin), jnp.bfloat16)
            zcol = jnp.zeros((Hp, 1, Cin), jnp.bfloat16)
            xb_ref[0:1, :, :] = zrow
            xb_ref[Hp - 1:Hp, :, :] = zrow
            xb_ref[:, 0:1, :] = zcol
            xb_ref[:, Wp - 1:Wp, :] = zcol
            # f32 elementwise math (v5e-safe); single bf16 store of interior.
            # TODO(synk): could use bf16 VPU math on v6e/v7x.
            scale = scale_ref[...].reshape(1, 1, Cin)
            bias = bias_ref[...].reshape(1, 1, Cin)
            v = jnp.maximum(x_ref[0].astype(jnp.float32) * scale + bias, 0.0)
            xb_ref[1:1 + H, 1:1 + W, :] = v.astype(jnp.bfloat16)

        # 9 accumulated MXU dots, M = H*W, bf16 operands, f32 accumulation.
        if has_residual:
            acc = r_ref[0].astype(jnp.float32)
        else:
            acc = jnp.zeros((HW, Tco), jnp.float32)
        for kh in range(3):
            for kw in range(3):
                tap = xb_ref[kh:kh + H, kw:kw + W, :].reshape(HW, Cin)
                acc = acc + jnp.dot(tap, w_ref[kh, kw],
                                    preferred_element_type=jnp.float32)
        o_ref[0] = acc.astype(o_ref.dtype)

        if has_shortcut:
            a = xb_ref[1:1 + H, 1:1 + W, :].reshape(HW, Cin)
            sc = jnp.dot(a, wsc_ref[...], preferred_element_type=jnp.float32)
            sc_ref[0] = sc.astype(sc_ref.dtype)

    return kernel


def fused_bn_relu_conv_s1(x, scale, bias, w, *, residual=None, w_sc=None):
    """relu(x*scale+bias) -> 3x3 conv (stride 1, pad 1) [+ residual];
    optionally also returns the fused 1x1-shortcut conv as a second output."""
    n, h, wd, cin = x.shape
    cout = w.shape[-1]
    hw = h * wd
    tco = _pick_cout_tile(cout)
    n_ct = cout // tco
    has_residual = residual is not None
    has_shortcut = w_sc is not None

    in_specs = [
        pl.BlockSpec((1, h, wd, cin), lambda i, j: (i, 0, 0, 0)),
        pl.BlockSpec((1, cin), lambda i, j: (0, 0)),
        pl.BlockSpec((1, cin), lambda i, j: (0, 0)),
        pl.BlockSpec((3, 3, cin, tco), lambda i, j: (0, 0, 0, j)),
    ]
    args = [x,
            scale.reshape(1, cin).astype(jnp.float32),
            bias.reshape(1, cin).astype(jnp.float32),
            w.astype(jnp.bfloat16)]
    if has_shortcut:
        in_specs.append(pl.BlockSpec((cin, tco), lambda i, j: (0, j)))
        args.append(w_sc.astype(jnp.bfloat16))
    if has_residual:
        in_specs.append(pl.BlockSpec((1, hw, tco), lambda i, j: (i, 0, j)))
        args.append(residual.reshape(n, hw, cout))

    out_block = pl.BlockSpec((1, hw, tco), lambda i, j: (i, 0, j))
    if has_shortcut:
        out_shape = (jax.ShapeDtypeStruct((n, hw, cout), jnp.bfloat16),
                     jax.ShapeDtypeStruct((n, hw, cout), jnp.bfloat16))
        out_specs = (out_block, out_block)
    else:
        out_shape = jax.ShapeDtypeStruct((n, hw, cout), jnp.bfloat16)
        out_specs = out_block

    kernel = _make_conv_s1_kernel(h, wd, cin, tco, has_residual, has_shortcut)
    res = pl.pallas_call(
        kernel,
        out_shape=out_shape,
        grid=(n, n_ct),
        in_specs=in_specs,
        out_specs=out_specs,
        scratch_shapes=[pltpu.VMEM((h + 2, wd + 2, cin), jnp.bfloat16)],
        compiler_params=pltpu.CompilerParams(
            dimension_semantics=("parallel", "arbitrary"),
            vmem_limit_bytes=48 * 1024 * 1024),
    )(*args)
    if has_shortcut:
        y, sc = res
        return y.reshape(n, h, wd, cout), sc.reshape(n, h, wd, cout)
    return res.reshape(n, h, wd, cout)


# ---------------------------- stride-2 conv kernel ---------------------------
#
# Stride-2 without any strided in-kernel access: the wrapper passes the 4
# parity subsamples x[a::2, b::2]; the kernel BN+ReLU's each and places it at
# offset (a, b) inside a zero (Ho+1, Wo+1, Cin) plane.  Tap (kh, kw) of the
# padded image then equals plane[1-kh%2, 1-kw%2][kh//2:kh//2+Ho,
# kw//2:kw//2+Wo] -- a contiguous slice -- so the conv is again 9 large dots
# with M = Ho*Wo.  The 1x1/stride-2 shortcut is simply plane (0,0)'s interior.

def _make_conv_s2_kernel(Ho, Wo, Cin, Tco, has_shortcut):
    HW = Ho * Wo

    def kernel(*refs):
        it = iter(refs)
        xpl = [next(it) for _ in range(4)]             # (1,Ho,Wo,Cin) per parity
        scale_ref = next(it)                           # (1, Cin) f32
        bias_ref = next(it)                            # (1, Cin) f32
        w_ref = next(it)                               # (3, 3, Cin, Tco) bf16
        wsc_ref = next(it) if has_shortcut else None   # (Cin, Tco) bf16
        o_ref = next(it)                               # (1, HW, Tco) bf16
        sc_ref = next(it) if has_shortcut else None    # (1, HW, Tco) bf16
        xb_ref = next(it)                              # VMEM (2,2,Ho+1,Wo+1,Cin) bf16

        j = pl.program_id(1)

        @pl.when(j == 0)
        def _():
            xb_ref[...] = jnp.zeros((2, 2, Ho + 1, Wo + 1, Cin), jnp.bfloat16)
            scale = scale_ref[...].reshape(1, 1, Cin)
            bias = bias_ref[...].reshape(1, 1, Cin)
            for p, (a, b) in enumerate(((0, 0), (0, 1), (1, 0), (1, 1))):
                v = jnp.maximum(
                    xpl[p][0].astype(jnp.float32) * scale + bias, 0.0)
                xb_ref[a, b, a:a + Ho, b:b + Wo, :] = v.astype(jnp.bfloat16)

        acc = jnp.zeros((HW, Tco), jnp.float32)
        for kh in range(3):
            for kw in range(3):
                a, b = 1 - (kh % 2), 1 - (kw % 2)
                r0, c0 = kh // 2, kw // 2
                tap = xb_ref[a, b, r0:r0 + Ho, c0:c0 + Wo, :].reshape(HW, Cin)
                acc = acc + jnp.dot(tap, w_ref[kh, kw],
                                    preferred_element_type=jnp.float32)
        o_ref[0] = acc.astype(o_ref.dtype)

        if has_shortcut:
            # 1x1 stride-2 shortcut uses the even/even samples = plane (0, 0).
            a = xb_ref[0, 0, 0:Ho, 0:Wo, :].reshape(HW, Cin)
            sc = jnp.dot(a, wsc_ref[...], preferred_element_type=jnp.float32)
            sc_ref[0] = sc.astype(sc_ref.dtype)

    return kernel


def fused_bn_relu_conv_s2(x, scale, bias, w, stride, *, w_sc=None):
    """relu(x*scale+bias) -> 3x3 conv (pad 1, stride 2); optional fused 1x1
    shortcut conv as a second output."""
    assert stride == 2, "WideResNet only uses stride 1 or 2"
    n, h, wd, cin = x.shape
    assert h % 2 == 0 and wd % 2 == 0
    cout = w.shape[-1]
    ho, wo = h // 2, wd // 2
    hw = ho * wo
    tco = _pick_cout_tile(cout)
    n_ct = cout // tco
    has_shortcut = w_sc is not None

    # Parity-subsampled views (row parity a, col parity b); cheap XLA strided
    # slices -- replaces strided in-kernel taps with contiguous slices.
    planes = [x[:, a::2, b::2, :] for a in (0, 1) for b in (0, 1)]

    plane_spec = pl.BlockSpec((1, ho, wo, cin), lambda i, j: (i, 0, 0, 0))
    in_specs = [plane_spec, plane_spec, plane_spec, plane_spec,
                pl.BlockSpec((1, cin), lambda i, j: (0, 0)),
                pl.BlockSpec((1, cin), lambda i, j: (0, 0)),
                pl.BlockSpec((3, 3, cin, tco), lambda i, j: (0, 0, 0, j))]
    args = planes + [scale.reshape(1, cin).astype(jnp.float32),
                     bias.reshape(1, cin).astype(jnp.float32),
                     w.astype(jnp.bfloat16)]
    if has_shortcut:
        in_specs.append(pl.BlockSpec((cin, tco), lambda i, j: (0, j)))
        args.append(w_sc.astype(jnp.bfloat16))

    out_block = pl.BlockSpec((1, hw, tco), lambda i, j: (i, 0, j))
    if has_shortcut:
        out_shape = (jax.ShapeDtypeStruct((n, hw, cout), jnp.bfloat16),
                     jax.ShapeDtypeStruct((n, hw, cout), jnp.bfloat16))
        out_specs = (out_block, out_block)
    else:
        out_shape = jax.ShapeDtypeStruct((n, hw, cout), jnp.bfloat16)
        out_specs = out_block

    kernel = _make_conv_s2_kernel(ho, wo, cin, tco, has_shortcut)
    res = pl.pallas_call(
        kernel,
        out_shape=out_shape,
        grid=(n, n_ct),
        in_specs=in_specs,
        out_specs=out_specs,
        scratch_shapes=[pltpu.VMEM((2, 2, ho + 1, wo + 1, cin), jnp.bfloat16)],
        compiler_params=pltpu.CompilerParams(
            dimension_semantics=("parallel", "arbitrary"),
            vmem_limit_bytes=48 * 1024 * 1024),
    )(*args)
    if has_shortcut:
        y, sc = res
        return y.reshape(n, ho, wo, cout), sc.reshape(n, ho, wo, cout)
    return res.reshape(n, ho, wo, cout)


# ------------------------------- model definition ----------------------------

def _bn_scale_bias(gamma, beta, mean, var, eps=1e-5):
    inv = gamma / jnp.sqrt(var + eps)
    return inv, beta - mean * inv


def basic_block_forward(x, params, stride, equal_in_out):
    scale1, bias1 = _bn_scale_bias(*params["bn1"])
    scale2, bias2 = _bn_scale_bias(*params["bn2"])
    w_sc = None if equal_in_out else params["conv_sc"]
    if stride == 1:
        r = fused_bn_relu_conv_s1(x, scale1, bias1, params["conv1"], w_sc=w_sc)
    else:
        r = fused_bn_relu_conv_s2(x, scale1, bias1, params["conv1"], stride,
                                  w_sc=w_sc)
    if equal_in_out:
        y1, shortcut = r, x
    else:
        y1, shortcut = r
    # conv2 (stride 1) with fused BN2 + ReLU and fused residual add.
    # dropout(dropRate=0.0) is a no-op.
    return fused_bn_relu_conv_s1(y1, scale2, bias2, params["conv2"],
                                 residual=shortcut)


def init_basic_block(key, in_planes, out_planes):
    """Parameters matching WideResNet init (kaiming-normal convs, BN gamma=1 /
    beta=0, running_mean=0 / running_var=1). Conv weights stored bf16."""
    k1, k2, k3 = jax.random.split(key, 3)

    def conv_w(k, kh, kw, cin, cout):
        std = jnp.sqrt(2.0 / (kh * kw * cout))
        w = jax.random.normal(k, (kh, kw, cin, cout), jnp.float32) * std
        return w.astype(jnp.bfloat16)

    def bn(c):
        return (jnp.ones((c,), jnp.float32), jnp.zeros((c,), jnp.float32),
                jnp.zeros((c,), jnp.float32), jnp.ones((c,), jnp.float32))

    params = {
        "bn1": bn(in_planes),
        "conv1": conv_w(k1, 3, 3, in_planes, out_planes),
        "bn2": bn(out_planes),
        "conv2": conv_w(k2, 3, 3, out_planes, out_planes),
    }
    if in_planes != out_planes:
        params["conv_sc"] = conv_w(k3, 1, 1, in_planes, out_planes)[0, 0]
    return params


def init_network_block(key, nb_layers, in_planes, out_planes):
    keys = jax.random.split(key, nb_layers)
    layers = []
    for i in range(nb_layers):
        cin = in_planes if i == 0 else out_planes
        layers.append(init_basic_block(keys[i], cin, out_planes))
    return layers


@functools.partial(jax.jit, static_argnames=("nb_layers", "in_planes",
                                             "out_planes", "stride"))
def network_block_forward(x_nchw, layer_params, nb_layers, in_planes,
                          out_planes, stride):
    # layout: NCHW (PyTorch) -> NHWC (channels on the lane axis) -> NCHW.
    x = jnp.transpose(x_nchw, (0, 2, 3, 1)).astype(jnp.float32)
    for i in range(nb_layers):
        cin = in_planes if i == 0 else out_planes
        s = stride if i == 0 else 1
        x = basic_block_forward(x, layer_params[i], s, cin == out_planes)
    return jnp.transpose(x, (0, 3, 1, 2)).astype(jnp.float32)


# ------------------------- pure-JAX reference (check) ------------------------

def _conv_ref(x, w, stride, padding):
    return lax.conv_general_dilated(
        x, w.astype(jnp.float32), window_strides=(stride, stride),
        padding=padding, dimension_numbers=("NHWC", "HWIO", "NHWC"))


def network_block_ref(x_nchw, layer_params, nb_layers, in_planes, out_planes,
                      stride, eps=1e-5):
    x = jnp.transpose(x_nchw, (0, 2, 3, 1)).astype(jnp.float32)
    for i in range(nb_layers):
        cin = in_planes if i == 0 else out_planes
        s = stride if i == 0 else 1
        p = layer_params[i]
        g1, b1, m1, v1 = p["bn1"]
        x1 = jnp.maximum((x - m1) * (g1 / jnp.sqrt(v1 + eps)) + b1, 0.0)
        y = _conv_ref(x1, p["conv1"], s, [(1, 1), (1, 1)])
        g2, b2, m2, v2 = p["bn2"]
        y = jnp.maximum((y - m2) * (g2 / jnp.sqrt(v2 + eps)) + b2, 0.0)
        y = _conv_ref(y, p["conv2"], 1, [(1, 1), (1, 1)])
        if cin == out_planes:
            sc = x
        else:
            wsc = p["conv_sc"].astype(jnp.float32).reshape(1, 1, cin, out_planes)
            sc = _conv_ref(x1, wsc, s, [(0, 0), (0, 0)])
        x = sc + y
    return jnp.transpose(x, (0, 3, 1, 2))


# ------------------------------------ main -----------------------------------

if __name__ == "__main__":
    nb_layers, in_planes, out_planes, stride = 2, 4, 8, 2

    key = jax.random.PRNGKey(0)
    kx, kp = jax.random.split(key)
    x = jax.random.normal(kx, (2, in_planes, 16, 16), jnp.float32)  # NCHW
    params = init_network_block(kp, nb_layers, in_planes, out_planes)

    out = network_block_forward(x, params, nb_layers, in_planes, out_planes,
                                stride)
    out = jax.block_until_ready(out)

    expected_shape = (2, out_planes, 16 // stride, 16 // stride)
    assert out.shape == expected_shape, (out.shape, expected_shape)
    assert bool(jnp.all(jnp.isfinite(out)))

    ref = network_block_ref(x, params, nb_layers, in_planes, out_planes, stride)
    abs_err = float(jnp.max(jnp.abs(out - ref)))
    rel_err = abs_err / max(1e-6, float(jnp.max(jnp.abs(ref))))
    # bf16 inter-kernel activations / MXU operands, f32 accumulation.
    assert abs_err < 0.15 and rel_err < 0.03, (abs_err, rel_err)

    print("KERNEL_OK")
</pallas_src>

<mosaic_0001>
module attributes {stable_mosaic.version = 11 : i64} {
  func.func @kernel(%arg0: i32, %arg1: i32, %arg2: memref<1x8x8x4xf32, #tpu.memory_space<vmem>>, %arg3: memref<1x8x8x4xf32, #tpu.memory_space<vmem>>, %arg4: memref<1x8x8x4xf32, #tpu.memory_space<vmem>>, %arg5: memref<1x8x8x4xf32, #tpu.memory_space<vmem>>, %arg6: memref<1x4xf32, #tpu.memory_space<vmem>>, %arg7: memref<1x4xf32, #tpu.memory_space<vmem>>, %arg8: memref<3x3x4x8xbf16, #tpu.memory_space<vmem>>, %arg9: memref<4x8xbf16, #tpu.memory_space<vmem>>, %arg10: memref<1x64x8xbf16, #tpu.memory_space<vmem>>, %arg11: memref<1x64x8xbf16, #tpu.memory_space<vmem>>, %arg12: memref<2x2x9x9x4xbf16, #tpu.memory_space<vmem>>) attributes {dimension_semantics = [#tpu.dimension_semantics<parallel>, #tpu.dimension_semantics<arbitrary>], iteration_bounds = array<i64: 2, 1>, scalar_prefetch = 0 : i64, scratch_operands = 1 : i64, tpu.core_type = #tpu.core_type<tc>, window_params = [{transform_indices = @transform_0, window_bounds = array<i64: 1, 8, 8, 4>}, {transform_indices = @transform_1, window_bounds = array<i64: 1, 8, 8, 4>}, {transform_indices = @transform_2, window_bounds = array<i64: 1, 8, 8, 4>}, {transform_indices = @transform_3, window_bounds = array<i64: 1, 8, 8, 4>}, {pipeline_mode = #tpu.pipeline_mode<synchronous>, transform_indices = @transform_4, window_bounds = array<i64: 1, 4>}, {pipeline_mode = #tpu.pipeline_mode<synchronous>, transform_indices = @transform_5, window_bounds = array<i64: 1, 4>}, {transform_indices = @transform_6, window_bounds = array<i64: 3, 3, 4, 8>}, {transform_indices = @transform_7, window_bounds = array<i64: 4, 8>}, {transform_indices = @transform_8, window_bounds = array<i64: 1, 64, 8>}, {transform_indices = @transform_9, window_bounds = array<i64: 1, 64, 8>}]} {
    %c0_i32 = arith.constant 0 : i32
    %0 = arith.cmpi eq, %arg1, %c0_i32 : i32
    %1 = arith.extui %0 : i1 to i32
    %c0_i32_0 = arith.constant 0 : i32
    %2 = arith.cmpi ne, %1, %c0_i32_0 : i32
    scf.if %2 {
      %cst_102 = arith.constant 0.000000e+00 : bf16
      %80 = vector.broadcast %cst_102 : bf16 to vector<2x2x9x9x4xbf16>
      %c0_103 = arith.constant 0 : index
      %c0_104 = arith.constant 0 : index
      %c0_105 = arith.constant 0 : index
      %c0_106 = arith.constant 0 : index
      %c0_107 = arith.constant 0 : index
      %81 = vector.load %arg12[%c0_103, %c0_104, %c0_105, %c0_106, %c0_107] : memref<2x2x9x9x4xbf16, #tpu.memory_space<vmem>>, vector<2x2x9x9x4xbf16>
      tpu.vector_store %arg12[%c0_103, %c0_104, %c0_105, %c0_106, %c0_107], %80 {strides = array<i32>} : memref<2x2x9x9x4xbf16, #tpu.memory_space<vmem>>, vector<2x2x9x9x4xbf16>,
      %c0_108 = arith.constant 0 : index
      %c0_109 = arith.constant 0 : index
      %82 = vector.load %arg6[%c0_108, %c0_109] : memref<1x4xf32, #tpu.memory_space<vmem>>, vector<1x4xf32>
      %83 = vector.shape_cast %82 : vector<1x4xf32> to vector<1x1x4xf32>
      %c0_110 = arith.constant 0 : index
      %c0_111 = arith.constant 0 : index
      %84 = vector.load %arg7[%c0_110, %c0_111] : memref<1x4xf32, #tpu.memory_space<vmem>>, vector<1x4xf32>
      %85 = vector.shape_cast %84 : vector<1x4xf32> to vector<1x1x4xf32>
      %c0_112 = arith.constant 0 : index
      %c0_113 = arith.constant 0 : index
      %c0_114 = arith.constant 0 : index
      %c0_115 = arith.constant 0 : index
      %86 = vector.load %arg2[%c0_112, %c0_113, %c0_114, %c0_115] : memref<1x8x8x4xf32, #tpu.memory_space<vmem>>, vector<1x8x8x4xf32>
      %87 = vector.shape_cast %86 : vector<1x8x8x4xf32> to vector<8x8x4xf32>
      %88 = vector.broadcast %83 : vector<1x1x4xf32> to vector<8x8x4xf32>
      %89 = arith.mulf %87, %88 : vector<8x8x4xf32>
      %90 = vector.broadcast %85 : vector<1x1x4xf32> to vector<8x8x4xf32>
      %91 = arith.addf %89, %90 : vector<8x8x4xf32>
      %cst_116 = arith.constant 0.000000e+00 : f32
      %92 = vector.broadcast %cst_116 : f32 to vector<8x8x4xf32>
      %93 = arith.maximumf %91, %92 : vector<8x8x4xf32>
      %94 = arith.truncf %93 : vector<8x8x4xf32> to vector<8x8x4xbf16>
      %c0_117 = arith.constant 0 : index
      %c0_118 = arith.constant 0 : index
      %c0_119 = arith.constant 0 : index
      %c0_120 = arith.constant 0 : index
      %c0_121 = arith.constant 0 : index
      %95 = vector.load %arg12[%c0_117, %c0_118, %c0_119, %c0_120, %c0_121] : memref<2x2x9x9x4xbf16, #tpu.memory_space<vmem>>, vector<1x1x8x8x4xbf16>
      %96 = vector.shape_cast %95 : vector<1x1x8x8x4xbf16> to vector<8x8x4xbf16>
      %97 = vector.shape_cast %94 : vector<8x8x4xbf16> to vector<1x1x8x8x4xbf16>
      tpu.vector_store %arg12[%c0_117, %c0_118, %c0_119, %c0_120, %c0_121], %97 {strides = array<i32>} : memref<2x2x9x9x4xbf16, #tpu.memory_space<vmem>>, vector<1x1x8x8x4xbf16>,
      %c0_122 = arith.constant 0 : index
      %c0_123 = arith.constant 0 : index
      %c0_124 = arith.constant 0 : index
      %c0_125 = arith.constant 0 : index
      %98 = vector.load %arg3[%c0_122, %c0_123, %c0_124, %c0_125] : memref<1x8x8x4xf32, #tpu.memory_space<vmem>>, vector<1x8x8x4xf32>
      %99 = vector.shape_cast %98 : vector<1x8x8x4xf32> to vector<8x8x4xf32>
      %100 = vector.broadcast %83 : vector<1x1x4xf32> to vector<8x8x4xf32>
      %101 = arith.mulf %99, %100 : vector<8x8x4xf32>
      %102 = vector.broadcast %85 : vector<1x1x4xf32> to vector<8x8x4xf32>
      %103 = arith.addf %101, %102 : vector<8x8x4xf32>
      %cst_126 = arith.constant 0.000000e+00 : f32
      %104 = vector.broadcast %cst_126 : f32 to vector<8x8x4xf32>
      %105 = arith.maximumf %103, %104 : vector<8x8x4xf32>
      %106 = arith.truncf %105 : vector<8x8x4xf32> to vector<8x8x4xbf16>
      %c0_127 = arith.constant 0 : index
      %c1_128 = arith.constant 1 : index
      %c0_129 = arith.constant 0 : index
      %c1_130 = arith.constant 1 : index
      %c0_131 = arith.constant 0 : index
      %107 = vector.load %arg12[%c0_127, %c1_128, %c0_129, %c1_130, %c0_131] : memref<2x2x9x9x4xbf16, #tpu.memory_space<vmem>>, vector<1x1x8x8x4xbf16>
      %108 = vector.shape_cast %107 : vector<1x1x8x8x4xbf16> to vector<8x8x4xbf16>
      %109 = vector.shape_cast %106 : vector<8x8x4xbf16> to vector<1x1x8x8x4xbf16>
      tpu.vector_store %arg12[%c0_127, %c1_128, %c0_129, %c1_130, %c0_131], %109 {strides = array<i32>} : memref<2x2x9x9x4xbf16, #tpu.memory_space<vmem>>, vector<1x1x8x8x4xbf16>,
      %c0_132 = arith.constant 0 : index
      %c0_133 = arith.constant 0 : index
      %c0_134 = arith.constant 0 : index
      %c0_135 = arith.constant 0 : index
      %110 = vector.load %arg4[%c0_132, %c0_133, %c0_134, %c0_135] : memref<1x8x8x4xf32, #tpu.memory_space<vmem>>, vector<1x8x8x4xf32>
      %111 = vector.shape_cast %110 : vector<1x8x8x4xf32> to vector<8x8x4xf32>
      %112 = vector.broadcast %83 : vector<1x1x4xf32> to vector<8x8x4xf32>
      %113 = arith.mulf %111, %112 : vector<8x8x4xf32>
      %114 = vector.broadcast %85 : vector<1x1x4xf32> to vector<8x8x4xf32>
      %115 = arith.addf %113, %114 : vector<8x8x4xf32>
      %cst_136 = arith.constant 0.000000e+00 : f32
      %116 = vector.broadcast %cst_136 : f32 to vector<8x8x4xf32>
      %117 = arith.maximumf %115, %116 : vector<8x8x4xf32>
      %118 = arith.truncf %117 : vector<8x8x4xf32> to vector<8x8x4xbf16>
      %c1_137 = arith.constant 1 : index
      %c0_138 = arith.constant 0 : index
      %c1_139 = arith.constant 1 : index
      %c0_140 = arith.constant 0 : index
      %c0_141 = arith.constant 0 : index
      %119 = vector.load %arg12[%c1_137, %c0_138, %c1_139, %c0_140, %c0_141] : memref<2x2x9x9x4xbf16, #tpu.memory_space<vmem>>, vector<1x1x8x8x4xbf16>
      %120 = vector.shape_cast %119 : vector<1x1x8x8x4xbf16> to vector<8x8x4xbf16>
      %121 = vector.shape_cast %118 : vector<8x8x4xbf16> to vector<1x1x8x8x4xbf16>
      tpu.vector_store %arg12[%c1_137, %c0_138, %c1_139, %c0_140, %c0_141], %121 {strides = array<i32>} : memref<2x2x9x9x4xbf16, #tpu.memory_space<vmem>>, vector<1x1x8x8x4xbf16>,
      %c0_142 = arith.constant 0 : index
      %c0_143 = arith.constant 0 : index
      %c0_144 = arith.constant 0 : index
      %c0_145 = arith.constant 0 : index
      %122 = vector.load %arg5[%c0_142, %c0_143, %c0_144, %c0_145] : memref<1x8x8x4xf32, #tpu.memory_space<vmem>>, vector<1x8x8x4xf32>
      %123 = vector.shape_cast %122 : vector<1x8x8x4xf32> to vector<8x8x4xf32>
      %124 = vector.broadcast %83 : vector<1x1x4xf32> to vector<8x8x4xf32>
      %125 = arith.mulf %123, %124 : vector<8x8x4xf32>
      %126 = vector.broadcast %85 : vector<1x1x4xf32> to vector<8x8x4xf32>
      %127 = arith.addf %125, %126 : vector<8x8x4xf32>
      %cst_146 = arith.constant 0.000000e+00 : f32
      %128 = vector.broadcast %cst_146 : f32 to vector<8x8x4xf32>
      %129 = arith.maximumf %127, %128 : vector<8x8x4xf32>
      %130 = arith.truncf %129 : vector<8x8x4xf32> to vector<8x8x4xbf16>
      %c1_147 = arith.constant 1 : index
      %c1_148 = arith.constant 1 : index
      %c1_149 = arith.constant 1 : index
      %c1_150 = arith.constant 1 : index
      %c0_151 = arith.constant 0 : index
      %131 = vector.load %arg12[%c1_147, %c1_148, %c1_149, %c1_150, %c0_151] : memref<2x2x9x9x4xbf16, #tpu.memory_space<vmem>>, vector<1x1x8x8x4xbf16>
      %132 = vector.shape_cast %131 : vector<1x1x8x8x4xbf16> to vector<8x8x4xbf16>
      %133 = vector.shape_cast %130 : vector<8x8x4xbf16> to vector<1x1x8x8x4xbf16>
      tpu.vector_store %arg12[%c1_147, %c1_148, %c1_149, %c1_150, %c0_151], %133 {strides = array<i32>} : memref<2x2x9x9x4xbf16, #tpu.memory_space<vmem>>, vector<1x1x8x8x4xbf16>,
    } else {
    }
    %cst = arith.constant 0.000000e+00 : f32
    %3 = vector.broadcast %cst : f32 to vector<64x8xf32>
    %c1 = arith.constant 1 : index
    %c1_1 = arith.constant 1 : index
    %c0 = arith.constant 0 : index
    %c0_2 = arith.constant 0 : index
    %c0_3 = arith.constant 0 : index
    %4 = vector.load %arg12[%c1, %c1_1, %c0, %c0_2, %c0_3] : memref<2x2x9x9x4xbf16, #tpu.memory_space<vmem>>, vector<1x1x8x8x4xbf16>
    %5 = vector.shape_cast %4 : vector<1x1x8x8x4xbf16> to vector<8x8x4xbf16>
    %6 = vector.shape_cast %5 : vector<8x8x4xbf16> to vector<64x4xbf16>
    %c0_4 = arith.constant 0 : index
    %c0_5 = arith.constant 0 : index
    %c0_6 = arith.constant 0 : index
    %c0_7 = arith.constant 0 : index
    %7 = vector.load %arg8[%c0_4, %c0_5, %c0_6, %c0_7] : memref<3x3x4x8xbf16, #tpu.memory_space<vmem>>, vector<1x1x4x8xbf16>
    %8 = vector.shape_cast %7 : vector<1x1x4x8xbf16> to vector<4x8xbf16>
    %cst_8 = arith.constant dense<0.000000e+00> : vector<64x8xf32>
    %9 = tpu.matmul %6, %8, %cst_8 {dimension_numbers = #tpu.dot_dimension_numbers<[1], [0], [0], [1], [0, 0, 1, 1], [], []>} : vector<64x4xbf16>, vector<4x8xbf16>, vector<64x8xf32> -> vector<64x8xf32>
    %10 = arith.addf %3, %9 : vector<64x8xf32>
    %c1_9 = arith.constant 1 : index
    %c0_10 = arith.constant 0 : index
    %c0_11 = arith.constant 0 : index
    %c0_12 = arith.constant 0 : index
    %c0_13 = arith.constant 0 : index
    %11 = vector.load %arg12[%c1_9, %c0_10, %c0_11, %c0_12, %c0_13] : memref<2x2x9x9x4xbf16, #tpu.memory_space<vmem>>, vector<1x1x8x8x4xbf16>
    %12 = vector.shape_cast %11 : vector<1x1x8x8x4xbf16> to vector<8x8x4xbf16>
    %13 = vector.shape_cast %12 : vector<8x8x4xbf16> to vector<64x4xbf16>
    %c0_14 = arith.constant 0 : index
    %c1_15 = arith.constant 1 : index
    %c0_16 = arith.constant 0 : index
    %c0_17 = arith.constant 0 : index
    %14 = vector.load %arg8[%c0_14, %c1_15, %c0_16, %c0_17] : memref<3x3x4x8xbf16, #tpu.memory_space<vmem>>, vector<1x1x4x8xbf16>
    %15 = vector.shape_cast %14 : vector<1x1x4x8xbf16> to vector<4x8xbf16>
    %cst_18 = arith.constant dense<0.000000e+00> : vector<64x8xf32>
    %16 = tpu.matmul %13, %15, %cst_18 {dimension_numbers = #tpu.dot_dimension_numbers<[1], [0], [0], [1], [0, 0, 1, 1], [], []>} : vector<64x4xbf16>, vector<4x8xbf16>, vector<64x8xf32> -> vector<64x8xf32>
    %17 = arith.addf %10, %16 : vector<64x8xf32>
    %c1_19 = arith.constant 1 : index
    %c1_20 = arith.constant 1 : index
    %c0_21 = arith.constant 0 : index
    %c1_22 = arith.constant 1 : index
    %c0_23 = arith.constant 0 : index
    %18 = vector.load %arg12[%c1_19, %c1_20, %c0_21, %c1_22, %c0_23] : memref<2x2x9x9x4xbf16, #tpu.memory_space<vmem>>, vector<1x1x8x8x4xbf16>
    %19 = vector.shape_cast %18 : vector<1x1x8x8x4xbf16> to vector<8x8x4xbf16>
    %20 = vector.shape_cast %19 : vector<8x8x4xbf16> to vector<64x4xbf16>
    %c0_24 = arith.constant 0 : index
    %c2 = arith.constant 2 : index
    %c0_25 = arith.constant 0 : index
    %c0_26 = arith.constant 0 : index
    %21 = vector.load %arg8[%c0_24, %c2, %c0_25, %c0_26] : memref<3x3x4x8xbf16, #tpu.memory_space<vmem>>, vector<1x1x4x8xbf16>
    %22 = vector.shape_cast %21 : vector<1x1x4x8xbf16> to vector<4x8xbf16>
    %cst_27 = arith.constant dense<0.000000e+00> : vector<64x8xf32>
    %23 = tpu.matmul %20, %22, %cst_27 {dimension_numbers = #tpu.dot_dimension_numbers<[1], [0], [0], [1], [0, 0, 1, 1], [], []>} : vector<64x4xbf16>, vector<4x8xbf16>, vector<64x8xf32> -> vector<64x8xf32>
    %24 = arith.addf %17, %23 : vector<64x8xf32>
    %c0_28 = arith.constant 0 : index
    %c1_29 = arith.constant 1 : index
    %c0_30 = arith.constant 0 : index
    %c0_31 = arith.constant 0 : index
    %c0_32 = arith.constant 0 : index
    %25 = vector.load %arg12[%c0_28, %c1_29, %c0_30, %c0_31, %c0_32] : memref<2x2x9x9x4xbf16, #tpu.memory_space<vmem>>, vector<1x1x8x8x4xbf16>
    %26 = vector.shape_cast %25 : vector<1x1x8x8x4xbf16> to vector<8x8x4xbf16>
    %27 = vector.shape_cast %26 : vector<8x8x4xbf16> to vector<64x4xbf16>
    %c1_33 = arith.constant 1 : index
    %c0_34 = arith.constant 0 : index
    %c0_35 = arith.constant 0 : index
    %c0_36 = arith.constant 0 : index
    %28 = vector.load %arg8[%c1_33, %c0_34, %c0_35, %c0_36] : memref<3x3x4x8xbf16, #tpu.memory_space<vmem>>, vector<1x1x4x8xbf16>
    %29 = vector.shape_cast %28 : vector<1x1x4x8xbf16> to vector<4x8xbf16>
    %cst_37 = arith.constant dense<0.000000e+00> : vector<64x8xf32>
    %30 = tpu.matmul %27, %29, %cst_37 {dimension_numbers = #tpu.dot_dimension_numbers<[1], [0], [0], [1], [0, 0, 1, 1], [], []>} : vector<64x4xbf16>, vector<4x8xbf16>, vector<64x8xf32> -> vector<64x8xf32>
    %31 = arith.addf %24, %30 : vector<64x8xf32>
    %c0_38 = arith.constant 0 : index
    %c0_39 = arith.constant 0 : index
    %c0_40 = arith.constant 0 : index
    %c0_41 = arith.constant 0 : index
    %c0_42 = arith.constant 0 : index
    %32 = vector.load %arg12[%c0_38, %c0_39, %c0_40, %c0_41, %c0_42] : memref<2x2x9x9x4xbf16, #tpu.memory_space<vmem>>, vector<1x1x8x8x4xbf16>
    %33 = vector.shape_cast %32 : vector<1x1x8x8x4xbf16> to vector<8x8x4xbf16>
    %34 = vector.shape_cast %33 : vector<8x8x4xbf16> to vector<64x4xbf16>
    %c1_43 = arith.constant 1 : index
    %c1_44 = arith.constant 1 : index
    %c0_45 = arith.constant 0 : index
    %c0_46 = arith.constant 0 : index
    %35 = vector.load %arg8[%c1_43, %c1_44, %c0_45, %c0_46] : memref<3x3x4x8xbf16, #tpu.memory_space<vmem>>, vector<1x1x4x8xbf16>
    %36 = vector.shape_cast %35 : vector<1x1x4x8xbf16> to vector<4x8xbf16>
    %cst_47 = arith.constant dense<0.000000e+00> : vector<64x8xf32>
    %37 = tpu.matmul %34, %36, %cst_47 {dimension_numbers = #tpu.dot_dimension_numbers<[1], [0], [0], [1], [0, 0, 1, 1], [], []>} : vector<64x4xbf16>, vector<4x8xbf16>, vector<64x8xf32> -> vector<64x8xf32>
    %38 = arith.addf %31, %37 : vector<64x8xf32>
    %c0_48 = arith.constant 0 : index
    %c1_49 = arith.constant 1 : index
    %c0_50 = arith.constant 0 : index
    %c1_51 = arith.constant 1 : index
    %c0_52 = arith.constant 0 : index
    %39 = vector.load %arg12[%c0_48, %c1_49, %c0_50, %c1_51, %c0_52] : memref<2x2x9x9x4xbf16, #tpu.memory_space<vmem>>, vector<1x1x8x8x4xbf16>
    %40 = vector.shape_cast %39 : vector<1x1x8x8x4xbf16> to vector<8x8x4xbf16>
    %41 = vector.shape_cast %40 : vector<8x8x4xbf16> to vector<64x4xbf16>
    %c1_53 = arith.constant 1 : index
    %c2_54 = arith.constant 2 : index
    %c0_55 = arith.constant 0 : index
    %c0_56 = arith.constant 0 : index
    %42 = vector.load %arg8[%c1_53, %c2_54, %c0_55, %c0_56] : memref<3x3x4x8xbf16, #tpu.memory_space<vmem>>, vector<1x1x4x8xbf16>
    %43 = vector.shape_cast %42 : vector<1x1x4x8xbf16> to vector<4x8xbf16>
    %cst_57 = arith.constant dense<0.000000e+00> : vector<64x8xf32>
    %44 = tpu.matmul %41, %43, %cst_57 {dimension_numbers = #tpu.dot_dimension_numbers<[1], [0], [0], [1], [0, 0, 1, 1], [], []>} : vector<64x4xbf16>, vector<4x8xbf16>, vector<64x8xf32> -> vector<64x8xf32>
    %45 = arith.addf %38, %44 : vector<64x8xf32>
    %c1_58 = arith.constant 1 : index
    %c1_59 = arith.constant 1 : index
    %c1_60 = arith.constant 1 : index
    %c0_61 = arith.constant 0 : index
    %c0_62 = arith.constant 0 : index
    %46 = vector.load %arg12[%c1_58, %c1_59, %c1_60, %c0_61, %c0_62] : memref<2x2x9x9x4xbf16, #tpu.memory_space<vmem>>, vector<1x1x8x8x4xbf16>
    %47 = vector.shape_cast %46 : vector<1x1x8x8x4xbf16> to vector<8x8x4xbf16>
    %48 = vector.shape_cast %47 : vector<8x8x4xbf16> to vector<64x4xbf16>
    %c2_63 = arith.constant 2 : index
    %c0_64 = arith.constant 0 : index
    %c0_65 = arith.constant 0 : index
    %c0_66 = arith.constant 0 : index
    %49 = vector.load %arg8[%c2_63, %c0_64, %c0_65, %c0_66] : memref<3x3x4x8xbf16, #tpu.memory_space<vmem>>, vector<1x1x4x8xbf16>
    %50 = vector.shape_cast %49 : vector<1x1x4x8xbf16> to vector<4x8xbf16>
    %cst_67 = arith.constant dense<0.000000e+00> : vector<64x8xf32>
    %51 = tpu.matmul %48, %50, %cst_67 {dimension_numbers = #tpu.dot_dimension_numbers<[1], [0], [0], [1], [0, 0, 1, 1], [], []>} : vector<64x4xbf16>, vector<4x8xbf16>, vector<64x8xf32> -> vector<64x8xf32>
    %52 = arith.addf %45, %51 : vector<64x8xf32>
    %c1_68 = arith.constant 1 : index
    %c0_69 = arith.constant 0 : index
    %c1_70 = arith.constant 1 : index
    %c0_71 = arith.constant 0 : index
    %c0_72 = arith.constant 0 : index
    %53 = vector.load %arg12[%c1_68, %c0_69, %c1_70, %c0_71, %c0_72] : memref<2x2x9x9x4xbf16, #tpu.memory_space<vmem>>, vector<1x1x8x8x4xbf16>
    %54 = vector.shape_cast %53 : vector<1x1x8x8x4xbf16> to vector<8x8x4xbf16>
    %55 = vector.shape_cast %54 : vector<8x8x4xbf16> to vector<64x4xbf16>
    %c2_73 = arith.constant 2 : index
    %c1_74 = arith.constant 1 : index
    %c0_75 = arith.constant 0 : index
    %c0_76 = arith.constant 0 : index
    %56 = vector.load %arg8[%c2_73, %c1_74, %c0_75, %c0_76] : memref<3x3x4x8xbf16, #tpu.memory_space<vmem>>, vector<1x1x4x8xbf16>
    %57 = vector.shape_cast %56 : vector<1x1x4x8xbf16> to vector<4x8xbf16>
    %cst_77 = arith.constant dense<0.000000e+00> : vector<64x8xf32>
    %58 = tpu.matmul %55, %57, %cst_77 {dimension_numbers = #tpu.dot_dimension_numbers<[1], [0], [0], [1], [0, 0, 1, 1], [], []>} : vector<64x4xbf16>, vector<4x8xbf16>, vector<64x8xf32> -> vector<64x8xf32>
    %59 = arith.addf %52, %58 : vector<64x8xf32>
    %c1_78 = arith.constant 1 : index
    %c1_79 = arith.constant 1 : index
    %c1_80 = arith.constant 1 : index
    %c1_81 = arith.constant 1 : index
    %c0_82 = arith.constant 0 : index
    %60 = vector.load %arg12[%c1_78, %c1_79, %c1_80, %c1_81, %c0_82] : memref<2x2x9x9x4xbf16, #tpu.memory_space<vmem>>, vector<1x1x8x8x4xbf16>
    %61 = vector.shape_cast %60 : vector<1x1x8x8x4xbf16> to vector<8x8x4xbf16>
    %62 = vector.shape_cast %61 : vector<8x8x4xbf16> to vector<64x4xbf16>
    %c2_83 = arith.constant 2 : index
    %c2_84 = arith.constant 2 : index
    %c0_85 = arith.constant 0 : index
    %c0_86 = arith.constant 0 : index
    %63 = vector.load %arg8[%c2_83, %c2_84, %c0_85, %c0_86] : memref<3x3x4x8xbf16, #tpu.memory_space<vmem>>, vector<1x1x4x8xbf16>
    %64 = vector.shape_cast %63 : vector<1x1x4x8xbf16> to vector<4x8xbf16>
    %cst_87 = arith.constant dense<0.000000e+00> : vector<64x8xf32>
    %65 = tpu.matmul %62, %64, %cst_87 {dimension_numbers = #tpu.dot_dimension_numbers<[1], [0], [0], [1], [0, 0, 1, 1], [], []>} : vector<64x4xbf16>, vector<4x8xbf16>, vector<64x8xf32> -> vector<64x8xf32>
    %66 = arith.addf %59, %65 : vector<64x8xf32>
    %67 = arith.truncf %66 : vector<64x8xf32> to vector<64x8xbf16>
    %c0_88 = arith.constant 0 : index
    %c0_89 = arith.constant 0 : index
    %c0_90 = arith.constant 0 : index
    %68 = vector.load %arg10[%c0_88, %c0_89, %c0_90] : memref<1x64x8xbf16, #tpu.memory_space<vmem>>, vector<1x64x8xbf16>
    %69 = vector.shape_cast %68 : vector<1x64x8xbf16> to vector<64x8xbf16>
    %70 = vector.shape_cast %67 : vector<64x8xbf16> to vector<1x64x8xbf16>
    tpu.vector_store %arg10[%c0_88, %c0_89, %c0_90], %70 {strides = array<i32>} : memref<1x64x8xbf16, #tpu.memory_space<vmem>>, vector<1x64x8xbf16>,
    %c0_91 = arith.constant 0 : index
    %c0_92 = arith.constant 0 : index
    %c0_93 = arith.constant 0 : index
    %c0_94 = arith.constant 0 : index
    %c0_95 = arith.constant 0 : index
    %71 = vector.load %arg12[%c0_91, %c0_92, %c0_93, %c0_94, %c0_95] : memref<2x2x9x9x4xbf16, #tpu.memory_space<vmem>>, vector<1x1x8x8x4xbf16>
    %72 = vector.shape_cast %71 : vector<1x1x8x8x4xbf16> to vector<8x8x4xbf16>
    %73 = vector.shape_cast %72 : vector<8x8x4xbf16> to vector<64x4xbf16>
    %c0_96 = arith.constant 0 : index
    %c0_97 = arith.constant 0 : index
    %74 = vector.load %arg9[%c0_96, %c0_97] : memref<4x8xbf16, #tpu.memory_space<vmem>>, vector<4x8xbf16>
    %cst_98 = arith.constant dense<0.000000e+00> : vector<64x8xf32>
    %75 = tpu.matmul %73, %74, %cst_98 {dimension_numbers = #tpu.dot_dimension_numbers<[1], [0], [0], [1], [0, 0, 1, 1], [], []>} : vector<64x4xbf16>, vector<4x8xbf16>, vector<64x8xf32> -> vector<64x8xf32>
    %76 = arith.truncf %75 : vector<64x8xf32> to vector<64x8xbf16>
    %c0_99 = arith.constant 0 : index
    %c0_100 = arith.constant 0 : index
    %c0_101 = arith.constant 0 : index
    %77 = vector.load %arg11[%c0_99, %c0_100, %c0_101] : memref<1x64x8xbf16, #tpu.memory_space<vmem>>, vector<1x64x8xbf16>
    %78 = vector.shape_cast %77 : vector<1x64x8xbf16> to vector<64x8xbf16>
    %79 = vector.shape_cast %76 : vector<64x8xbf16> to vector<1x64x8xbf16>
    tpu.vector_store %arg11[%c0_99, %c0_100, %c0_101], %79 {strides = array<i32>} : memref<1x64x8xbf16, #tpu.memory_space<vmem>>, vector<1x64x8xbf16>,
    return
  }
  func.func @transform_0(%arg0: i32, %arg1: i32) -> (i32, i32, i32, i32) {
    %c0_i32 = arith.constant 0 : i32
    %c0_i32_0 = arith.constant 0 : i32
    %c0_i32_1 = arith.constant 0 : i32
    %c0_i32_2 = arith.constant 0 : i32
    return %arg0, %c0_i32, %c0_i32_0, %c0_i32_1 : i32, i32, i32, i32
  }
  func.func @transform_1(%arg0: i32, %arg1: i32) -> (i32, i32, i32, i32) {
    %c0_i32 = arith.constant 0 : i32
    %c0_i32_0 = arith.constant 0 : i32
    %c0_i32_1 = arith.constant 0 : i32
    %c0_i32_2 = arith.constant 0 : i32
    return %arg0, %c0_i32, %c0_i32_0, %c0_i32_1 : i32, i32, i32, i32
  }
  func.func @transform_2(%arg0: i32, %arg1: i32) -> (i32, i32, i32, i32) {
    %c0_i32 = arith.constant 0 : i32
    %c0_i32_0 = arith.constant 0 : i32
    %c0_i32_1 = arith.constant 0 : i32
    %c0_i32_2 = arith.constant 0 : i32
    return %arg0, %c0_i32, %c0_i32_0, %c0_i32_1 : i32, i32, i32, i32
  }
  func.func @transform_3(%arg0: i32, %arg1: i32) -> (i32, i32, i32, i32) {
    %c0_i32 = arith.constant 0 : i32
    %c0_i32_0 = arith.constant 0 : i32
    %c0_i32_1 = arith.constant 0 : i32
    %c0_i32_2 = arith.constant 0 : i32
    return %arg0, %c0_i32, %c0_i32_0, %c0_i32_1 : i32, i32, i32, i32
  }
  func.func @transform_4(%arg0: i32, %arg1: i32) -> (i32, i32) {
    %c0_i32 = arith.constant 0 : i32
    %c0_i32_0 = arith.constant 0 : i32
    %c0_i32_1 = arith.constant 0 : i32
    return %c0_i32, %c0_i32_0 : i32, i32
  }
  func.func @transform_5(%arg0: i32, %arg1: i32) -> (i32, i32) {
    %c0_i32 = arith.constant 0 : i32
    %c0_i32_0 = arith.constant 0 : i32
    %c0_i32_1 = arith.constant 0 : i32
    return %c0_i32, %c0_i32_0 : i32, i32
  }
  func.func @transform_6(%arg0: i32, %arg1: i32) -> (i32, i32, i32, i32) {
    %c0_i32 = arith.constant 0 : i32
    %c0_i32_0 = arith.constant 0 : i32
    %c0_i32_1 = arith.constant 0 : i32
    %c0_i32_2 = arith.constant 0 : i32
    return %c0_i32, %c0_i32_0, %c0_i32_1, %arg1 : i32, i32, i32, i32
  }
  func.func @transform_7(%arg0: i32, %arg1: i32) -> (i32, i32) {
    %c0_i32 = arith.constant 0 : i32
    %c0_i32_0 = arith.constant 0 : i32
    return %c0_i32, %arg1 : i32, i32
  }
  func.func @transform_8(%arg0: i32, %arg1: i32) -> (i32, i32, i32) {
    %c0_i32 = arith.constant 0 : i32
    %c0_i32_0 = arith.constant 0 : i32
    return %arg0, %c0_i32, %arg1 : i32, i32, i32
  }
  func.func @transform_9(%arg0: i32, %arg1: i32) -> (i32, i32, i32) {
    %c0_i32 = arith.constant 0 : i32
    %c0_i32_0 = arith.constant 0 : i32
    return %arg0, %c0_i32, %arg1 : i32, i32, i32
  }
}

module attributes {stable_mosaic.version = 11 : i64} {
  func.func @kernel(%arg0: i32, %arg1: i32, %arg2: memref<1x8x8x8xbf16, #tpu.memory_space<vmem>>, %arg3: memref<1x8xf32, #tpu.memory_space<vmem>>, %arg4: memref<1x8xf32, #tpu.memory_space<vmem>>, %arg5: memref<3x3x8x8xbf16, #tpu.memory_space<vmem>>, %arg6: memref<1x64x8xbf16, #tpu.memory_space<vmem>>, %arg7: memref<1x64x8xbf16, #tpu.memory_space<vmem>>, %arg8: memref<10x10x8xbf16, #tpu.memory_space<vmem>>) attributes {dimension_semantics = [#tpu.dimension_semantics<parallel>, #tpu.dimension_semantics<arbitrary>], iteration_bounds = array<i64: 2, 1>, scalar_prefetch = 0 : i64, scratch_operands = 1 : i64, tpu.core_type = #tpu.core_type<tc>, window_params = [{transform_indices = @transform_0, window_bounds = array<i64: 1, 8, 8, 8>}, {pipeline_mode = #tpu.pipeline_mode<synchronous>, transform_indices = @transform_1, window_bounds = array<i64: 1, 8>}, {pipeline_mode = #tpu.pipeline_mode<synchronous>, transform_indices = @transform_2, window_bounds = array<i64: 1, 8>}, {transform_indices = @transform_3, window_bounds = array<i64: 3, 3, 8, 8>}, {transform_indices = @transform_4, window_bounds = array<i64: 1, 64, 8>}, {transform_indices = @transform_5, window_bounds = array<i64: 1, 64, 8>}]} {
    %c0_i32 = arith.constant 0 : i32
    %0 = arith.cmpi eq, %arg1, %c0_i32 : i32
    %1 = arith.extui %0 : i1 to i32
    %c0_i32_0 = arith.constant 0 : i32
    %2 = arith.cmpi ne, %1, %c0_i32_0 : i32
    scf.if %2 {
      %cst_75 = arith.constant 0.000000e+00 : bf16
      %64 = vector.broadcast %cst_75 : bf16 to vector<1x10x8xbf16>
      %cst_76 = arith.constant 0.000000e+00 : bf16
      %65 = vector.broadcast %cst_76 : bf16 to vector<10x1x8xbf16>
      %c0_77 = arith.constant 0 : index
      %c0_78 = arith.constant 0 : index
      %c0_79 = arith.constant 0 : index
      %66 = vector.load %arg8[%c0_77, %c0_78, %c0_79] : memref<10x10x8xbf16, #tpu.memory_space<vmem>>, vector<1x10x8xbf16>
      tpu.vector_store %arg8[%c0_77, %c0_78, %c0_79], %64 {strides = array<i32>} : memref<10x10x8xbf16, #tpu.memory_space<vmem>>, vector<1x10x8xbf16>,
      %c9 = arith.constant 9 : index
      %c0_80 = arith.constant 0 : index
      %c0_81 = arith.constant 0 : index
      %67 = vector.load %arg8[%c9, %c0_80, %c0_81] : memref<10x10x8xbf16, #tpu.memory_space<vmem>>, vector<1x10x8xbf16>
      tpu.vector_store %arg8[%c9, %c0_80, %c0_81], %64 {strides = array<i32>} : memref<10x10x8xbf16, #tpu.memory_space<vmem>>, vector<1x10x8xbf16>,
      %c0_82 = arith.constant 0 : index
      %c0_83 = arith.constant 0 : index
      %c0_84 = arith.constant 0 : index
      %68 = vector.load %arg8[%c0_82, %c0_83, %c0_84] : memref<10x10x8xbf16, #tpu.memory_space<vmem>>, vector<10x1x8xbf16>
      tpu.vector_store %arg8[%c0_82, %c0_83, %c0_84], %65 {strides = array<i32>} : memref<10x10x8xbf16, #tpu.memory_space<vmem>>, vector<10x1x8xbf16>,
      %c0_85 = arith.constant 0 : index
      %c9_86 = arith.constant 9 : index
      %c0_87 = arith.constant 0 : index
      %69 = vector.load %arg8[%c0_85, %c9_86, %c0_87] : memref<10x10x8xbf16, #tpu.memory_space<vmem>>, vector<10x1x8xbf16>
      tpu.vector_store %arg8[%c0_85, %c9_86, %c0_87], %65 {strides = array<i32>} : memref<10x10x8xbf16, #tpu.memory_space<vmem>>, vector<10x1x8xbf16>,
      %c0_88 = arith.constant 0 : index
      %c0_89 = arith.constant 0 : index
      %70 = vector.load %arg3[%c0_88, %c0_89] : memref<1x8xf32, #tpu.memory_space<vmem>>, vector<1x8xf32>
      %71 = vector.shape_cast %70 : vector<1x8xf32> to vector<1x1x8xf32>
      %c0_90 = arith.constant 0 : index
      %c0_91 = arith.constant 0 : index
      %72 = vector.load %arg4[%c0_90, %c0_91] : memref<1x8xf32, #tpu.memory_space<vmem>>, vector<1x8xf32>
      %73 = vector.shape_cast %72 : vector<1x8xf32> to vector<1x1x8xf32>
      %c0_92 = arith.constant 0 : index
      %c0_93 = arith.constant 0 : index
      %c0_94 = arith.constant 0 : index
      %c0_95 = arith.constant 0 : index
      %74 = vector.load %arg2[%c0_92, %c0_93, %c0_94, %c0_95] : memref<1x8x8x8xbf16, #tpu.memory_space<vmem>>, vector<1x8x8x8xbf16>
      %75 = vector.shape_cast %74 : vector<1x8x8x8xbf16> to vector<8x8x8xbf16>
      %76 = arith.extf %75 : vector<8x8x8xbf16> to vector<8x8x8xf32>
      %77 = vector.broadcast %71 : vector<1x1x8xf32> to vector<8x8x8xf32>
      %78 = arith.mulf %76, %77 : vector<8x8x8xf32>
      %79 = vector.broadcast %73 : vector<1x1x8xf32> to vector<8x8x8xf32>
      %80 = arith.addf %78, %79 : vector<8x8x8xf32>
      %cst_96 = arith.constant 0.000000e+00 : f32
      %81 = vector.broadcast %cst_96 : f32 to vector<8x8x8xf32>
      %82 = arith.maximumf %80, %81 : vector<8x8x8xf32>
      %83 = arith.truncf %82 : vector<8x8x8xf32> to vector<8x8x8xbf16>
      %c1_97 = arith.constant 1 : index
      %c1_98 = arith.constant 1 : index
      %c0_99 = arith.constant 0 : index
      %84 = vector.load %arg8[%c1_97, %c1_98, %c0_99] : memref<10x10x8xbf16, #tpu.memory_space<vmem>>, vector<8x8x8xbf16>
      tpu.vector_store %arg8[%c1_97, %c1_98, %c0_99], %83 {strides = array<i32>} : memref<10x10x8xbf16, #tpu.memory_space<vmem>>, vector<8x8x8xbf16>,
    } else {
    }
    %c0 = arith.constant 0 : index
    %c0_1 = arith.constant 0 : index
    %c0_2 = arith.constant 0 : index
    %3 = vector.load %arg6[%c0, %c0_1, %c0_2] : memref<1x64x8xbf16, #tpu.memory_space<vmem>>, vector<1x64x8xbf16>
    %4 = vector.shape_cast %3 : vector<1x64x8xbf16> to vector<64x8xbf16>
    %5 = arith.extf %4 : vector<64x8xbf16> to vector<64x8xf32>
    %c0_3 = arith.constant 0 : index
    %c0_4 = arith.constant 0 : index
    %c0_5 = arith.constant 0 : index
    %6 = vector.load %arg8[%c0_3, %c0_4, %c0_5] : memref<10x10x8xbf16, #tpu.memory_space<vmem>>, vector<8x8x8xbf16>
    %7 = vector.shape_cast %6 : vector<8x8x8xbf16> to vector<64x8xbf16>
    %c0_6 = arith.constant 0 : index
    %c0_7 = arith.constant 0 : index
    %c0_8 = arith.constant 0 : index
    %c0_9 = arith.constant 0 : index
    %8 = vector.load %arg5[%c0_6, %c0_7, %c0_8, %c0_9] : memref<3x3x8x8xbf16, #tpu.memory_space<vmem>>, vector<1x1x8x8xbf16>
    %9 = vector.shape_cast %8 : vector<1x1x8x8xbf16> to vector<8x8xbf16>
    %cst = arith.constant dense<0.000000e+00> : vector<64x8xf32>
    %10 = tpu.matmul %7, %9, %cst {dimension_numbers = #tpu.dot_dimension_numbers<[1], [0], [0], [1], [0, 0, 1, 1], [], []>} : vector<64x8xbf16>, vector<8x8xbf16>, vector<64x8xf32> -> vector<64x8xf32>
    %11 = arith.addf %5, %10 : vector<64x8xf32>
    %c0_10 = arith.constant 0 : index
    %c1 = arith.constant 1 : index
    %c0_11 = arith.constant 0 : index
    %12 = vector.load %arg8[%c0_10, %c1, %c0_11] : memref<10x10x8xbf16, #tpu.memory_space<vmem>>, vector<8x8x8xbf16>
    %13 = vector.shape_cast %12 : vector<8x8x8xbf16> to vector<64x8xbf16>
    %c0_12 = arith.constant 0 : index
    %c1_13 = arith.constant 1 : index
    %c0_14 = arith.constant 0 : index
    %c0_15 = arith.constant 0 : index
    %14 = vector.load %arg5[%c0_12, %c1_13, %c0_14, %c0_15] : memref<3x3x8x8xbf16, #tpu.memory_space<vmem>>, vector<1x1x8x8xbf16>
    %15 = vector.shape_cast %14 : vector<1x1x8x8xbf16> to vector<8x8xbf16>
    %cst_16 = arith.constant dense<0.000000e+00> : vector<64x8xf32>
    %16 = tpu.matmul %13, %15, %cst_16 {dimension_numbers = #tpu.dot_dimension_numbers<[1], [0], [0], [1], [0, 0, 1, 1], [], []>} : vector<64x8xbf16>, vector<8x8xbf16>, vector<64x8xf32> -> vector<64x8xf32>
    %17 = arith.addf %11, %16 : vector<64x8xf32>
    %c0_17 = arith.constant 0 : index
    %c2 = arith.constant 2 : index
    %c0_18 = arith.constant 0 : index
    %18 = vector.load %arg8[%c0_17, %c2, %c0_18] : memref<10x10x8xbf16, #tpu.memory_space<vmem>>, vector<8x8x8xbf16>
    %19 = vector.shape_cast %18 : vector<8x8x8xbf16> to vector<64x8xbf16>
    %c0_19 = arith.constant 0 : index
    %c2_20 = arith.constant 2 : index
    %c0_21 = arith.constant 0 : index
    %c0_22 = arith.constant 0 : index
    %20 = vector.load %arg5[%c0_19, %c2_20, %c0_21, %c0_22] : memref<3x3x8x8xbf16, #tpu.memory_space<vmem>>, vector<1x1x8x8xbf16>
    %21 = vector.shape_cast %20 : vector<1x1x8x8xbf16> to vector<8x8xbf16>
    %cst_23 = arith.constant dense<0.000000e+00> : vector<64x8xf32>
    %22 = tpu.matmul %19, %21, %cst_23 {dimension_numbers = #tpu.dot_dimension_numbers<[1], [0], [0], [1], [0, 0, 1, 1], [], []>} : vector<64x8xbf16>, vector<8x8xbf16>, vector<64x8xf32> -> vector<64x8xf32>
    %23 = arith.addf %17, %22 : vector<64x8xf32>
    %c1_24 = arith.constant 1 : index
    %c0_25 = arith.constant 0 : index
    %c0_26 = arith.constant 0 : index
    %24 = vector.load %arg8[%c1_24, %c0_25, %c0_26] : memref<10x10x8xbf16, #tpu.memory_space<vmem>>, vector<8x8x8xbf16>
    %25 = vector.shape_cast %24 : vector<8x8x8xbf16> to vector<64x8xbf16>
    %c1_27 = arith.constant 1 : index
    %c0_28 = arith.constant 0 : index
    %c0_29 = arith.constant 0 : index
    %c0_30 = arith.constant 0 : index
    %26 = vector.load %arg5[%c1_27, %c0_28, %c0_29, %c0_30] : memref<3x3x8x8xbf16, #tpu.memory_space<vmem>>, vector<1x1x8x8xbf16>
    %27 = vector.shape_cast %26 : vector<1x1x8x8xbf16> to vector<8x8xbf16>
    %cst_31 = arith.constant dense<0.000000e+00> : vector<64x8xf32>
    %28 = tpu.matmul %25, %27, %cst_31 {dimension_numbers = #tpu.dot_dimension_numbers<[1], [0], [0], [1], [0, 0, 1, 1], [], []>} : vector<64x8xbf16>, vector<8x8xbf16>, vector<64x8xf32> -> vector<64x8xf32>
    %29 = arith.addf %23, %28 : vector<64x8xf32>
    %c1_32 = arith.constant 1 : index
    %c1_33 = arith.constant 1 : index
    %c0_34 = arith.constant 0 : index
    %30 = vector.load %arg8[%c1_32, %c1_33, %c0_34] : memref<10x10x8xbf16, #tpu.memory_space<vmem>>, vector<8x8x8xbf16>
    %31 = vector.shape_cast %30 : vector<8x8x8xbf16> to vector<64x8xbf16>
    %c1_35 = arith.constant 1 : index
    %c1_36 = arith.constant 1 : index
    %c0_37 = arith.constant 0 : index
    %c0_38 = arith.constant 0 : index
    %32 = vector.load %arg5[%c1_35, %c1_36, %c0_37, %c0_38] : memref<3x3x8x8xbf16, #tpu.memory_space<vmem>>, vector<1x1x8x8xbf16>
    %33 = vector.shape_cast %32 : vector<1x1x8x8xbf16> to vector<8x8xbf16>
    %cst_39 = arith.constant dense<0.000000e+00> : vector<64x8xf32>
    %34 = tpu.matmul %31, %33, %cst_39 {dimension_numbers = #tpu.dot_dimension_numbers<[1], [0], [0], [1], [0, 0, 1, 1], [], []>} : vector<64x8xbf16>, vector<8x8xbf16>, vector<64x8xf32> -> vector<64x8xf32>
    %35 = arith.addf %29, %34 : vector<64x8xf32>
    %c1_40 = arith.constant 1 : index
    %c2_41 = arith.constant 2 : index
    %c0_42 = arith.constant 0 : index
    %36 = vector.load %arg8[%c1_40, %c2_41, %c0_42] : memref<10x10x8xbf16, #tpu.memory_space<vmem>>, vector<8x8x8xbf16>
    %37 = vector.shape_cast %36 : vector<8x8x8xbf16> to vector<64x8xbf16>
    %c1_43 = arith.constant 1 : index
    %c2_44 = arith.constant 2 : index
    %c0_45 = arith.constant 0 : index
    %c0_46 = arith.constant 0 : index
    %38 = vector.load %arg5[%c1_43, %c2_44, %c0_45, %c0_46] : memref<3x3x8x8xbf16, #tpu.memory_space<vmem>>, vector<1x1x8x8xbf16>
    %39 = vector.shape_cast %38 : vector<1x1x8x8xbf16> to vector<8x8xbf16>
    %cst_47 = arith.constant dense<0.000000e+00> : vector<64x8xf32>
    %40 = tpu.matmul %37, %39, %cst_47 {dimension_numbers = #tpu.dot_dimension_numbers<[1], [0], [0], [1], [0, 0, 1, 1], [], []>} : vector<64x8xbf16>, vector<8x8xbf16>, vector<64x8xf32> -> vector<64x8xf32>
    %41 = arith.addf %35, %40 : vector<64x8xf32>
    %c2_48 = arith.constant 2 : index
    %c0_49 = arith.constant 0 : index
    %c0_50 = arith.constant 0 : index
    %42 = vector.load %arg8[%c2_48, %c0_49, %c0_50] : memref<10x10x8xbf16, #tpu.memory_space<vmem>>, vector<8x8x8xbf16>
    %43 = vector.shape_cast %42 : vector<8x8x8xbf16> to vector<64x8xbf16>
    %c2_51 = arith.constant 2 : index
    %c0_52 = arith.constant 0 : index
    %c0_53 = arith.constant 0 : index
    %c0_54 = arith.constant 0 : index
    %44 = vector.load %arg5[%c2_51, %c0_52, %c0_53, %c0_54] : memref<3x3x8x8xbf16, #tpu.memory_space<vmem>>, vector<1x1x8x8xbf16>
    %45 = vector.shape_cast %44 : vector<1x1x8x8xbf16> to vector<8x8xbf16>
    %cst_55 = arith.constant dense<0.000000e+00> : vector<64x8xf32>
    %46 = tpu.matmul %43, %45, %cst_55 {dimension_numbers = #tpu.dot_dimension_numbers<[1], [0], [0], [1], [0, 0, 1, 1], [], []>} : vector<64x8xbf16>, vector<8x8xbf16>, vector<64x8xf32> -> vector<64x8xf32>
    %47 = arith.addf %41, %46 : vector<64x8xf32>
    %c2_56 = arith.constant 2 : index
    %c1_57 = arith.constant 1 : index
    %c0_58 = arith.constant 0 : index
    %48 = vector.load %arg8[%c2_56, %c1_57, %c0_58] : memref<10x10x8xbf16, #tpu.memory_space<vmem>>, vector<8x8x8xbf16>
    %49 = vector.shape_cast %48 : vector<8x8x8xbf16> to vector<64x8xbf16>
    %c2_59 = arith.constant 2 : index
    %c1_60 = arith.constant 1 : index
    %c0_61 = arith.constant 0 : index
    %c0_62 = arith.constant 0 : index
    %50 = vector.load %arg5[%c2_59, %c1_60, %c0_61, %c0_62] : memref<3x3x8x8xbf16, #tpu.memory_space<vmem>>, vector<1x1x8x8xbf16>
    %51 = vector.shape_cast %50 : vector<1x1x8x8xbf16> to vector<8x8xbf16>
    %cst_63 = arith.constant dense<0.000000e+00> : vector<64x8xf32>
    %52 = tpu.matmul %49, %51, %cst_63 {dimension_numbers = #tpu.dot_dimension_numbers<[1], [0], [0], [1], [0, 0, 1, 1], [], []>} : vector<64x8xbf16>, vector<8x8xbf16>, vector<64x8xf32> -> vector<64x8xf32>
    %53 = arith.addf %47, %52 : vector<64x8xf32>
    %c2_64 = arith.constant 2 : index
    %c2_65 = arith.constant 2 : index
    %c0_66 = arith.constant 0 : index
    %54 = vector.load %arg8[%c2_64, %c2_65, %c0_66] : memref<10x10x8xbf16, #tpu.memory_space<vmem>>, vector<8x8x8xbf16>
    %55 = vector.shape_cast %54 : vector<8x8x8xbf16> to vector<64x8xbf16>
    %c2_67 = arith.constant 2 : index
    %c2_68 = arith.constant 2 : index
    %c0_69 = arith.constant 0 : index
    %c0_70 = arith.constant 0 : index
    %56 = vector.load %arg5[%c2_67, %c2_68, %c0_69, %c0_70] : memref<3x3x8x8xbf16, #tpu.memory_space<vmem>>, vector<1x1x8x8xbf16>
    %57 = vector.shape_cast %56 : vector<1x1x8x8xbf16> to vector<8x8xbf16>
    %cst_71 = arith.constant dense<0.000000e+00> : vector<64x8xf32>
    %58 = tpu.matmul %55, %57, %cst_71 {dimension_numbers = #tpu.dot_dimension_numbers<[1], [0], [0], [1], [0, 0, 1, 1], [], []>} : vector<64x8xbf16>, vector<8x8xbf16>, vector<64x8xf32> -> vector<64x8xf32>
    %59 = arith.addf %53, %58 : vector<64x8xf32>
    %60 = arith.truncf %59 : vector<64x8xf32> to vector<64x8xbf16>
    %c0_72 = arith.constant 0 : index
    %c0_73 = arith.constant 0 : index
    %c0_74 = arith.constant 0 : index
    %61 = vector.load %arg7[%c0_72, %c0_73, %c0_74] : memref<1x64x8xbf16, #tpu.memory_space<vmem>>, vector<1x64x8xbf16>
    %62 = vector.shape_cast %61 : vector<1x64x8xbf16> to vector<64x8xbf16>
    %63 = vector.shape_cast %60 : vector<64x8xbf16> to vector<1x64x8xbf16>
    tpu.vector_store %arg7[%c0_72, %c0_73, %c0_74], %63 {strides = array<i32>} : memref<1x64x8xbf16, #tpu.memory_space<vmem>>, vector<1x64x8xbf16>,
    return
  }
  func.func @transform_0(%arg0: i32, %arg1: i32) -> (i32, i32, i32, i32) {
    %c0_i32 = arith.constant 0 : i32
    %c0_i32_0 = arith.constant 0 : i32
    %c0_i32_1 = arith.constant 0 : i32
    %c0_i32_2 = arith.constant 0 : i32
    return %arg0, %c0_i32, %c0_i32_0, %c0_i32_1 : i32, i32, i32, i32
  }
  func.func @transform_1(%arg0: i32, %arg1: i32) -> (i32, i32) {
    %c0_i32 = arith.constant 0 : i32
    %c0_i32_0 = arith.constant 0 : i32
    %c0_i32_1 = arith.constant 0 : i32
    return %c0_i32, %c0_i32_0 : i32, i32
  }
  func.func @transform_2(%arg0: i32, %arg1: i32) -> (i32, i32) {
    %c0_i32 = arith.constant 0 : i32
    %c0_i32_0 = arith.constant 0 : i32
    %c0_i32_1 = arith.constant 0 : i32
    return %c0_i32, %c0_i32_0 : i32, i32
  }
  func.func @transform_3(%arg0: i32, %arg1: i32) -> (i32, i32, i32, i32) {
    %c0_i32 = arith.constant 0 : i32
    %c0_i32_0 = arith.constant 0 : i32
    %c0_i32_1 = arith.constant 0 : i32
    %c0_i32_2 = arith.constant 0 : i32
    return %c0_i32, %c0_i32_0, %c0_i32_1, %arg1 : i32, i32, i32, i32
  }
  func.func @transform_4(%arg0: i32, %arg1: i32) -> (i32, i32, i32) {
    %c0_i32 = arith.constant 0 : i32
    %c0_i32_0 = arith.constant 0 : i32
    return %arg0, %c0_i32, %arg1 : i32, i32, i32
  }
  func.func @transform_5(%arg0: i32, %arg1: i32) -> (i32, i32, i32) {
    %c0_i32 = arith.constant 0 : i32
    %c0_i32_0 = arith.constant 0 : i32
    return %arg0, %c0_i32, %arg1 : i32, i32, i32
  }
}

module attributes {stable_mosaic.version = 11 : i64} {
  func.func @kernel(%arg0: i32, %arg1: i32, %arg2: memref<1x8x8x8xbf16, #tpu.memory_space<vmem>>, %arg3: memref<1x8xf32, #tpu.memory_space<vmem>>, %arg4: memref<1x8xf32, #tpu.memory_space<vmem>>, %arg5: memref<3x3x8x8xbf16, #tpu.memory_space<vmem>>, %arg6: memref<1x64x8xbf16, #tpu.memory_space<vmem>>, %arg7: memref<10x10x8xbf16, #tpu.memory_space<vmem>>) attributes {dimension_semantics = [#tpu.dimension_semantics<parallel>, #tpu.dimension_semantics<arbitrary>], iteration_bounds = array<i64: 2, 1>, scalar_prefetch = 0 : i64, scratch_operands = 1 : i64, tpu.core_type = #tpu.core_type<tc>, window_params = [{transform_indices = @transform_0, window_bounds = array<i64: 1, 8, 8, 8>}, {pipeline_mode = #tpu.pipeline_mode<synchronous>, transform_indices = @transform_1, window_bounds = array<i64: 1, 8>}, {pipeline_mode = #tpu.pipeline_mode<synchronous>, transform_indices = @transform_2, window_bounds = array<i64: 1, 8>}, {transform_indices = @transform_3, window_bounds = array<i64: 3, 3, 8, 8>}, {transform_indices = @transform_4, window_bounds = array<i64: 1, 64, 8>}]} {
    %c0_i32 = arith.constant 0 : i32
    %0 = arith.cmpi eq, %arg1, %c0_i32 : i32
    %1 = arith.extui %0 : i1 to i32
    %c0_i32_0 = arith.constant 0 : i32
    %2 = arith.cmpi ne, %1, %c0_i32_0 : i32
    scf.if %2 {
      %cst_73 = arith.constant 0.000000e+00 : bf16
      %62 = vector.broadcast %cst_73 : bf16 to vector<1x10x8xbf16>
      %cst_74 = arith.constant 0.000000e+00 : bf16
      %63 = vector.broadcast %cst_74 : bf16 to vector<10x1x8xbf16>
      %c0_75 = arith.constant 0 : index
      %c0_76 = arith.constant 0 : index
      %c0_77 = arith.constant 0 : index
      %64 = vector.load %arg7[%c0_75, %c0_76, %c0_77] : memref<10x10x8xbf16, #tpu.memory_space<vmem>>, vector<1x10x8xbf16>
      tpu.vector_store %arg7[%c0_75, %c0_76, %c0_77], %62 {strides = array<i32>} : memref<10x10x8xbf16, #tpu.memory_space<vmem>>, vector<1x10x8xbf16>,
      %c9 = arith.constant 9 : index
      %c0_78 = arith.constant 0 : index
      %c0_79 = arith.constant 0 : index
      %65 = vector.load %arg7[%c9, %c0_78, %c0_79] : memref<10x10x8xbf16, #tpu.memory_space<vmem>>, vector<1x10x8xbf16>
      tpu.vector_store %arg7[%c9, %c0_78, %c0_79], %62 {strides = array<i32>} : memref<10x10x8xbf16, #tpu.memory_space<vmem>>, vector<1x10x8xbf16>,
      %c0_80 = arith.constant 0 : index
      %c0_81 = arith.constant 0 : index
      %c0_82 = arith.constant 0 : index
      %66 = vector.load %arg7[%c0_80, %c0_81, %c0_82] : memref<10x10x8xbf16, #tpu.memory_space<vmem>>, vector<10x1x8xbf16>
      tpu.vector_store %arg7[%c0_80, %c0_81, %c0_82], %63 {strides = array<i32>} : memref<10x10x8xbf16, #tpu.memory_space<vmem>>, vector<10x1x8xbf16>,
      %c0_83 = arith.constant 0 : index
      %c9_84 = arith.constant 9 : index
      %c0_85 = arith.constant 0 : index
      %67 = vector.load %arg7[%c0_83, %c9_84, %c0_85] : memref<10x10x8xbf16, #tpu.memory_space<vmem>>, vector<10x1x8xbf16>
      tpu.vector_store %arg7[%c0_83, %c9_84, %c0_85], %63 {strides = array<i32>} : memref<10x10x8xbf16, #tpu.memory_space<vmem>>, vector<10x1x8xbf16>,
      %c0_86 = arith.constant 0 : index
      %c0_87 = arith.constant 0 : index
      %68 = vector.load %arg3[%c0_86, %c0_87] : memref<1x8xf32, #tpu.memory_space<vmem>>, vector<1x8xf32>
      %69 = vector.shape_cast %68 : vector<1x8xf32> to vector<1x1x8xf32>
      %c0_88 = arith.constant 0 : index
      %c0_89 = arith.constant 0 : index
      %70 = vector.load %arg4[%c0_88, %c0_89] : memref<1x8xf32, #tpu.memory_space<vmem>>, vector<1x8xf32>
      %71 = vector.shape_cast %70 : vector<1x8xf32> to vector<1x1x8xf32>
      %c0_90 = arith.constant 0 : index
      %c0_91 = arith.constant 0 : index
      %c0_92 = arith.constant 0 : index
      %c0_93 = arith.constant 0 : index
      %72 = vector.load %arg2[%c0_90, %c0_91, %c0_92, %c0_93] : memref<1x8x8x8xbf16, #tpu.memory_space<vmem>>, vector<1x8x8x8xbf16>
      %73 = vector.shape_cast %72 : vector<1x8x8x8xbf16> to vector<8x8x8xbf16>
      %74 = arith.extf %73 : vector<8x8x8xbf16> to vector<8x8x8xf32>
      %75 = vector.broadcast %69 : vector<1x1x8xf32> to vector<8x8x8xf32>
      %76 = arith.mulf %74, %75 : vector<8x8x8xf32>
      %77 = vector.broadcast %71 : vector<1x1x8xf32> to vector<8x8x8xf32>
      %78 = arith.addf %76, %77 : vector<8x8x8xf32>
      %cst_94 = arith.constant 0.000000e+00 : f32
      %79 = vector.broadcast %cst_94 : f32 to vector<8x8x8xf32>
      %80 = arith.maximumf %78, %79 : vector<8x8x8xf32>
      %81 = arith.truncf %80 : vector<8x8x8xf32> to vector<8x8x8xbf16>
      %c1_95 = arith.constant 1 : index
      %c1_96 = arith.constant 1 : index
      %c0_97 = arith.constant 0 : index
      %82 = vector.load %arg7[%c1_95, %c1_96, %c0_97] : memref<10x10x8xbf16, #tpu.memory_space<vmem>>, vector<8x8x8xbf16>
      tpu.vector_store %arg7[%c1_95, %c1_96, %c0_97], %81 {strides = array<i32>} : memref<10x10x8xbf16, #tpu.memory_space<vmem>>, vector<8x8x8xbf16>,
    } else {
    }
    %cst = arith.constant 0.000000e+00 : f32
    %3 = vector.broadcast %cst : f32 to vector<64x8xf32>
    %c0 = arith.constant 0 : index
    %c0_1 = arith.constant 0 : index
    %c0_2 = arith.constant 0 : index
    %4 = vector.load %arg7[%c0, %c0_1, %c0_2] : memref<10x10x8xbf16, #tpu.memory_space<vmem>>, vector<8x8x8xbf16>
    %5 = vector.shape_cast %4 : vector<8x8x8xbf16> to vector<64x8xbf16>
    %c0_3 = arith.constant 0 : index
    %c0_4 = arith.constant 0 : index
    %c0_5 = arith.constant 0 : index
    %c0_6 = arith.constant 0 : index
    %6 = vector.load %arg5[%c0_3, %c0_4, %c0_5, %c0_6] : memref<3x3x8x8xbf16, #tpu.memory_space<vmem>>, vector<1x1x8x8xbf16>
    %7 = vector.shape_cast %6 : vector<1x1x8x8xbf16> to vector<8x8xbf16>
    %cst_7 = arith.constant dense<0.000000e+00> : vector<64x8xf32>
    %8 = tpu.matmul %5, %7, %cst_7 {dimension_numbers = #tpu.dot_dimension_numbers<[1], [0], [0], [1], [0, 0, 1, 1], [], []>} : vector<64x8xbf16>, vector<8x8xbf16>, vector<64x8xf32> -> vector<64x8xf32>
    %9 = arith.addf %3, %8 : vector<64x8xf32>
    %c0_8 = arith.constant 0 : index
    %c1 = arith.constant 1 : index
    %c0_9 = arith.constant 0 : index
    %10 = vector.load %arg7[%c0_8, %c1, %c0_9] : memref<10x10x8xbf16, #tpu.memory_space<vmem>>, vector<8x8x8xbf16>
    %11 = vector.shape_cast %10 : vector<8x8x8xbf16> to vector<64x8xbf16>
    %c0_10 = arith.constant 0 : index
    %c1_11 = arith.constant 1 : index
    %c0_12 = arith.constant 0 : index
    %c0_13 = arith.constant 0 : index
    %12 = vector.load %arg5[%c0_10, %c1_11, %c0_12, %c0_13] : memref<3x3x8x8xbf16, #tpu.memory_space<vmem>>, vector<1x1x8x8xbf16>
    %13 = vector.shape_cast %12 : vector<1x1x8x8xbf16> to vector<8x8xbf16>
    %cst_14 = arith.constant dense<0.000000e+00> : vector<64x8xf32>
    %14 = tpu.matmul %11, %13, %cst_14 {dimension_numbers = #tpu.dot_dimension_numbers<[1], [0], [0], [1], [0, 0, 1, 1], [], []>} : vector<64x8xbf16>, vector<8x8xbf16>, vector<64x8xf32> -> vector<64x8xf32>
    %15 = arith.addf %9, %14 : vector<64x8xf32>
    %c0_15 = arith.constant 0 : index
    %c2 = arith.constant 2 : index
    %c0_16 = arith.constant 0 : index
    %16 = vector.load %arg7[%c0_15, %c2, %c0_16] : memref<10x10x8xbf16, #tpu.memory_space<vmem>>, vector<8x8x8xbf16>
    %17 = vector.shape_cast %16 : vector<8x8x8xbf16> to vector<64x8xbf16>
    %c0_17 = arith.constant 0 : index
    %c2_18 = arith.constant 2 : index
    %c0_19 = arith.constant 0 : index
    %c0_20 = arith.constant 0 : index
    %18 = vector.load %arg5[%c0_17, %c2_18, %c0_19, %c0_20] : memref<3x3x8x8xbf16, #tpu.memory_space<vmem>>, vector<1x1x8x8xbf16>
    %19 = vector.shape_cast %18 : vector<1x1x8x8xbf16> to vector<8x8xbf16>
    %cst_21 = arith.constant dense<0.000000e+00> : vector<64x8xf32>
    %20 = tpu.matmul %17, %19, %cst_21 {dimension_numbers = #tpu.dot_dimension_numbers<[1], [0], [0], [1], [0, 0, 1, 1], [], []>} : vector<64x8xbf16>, vector<8x8xbf16>, vector<64x8xf32> -> vector<64x8xf32>
    %21 = arith.addf %15, %20 : vector<64x8xf32>
    %c1_22 = arith.constant 1 : index
    %c0_23 = arith.constant 0 : index
    %c0_24 = arith.constant 0 : index
    %22 = vector.load %arg7[%c1_22, %c0_23, %c0_24] : memref<10x10x8xbf16, #tpu.memory_space<vmem>>, vector<8x8x8xbf16>
    %23 = vector.shape_cast %22 : vector<8x8x8xbf16> to vector<64x8xbf16>
    %c1_25 = arith.constant 1 : index
    %c0_26 = arith.constant 0 : index
    %c0_27 = arith.constant 0 : index
    %c0_28 = arith.constant 0 : index
    %24 = vector.load %arg5[%c1_25, %c0_26, %c0_27, %c0_28] : memref<3x3x8x8xbf16, #tpu.memory_space<vmem>>, vector<1x1x8x8xbf16>
    %25 = vector.shape_cast %24 : vector<1x1x8x8xbf16> to vector<8x8xbf16>
    %cst_29 = arith.constant dense<0.000000e+00> : vector<64x8xf32>
    %26 = tpu.matmul %23, %25, %cst_29 {dimension_numbers = #tpu.dot_dimension_numbers<[1], [0], [0], [1], [0, 0, 1, 1], [], []>} : vector<64x8xbf16>, vector<8x8xbf16>, vector<64x8xf32> -> vector<64x8xf32>
    %27 = arith.addf %21, %26 : vector<64x8xf32>
    %c1_30 = arith.constant 1 : index
    %c1_31 = arith.constant 1 : index
    %c0_32 = arith.constant 0 : index
    %28 = vector.load %arg7[%c1_30, %c1_31, %c0_32] : memref<10x10x8xbf16, #tpu.memory_space<vmem>>, vector<8x8x8xbf16>
    %29 = vector.shape_cast %28 : vector<8x8x8xbf16> to vector<64x8xbf16>
    %c1_33 = arith.constant 1 : index
    %c1_34 = arith.constant 1 : index
    %c0_35 = arith.constant 0 : index
    %c0_36 = arith.constant 0 : index
    %30 = vector.load %arg5[%c1_33, %c1_34, %c0_35, %c0_36] : memref<3x3x8x8xbf16, #tpu.memory_space<vmem>>, vector<1x1x8x8xbf16>
    %31 = vector.shape_cast %30 : vector<1x1x8x8xbf16> to vector<8x8xbf16>
    %cst_37 = arith.constant dense<0.000000e+00> : vector<64x8xf32>
    %32 = tpu.matmul %29, %31, %cst_37 {dimension_numbers = #tpu.dot_dimension_numbers<[1], [0], [0], [1], [0, 0, 1, 1], [], []>} : vector<64x8xbf16>, vector<8x8xbf16>, vector<64x8xf32> -> vector<64x8xf32>
    %33 = arith.addf %27, %32 : vector<64x8xf32>
    %c1_38 = arith.constant 1 : index
    %c2_39 = arith.constant 2 : index
    %c0_40 = arith.constant 0 : index
    %34 = vector.load %arg7[%c1_38, %c2_39, %c0_40] : memref<10x10x8xbf16, #tpu.memory_space<vmem>>, vector<8x8x8xbf16>
    %35 = vector.shape_cast %34 : vector<8x8x8xbf16> to vector<64x8xbf16>
    %c1_41 = arith.constant 1 : index
    %c2_42 = arith.constant 2 : index
    %c0_43 = arith.constant 0 : index
    %c0_44 = arith.constant 0 : index
    %36 = vector.load %arg5[%c1_41, %c2_42, %c0_43, %c0_44] : memref<3x3x8x8xbf16, #tpu.memory_space<vmem>>, vector<1x1x8x8xbf16>
    %37 = vector.shape_cast %36 : vector<1x1x8x8xbf16> to vector<8x8xbf16>
    %cst_45 = arith.constant dense<0.000000e+00> : vector<64x8xf32>
    %38 = tpu.matmul %35, %37, %cst_45 {dimension_numbers = #tpu.dot_dimension_numbers<[1], [0], [0], [1], [0, 0, 1, 1], [], []>} : vector<64x8xbf16>, vector<8x8xbf16>, vector<64x8xf32> -> vector<64x8xf32>
    %39 = arith.addf %33, %38 : vector<64x8xf32>
    %c2_46 = arith.constant 2 : index
    %c0_47 = arith.constant 0 : index
    %c0_48 = arith.constant 0 : index
    %40 = vector.load %arg7[%c2_46, %c0_47, %c0_48] : memref<10x10x8xbf16, #tpu.memory_space<vmem>>, vector<8x8x8xbf16>
    %41 = vector.shape_cast %40 : vector<8x8x8xbf16> to vector<64x8xbf16>
    %c2_49 = arith.constant 2 : index
    %c0_50 = arith.constant 0 : index
    %c0_51 = arith.constant 0 : index
    %c0_52 = arith.constant 0 : index
    %42 = vector.load %arg5[%c2_49, %c0_50, %c0_51, %c0_52] : memref<3x3x8x8xbf16, #tpu.memory_space<vmem>>, vector<1x1x8x8xbf16>
    %43 = vector.shape_cast %42 : vector<1x1x8x8xbf16> to vector<8x8xbf16>
    %cst_53 = arith.constant dense<0.000000e+00> : vector<64x8xf32>
    %44 = tpu.matmul %41, %43, %cst_53 {dimension_numbers = #tpu.dot_dimension_numbers<[1], [0], [0], [1], [0, 0, 1, 1], [], []>} : vector<64x8xbf16>, vector<8x8xbf16>, vector<64x8xf32> -> vector<64x8xf32>
    %45 = arith.addf %39, %44 : vector<64x8xf32>
    %c2_54 = arith.constant 2 : index
    %c1_55 = arith.constant 1 : index
    %c0_56 = arith.constant 0 : index
    %46 = vector.load %arg7[%c2_54, %c1_55, %c0_56] : memref<10x10x8xbf16, #tpu.memory_space<vmem>>, vector<8x8x8xbf16>
    %47 = vector.shape_cast %46 : vector<8x8x8xbf16> to vector<64x8xbf16>
    %c2_57 = arith.constant 2 : index
    %c1_58 = arith.constant 1 : index
    %c0_59 = arith.constant 0 : index
    %c0_60 = arith.constant 0 : index
    %48 = vector.load %arg5[%c2_57, %c1_58, %c0_59, %c0_60] : memref<3x3x8x8xbf16, #tpu.memory_space<vmem>>, vector<1x1x8x8xbf16>
    %49 = vector.shape_cast %48 : vector<1x1x8x8xbf16> to vector<8x8xbf16>
    %cst_61 = arith.constant dense<0.000000e+00> : vector<64x8xf32>
    %50 = tpu.matmul %47, %49, %cst_61 {dimension_numbers = #tpu.dot_dimension_numbers<[1], [0], [0], [1], [0, 0, 1, 1], [], []>} : vector<64x8xbf16>, vector<8x8xbf16>, vector<64x8xf32> -> vector<64x8xf32>
    %51 = arith.addf %45, %50 : vector<64x8xf32>
    %c2_62 = arith.constant 2 : index
    %c2_63 = arith.constant 2 : index
    %c0_64 = arith.constant 0 : index
    %52 = vector.load %arg7[%c2_62, %c2_63, %c0_64] : memref<10x10x8xbf16, #tpu.memory_space<vmem>>, vector<8x8x8xbf16>
    %53 = vector.shape_cast %52 : vector<8x8x8xbf16> to vector<64x8xbf16>
    %c2_65 = arith.constant 2 : index
    %c2_66 = arith.constant 2 : index
    %c0_67 = arith.constant 0 : index
    %c0_68 = arith.constant 0 : index
    %54 = vector.load %arg5[%c2_65, %c2_66, %c0_67, %c0_68] : memref<3x3x8x8xbf16, #tpu.memory_space<vmem>>, vector<1x1x8x8xbf16>
    %55 = vector.shape_cast %54 : vector<1x1x8x8xbf16> to vector<8x8xbf16>
    %cst_69 = arith.constant dense<0.000000e+00> : vector<64x8xf32>
    %56 = tpu.matmul %53, %55, %cst_69 {dimension_numbers = #tpu.dot_dimension_numbers<[1], [0], [0], [1], [0, 0, 1, 1], [], []>} : vector<64x8xbf16>, vector<8x8xbf16>, vector<64x8xf32> -> vector<64x8xf32>
    %57 = arith.addf %51, %56 : vector<64x8xf32>
    %58 = arith.truncf %57 : vector<64x8xf32> to vector<64x8xbf16>
    %c0_70 = arith.constant 0 : index
    %c0_71 = arith.constant 0 : index
    %c0_72 = arith.constant 0 : index
    %59 = vector.load %arg6[%c0_70, %c0_71, %c0_72] : memref<1x64x8xbf16, #tpu.memory_space<vmem>>, vector<1x64x8xbf16>
    %60 = vector.shape_cast %59 : vector<1x64x8xbf16> to vector<64x8xbf16>
    %61 = vector.shape_cast %58 : vector<64x8xbf16> to vector<1x64x8xbf16>
    tpu.vector_store %arg6[%c0_70, %c0_71, %c0_72], %61 {strides = array<i32>} : memref<1x64x8xbf16, #tpu.memory_space<vmem>>, vector<1x64x8xbf16>,
    return
  }
  func.func @transform_0(%arg0: i32, %arg1: i32) -> (i32, i32, i32, i32) {
    %c0_i32 = arith.constant 0 : i32
    %c0_i32_0 = arith.constant 0 : i32
    %c0_i32_1 = arith.constant 0 : i32
    %c0_i32_2 = arith.constant 0 : i32
    return %arg0, %c0_i32, %c0_i32_0, %c0_i32_1 : i32, i32, i32, i32
  }
  func.func @transform_1(%arg0: i32, %arg1: i32) -> (i32, i32) {
    %c0_i32 = arith.constant 0 : i32
    %c0_i32_0 = arith.constant 0 : i32
    %c0_i32_1 = arith.constant 0 : i32
    return %c0_i32, %c0_i32_0 : i32, i32
  }
  func.func @transform_2(%arg0: i32, %arg1: i32) -> (i32, i32) {
    %c0_i32 = arith.constant 0 : i32
    %c0_i32_0 = arith.constant 0 : i32
    %c0_i32_1 = arith.constant 0 : i32
    return %c0_i32, %c0_i32_0 : i32, i32
  }
  func.func @transform_3(%arg0: i32, %arg1: i32) -> (i32, i32, i32, i32) {
    %c0_i32 = arith.constant 0 : i32
    %c0_i32_0 = arith.constant 0 : i32
    %c0_i32_1 = arith.constant 0 : i32
    %c0_i32_2 = arith.constant 0 : i32
    return %c0_i32, %c0_i32_0, %c0_i32_1, %arg1 : i32, i32, i32, i32
  }
  func.func @transform_4(%arg0: i32, %arg1: i32) -> (i32, i32, i32) {
    %c0_i32 = arith.constant 0 : i32
    %c0_i32_0 = arith.constant 0 : i32
    return %arg0, %c0_i32, %arg1 : i32, i32, i32
  }
}

</mosaic_0001>

<llo_original>
// kernel: network_block_forward.5
$region0: #{network_block_forward.5}
  #allocation0 [shape = 'u32[]', space=smem, size = 0x4, offset = 0x4, fixed_abs, tag = 'smem constant byte address 0x4 - core index']
  #allocation1 [shape = 'u32[144,128]{1,0:T(1,128)}', space=vmem, size = 0x12000, scoped, tag = 'internal scratch']
  #allocation2 [shape = 'bf16[10,10,8]{2,1,0:T(8,128)(2,1)}', space=vmem, size = 0xa000, scoped, tag = 'scratch operand']
  %s0 = inlined_call_operand.vmem [shape: bf16[2,8,8,8], index: 0, kind: input, shape index: {}]
  %s1 = inlined_call_operand.vmem [shape: f32[1,8], index: 1, kind: input, shape index: {}]
  %s2 = inlined_call_operand.vmem [shape: f32[1,8], index: 2, kind: input, shape index: {}]
  %s3 = inlined_call_operand.vmem [shape: bf16[3,3,8,8], index: 3, kind: input, shape index: {}]
  %s4 = inlined_call_operand.vmem [shape: bf16[2,64,8], index: 4, kind: input, shape index: {}]
  %s5 = inlined_call_operand.vmem [shape: bf16[2,64,8], index: 5, kind: output, shape index: {}]
  %s6 = sld [smem:[#allocation0]]
  $region57: #{network_block_forward.5} parent=0
    _
  %s8 = ssub.s32 1, %s6
  %s9 = scalar_select 0, %s8, %s6
  loop: start=0, step=1, limit=4
  $region2: #{network_block_forward.5} parent=0 // loop_pre_header
    _
  $region3: #{network_block_forward.5} parent=0 // loop_header
    %s11 = sphi 0, %s15
    %p12 = scmp.ge.s32.totalorder %s11, 4
    %s18 = sphi 0, %s30
    %s19 = sphi 0, %s26
    %s20 = sphi 0, %s18
    %s21 = sphi 0, %s19
    %s22 = sphi 0, %s20
    %s23 = sphi 0, %s21
    %s33 = sphi 0, %s35
    %s36 = sphi 0, %s33
    %s37 = sphi 0, %s36
    %s53 = sphi 0, %s37
    %s57 = sphi 0, %s57
    %s59 = sphi 0, %s57
    %s60 = sphi 0, %s59
    %s74 = sphi 0, %s60
    %s78 = sphi 0, %s78
    %s80 = sphi 0, %s78
    %s81 = sphi 0, %s80
    %s95 = sphi 0, %s81
    %s101 = sphi 0, %s103
    %s104 = sphi 0, %s101
    %s105 = sphi 0, %s104
    %s121 = sphi 0, %s105
    %s129 = sphi 0, %s131
    %s132 = sphi 0, %s129
    %s133 = sphi 0, %s132
    %s149 = sphi 0, %s133
    %s157 = sphi 0, %s159
    %s160 = sphi 0, %s157
    %s161 = sphi 0, %s160
    %s177 = sphi 0, %s161
  $region4: #{network_block_forward.5} parent=0 // loop_header_branch
    %14 = sbr.rel (%p12) target = $region8
  $region5: #{network_block_forward.5} parent=0 // loop_body
    %s16 = ssub.s32 %s11, 1
    %s17 = ssub.s32 %s11, 2
    %s24 = sadd.s32 1, %s19
    %p25 = scmp.ge.s32.totalorder %s24, 1
    %s26 = scalar_select %p25, 0, %s24
    %s27 = sadd.s32 1, %s18
    %s28 = scalar_select %p25, %s27, %s18
    %p29 = scmp.ge.s32.totalorder %s28, 2
    %s30 = scalar_select %p29, 0, %s28
    %s31 = ssub.s32 %s18, %s30
    %p32 = scmp.eq.s32.totalorder %s31, 0
    %s34 = sadd.s32 %s33, 1
    %s35 = scalar_select %p32, %s33, %s34
    %p38 = pneg %p32
    %p39 = scmp.eq.s32.totalorder %s11, 1
    %p40 = por %p38, %p39
    %p41 = scmp.ne.s32.totalorder %s33, %s36
    %p42 = scmp.eq.s32.totalorder %s11, 0
    %p43 = por %p41, %p42
    %p44 = scmp.ne.s32.totalorder %s33, %s36
    %p45 = scmp.eq.s32.totalorder %s16, 1
    %p46 = por %p44, %p45
    %p47 = scmp.ne.s32.totalorder %s36, %s37
    %p48 = scmp.eq.s32.totalorder %s16, 0
    %p49 = por %p47, %p48
    %p50 = scmp.ne.s32.totalorder %s36, %s37
    %p51 = scmp.eq.s32.totalorder %s17, 1
    %p52 = por %p50, %p51
    %p54 = scmp.ne.s32.totalorder %s37, %s53
    %p55 = scmp.eq.s32.totalorder %s17, 0
    %p56 = por %p54, %p55
    %s58 = sadd.s32 %s57, 1
    %p61 = scmp.eq.s32.totalorder %s11, 1
    %p62 = scmp.ne.s32.totalorder %s57, %s59
    %p63 = scmp.eq.s32.totalorder %s11, 0
    %p64 = por %p62, %p63
    %p65 = scmp.ne.s32.totalorder %s57, %s59
    %p66 = scmp.eq.s32.totalorder %s16, 1
    %p67 = por %p65, %p66
    %p68 = scmp.ne.s32.totalorder %s59, %s60
    %p69 = scmp.eq.s32.totalorder %s16, 0
    %p70 = por %p68, %p69
    %p71 = scmp.ne.s32.totalorder %s59, %s60
    %p72 = scmp.eq.s32.totalorder %s17, 1
    %p73 = por %p71, %p72
    %p75 = scmp.ne.s32.totalorder %s60, %s74
    %p76 = scmp.eq.s32.totalorder %s17, 0
    %p77 = por %p75, %p76
    %s79 = sadd.s32 %s78, 1
    %p82 = scmp.eq.s32.totalorder %s11, 1
    %p83 = scmp.ne.s32.totalorder %s78, %s80
    %p84 = scmp.eq.s32.totalorder %s11, 0
    %p85 = por %p83, %p84
    %p86 = scmp.ne.s32.totalorder %s78, %s80
    %p87 = scmp.eq.s32.totalorder %s16, 1
    %p88 = por %p86, %p87
    %p89 = scmp.ne.s32.totalorder %s80, %s81
    %p90 = scmp.eq.s32.totalorder %s16, 0
    %p91 = por %p89, %p90
    %p92 = scmp.ne.s32.totalorder %s80, %s81
    %p93 = scmp.eq.s32.totalorder %s17, 1
    %p94 = por %p92, %p93
    %p96 = scmp.ne.s32.totalorder %s81, %s95
    %p97 = scmp.eq.s32.totalorder %s17, 0
    %p98 = por %p96, %p97
    %s99 = ssub.s32 %s19, %s26
    %p100 = scmp.eq.s32.totalorder %s99, 0
    %s102 = sadd.s32 %s101, 1
    %s103 = scalar_select %p100, %s101, %s102
    %p106 = pneg %p100
    %p107 = scmp.eq.s32.totalorder %s11, 1
    %p108 = por %p106, %p107
    %p109 = scmp.ne.s32.totalorder %s101, %s104
    %p110 = scmp.eq.s32.totalorder %s11, 0
    %p111 = por %p109, %p110
    %p112 = scmp.ne.s32.totalorder %s101, %s104
    %p113 = scmp.eq.s32.totalorder %s16, 1
    %p114 = por %p112, %p113
    %p115 = scmp.ne.s32.totalorder %s104, %s105
    %p116 = scmp.eq.s32.totalorder %s16, 0
    %p117 = por %p115, %p116
    %p118 = scmp.ne.s32.totalorder %s104, %s105
    %p119 = scmp.eq.s32.totalorder %s17, 1
    %p120 = por %p118, %p119
    %p122 = scmp.ne.s32.totalorder %s105, %s121
    %p123 = scmp.eq.s32.totalorder %s17, 0
    %p124 = por %p122, %p123
    %s125 = ssub.s32 %s18, %s30
    %s126 = ssub.s32 %s19, %s26
    %s127 = sor.u32 %s125, %s126
    %p128 = scmp.eq.s32.totalorder %s127, 0
    %s130 = sadd.s32 %s129, 1
    %s131 = scalar_select %p128, %s129, %s130
    %p134 = pneg %p128
    %p135 = scmp.eq.s32.totalorder %s11, 1
    %p136 = por %p134, %p135
    %p137 = scmp.ne.s32.totalorder %s129, %s132
    %p138 = scmp.eq.s32.totalorder %s11, 0
    %p139 = por %p137, %p138
    %p140 = scmp.ne.s32.totalorder %s129, %s132
    %p141 = scmp.eq.s32.totalorder %s16, 1
    %p142 = por %p140, %p141
    %p143 = scmp.ne.s32.totalorder %s132, %s133
    %p144 = scmp.eq.s32.totalorder %s16, 0
    %p145 = por %p143, %p144
    %p146 = scmp.ne.s32.totalorder %s132, %s133
    %p147 = scmp.eq.s32.totalorder %s17, 1
    %p148 = por %p146, %p147
    %p150 = scmp.ne.s32.totalorder %s133, %s149
    %p151 = scmp.eq.s32.totalorder %s17, 0
    %p152 = por %p150, %p151
    %s153 = ssub.s32 %s18, %s30
    %s154 = ssub.s32 %s19, %s26
    %s155 = sor.u32 %s153, %s154
    %p156 = scmp.eq.s32.totalorder %s155, 0
    %s158 = sadd.s32 %s157, 1
    %s159 = scalar_select %p156, %s157, %s158
    %p162 = pneg %p156
    %p163 = scmp.eq.s32.totalorder %s11, 1
    %p164 = por %p162, %p163
    %p165 = scmp.ne.s32.totalorder %s157, %s160
    %p166 = scmp.eq.s32.totalorder %s11, 0
    %p167 = por %p165, %p166
    %p168 = scmp.ne.s32.totalorder %s157, %s160
    %p169 = scmp.eq.s32.totalorder %s16, 1
    %p170 = por %p168, %p169
    %p171 = scmp.ne.s32.totalorder %s160, %s161
    %p172 = scmp.eq.s32.totalorder %s16, 0
    %p173 = por %p171, %p172
    %p174 = scmp.ne.s32.totalorder %s160, %s161
    %p175 = scmp.eq.s32.totalorder %s17, 1
    %p176 = por %p174, %p175
    %p178 = scmp.ne.s32.totalorder %s161, %s177
    %p179 = scmp.eq.s32.totalorder %s17, 0
    %p180 = por %p178, %p179
    %p181 = scmp.le.s32.totalorder 1, %s11
    %p182 = scmp.lt.s32.totalorder %s11, 3
    %p183 = pnand %p181, %p182
    %p184 = pneg %p183
    // Predicated region
    $region9: #{network_block_forward.5} parent=5 // pred_check
      _
    $region10: #{network_block_forward.5} parent=5 // pred_check_branch
      %186 = sbr.rel (%p183) target = $region12
    $region11: #{network_block_forward.5} parent=5 // pred_region
      %s187 = ssub.s32 %s11, 1
      // Predicated region
      $region13: #{network_block_forward.5} parent=11 // pred_check
        %p188 = pneg %p70
      $region14: #{network_block_forward.5} parent=11 // pred_check_branch
        %190 = sbr.rel (%p188) target = $region16
      $region15: #{network_block_forward.5} parent=11 // pred_region
        _
      $region16: #{network_block_forward.5} parent=11 // pred_fallthru
        _
      // Predicated region
      $region17: #{network_block_forward.5} parent=11 // pred_check
        %p191 = pneg %p91
      $region18: #{network_block_forward.5} parent=11 // pred_check_branch
        %193 = sbr.rel (%p191) target = $region20
      $region19: #{network_block_forward.5} parent=11 // pred_region
        _
      $region20: #{network_block_forward.5} parent=11 // pred_fallthru
        _
      // Predicated region
      $region21: #{network_block_forward.5} parent=11 // pred_check
        %p194 = pneg %p117
      $region22: #{network_block_forward.5} parent=11 // pred_check_branch
        %196 = sbr.rel (%p194) target = $region24
      $region23: #{network_block_forward.5} parent=11 // pred_region
        %p197 = scmp.lt.s32.totalorder %s21, 0
        %s198 = scalar_select %p197, %s21, 0
        %s199 = smul.addr %s198, 4
        %s200 = scalar_lea.vmem %s3, %s199
      $region24: #{network_block_forward.5} parent=11 // pred_fallthru
        _
    $region12: #{network_block_forward.5} parent=5 // pred_fallthru
      _
    %p201 = scmp.lt.s32.totalorder %s11, 2
    // Predicated region
    $region25: #{network_block_forward.5} parent=5 // pred_check
      %p202 = pneg %p201
    $region26: #{network_block_forward.5} parent=5 // pred_check_branch
      %204 = sbr.rel (%p202) target = $region28
    $region27: #{network_block_forward.5} parent=5 // pred_region
      // Predicated region
      $region29: #{network_block_forward.5} parent=27 // pred_check
        %p205 = pneg %p43
      $region30: #{network_block_forward.5} parent=27 // pred_check_branch
        %207 = sbr.rel (%p205) target = $region32
      $region31: #{network_block_forward.5} parent=27 // pred_region
        %p208 = scmp.lt.s32.totalorder %s18, 1
        %s209 = scalar_select %p208, %s18, 1
        %s210 = smul.addr %s209, 8
        %s211 = smul.addr %s210, 4
        %s212 = scalar_lea.vmem %s0, %s211
      $region32: #{network_block_forward.5} parent=27 // pred_fallthru
        _
      // Predicated region
      $region33: #{network_block_forward.5} parent=27 // pred_check
        %p213 = pneg %p139
      $region34: #{network_block_forward.5} parent=27 // pred_check_branch
        %215 = sbr.rel (%p213) target = $region36
      $region35: #{network_block_forward.5} parent=27 // pred_region
        %p216 = scmp.lt.s32.totalorder %s18, 1
        %s217 = scalar_select %p216, %s18, 1
        %p218 = scmp.lt.s32.totalorder %s19, 0
        %s219 = scalar_select %p218, %s19, 0
        %s220 = smul.addr %s217, 8
        %s221 = sadd.s32 %s219, %s220
        %s222 = smul.addr %s221, 4
        %s223 = scalar_lea.vmem %s4, %s222
      $region36: #{network_block_forward.5} parent=27 // pred_fallthru
        _
    $region28: #{network_block_forward.5} parent=5 // pred_fallthru
      _
    %p224 = scmp.le.s32.totalorder 1, %s11
    %p225 = scmp.lt.s32.totalorder %s11, 3
    %p226 = pnand %p224, %p225
    %p227 = pneg %p226
    // Predicated region
    $region37: #{network_block_forward.5} parent=5 // pred_check
      _
    $region38: #{network_block_forward.5} parent=5 // pred_check_branch
      %229 = sbr.rel (%p226) target = $region40
    $region39: #{network_block_forward.5} parent=5 // pred_region
      %s230 = ssub.s32 %s11, 1
      %p231 = scmp.lt.s32.totalorder %s20, 1
      %s232 = scalar_select %p231, %s20, 1
      %s233 = smul.addr %s232, 8
      %s234 = smul.addr %s233, 4
      %s235 = scalar_lea.vmem %s0, %s234
      %p236 = pneg %p49
      %p237 = pneg %p46
      %p238 = pneg %p70
      %p239 = pneg %p67
      %p240 = pneg %p91
      %p241 = pneg %p88
      %p242 = scmp.lt.s32.totalorder %s21, 0
      %s243 = scalar_select %p242, %s21, 0
      %s244 = smul.addr %s243, 4
      %s245 = scalar_lea.vmem %s3, %s244
      %p246 = pneg %p117
      %p247 = pneg %p114
      %p248 = scmp.lt.s32.totalorder %s20, 1
      %s249 = scalar_select %p248, %s20, 1
      %p250 = scmp.lt.s32.totalorder %s21, 0
      %s251 = scalar_select %p250, %s21, 0
      %s252 = smul.addr %s249, 8
      %s253 = sadd.s32 %s251, %s252
      %s254 = smul.addr %s253, 4
      %s255 = scalar_lea.vmem %s4, %s254
      %p256 = pneg %p145
      %p257 = pneg %p142
      %p258 = pneg %p173
      %p259 = pneg %p170
      %p260 = scmp.lt.s32.totalorder %s20, 1
      %s261 = scalar_select %p260, %s20, 1
      %p262 = scmp.lt.s32.totalorder %s21, 0
      %s263 = scalar_select %p262, %s21, 0
      %s264 = smul.addr %s261, 8
      %s265 = sadd.s32 %s263, %s264
      %s266 = smul.addr %s265, 4
      %s267 = scalar_lea.vmem %s5, %s266
      %p268 = scmp.lt.s32.totalorder %s20, 1
      %s269 = scalar_select %p268, %s20, 1
      %s270 = smul.addr %s269, 8
      %s271 = smul.addr %s270, 4
      %s272 = scalar_lea.vmem %s0, %s271
      %p273 = scmp.lt.s32.totalorder %s21, 0
      %s274 = scalar_select %p273, %s21, 0
      %s275 = smul.addr %s274, 4
      %s276 = scalar_lea.vmem %s3, %s275
      %p277 = scmp.lt.s32.totalorder %s20, 1
      %s278 = scalar_select %p277, %s20, 1
      %p279 = scmp.lt.s32.totalorder %s21, 0
      %s280 = scalar_select %p279, %s21, 0
      %s281 = smul.addr %s278, 8
      %s282 = sadd.s32 %s280, %s281
      %s283 = smul.addr %s282, 4
      %s284 = scalar_lea.vmem %s4, %s283
      %p285 = scmp.lt.s32.totalorder %s20, 1
      %s286 = scalar_select %p285, %s20, 1
      %p287 = scmp.lt.s32.totalorder %s21, 0
      %s288 = scalar_select %p287, %s21, 0
      %s289 = smul.addr %s286, 8
      %s290 = sadd.s32 %s288, %s289
      %s291 = smul.addr %s290, 4
      %s292 = scalar_lea.vmem %s5, %s291
      %p294 = scmp.eq.s32.totalorder %s21, 0
      // Predicated region
      $region41: #{network_block_forward.5} parent=39 // pred_check
        %p295 = pneg %p294
      $region42: #{network_block_forward.5} parent=39 // pred_check_branch
        %297 = sbr.rel (%p295) target = $region44
      $region43: #{network_block_forward.5} parent=39 // pred_region
        %vm298 = vcmask 60416
        %299 = vst.msk [vmem:[#allocation2] sm:$0xf] %vm298, 0
        %vm300 = vcmask 57344
        %301 = vst.msk [vmem:[#allocation2 + $0x4] sm:$0x1] %vm300, 0
        %s302 = scalar_lea.vmem [#allocation2], 72
        %303 = vst.msk [vmem:[%s302] sm:$0xf] %vm298, 0
        %304 = vst.msk [vmem:[%s302 + $0x4] sm:$0x1] %vm300, 0
        %vm305 = vcmask 57344
        %vm306 = vsmask.f32 256
        %vm307 = vmand %vm305, %vm306
        %v308 = vld [vmem:[#allocation2] sm:$0x1]
        %v309 = vsel %vm307, 0, %v308
        %310 = vst [vmem:[#allocation2] sm:$0x1] %v309
        %v311 = vld [vmem:[#allocation2 + $0x8] sm:$0x1]
        %v312 = vsel %vm307, 0, %v311
        %313 = vst [vmem:[#allocation2 + $0x8] sm:$0x1] %v312
        %v314 = vld [vmem:[#allocation2 + $0x10] sm:$0x1]
        %v315 = vsel %vm307, 0, %v314
        %316 = vst [vmem:[#allocation2 + $0x10] sm:$0x1] %v315
        %v317 = vld [vmem:[#allocation2 + $0x18] sm:$0x1]
        %v318 = vsel %vm307, 0, %v317
        %319 = vst [vmem:[#allocation2 + $0x18] sm:$0x1] %v318
        %v320 = vld [vmem:[#allocation2 + $0x20] sm:$0x1]
        %v321 = vsel %vm307, 0, %v320
        %322 = vst [vmem:[#allocation2 + $0x20] sm:$0x1] %v321
        %v323 = vld [vmem:[#allocation2 + $0x28] sm:$0x1]
        %v324 = vsel %vm307, 0, %v323
        %325 = vst [vmem:[#allocation2 + $0x28] sm:$0x1] %v324
        %v326 = vld [vmem:[#allocation2 + $0x30] sm:$0x1]
        %v327 = vsel %vm307, 0, %v326
        %328 = vst [vmem:[#allocation2 + $0x30] sm:$0x1] %v327
        %v329 = vld [vmem:[#allocation2 + $0x38] sm:$0x1]
        %v330 = vsel %vm307, 0, %v329
        %331 = vst [vmem:[#allocation2 + $0x38] sm:$0x1] %v330
        %v332 = vld [vmem:[#allocation2 + $0x40] sm:$0x1]
        %v333 = vsel %vm307, 0, %v332
        %334 = vst [vmem:[#allocation2 + $0x40] sm:$0x1] %v333
        %v335 = vld [vmem:[#allocation2 + $0x48] sm:$0x1]
        %v336 = vsel %vm307, 0, %v335
        %337 = vst [vmem:[#allocation2 + $0x48] sm:$0x1] %v336
        %vm338 = vsmask.f32 7938
        %vm339 = vmand %vm305, %vm338
        %v340 = vld [vmem:[#allocation2 + $0x4] sm:$0x1]
        %v341 = vsel %vm339, 0, %v340
        %342 = vst [vmem:[#allocation2 + $0x4] sm:$0x1] %v341
        %v343 = vld [vmem:[#allocation2 + $0xc] sm:$0x1]
        %v344 = vsel %vm339, 0, %v343
        %345 = vst [vmem:[#allocation2 + $0xc] sm:$0x1] %v344
        %v346 = vld [vmem:[#allocation2 + $0x14] sm:$0x1]
        %v347 = vsel %vm339, 0, %v346
        %348 = vst [vmem:[#allocation2 + $0x14] sm:$0x1] %v347
        %v349 = vld [vmem:[#allocation2 + $0x1c] sm:$0x1]
        %v350 = vsel %vm339, 0, %v349
        %351 = vst [vmem:[#allocation2 + $0x1c] sm:$0x1] %v350
        %v352 = vld [vmem:[#allocation2 + $0x24] sm:$0x1]
        %v353 = vsel %vm339, 0, %v352
        %354 = vst [vmem:[#allocation2 + $0x24] sm:$0x1] %v353
        %v355 = vld [vmem:[#allocation2 + $0x2c] sm:$0x1]
        %v356 = vsel %vm339, 0, %v355
        %357 = vst [vmem:[#allocation2 + $0x2c] sm:$0x1] %v356
        %v358 = vld [vmem:[#allocation2 + $0x34] sm:$0x1]
        %v359 = vsel %vm339, 0, %v358
        %360 = vst [vmem:[#allocation2 + $0x34] sm:$0x1] %v359
        %v361 = vld [vmem:[#allocation2 + $0x3c] sm:$0x1]
        %v362 = vsel %vm339, 0, %v361
        %363 = vst [vmem:[#allocation2 + $0x3c] sm:$0x1] %v362
        %v364 = vld [vmem:[#allocation2 + $0x44] sm:$0x1]
        %v365 = vsel %vm339, 0, %v364
        %366 = vst [vmem:[#allocation2 + $0x44] sm:$0x1] %v365
        %v367 = vld [vmem:[#allocation2 + $0x4c] sm:$0x1]
        %v368 = vsel %vm339, 0, %v367
        %369 = vst [vmem:[#allocation2 + $0x4c] sm:$0x1] %v368
        %v370 = vld [vmem:[%s1] sm:$0x1]
        %v371 = vld [vmem:[%s2] sm:$0x1]
        %v372 = vld [vmem:[%s272] sm:$0xf]
        %v373 = vld [vmem:[%s272 + $0x4] sm:$0xf]
        %v374 = vld [vmem:[%s272 + $0x8] sm:$0xf]
        %v375 = vld [vmem:[%s272 + $0xc] sm:$0xf]
        %v376 = vld [vmem:[%s272 + $0x10] sm:$0xf]
        %v377 = vld [vmem:[%s272 + $0x14] sm:$0xf]
        %v378 = vld [vmem:[%s272 + $0x18] sm:$0xf]
        %v379 = vld [vmem:[%s272 + $0x1c] sm:$0xf]
        %v380 = vunpack.c.l.bf16 %v372
        %v381 = vunpack.c.l.bf16 %v373
        %v382 = vunpack.c.l.bf16 %v374
        %v383 = vunpack.c.l.bf16 %v375
        %v384 = vunpack.c.l.bf16 %v376
        %v385 = vunpack.c.l.bf16 %v377
        %v386 = vunpack.c.l.bf16 %v378
        %v387 = vunpack.c.l.bf16 %v379
        %v389 = vlaneseq
        %v390 = vshrl.u32 %v389, 7
        %v391 = vsub.s32 0, %v390
        %v392 = vrot.slane %v370, %v391
        %v394 = vmul.f32 %v380, %v392
        %v395 = vmul.f32 %v381, %v392
        %v396 = vmul.f32 %v382, %v392
        %v397 = vmul.f32 %v383, %v392
        %v398 = vmul.f32 %v384, %v392
        %v399 = vmul.f32 %v385, %v392
        %v400 = vmul.f32 %v386, %v392
        %v401 = vmul.f32 %v387, %v392
        %v403 = vlaneseq
        %v404 = vshrl.u32 %v403, 7
        %v405 = vsub.s32 0, %v404
        %v406 = vrot.slane %v371, %v405
        %v408 = vadd.f32 %v394, %v406
        %v409 = vadd.f32 %v395, %v406
        %v410 = vadd.f32 %v396, %v406
        %v411 = vadd.f32 %v397, %v406
        %v412 = vadd.f32 %v398, %v406
        %v413 = vadd.f32 %v399, %v406
        %v414 = vadd.f32 %v400, %v406
        %v415 = vadd.f32 %v401, %v406
        %v416 = vmax.f32 %v408, 0.0
        %v417 = vmax.f32 %v409, 0.0
        %v418 = vmax.f32 %v410, 0.0
        %v419 = vmax.f32 %v411, 0.0
        %v420 = vmax.f32 %v412, 0.0
        %v421 = vmax.f32 %v413, 0.0
        %v422 = vmax.f32 %v414, 0.0
        %v423 = vmax.f32 %v415, 0.0
        %v424 = vpack.c.bf16 %v416, %v416
        %v425 = vpack.c.bf16 %v417, %v417
        %v426 = vpack.c.bf16 %v418, %v418
        %v427 = vpack.c.bf16 %v419, %v419
        %v428 = vpack.c.bf16 %v420, %v420
        %v429 = vpack.c.bf16 %v421, %v421
        %v430 = vpack.c.bf16 %v422, %v422
        %v431 = vpack.c.bf16 %v423, %v423
        %v440 = vunpack.c.l.b16 %v424
        %v441 = vunpack.c.l.b16 %v425
        %v442 = vunpack.c.l.b16 %v426
        %v443 = vunpack.c.l.b16 %v427
        %v444 = vunpack.c.l.b16 %v428
        %v445 = vunpack.c.l.b16 %v429
        %v446 = vunpack.c.l.b16 %v430
        %v447 = vunpack.c.l.b16 %v431
        %v448 = vpack.c.b16 %v440, %v440
        %v449 = vpack.c.b16 %v441, %v441
        %v450 = vpack.c.b16 %v442, %v442
        %v451 = vpack.c.b16 %v443, %v443
        %v452 = vpack.c.b16 %v444, %v444
        %v453 = vpack.c.b16 %v445, %v445
        %v454 = vpack.c.b16 %v446, %v446
        %v455 = vpack.c.b16 %v447, %v447
        %v457 = vshrl.u32 %v448, 16
        %v459 = vrot.slane %v457, 7
        %v460 = vshll.u32 %v448, 16
        %v462 = vor.u32 %v459, %v460
        %v463 = vrot.slane %v459, 4
        %v465 = vshrl.u32 %v449, 16
        %v467 = vrot.slane %v465, 7
        %v468 = vshll.u32 %v449, 16
        %v470 = vor.u32 %v467, %v468
        %v471 = vrot.slane %v467, 4
        %v473 = vshrl.u32 %v450, 16
        %v475 = vrot.slane %v473, 7
        %v476 = vshll.u32 %v450, 16
        %v478 = vor.u32 %v475, %v476
        %v479 = vrot.slane %v475, 4
        %v481 = vshrl.u32 %v451, 16
        %v483 = vrot.slane %v481, 7
        %v484 = vshll.u32 %v451, 16
        %v486 = vor.u32 %v483, %v484
        %v487 = vrot.slane %v483, 4
        %v489 = vshrl.u32 %v452, 16
        %v491 = vrot.slane %v489, 7
        %v492 = vshll.u32 %v452, 16
        %v494 = vor.u32 %v491, %v492
        %v495 = vrot.slane %v491, 4
        %v497 = vshrl.u32 %v453, 16
        %v499 = vrot.slane %v497, 7
        %v500 = vshll.u32 %v453, 16
        %v502 = vor.u32 %v499, %v500
        %v503 = vrot.slane %v499, 4
        %v505 = vshrl.u32 %v454, 16
        %v507 = vrot.slane %v505, 7
        %v508 = vshll.u32 %v454, 16
        %v510 = vor.u32 %v507, %v508
        %v511 = vrot.slane %v507, 4
        %v513 = vshrl.u32 %v455, 16
        %v515 = vrot.slane %v513, 7
        %v516 = vshll.u32 %v455, 16
        %v518 = vor.u32 %v515, %v516
        %v519 = vrot.slane %v515, 4
        %s536 = scalar_lea.vmem [#allocation2], 8
        %vm537 = vcmask 60416
        %vm538 = vmand %vm537, %vm338
        %v539 = vld [vmem:[%s536] sm:$0xf]
        %v540 = vsel %vm538, %v462, %v539
        %541 = vst [vmem:[%s536] sm:$0xf] %v540
        %v542 = vld [vmem:[%s536 + $0x4] sm:$0x1]
        %v543 = vsel %vm307, %v463, %v542
        %544 = vst [vmem:[%s536 + $0x4] sm:$0x1] %v543
        %v545 = vld [vmem:[%s536 + $0x8] sm:$0xf]
        %v546 = vsel %vm538, %v470, %v545
        %547 = vst [vmem:[%s536 + $0x8] sm:$0xf] %v546
        %v548 = vld [vmem:[%s536 + $0xc] sm:$0x1]
        %v549 = vsel %vm307, %v471, %v548
        %550 = vst [vmem:[%s536 + $0xc] sm:$0x1] %v549
        %v551 = vld [vmem:[%s536 + $0x10] sm:$0xf]
        %v552 = vsel %vm538, %v478, %v551
        %553 = vst [vmem:[%s536 + $0x10] sm:$0xf] %v552
        %v554 = vld [vmem:[%s536 + $0x14] sm:$0x1]
        %v555 = vsel %vm307, %v479, %v554
        %556 = vst [vmem:[%s536 + $0x14] sm:$0x1] %v555
        %v557 = vld [vmem:[%s536 + $0x18] sm:$0xf]
        %v558 = vsel %vm538, %v486, %v557
        %559 = vst [vmem:[%s536 + $0x18] sm:$0xf] %v558
        %v560 = vld [vmem:[%s536 + $0x1c] sm:$0x1]
        %v561 = vsel %vm307, %v487, %v560
        %562 = vst [vmem:[%s536 + $0x1c] sm:$0x1] %v561
        %v563 = vld [vmem:[%s536 + $0x20] sm:$0xf]
        %v564 = vsel %vm538, %v494, %v563
        %565 = vst [vmem:[%s536 + $0x20] sm:$0xf] %v564
        %v566 = vld [vmem:[%s536 + $0x24] sm:$0x1]
        %v567 = vsel %vm307, %v495, %v566
        %568 = vst [vmem:[%s536 + $0x24] sm:$0x1] %v567
        %v569 = vld [vmem:[%s536 + $0x28] sm:$0xf]
        %v570 = vsel %vm538, %v502, %v569
        %571 = vst [vmem:[%s536 + $0x28] sm:$0xf] %v570
        %v572 = vld [vmem:[%s536 + $0x2c] sm:$0x1]
        %v573 = vsel %vm307, %v503, %v572
        %574 = vst [vmem:[%s536 + $0x2c] sm:$0x1] %v573
        %v575 = vld [vmem:[%s536 + $0x30] sm:$0xf]
        %v576 = vsel %vm538, %v510, %v575
        %577 = vst [vmem:[%s536 + $0x30] sm:$0xf] %v576
        %v578 = vld [vmem:[%s536 + $0x34] sm:$0x1]
        %v579 = vsel %vm307, %v511, %v578
        %580 = vst [vmem:[%s536 + $0x34] sm:$0x1] %v579
        %v581 = vld [vmem:[%s536 + $0x38] sm:$0xf]
        %v582 = vsel %vm538, %v518, %v581
        %583 = vst [vmem:[%s536 + $0x38] sm:$0xf] %v582
        %v584 = vld [vmem:[%s536 + $0x3c] sm:$0x1]
        %v585 = vsel %vm307, %v519, %v584
        %586 = vst [vmem:[%s536 + $0x3c] sm:$0x1] %v585
      $region44: #{network_block_forward.5} parent=39 // pred_fallthru
        _
      %v587 = vld [vmem:[%s284] sm:$0xf]
      %v588 = vld [vmem:[%s284 + $0x4] sm:$0xf]
      %v589 = vld [vmem:[%s284 + $0x8] sm:$0xf]
      %v590 = vld [vmem:[%s284 + $0xc] sm:$0xf]
      %v591 = vld [vmem:[%s284 + $0x10] sm:$0xf]
      %v592 = vld [vmem:[%s284 + $0x14] sm:$0xf]
      %v593 = vld [vmem:[%s284 + $0x18] sm:$0xf]
      %v594 = vld [vmem:[%s284 + $0x1c] sm:$0xf]
      %v595 = vunpack.c.l.bf16 %v587
      %v596 = vunpack.c.l.bf16 %v588
      %v597 = vunpack.c.l.bf16 %v589
      %v598 = vunpack.c.l.bf16 %v590
      %v599 = vunpack.c.l.bf16 %v591
      %v600 = vunpack.c.l.bf16 %v592
      %v601 = vunpack.c.l.bf16 %v593
      %v602 = vunpack.c.l.bf16 %v594
      %v603 = vld [vmem:[#allocation2] sm:$0xf]
      %v604 = vld [vmem:[#allocation2 + $0x8] sm:$0xf]
      %v605 = vld [vmem:[#allocation2 + $0x10] sm:$0xf]
      %v606 = vld [vmem:[#allocation2 + $0x18] sm:$0xf]
      %v607 = vld [vmem:[#allocation2 + $0x20] sm:$0xf]
      %v608 = vld [vmem:[#allocation2 + $0x28] sm:$0xf]
      %v609 = vld [vmem:[#allocation2 + $0x30] sm:$0xf]
      %v610 = vld [vmem:[#allocation2 + $0x38] sm:$0xf]
      %v611 = vld [vmem:[%s276] sm:$0xf]
      %v620 = vunpack.c.l.b16 %v603
      %v621 = vunpack.c.l.b16 %v604
      %v622 = vunpack.c.l.b16 %v605
      %v623 = vunpack.c.l.b16 %v606
      %v624 = vunpack.c.l.b16 %v607
      %v625 = vunpack.c.l.b16 %v608
      %v626 = vunpack.c.l.b16 %v609
      %v627 = vunpack.c.l.b16 %v610
      %v628 = vpack.c.b16 %v621, %v620
      %v629 = vpack.c.b16 %v623, %v622
      %v630 = vpack.c.b16 %v625, %v624
      %v631 = vpack.c.b16 %v627, %v626
      %vm632 = vcmask 64512
      %v634 = vsel %vm632, %v628, 0
      %v637 = vsel %vm632, %v629, 0
      %v640 = vsel %vm632, %v630, 0
      %v643 = vsel %vm632, %v631, 0
      %vm645 = vcmask 1043456
      %v647 = vsel %vm645, %v611, 0
      %649 = vmatprep.subr.bf16.mxu0 0
      %650 = vmatpush1.bf16.msra.mxu0 0
      %651 = vmatprep.subr.bf16.mxu0 0
      %652 = vmatpush1.bf16.msra.mxu0 0
      %653 = vmatprep.subr.bf16.mxu0 0
      %654 = vmatpush1.bf16.msra.mxu0 0
      %655 = vmatprep.subr.bf16.mxu0 0
      %656 = vmatpush1.bf16.msra.mxu0 0
      %657 = vmatprep.subr.bf16.mxu0 0
      %658 = vmatpush1.bf16.msra.mxu0 0
      %659 = vmatprep.subr.bf16.mxu0 0
      %660 = vmatpush1.bf16.msra.mxu0 0
      %661 = vmatprep.subr.bf16.mxu0 0
      %662 = vmatpush1.bf16.msra.mxu0 0
      %663 = vmatprep.subr.bf16.mxu0 0
      %664 = vmatpush1.bf16.msra.mxu0 %v647
      %665 = vmatprep.subr.bf16.mxu0 0
      %666 = vmatpush2.bf16.msra.mxu0 0
      %667 = vmatprep.subr.bf16.mxu0 0
      %668 = vmatpush2.bf16.msra.mxu0 0
      %669 = vmatprep.subr.bf16.mxu0 0
      %670 = vmatpush2.bf16.msra.mxu0 0
      %671 = vmatprep.subr.bf16.mxu0 0
      %672 = vmatpush2.bf16.msra.mxu0 0
      %673 = vmatprep.subr.bf16.mxu0 0
      %674 = vmatpush2.bf16.msra.mxu0 0
      %675 = vmatprep.subr.bf16.mxu0 0
      %676 = vmatpush2.bf16.msra.mxu0 0
      %677 = vmatprep.subr.bf16.mxu0 0
      %678 = vmatpush2.bf16.msra.mxu0 0
      %679 = vmatprep.subr.bf16.mxu0 0
      %680 = vmatpush2.bf16.msra.mxu0 0
      %681 = vmatprep.mubr.bf16.mxu0 0
      %682 = vmatmul.mubr.bf16.gmra.mxu0 %v634
      %v683 = vpop.f32.mrf.mxu0
      %v684 = vadd.f32 0.0, %v683
      %v685 = vpop.f32.mrf.mxu0
      %v686 = vpop.f32.mrf.mxu0
      %v687 = vadd.f32 0.0, %v686
      %v688 = vpop.f32.mrf.mxu0
      %689 = vmatprep.mubr.bf16.mxu0 0
      %690 = vmatmul.mubr.bf16.gmra.mxu0 %v637
      %v691 = vpop.f32.mrf.mxu0
      %v692 = vadd.f32 0.0, %v691
      %v693 = vpop.f32.mrf.mxu0
      %v694 = vpop.f32.mrf.mxu0
      %v695 = vadd.f32 0.0, %v694
      %v696 = vpop.f32.mrf.mxu0
      %697 = vmatprep.mubr.bf16.mxu0 0
      %698 = vmatmul.mubr.bf16.gmra.mxu0 %v640
      %v699 = vpop.f32.mrf.mxu0
      %v700 = vadd.f32 0.0, %v699
      %v701 = vpop.f32.mrf.mxu0
      %v702 = vpop.f32.mrf.mxu0
      %v703 = vadd.f32 0.0, %v702
      %v704 = vpop.f32.mrf.mxu0
      %705 = vmatprep.mubr.bf16.mxu0 0
      %706 = vmatmul.mubr.bf16.gmra.mxu0 %v643
      %v707 = vpop.f32.mrf.mxu0
      %v708 = vadd.f32 0.0, %v707
      %v709 = vpop.f32.mrf.mxu0
      %v710 = vpop.f32.mrf.mxu0
      %v711 = vadd.f32 0.0, %v710
      %v712 = vpop.f32.mrf.mxu0
      %713 = vdwg.mxu0
      %v714 = vadd.f32 %v595, %v684
      %v715 = vadd.f32 %v596, %v687
      %v716 = vadd.f32 %v597, %v692
      %v717 = vadd.f32 %v598, %v695
      %v718 = vadd.f32 %v599, %v700
      %v719 = vadd.f32 %v600, %v703
      %v720 = vadd.f32 %v601, %v708
      %v721 = vadd.f32 %v602, %v711
      %v722 = vld [vmem:[#allocation2] sm:$0xf]
      %v723 = vld [vmem:[#allocation2 + $0x4] sm:$0x1]
      %v724 = vld [vmem:[#allocation2 + $0x8] sm:$0xf]
      %v725 = vld [vmem:[#allocation2 + $0xc] sm:$0x1]
      %v726 = vld [vmem:[#allocation2 + $0x10] sm:$0xf]
      %v727 = vld [vmem:[#allocation2 + $0x14] sm:$0x1]
      %v728 = vld [vmem:[#allocation2 + $0x18] sm:$0xf]
      %v729 = vld [vmem:[#allocation2 + $0x1c] sm:$0x1]
      %v730 = vld [vmem:[#allocation2 + $0x20] sm:$0xf]
      %v731 = vld [vmem:[#allocation2 + $0x24] sm:$0x1]
      %v732 = vld [vmem:[#allocation2 + $0x28] sm:$0xf]
      %v733 = vld [vmem:[#allocation2 + $0x2c] sm:$0x1]
      %v734 = vld [vmem:[#allocation2 + $0x30] sm:$0xf]
      %v735 = vld [vmem:[#allocation2 + $0x34] sm:$0x1]
      %v736 = vld [vmem:[#allocation2 + $0x38] sm:$0xf]
      %v737 = vld [vmem:[#allocation2 + $0x3c] sm:$0x1]
      %vm738 = vsmask.f32 3328
      %vm739 = vsmask.f32 7440
      %vm740 = vmor %vm738, %vm739
      %v742 = vshrl.u32 %v722, 16
      %v744 = vrot.slane %v742, 4
      %v745 = vshll.u32 %v722, 16
      %v747 = vrot.slane %v745, 5
      %v748 = vor.u32 %v744, %v747
      %v749 = vrot.slane %v748, 4
      %v751 = vshll.u32 %v723, 16
      %v753 = vrot.slane %v751, 5
      %v754 = vsel %vm740, %v749, %v753
      %v756 = vshrl.u32 %v724, 16
      %v758 = vrot.slane %v756, 4
      %v759 = vshll.u32 %v724, 16
      %v761 = vrot.slane %v759, 5
      %v762 = vor.u32 %v758, %v761
      %v763 = vrot.slane %v762, 4
      %v765 = vshll.u32 %v725, 16
      %v767 = vrot.slane %v765, 5
      %v768 = vsel %vm740, %v763, %v767
      %v770 = vshrl.u32 %v726, 16
      %v772 = vrot.slane %v770, 4
      %v773 = vshll.u32 %v726, 16
      %v775 = vrot.slane %v773, 5
      %v776 = vor.u32 %v772, %v775
      %v777 = vrot.slane %v776, 4
      %v779 = vshll.u32 %v727, 16
      %v781 = vrot.slane %v779, 5
      %v782 = vsel %vm740, %v777, %v781
      %v784 = vshrl.u32 %v728, 16
      %v786 = vrot.slane %v784, 4
      %v787 = vshll.u32 %v728, 16
      %v789 = vrot.slane %v787, 5
      %v790 = vor.u32 %v786, %v789
      %v791 = vrot.slane %v790, 4
      %v793 = vshll.u32 %v729, 16
      %v795 = vrot.slane %v793, 5
      %v796 = vsel %vm740, %v791, %v795
      %v798 = vshrl.u32 %v730, 16
      %v800 = vrot.slane %v798, 4
      %v801 = vshll.u32 %v730, 16
      %v803 = vrot.slane %v801, 5
      %v804 = vor.u32 %v800, %v803
      %v805 = vrot.slane %v804, 4
      %v807 = vshll.u32 %v731, 16
      %v809 = vrot.slane %v807, 5
      %v810 = vsel %vm740, %v805, %v809
      %v812 = vshrl.u32 %v732, 16
      %v814 = vrot.slane %v812, 4
      %v815 = vshll.u32 %v732, 16
      %v817 = vrot.slane %v815, 5
      %v818 = vor.u32 %v814, %v817
      %v819 = vrot.slane %v818, 4
      %v821 = vshll.u32 %v733, 16
      %v823 = vrot.slane %v821, 5
      %v824 = vsel %vm740, %v819, %v823
      %v826 = vshrl.u32 %v734, 16
      %v828 = vrot.slane %v826, 4
      %v829 = vshll.u32 %v734, 16
      %v831 = vrot.slane %v829, 5
      %v832 = vor.u32 %v828, %v831
      %v833 = vrot.slane %v832, 4
      %v835 = vshll.u32 %v735, 16
      %v837 = vrot.slane %v835, 5
      %v838 = vsel %vm740, %v833, %v837
      %v840 = vshrl.u32 %v736, 16
      %v842 = vrot.slane %v840, 4
      %v843 = vshll.u32 %v736, 16
      %v845 = vrot.slane %v843, 5
      %v846 = vor.u32 %v842, %v845
      %v847 = vrot.slane %v846, 4
      %v849 = vshll.u32 %v737, 16
      %v851 = vrot.slane %v849, 5
      %v852 = vsel %vm740, %v847, %v851
      %s853 = scalar_lea.vmem %s276, 4
      %v854 = vld [vmem:[%s853] sm:$0xf]
      %v855 = vunpack.c.l.b16 %v754
      %v856 = vunpack.c.l.b16 %v768
      %v857 = vunpack.c.l.b16 %v782
      %v858 = vunpack.c.l.b16 %v796
      %v859 = vunpack.c.l.b16 %v810
      %v860 = vunpack.c.l.b16 %v824
      %v861 = vunpack.c.l.b16 %v838
      %v862 = vunpack.c.l.b16 %v852
      %v863 = vpack.c.b16 %v856, %v855
      %v864 = vpack.c.b16 %v858, %v857
      %v865 = vpack.c.b16 %v860, %v859
      %v866 = vpack.c.b16 %v862, %v861
      %v868 = vsel %vm632, %v863, 0
      %v871 = vsel %vm632, %v864, 0
      %v874 = vsel %vm632, %v865, 0
      %v877 = vsel %vm632, %v866, 0
      %v880 = vsel %vm645, %v854, 0
      %882 = vmatprep.subr.bf16.mxu0 0
      %883 = vmatpush1.bf16.msra.mxu0 0
      %884 = vmatprep.subr.bf16.mxu0 0
      %885 = vmatpush1.bf16.msra.mxu0 0
      %886 = vmatprep.subr.bf16.mxu0 0
      %887 = vmatpush1.bf16.msra.mxu0 0
      %888 = vmatprep.subr.bf16.mxu0 0
      %889 = vmatpush1.bf16.msra.mxu0 0
      %890 = vmatprep.subr.bf16.mxu0 0
      %891 = vmatpush1.bf16.msra.mxu0 0
      %892 = vmatprep.subr.bf16.mxu0 0
      %893 = vmatpush1.bf16.msra.mxu0 0
      %894 = vmatprep.subr.bf16.mxu0 0
      %895 = vmatpush1.bf16.msra.mxu0 0
      %896 = vmatprep.subr.bf16.mxu0 0
      %897 = vmatpush1.bf16.msra.mxu0 %v880
      %898 = vmatprep.subr.bf16.mxu0 0
      %899 = vmatpush2.bf16.msra.mxu0 0
      %900 = vmatprep.subr.bf16.mxu0 0
      %901 = vmatpush2.bf16.msra.mxu0 0
      %902 = vmatprep.subr.bf16.mxu0 0
      %903 = vmatpush2.bf16.msra.mxu0 0
      %904 = vmatprep.subr.bf16.mxu0 0
      %905 = vmatpush2.bf16.msra.mxu0 0
      %906 = vmatprep.subr.bf16.mxu0 0
      %907 = vmatpush2.bf16.msra.mxu0 0
      %908 = vmatprep.subr.bf16.mxu0 0
      %909 = vmatpush2.bf16.msra.mxu0 0
      %910 = vmatprep.subr.bf16.mxu0 0
      %911 = vmatpush2.bf16.msra.mxu0 0
      %912 = vmatprep.subr.bf16.mxu0 0
      %913 = vmatpush2.bf16.msra.mxu0 0
      %914 = vmatprep.mubr.bf16.mxu0 0
      %915 = vmatmul.mubr.bf16.gmra.mxu0 %v868
      %v916 = vpop.f32.mrf.mxu0
      %v917 = vadd.f32 0.0, %v916
      %v918 = vpop.f32.mrf.mxu0
      %v919 = vpop.f32.mrf.mxu0
      %v920 = vadd.f32 0.0, %v919
      %v921 = vpop.f32.mrf.mxu0
      %922 = vmatprep.mubr.bf16.mxu0 0
      %923 = vmatmul.mubr.bf16.gmra.mxu0 %v871
      %v924 = vpop.f32.mrf.mxu0
      %v925 = vadd.f32 0.0, %v924
      %v926 = vpop.f32.mrf.mxu0
      %v927 = vpop.f32.mrf.mxu0
      %v928 = vadd.f32 0.0, %v927
      %v929 = vpop.f32.mrf.mxu0
      %930 = vmatprep.mubr.bf16.mxu0 0
      %931 = vmatmul.mubr.bf16.gmra.mxu0 %v874
      %v932 = vpop.f32.mrf.mxu0
      %v933 = vadd.f32 0.0, %v932
      %v934 = vpop.f32.mrf.mxu0
      %v935 = vpop.f32.mrf.mxu0
      %v936 = vadd.f32 0.0, %v935
      %v937 = vpop.f32.mrf.mxu0
      %938 = vmatprep.mubr.bf16.mxu0 0
      %939 = vmatmul.mubr.bf16.gmra.mxu0 %v877
      %v940 = vpop.f32.mrf.mxu0
      %v941 = vadd.f32 0.0, %v940
      %v942 = vpop.f32.mrf.mxu0
      %v943 = vpop.f32.mrf.mxu0
      %v944 = vadd.f32 0.0, %v943
      %v945 = vpop.f32.mrf.mxu0
      %946 = vdwg.mxu0
      %v947 = vadd.f32 %v714, %v917
      %v948 = vadd.f32 %v715, %v920
      %v949 = vadd.f32 %v716, %v925
      %v950 = vadd.f32 %v717, %v928
      %v951 = vadd.f32 %v718, %v933
      %v952 = vadd.f32 %v719, %v936
      %v953 = vadd.f32 %v720, %v941
      %v954 = vadd.f32 %v721, %v944
      %v955 = vld [vmem:[#allocation2] sm:$0xe]
      %v956 = vld [vmem:[#allocation2 + $0x8] sm:$0xe]
      %v957 = vld [vmem:[#allocation2 + $0x10] sm:$0xe]
      %v958 = vld [vmem:[#allocation2 + $0x18] sm:$0xe]
      %v959 = vld [vmem:[#allocation2 + $0x20] sm:$0xe]
      %v960 = vld [vmem:[#allocation2 + $0x28] sm:$0xe]
      %v961 = vld [vmem:[#allocation2 + $0x30] sm:$0xe]
      %v962 = vld [vmem:[#allocation2 + $0x38] sm:$0xe]
      %vm979 = vcmask 1042432
      %vm980 = vcmask 1046532
      %vm981 = vmor %vm979, %vm980
      %v982 = vrot.slane %v955, 5
      %v983 = vrot.slane %v982, 4
      %v984 = vrot.slane %v723, 5
      %v985 = vsel %vm981, %v983, %v984
      %v986 = vrot.slane %v956, 5
      %v987 = vrot.slane %v986, 4
      %v988 = vrot.slane %v725, 5
      %v989 = vsel %vm981, %v987, %v988
      %v990 = vrot.slane %v957, 5
      %v991 = vrot.slane %v990, 4
      %v992 = vrot.slane %v727, 5
      %v993 = vsel %vm981, %v991, %v992
      %v994 = vrot.slane %v958, 5
      %v995 = vrot.slane %v994, 4
      %v996 = vrot.slane %v729, 5
      %v997 = vsel %vm981, %v995, %v996
      %v998 = vrot.slane %v959, 5
      %v999 = vrot.slane %v998, 4
      %v1000 = vrot.slane %v731, 5
      %v1001 = vsel %vm981, %v999, %v1000
      %v1002 = vrot.slane %v960, 5
      %v1003 = vrot.slane %v1002, 4
      %v1004 = vrot.slane %v733, 5
      %v1005 = vsel %vm981, %v1003, %v1004
      %v1006 = vrot.slane %v961, 5
      %v1007 = vrot.slane %v1006, 4
      %v1008 = vrot.slane %v735, 5
      %v1009 = vsel %vm981, %v1007, %v1008
      %v1010 = vrot.slane %v962, 5
      %v1011 = vrot.slane %v1010, 4
      %v1012 = vrot.slane %v737, 5
      %v1013 = vsel %vm981, %v1011, %v1012
      %s1014 = scalar_lea.vmem %s276, 8
      %v1015 = vld [vmem:[%s1014] sm:$0xf]
      %v1016 = vunpack.c.l.b16 %v985
      %v1017 = vunpack.c.l.b16 %v989
      %v1018 = vunpack.c.l.b16 %v993
      %v1019 = vunpack.c.l.b16 %v997
      %v1020 = vunpack.c.l.b16 %v1001
      %v1021 = vunpack.c.l.b16 %v1005
      %v1022 = vunpack.c.l.b16 %v1009
      %v1023 = vunpack.c.l.b16 %v1013
      %v1024 = vpack.c.b16 %v1017, %v1016
      %v1025 = vpack.c.b16 %v1019, %v1018
      %v1026 = vpack.c.b16 %v1021, %v1020
      %v1027 = vpack.c.b16 %v1023, %v1022
      %v1029 = vsel %vm632, %v1024, 0
      %v1032 = vsel %vm632, %v1025, 0
      %v1035 = vsel %vm632, %v1026, 0
      %v1038 = vsel %vm632, %v1027, 0
      %v1041 = vsel %vm645, %v1015, 0
      %1043 = vmatprep.subr.bf16.mxu0 0
      %1044 = vmatpush1.bf16.msra.mxu0 0
      %1045 = vmatprep.subr.bf16.mxu0 0
      %1046 = vmatpush1.bf16.msra.mxu0 0
      %1047 = vmatprep.subr.bf16.mxu0 0
      %1048 = vmatpush1.bf16.msra.mxu0 0
      %1049 = vmatprep.subr.bf16.mxu0 0
      %1050 = vmatpush1.bf16.msra.mxu0 0
      %1051 = vmatprep.subr.bf16.mxu0 0
      %1052 = vmatpush1.bf16.msra.mxu0 0
      %1053 = vmatprep.subr.bf16.mxu0 0
      %1054 = vmatpush1.bf16.msra.mxu0 0
      %1055 = vmatprep.subr.bf16.mxu0 0
      %1056 = vmatpush1.bf16.msra.mxu0 0
      %1057 = vmatprep.subr.bf16.mxu0 0
      %1058 = vmatpush1.bf16.msra.mxu0 %v1041
      %1059 = vmatprep.subr.bf16.mxu0 0
      %1060 = vmatpush2.bf16.msra.mxu0 0
      %1061 = vmatprep.subr.bf16.mxu0 0
      %1062 = vmatpush2.bf16.msra.mxu0 0
      %1063 = vmatprep.subr.bf16.mxu0 0
      %1064 = vmatpush2.bf16.msra.mxu0 0
      %1065 = vmatprep.subr.bf16.mxu0 0
      %1066 = vmatpush2.bf16.msra.mxu0 0
      %1067 = vmatprep.subr.bf16.mxu0 0
      %1068 = vmatpush2.bf16.msra.mxu0 0
      %1069 = vmatprep.subr.bf16.mxu0 0
      %1070 = vmatpush2.bf16.msra.mxu0 0
      %1071 = vmatprep.subr.bf16.mxu0 0
      %1072 = vmatpush2.bf16.msra.mxu0 0
      %1073 = vmatprep.subr.bf16.mxu0 0
      %1074 = vmatpush2.bf16.msra.mxu0 0
      %1075 = vmatprep.mubr.bf16.mxu0 0
      %1076 = vmatmul.mubr.bf16.gmra.mxu0 %v1029
      %v1077 = vpop.f32.mrf.mxu0
      %v1078 = vadd.f32 0.0, %v1077
      %v1079 = vpop.f32.mrf.mxu0
      %v1080 = vpop.f32.mrf.mxu0
      %v1081 = vadd.f32 0.0, %v1080
      %v1082 = vpop.f32.mrf.mxu0
      %1083 = vmatprep.mubr.bf16.mxu0 0
      %1084 = vmatmul.mubr.bf16.gmra.mxu0 %v1032
      %v1085 = vpop.f32.mrf.mxu0
      %v1086 = vadd.f32 0.0, %v1085
      %v1087 = vpop.f32.mrf.mxu0
      %v1088 = vpop.f32.mrf.mxu0
      %v1089 = vadd.f32 0.0, %v1088
      %v1090 = vpop.f32.mrf.mxu0
      %1091 = vmatprep.mubr.bf16.mxu0 0
      %1092 = vmatmul.mubr.bf16.gmra.mxu0 %v1035
      %v1093 = vpop.f32.mrf.mxu0
      %v1094 = vadd.f32 0.0, %v1093
      %v1095 = vpop.f32.mrf.mxu0
      %v1096 = vpop.f32.mrf.mxu0
      %v1097 = vadd.f32 0.0, %v1096
      %v1098 = vpop.f32.mrf.mxu0
      %1099 = vmatprep.mubr.bf16.mxu0 0
      %1100 = vmatmul.mubr.bf16.gmra.mxu0 %v1038
      %v1101 = vpop.f32.mrf.mxu0
      %v1102 = vadd.f32 0.0, %v1101
      %v1103 = vpop.f32.mrf.mxu0
      %v1104 = vpop.f32.mrf.mxu0
      %v1105 = vadd.f32 0.0, %v1104
      %v1106 = vpop.f32.mrf.mxu0
      %1107 = vdwg.mxu0
      %v1108 = vadd.f32 %v947, %v1078
      %v1109 = vadd.f32 %v948, %v1081
      %v1110 = vadd.f32 %v949, %v1086
      %v1111 = vadd.f32 %v950, %v1089
      %v1112 = vadd.f32 %v951, %v1094
      %v1113 = vadd.f32 %v952, %v1097
      %v1114 = vadd.f32 %v953, %v1102
      %v1115 = vadd.f32 %v954, %v1105
      %s1116 = scalar_lea.vmem [#allocation2], 8
      %v1117 = vld [vmem:[%s1116] sm:$0xf]
      %v1118 = vld [vmem:[%s1116 + $0x8] sm:$0xf]
      %v1119 = vld [vmem:[%s1116 + $0x10] sm:$0xf]
      %v1120 = vld [vmem:[%s1116 + $0x18] sm:$0xf]
      %v1121 = vld [vmem:[%s1116 + $0x20] sm:$0xf]
      %v1122 = vld [vmem:[%s1116 + $0x28] sm:$0xf]
      %v1123 = vld [vmem:[%s1116 + $0x30] sm:$0xf]
      %v1124 = vld [vmem:[%s1116 + $0x38] sm:$0xf]
      %s1125 = scalar_lea.vmem %s276, 12
      %v1126 = vld [vmem:[%s1125] sm:$0xf]
      %v1135 = vunpack.c.l.b16 %v1117
      %v1136 = vunpack.c.l.b16 %v1118
      %v1137 = vunpack.c.l.b16 %v1119
      %v1138 = vunpack.c.l.b16 %v1120
      %v1139 = vunpack.c.l.b16 %v1121
      %v1140 = vunpack.c.l.b16 %v1122
      %v1141 = vunpack.c.l.b16 %v1123
      %v1142 = vunpack.c.l.b16 %v1124
      %v1143 = vpack.c.b16 %v1136, %v1135
      %v1144 = vpack.c.b16 %v1138, %v1137
      %v1145 = vpack.c.b16 %v1140, %v1139
      %v1146 = vpack.c.b16 %v1142, %v1141
      %v1148 = vsel %vm632, %v1143, 0
      %v1151 = vsel %vm632, %v1144, 0
      %v1154 = vsel %vm632, %v1145, 0
      %v1157 = vsel %vm632, %v1146, 0
      %v1160 = vsel %vm645, %v1126, 0
      %1162 = vmatprep.subr.bf16.mxu0 0
      %1163 = vmatpush1.bf16.msra.mxu0 0
      %1164 = vmatprep.subr.bf16.mxu0 0
      %1165 = vmatpush1.bf16.msra.mxu0 0
      %1166 = vmatprep.subr.bf16.mxu0 0
      %1167 = vmatpush1.bf16.msra.mxu0 0
      %1168 = vmatprep.subr.bf16.mxu0 0
      %1169 = vmatpush1.bf16.msra.mxu0 0
      %1170 = vmatprep.subr.bf16.mxu0 0
      %1171 = vmatpush1.bf16.msra.mxu0 0
      %1172 = vmatprep.subr.bf16.mxu0 0
      %1173 = vmatpush1.bf16.msra.mxu0 0
      %1174 = vmatprep.subr.bf16.mxu0 0
      %1175 = vmatpush1.bf16.msra.mxu0 0
      %1176 = vmatprep.subr.bf16.mxu0 0
      %1177 = vmatpush1.bf16.msra.mxu0 %v1160
      %1178 = vmatprep.subr.bf16.mxu0 0
      %1179 = vmatpush2.bf16.msra.mxu0 0
      %1180 = vmatprep.subr.bf16.mxu0 0
      %1181 = vmatpush2.bf16.msra.mxu0 0
      %1182 = vmatprep.subr.bf16.mxu0 0
      %1183 = vmatpush2.bf16.msra.mxu0 0
      %1184 = vmatprep.subr.bf16.mxu0 0
      %1185 = vmatpush2.bf16.msra.mxu0 0
      %1186 = vmatprep.subr.bf16.mxu0 0
      %1187 = vmatpush2.bf16.msra.mxu0 0
      %1188 = vmatprep.subr.bf16.mxu0 0
      %1189 = vmatpush2.bf16.msra.mxu0 0
      %1190 = vmatprep.subr.bf16.mxu0 0
      %1191 = vmatpush2.bf16.msra.mxu0 0
      %1192 = vmatprep.subr.bf16.mxu0 0
      %1193 = vmatpush2.bf16.msra.mxu0 0
      %1194 = vmatprep.mubr.bf16.mxu0 0
      %1195 = vmatmul.mubr.bf16.gmra.mxu0 %v1148
      %v1196 = vpop.f32.mrf.mxu0
      %v1197 = vadd.f32 0.0, %v1196
      %v1198 = vpop.f32.mrf.mxu0
      %v1199 = vpop.f32.mrf.mxu0
      %v1200 = vadd.f32 0.0, %v1199
      %v1201 = vpop.f32.mrf.mxu0
      %1202 = vmatprep.mubr.bf16.mxu0 0
      %1203 = vmatmul.mubr.bf16.gmra.mxu0 %v1151
      %v1204 = vpop.f32.mrf.mxu0
      %v1205 = vadd.f32 0.0, %v1204
      %v1206 = vpop.f32.mrf.mxu0
      %v1207 = vpop.f32.mrf.mxu0
      %v1208 = vadd.f32 0.0, %v1207
      %v1209 = vpop.f32.mrf.mxu0
      %1210 = vmatprep.mubr.bf16.mxu0 0
      %1211 = vmatmul.mubr.bf16.gmra.mxu0 %v1154
      %v1212 = vpop.f32.mrf.mxu0
      %v1213 = vadd.f32 0.0, %v1212
      %v1214 = vpop.f32.mrf.mxu0
      %v1215 = vpop.f32.mrf.mxu0
      %v1216 = vadd.f32 0.0, %v1215
      %v1217 = vpop.f32.mrf.mxu0
      %1218 = vmatprep.mubr.bf16.mxu0 0
      %1219 = vmatmul.mubr.bf16.gmra.mxu0 %v1157
      %v1220 = vpop.f32.mrf.mxu0
      %v1221 = vadd.f32 0.0, %v1220
      %v1222 = vpop.f32.mrf.mxu0
      %v1223 = vpop.f32.mrf.mxu0
      %v1224 = vadd.f32 0.0, %v1223
      %v1225 = vpop.f32.mrf.mxu0
      %1226 = vdwg.mxu0
      %v1227 = vadd.f32 %v1108, %v1197
      %v1228 = vadd.f32 %v1109, %v1200
      %v1229 = vadd.f32 %v1110, %v1205
      %v1230 = vadd.f32 %v1111, %v1208
      %v1231 = vadd.f32 %v1112, %v1213
      %v1232 = vadd.f32 %v1113, %v1216
      %v1233 = vadd.f32 %v1114, %v1221
      %v1234 = vadd.f32 %v1115, %v1224
      %v1235 = vld [vmem:[%s1116] sm:$0xf]
      %v1236 = vld [vmem:[%s1116 + $0x4] sm:$0x1]
      %v1237 = vld [vmem:[%s1116 + $0x8] sm:$0xf]
      %v1238 = vld [vmem:[%s1116 + $0xc] sm:$0x1]
      %v1239 = vld [vmem:[%s1116 + $0x10] sm:$0xf]
      %v1240 = vld [vmem:[%s1116 + $0x14] sm:$0x1]
      %v1241 = vld [vmem:[%s1116 + $0x18] sm:$0xf]
      %v1242 = vld [vmem:[%s1116 + $0x1c] sm:$0x1]
      %v1243 = vld [vmem:[%s1116 + $0x20] sm:$0xf]
      %v1244 = vld [vmem:[%s1116 + $0x24] sm:$0x1]
      %v1245 = vld [vmem:[%s1116 + $0x28] sm:$0xf]
      %v1246 = vld [vmem:[%s1116 + $0x2c] sm:$0x1]
      %v1247 = vld [vmem:[%s1116 + $0x30] sm:$0xf]
      %v1248 = vld [vmem:[%s1116 + $0x34] sm:$0x1]
      %v1249 = vld [vmem:[%s1116 + $0x38] sm:$0xf]
      %v1250 = vld [vmem:[%s1116 + $0x3c] sm:$0x1]
      %v1252 = vshrl.u32 %v1235, 16
      %v1254 = vrot.slane %v1252, 4
      %v1255 = vshll.u32 %v1235, 16
      %v1257 = vrot.slane %v1255, 5
      %v1258 = vor.u32 %v1254, %v1257
      %v1259 = vrot.slane %v1258, 4
      %v1261 = vshll.u32 %v1236, 16
      %v1263 = vrot.slane %v1261, 5
      %v1264 = vsel %vm740, %v1259, %v1263
      %v1266 = vshrl.u32 %v1237, 16
      %v1268 = vrot.slane %v1266, 4
      %v1269 = vshll.u32 %v1237, 16
      %v1271 = vrot.slane %v1269, 5
      %v1272 = vor.u32 %v1268, %v1271
      %v1273 = vrot.slane %v1272, 4
      %v1275 = vshll.u32 %v1238, 16
      %v1277 = vrot.slane %v1275, 5
      %v1278 = vsel %vm740, %v1273, %v1277
      %v1280 = vshrl.u32 %v1239, 16
      %v1282 = vrot.slane %v1280, 4
      %v1283 = vshll.u32 %v1239, 16
      %v1285 = vrot.slane %v1283, 5
      %v1286 = vor.u32 %v1282, %v1285
      %v1287 = vrot.slane %v1286, 4
      %v1289 = vshll.u32 %v1240, 16
      %v1291 = vrot.slane %v1289, 5
      %v1292 = vsel %vm740, %v1287, %v1291
      %v1294 = vshrl.u32 %v1241, 16
      %v1296 = vrot.slane %v1294, 4
      %v1297 = vshll.u32 %v1241, 16
      %v1299 = vrot.slane %v1297, 5
      %v1300 = vor.u32 %v1296, %v1299
      %v1301 = vrot.slane %v1300, 4
      %v1303 = vshll.u32 %v1242, 16
      %v1305 = vrot.slane %v1303, 5
      %v1306 = vsel %vm740, %v1301, %v1305
      %v1308 = vshrl.u32 %v1243, 16
      %v1310 = vrot.slane %v1308, 4
      %v1311 = vshll.u32 %v1243, 16
      %v1313 = vrot.slane %v1311, 5
      %v1314 = vor.u32 %v1310, %v1313
      %v1315 = vrot.slane %v1314, 4
      %v1317 = vshll.u32 %v1244, 16
      %v1319 = vrot.slane %v1317, 5
      %v1320 = vsel %vm740, %v1315, %v1319
      %v1322 = vshrl.u32 %v1245, 16
      %v1324 = vrot.slane %v1322, 4
      %v1325 = vshll.u32 %v1245, 16
      %v1327 = vrot.slane %v1325, 5
      %v1328 = vor.u32 %v1324, %v1327
      %v1329 = vrot.slane %v1328, 4
      %v1331 = vshll.u32 %v1246, 16
      %v1333 = vrot.slane %v1331, 5
      %v1334 = vsel %vm740, %v1329, %v1333
      %v1336 = vshrl.u32 %v1247, 16
      %v1338 = vrot.slane %v1336, 4
      %v1339 = vshll.u32 %v1247, 16
      %v1341 = vrot.slane %v1339, 5
      %v1342 = vor.u32 %v1338, %v1341
      %v1343 = vrot.slane %v1342, 4
      %v1345 = vshll.u32 %v1248, 16
      %v1347 = vrot.slane %v1345, 5
      %v1348 = vsel %vm740, %v1343, %v1347
      %v1350 = vshrl.u32 %v1249, 16
      %v1352 = vrot.slane %v1350, 4
      %v1353 = vshll.u32 %v1249, 16
      %v1355 = vrot.slane %v1353, 5
      %v1356 = vor.u32 %v1352, %v1355
      %v1357 = vrot.slane %v1356, 4
      %v1359 = vshll.u32 %v1250, 16
      %v1361 = vrot.slane %v1359, 5
      %v1362 = vsel %vm740, %v1357, %v1361
      %s1363 = scalar_lea.vmem %s276, 16
      %v1364 = vld [vmem:[%s1363] sm:$0xf]
      %v1365 = vunpack.c.l.b16 %v1264
      %v1366 = vunpack.c.l.b16 %v1278
      %v1367 = vunpack.c.l.b16 %v1292
      %v1368 = vunpack.c.l.b16 %v1306
      %v1369 = vunpack.c.l.b16 %v1320
      %v1370 = vunpack.c.l.b16 %v1334
      %v1371 = vunpack.c.l.b16 %v1348
      %v1372 = vunpack.c.l.b16 %v1362
      %v1373 = vpack.c.b16 %v1366, %v1365
      %v1374 = vpack.c.b16 %v1368, %v1367
      %v1375 = vpack.c.b16 %v1370, %v1369
      %v1376 = vpack.c.b16 %v1372, %v1371
      %v1378 = vsel %vm632, %v1373, 0
      %v1381 = vsel %vm632, %v1374, 0
      %v1384 = vsel %vm632, %v1375, 0
      %v1387 = vsel %vm632, %v1376, 0
      %v1390 = vsel %vm645, %v1364, 0
      %1392 = vmatprep.subr.bf16.mxu0 0
      %1393 = vmatpush1.bf16.msra.mxu0 0
      %1394 = vmatprep.subr.bf16.mxu0 0
      %1395 = vmatpush1.bf16.msra.mxu0 0
      %1396 = vmatprep.subr.bf16.mxu0 0
      %1397 = vmatpush1.bf16.msra.mxu0 0
      %1398 = vmatprep.subr.bf16.mxu0 0
      %1399 = vmatpush1.bf16.msra.mxu0 0
      %1400 = vmatprep.subr.bf16.mxu0 0
      %1401 = vmatpush1.bf16.msra.mxu0 0
      %1402 = vmatprep.subr.bf16.mxu0 0
      %1403 = vmatpush1.bf16.msra.mxu0 0
      %1404 = vmatprep.subr.bf16.mxu0 0
      %1405 = vmatpush1.bf16.msra.mxu0 0
      %1406 = vmatprep.subr.bf16.mxu0 0
      %1407 = vmatpush1.bf16.msra.mxu0 %v1390
      %1408 = vmatprep.subr.bf16.mxu0 0
      %1409 = vmatpush2.bf16.msra.mxu0 0
      %1410 = vmatprep.subr.bf16.mxu0 0
      %1411 = vmatpush2.bf16.msra.mxu0 0
      %1412 = vmatprep.subr.bf16.mxu0 0
      %1413 = vmatpush2.bf16.msra.mxu0 0
      %1414 = vmatprep.subr.bf16.mxu0 0
      %1415 = vmatpush2.bf16.msra.mxu0 0
      %1416 = vmatprep.subr.bf16.mxu0 0
      %1417 = vmatpush2.bf16.msra.mxu0 0
      %1418 = vmatprep.subr.bf16.mxu0 0
      %1419 = vmatpush2.bf16.msra.mxu0 0
      %1420 = vmatprep.subr.bf16.mxu0 0
      %1421 = vmatpush2.bf16.msra.mxu0 0
      %1422 = vmatprep.subr.bf16.mxu0 0
      %1423 = vmatpush2.bf16.msra.mxu0 0
      %1424 = vmatprep.mubr.bf16.mxu0 0
      %1425 = vmatmul.mubr.bf16.gmra.mxu0 %v1378
      %v1426 = vpop.f32.mrf.mxu0
      %v1427 = vadd.f32 0.0, %v1426
      %v1428 = vpop.f32.mrf.mxu0
      %v1429 = vpop.f32.mrf.mxu0
      %v1430 = vadd.f32 0.0, %v1429
      %v1431 = vpop.f32.mrf.mxu0
      %1432 = vmatprep.mubr.bf16.mxu0 0
      %1433 = vmatmul.mubr.bf16.gmra.mxu0 %v1381
      %v1434 = vpop.f32.mrf.mxu0
      %v1435 = vadd.f32 0.0, %v1434
      %v1436 = vpop.f32.mrf.mxu0
      %v1437 = vpop.f32.mrf.mxu0
      %v1438 = vadd.f32 0.0, %v1437
      %v1439 = vpop.f32.mrf.mxu0
      %1440 = vmatprep.mubr.bf16.mxu0 0
      %1441 = vmatmul.mubr.bf16.gmra.mxu0 %v1384
      %v1442 = vpop.f32.mrf.mxu0
      %v1443 = vadd.f32 0.0, %v1442
      %v1444 = vpop.f32.mrf.mxu0
      %v1445 = vpop.f32.mrf.mxu0
      %v1446 = vadd.f32 0.0, %v1445
      %v1447 = vpop.f32.mrf.mxu0
      %1448 = vmatprep.mubr.bf16.mxu0 0
      %1449 = vmatmul.mubr.bf16.gmra.mxu0 %v1387
      %v1450 = vpop.f32.mrf.mxu0
      %v1451 = vadd.f32 0.0, %v1450
      %v1452 = vpop.f32.mrf.mxu0
      %v1453 = vpop.f32.mrf.mxu0
      %v1454 = vadd.f32 0.0, %v1453
      %v1455 = vpop.f32.mrf.mxu0
      %1456 = vdwg.mxu0
      %v1457 = vadd.f32 %v1227, %v1427
      %v1458 = vadd.f32 %v1228, %v1430
      %v1459 = vadd.f32 %v1229, %v1435
      %v1460 = vadd.f32 %v1230, %v1438
      %v1461 = vadd.f32 %v1231, %v1443
      %v1462 = vadd.f32 %v1232, %v1446
      %v1463 = vadd.f32 %v1233, %v1451
      %v1464 = vadd.f32 %v1234, %v1454
      %v1465 = vld [vmem:[%s1116] sm:$0xe]
      %v1466 = vld [vmem:[%s1116 + $0x8] sm:$0xe]
      %v1467 = vld [vmem:[%s1116 + $0x10] sm:$0xe]
      %v1468 = vld [vmem:[%s1116 + $0x18] sm:$0xe]
      %v1469 = vld [vmem:[%s1116 + $0x20] sm:$0xe]
      %v1470 = vld [vmem:[%s1116 + $0x28] sm:$0xe]
      %v1471 = vld [vmem:[%s1116 + $0x30] sm:$0xe]
      %v1472 = vld [vmem:[%s1116 + $0x38] sm:$0xe]
      %v1489 = vrot.slane %v1465, 5
      %v1490 = vrot.slane %v1489, 4
      %v1491 = vrot.slane %v1236, 5
      %v1492 = vsel %vm981, %v1490, %v1491
      %v1493 = vrot.slane %v1466, 5
      %v1494 = vrot.slane %v1493, 4
      %v1495 = vrot.slane %v1238, 5
      %v1496 = vsel %vm981, %v1494, %v1495
      %v1497 = vrot.slane %v1467, 5
      %v1498 = vrot.slane %v1497, 4
      %v1499 = vrot.slane %v1240, 5
      %v1500 = vsel %vm981, %v1498, %v1499
      %v1501 = vrot.slane %v1468, 5
      %v1502 = vrot.slane %v1501, 4
      %v1503 = vrot.slane %v1242, 5
      %v1504 = vsel %vm981, %v1502, %v1503
      %v1505 = vrot.slane %v1469, 5
      %v1506 = vrot.slane %v1505, 4
      %v1507 = vrot.slane %v1244, 5
      %v1508 = vsel %vm981, %v1506, %v1507
      %v1509 = vrot.slane %v1470, 5
      %v1510 = vrot.slane %v1509, 4
      %v1511 = vrot.slane %v1246, 5
      %v1512 = vsel %vm981, %v1510, %v1511
      %v1513 = vrot.slane %v1471, 5
      %v1514 = vrot.slane %v1513, 4
      %v1515 = vrot.slane %v1248, 5
      %v1516 = vsel %vm981, %v1514, %v1515
      %v1517 = vrot.slane %v1472, 5
      %v1518 = vrot.slane %v1517, 4
      %v1519 = vrot.slane %v1250, 5
      %v1520 = vsel %vm981, %v1518, %v1519
      %s1521 = scalar_lea.vmem %s276, 20
      %v1522 = vld [vmem:[%s1521] sm:$0xf]
      %v1523 = vunpack.c.l.b16 %v1492
      %v1524 = vunpack.c.l.b16 %v1496
      %v1525 = vunpack.c.l.b16 %v1500
      %v1526 = vunpack.c.l.b16 %v1504
      %v1527 = vunpack.c.l.b16 %v1508
      %v1528 = vunpack.c.l.b16 %v1512
      %v1529 = vunpack.c.l.b16 %v1516
      %v1530 = vunpack.c.l.b16 %v1520
      %v1531 = vpack.c.b16 %v1524, %v1523
      %v1532 = vpack.c.b16 %v1526, %v1525
      %v1533 = vpack.c.b16 %v1528, %v1527
      %v1534 = vpack.c.b16 %v1530, %v1529
      %v1536 = vsel %vm632, %v1531, 0
      %v1539 = vsel %vm632, %v1532, 0
      %v1542 = vsel %vm632, %v1533, 0
      %v1545 = vsel %vm632, %v1534, 0
      %v1548 = vsel %vm645, %v1522, 0
      %1550 = vmatprep.subr.bf16.mxu0 0
      %1551 = vmatpush1.bf16.msra.mxu0 0
      %1552 = vmatprep.subr.bf16.mxu0 0
      %1553 = vmatpush1.bf16.msra.mxu0 0
      %1554 = vmatprep.subr.bf16.mxu0 0
      %1555 = vmatpush1.bf16.msra.mxu0 0
      %1556 = vmatprep.subr.bf16.mxu0 0
      %1557 = vmatpush1.bf16.msra.mxu0 0
      %1558 = vmatprep.subr.bf16.mxu0 0
      %1559 = vmatpush1.bf16.msra.mxu0 0
      %1560 = vmatprep.subr.bf16.mxu0 0
      %1561 = vmatpush1.bf16.msra.mxu0 0
      %1562 = vmatprep.subr.bf16.mxu0 0
      %1563 = vmatpush1.bf16.msra.mxu0 0
      %1564 = vmatprep.subr.bf16.mxu0 0
      %1565 = vmatpush1.bf16.msra.mxu0 %v1548
      %1566 = vmatprep.subr.bf16.mxu0 0
      %1567 = vmatpush2.bf16.msra.mxu0 0
      %1568 = vmatprep.subr.bf16.mxu0 0
      %1569 = vmatpush2.bf16.msra.mxu0 0
      %1570 = vmatprep.subr.bf16.mxu0 0
      %1571 = vmatpush2.bf16.msra.mxu0 0
      %1572 = vmatprep.subr.bf16.mxu0 0
      %1573 = vmatpush2.bf16.msra.mxu0 0
      %1574 = vmatprep.subr.bf16.mxu0 0
      %1575 = vmatpush2.bf16.msra.mxu0 0
      %1576 = vmatprep.subr.bf16.mxu0 0
      %1577 = vmatpush2.bf16.msra.mxu0 0
      %1578 = vmatprep.subr.bf16.mxu0 0
      %1579 = vmatpush2.bf16.msra.mxu0 0
      %1580 = vmatprep.subr.bf16.mxu0 0
      %1581 = vmatpush2.bf16.msra.mxu0 0
      %1582 = vmatprep.mubr.bf16.mxu0 0
      %1583 = vmatmul.mubr.bf16.gmra.mxu0 %v1536
      %v1584 = vpop.f32.mrf.mxu0
      %v1585 = vadd.f32 0.0, %v1584
      %v1586 = vpop.f32.mrf.mxu0
      %v1587 = vpop.f32.mrf.mxu0
      %v1588 = vadd.f32 0.0, %v1587
      %v1589 = vpop.f32.mrf.mxu0
      %1590 = vmatprep.mubr.bf16.mxu0 0
      %1591 = vmatmul.mubr.bf16.gmra.mxu0 %v1539
      %v1592 = vpop.f32.mrf.mxu0
      %v1593 = vadd.f32 0.0, %v1592
      %v1594 = vpop.f32.mrf.mxu0
      %v1595 = vpop.f32.mrf.mxu0
      %v1596 = vadd.f32 0.0, %v1595
      %v1597 = vpop.f32.mrf.mxu0
      %1598 = vmatprep.mubr.bf16.mxu0 0
      %1599 = vmatmul.mubr.bf16.gmra.mxu0 %v1542
      %v1600 = vpop.f32.mrf.mxu0
      %v1601 = vadd.f32 0.0, %v1600
      %v1602 = vpop.f32.mrf.mxu0
      %v1603 = vpop.f32.mrf.mxu0
      %v1604 = vadd.f32 0.0, %v1603
      %v1605 = vpop.f32.mrf.mxu0
      %1606 = vmatprep.mubr.bf16.mxu0 0
      %1607 = vmatmul.mubr.bf16.gmra.mxu0 %v1545
      %v1608 = vpop.f32.mrf.mxu0
      %v1609 = vadd.f32 0.0, %v1608
      %v1610 = vpop.f32.mrf.mxu0
      %v1611 = vpop.f32.mrf.mxu0
      %v1612 = vadd.f32 0.0, %v1611
      %v1613 = vpop.f32.mrf.mxu0
      %1614 = vdwg.mxu0
      %v1615 = vadd.f32 %v1457, %v1585
      %v1616 = vadd.f32 %v1458, %v1588
      %v1617 = vadd.f32 %v1459, %v1593
      %v1618 = vadd.f32 %v1460, %v1596
      %v1619 = vadd.f32 %v1461, %v1601
      %v1620 = vadd.f32 %v1462, %v1604
      %v1621 = vadd.f32 %v1463, %v1609
      %v1622 = vadd.f32 %v1464, %v1612
      %s1623 = scalar_lea.vmem [#allocation2], 16
      %v1624 = vld [vmem:[%s1623] sm:$0xf]
      %v1625 = vld [vmem:[%s1623 + $0x8] sm:$0xf]
      %v1626 = vld [vmem:[%s1623 + $0x10] sm:$0xf]
      %v1627 = vld [vmem:[%s1623 + $0x18] sm:$0xf]
      %v1628 = vld [vmem:[%s1623 + $0x20] sm:$0xf]
      %v1629 = vld [vmem:[%s1623 + $0x28] sm:$0xf]
      %v1630 = vld [vmem:[%s1623 + $0x30] sm:$0xf]
      %v1631 = vld [vmem:[%s1623 + $0x38] sm:$0xf]
      %s1632 = scalar_lea.vmem %s276, 24
      %v1633 = vld [vmem:[%s1632] sm:$0xf]
      %v1642 = vunpack.c.l.b16 %v1624
      %v1643 = vunpack.c.l.b16 %v1625
      %v1644 = vunpack.c.l.b16 %v1626
      %v1645 = vunpack.c.l.b16 %v1627
      %v1646 = vunpack.c.l.b16 %v1628
      %v1647 = vunpack.c.l.b16 %v1629
      %v1648 = vunpack.c.l.b16 %v1630
      %v1649 = vunpack.c.l.b16 %v1631
      %v1650 = vpack.c.b16 %v1643, %v1642
      %v1651 = vpack.c.b16 %v1645, %v1644
      %v1652 = vpack.c.b16 %v1647, %v1646
      %v1653 = vpack.c.b16 %v1649, %v1648
      %v1655 = vsel %vm632, %v1650, 0
      %v1658 = vsel %vm632, %v1651, 0
      %v1661 = vsel %vm632, %v1652, 0
      %v1664 = vsel %vm632, %v1653, 0
      %v1667 = vsel %vm645, %v1633, 0
      %1669 = vmatprep.subr.bf16.mxu0 0
      %1670 = vmatpush1.bf16.msra.mxu0 0
      %1671 = vmatprep.subr.bf16.mxu0 0
      %1672 = vmatpush1.bf16.msra.mxu0 0
      %1673 = vmatprep.subr.bf16.mxu0 0
      %1674 = vmatpush1.bf16.msra.mxu0 0
      %1675 = vmatprep.subr.bf16.mxu0 0
      %1676 = vmatpush1.bf16.msra.mxu0 0
      %1677 = vmatprep.subr.bf16.mxu0 0
      %1678 = vmatpush1.bf16.msra.mxu0 0
      %1679 = vmatprep.subr.bf16.mxu0 0
      %1680 = vmatpush1.bf16.msra.mxu0 0
      %1681 = vmatprep.subr.bf16.mxu0 0
      %1682 = vmatpush1.bf16.msra.mxu0 0
      %1683 = vmatprep.subr.bf16.mxu0 0
      %1684 = vmatpush1.bf16.msra.mxu0 %v1667
      %1685 = vmatprep.subr.bf16.mxu0 0
      %1686 = vmatpush2.bf16.msra.mxu0 0
      %1687 = vmatprep.subr.bf16.mxu0 0
      %1688 = vmatpush2.bf16.msra.mxu0 0
      %1689 = vmatprep.subr.bf16.mxu0 0
      %1690 = vmatpush2.bf16.msra.mxu0 0
      %1691 = vmatprep.subr.bf16.mxu0 0
      %1692 = vmatpush2.bf16.msra.mxu0 0
      %1693 = vmatprep.subr.bf16.mxu0 0
      %1694 = vmatpush2.bf16.msra.mxu0 0
      %1695 = vmatprep.subr.bf16.mxu0 0
      %1696 = vmatpush2.bf16.msra.mxu0 0
      %1697 = vmatprep.subr.bf16.mxu0 0
      %1698 = vmatpush2.bf16.msra.mxu0 0
      %1699 = vmatprep.subr.bf16.mxu0 0
      %1700 = vmatpush2.bf16.msra.mxu0 0
      %1701 = vmatprep.mubr.bf16.mxu0 0
      %1702 = vmatmul.mubr.bf16.gmra.mxu0 %v1655
      %v1703 = vpop.f32.mrf.mxu0
      %v1704 = vadd.f32 0.0, %v1703
      %v1705 = vpop.f32.mrf.mxu0
      %v1706 = vpop.f32.mrf.mxu0
      %v1707 = vadd.f32 0.0, %v1706
      %v1708 = vpop.f32.mrf.mxu0
      %1709 = vmatprep.mubr.bf16.mxu0 0
      %1710 = vmatmul.mubr.bf16.gmra.mxu0 %v1658
      %v1711 = vpop.f32.mrf.mxu0
      %v1712 = vadd.f32 0.0, %v1711
      %v1713 = vpop.f32.mrf.mxu0
      %v1714 = vpop.f32.mrf.mxu0
      %v1715 = vadd.f32 0.0, %v1714
      %v1716 = vpop.f32.mrf.mxu0
      %1717 = vmatprep.mubr.bf16.mxu0 0
      %1718 = vmatmul.mubr.bf16.gmra.mxu0 %v1661
      %v1719 = vpop.f32.mrf.mxu0
      %v1720 = vadd.f32 0.0, %v1719
      %v1721 = vpop.f32.mrf.mxu0
      %v1722 = vpop.f32.mrf.mxu0
      %v1723 = vadd.f32 0.0, %v1722
      %v1724 = vpop.f32.mrf.mxu0
      %1725 = vmatprep.mubr.bf16.mxu0 0
      %1726 = vmatmul.mubr.bf16.gmra.mxu0 %v1664
      %v1727 = vpop.f32.mrf.mxu0
      %v1728 = vadd.f32 0.0, %v1727
      %v1729 = vpop.f32.mrf.mxu0
      %v1730 = vpop.f32.mrf.mxu0
      %v1731 = vadd.f32 0.0, %v1730
      %v1732 = vpop.f32.mrf.mxu0
      %1733 = vdwg.mxu0
      %v1734 = vadd.f32 %v1615, %v1704
      %v1735 = vadd.f32 %v1616, %v1707
      %v1736 = vadd.f32 %v1617, %v1712
      %v1737 = vadd.f32 %v1618, %v1715
      %v1738 = vadd.f32 %v1619, %v1720
      %v1739 = vadd.f32 %v1620, %v1723
      %v1740 = vadd.f32 %v1621, %v1728
      %v1741 = vadd.f32 %v1622, %v1731
      %v1742 = vld [vmem:[%s1623] sm:$0xf]
      %v1743 = vld [vmem:[%s1623 + $0x4] sm:$0x1]
      %v1744 = vld [vmem:[%s1623 + $0x8] sm:$0xf]
      %v1745 = vld [vmem:[%s1623 + $0xc] sm:$0x1]
      %v1746 = vld [vmem:[%s1623 + $0x10] sm:$0xf]
      %v1747 = vld [vmem:[%s1623 + $0x14] sm:$0x1]
      %v1748 = vld [vmem:[%s1623 + $0x18] sm:$0xf]
      %v1749 = vld [vmem:[%s1623 + $0x1c] sm:$0x1]
      %v1750 = vld [vmem:[%s1623 + $0x20] sm:$0xf]
      %v1751 = vld [vmem:[%s1623 + $0x24] sm:$0x1]
      %v1752 = vld [vmem:[%s1623 + $0x28] sm:$0xf]
      %v1753 = vld [vmem:[%s1623 + $0x2c] sm:$0x1]
      %v1754 = vld [vmem:[%s1623 + $0x30] sm:$0xf]
      %v1755 = vld [vmem:[%s1623 + $0x34] sm:$0x1]
      %v1756 = vld [vmem:[%s1623 + $0x38] sm:$0xf]
      %v1757 = vld [vmem:[%s1623 + $0x3c] sm:$0x1]
      %v1759 = vshrl.u32 %v1742, 16
      %v1761 = vrot.slane %v1759, 4
      %v1762 = vshll.u32 %v1742, 16
      %v1764 = vrot.slane %v1762, 5
      %v1765 = vor.u32 %v1761, %v1764
      %v1766 = vrot.slane %v1765, 4
      %v1768 = vshll.u32 %v1743, 16
      %v1770 = vrot.slane %v1768, 5
      %v1771 = vsel %vm740, %v1766, %v1770
      %v1773 = vshrl.u32 %v1744, 16
      %v1775 = vrot.slane %v1773, 4
      %v1776 = vshll.u32 %v1744, 16
      %v1778 = vrot.slane %v1776, 5
      %v1779 = vor.u32 %v1775, %v1778
      %v1780 = vrot.slane %v1779, 4
      %v1782 = vshll.u32 %v1745, 16
      %v1784 = vrot.slane %v1782, 5
      %v1785 = vsel %vm740, %v1780, %v1784
      %v1787 = vshrl.u32 %v1746, 16
      %v1789 = vrot.slane %v1787, 4
      %v1790 = vshll.u32 %v1746, 16
      %v1792 = vrot.slane %v1790, 5
      %v1793 = vor.u32 %v1789, %v1792
      %v1794 = vrot.slane %v1793, 4
      %v1796 = vshll.u32 %v1747, 16
      %v1798 = vrot.slane %v1796, 5
      %v1799 = vsel %vm740, %v1794, %v1798
      %v1801 = vshrl.u32 %v1748, 16
      %v1803 = vrot.slane %v1801, 4
      %v1804 = vshll.u32 %v1748, 16
      %v1806 = vrot.slane %v1804, 5
      %v1807 = vor.u32 %v1803, %v1806
      %v1808 = vrot.slane %v1807, 4
      %v1810 = vshll.u32 %v1749, 16
      %v1812 = vrot.slane %v1810, 5
      %v1813 = vsel %vm740, %v1808, %v1812
      %v1815 = vshrl.u32 %v1750, 16
      %v1817 = vrot.slane %v1815, 4
      %v1818 = vshll.u32 %v1750, 16
      %v1820 = vrot.slane %v1818, 5
      %v1821 = vor.u32 %v1817, %v1820
      %v1822 = vrot.slane %v1821, 4
      %v1824 = vshll.u32 %v1751, 16
      %v1826 = vrot.slane %v1824, 5
      %v1827 = vsel %vm740, %v1822, %v1826
      %v1829 = vshrl.u32 %v1752, 16
      %v1831 = vrot.slane %v1829, 4
      %v1832 = vshll.u32 %v1752, 16
      %v1834 = vrot.slane %v1832, 5
      %v1835 = vor.u32 %v1831, %v1834
      %v1836 = vrot.slane %v1835, 4
      %v1838 = vshll.u32 %v1753, 16
      %v1840 = vrot.slane %v1838, 5
      %v1841 = vsel %vm740, %v1836, %v1840
      %v1843 = vshrl.u32 %v1754, 16
      %v1845 = vrot.slane %v1843, 4
      %v1846 = vshll.u32 %v1754, 16
      %v1848 = vrot.slane %v1846, 5
      %v1849 = vor.u32 %v1845, %v1848
      %v1850 = vrot.slane %v1849, 4
      %v1852 = vshll.u32 %v1755, 16
      %v1854 = vrot.slane %v1852, 5
      %v1855 = vsel %vm740, %v1850, %v1854
      %v1857 = vshrl.u32 %v1756, 16
      %v1859 = vrot.slane %v1857, 4
      %v1860 = vshll.u32 %v1756, 16
      %v1862 = vrot.slane %v1860, 5
      %v1863 = vor.u32 %v1859, %v1862
      %v1864 = vrot.slane %v1863, 4
      %v1866 = vshll.u32 %v1757, 16
      %v1868 = vrot.slane %v1866, 5
      %v1869 = vsel %vm740, %v1864, %v1868
      %s1870 = scalar_lea.vmem %s276, 28
      %v1871 = vld [vmem:[%s1870] sm:$0xf]
      %v1872 = vunpack.c.l.b16 %v1771
      %v1873 = vunpack.c.l.b16 %v1785
      %v1874 = vunpack.c.l.b16 %v1799
      %v1875 = vunpack.c.l.b16 %v1813
      %v1876 = vunpack.c.l.b16 %v1827
      %v1877 = vunpack.c.l.b16 %v1841
      %v1878 = vunpack.c.l.b16 %v1855
      %v1879 = vunpack.c.l.b16 %v1869
      %v1880 = vpack.c.b16 %v1873, %v1872
      %v1881 = vpack.c.b16 %v1875, %v1874
      %v1882 = vpack.c.b16 %v1877, %v1876
      %v1883 = vpack.c.b16 %v1879, %v1878
      %v1885 = vsel %vm632, %v1880, 0
      %v1888 = vsel %vm632, %v1881, 0
      %v1891 = vsel %vm632, %v1882, 0
      %v1894 = vsel %vm632, %v1883, 0
      %v1897 = vsel %vm645, %v1871, 0
      %1899 = vmatprep.subr.bf16.mxu0 0
      %1900 = vmatpush1.bf16.msra.mxu0 0
      %1901 = vmatprep.subr.bf16.mxu0 0
      %1902 = vmatpush1.bf16.msra.mxu0 0
      %1903 = vmatprep.subr.bf16.mxu0 0
      %1904 = vmatpush1.bf16.msra.mxu0 0
      %1905 = vmatprep.subr.bf16.mxu0 0
      %1906 = vmatpush1.bf16.msra.mxu0 0
      %1907 = vmatprep.subr.bf16.mxu0 0
      %1908 = vmatpush1.bf16.msra.mxu0 0
      %1909 = vmatprep.subr.bf16.mxu0 0
      %1910 = vmatpush1.bf16.msra.mxu0 0
      %1911 = vmatprep.subr.bf16.mxu0 0
      %1912 = vmatpush1.bf16.msra.mxu0 0
      %1913 = vmatprep.subr.bf16.mxu0 0
      %1914 = vmatpush1.bf16.msra.mxu0 %v1897
      %1915 = vmatprep.subr.bf16.mxu0 0
      %1916 = vmatpush2.bf16.msra.mxu0 0
      %1917 = vmatprep.subr.bf16.mxu0 0
      %1918 = vmatpush2.bf16.msra.mxu0 0
      %1919 = vmatprep.subr.bf16.mxu0 0
      %1920 = vmatpush2.bf16.msra.mxu0 0
      %1921 = vmatprep.subr.bf16.mxu0 0
      %1922 = vmatpush2.bf16.msra.mxu0 0
      %1923 = vmatprep.subr.bf16.mxu0 0
      %1924 = vmatpush2.bf16.msra.mxu0 0
      %1925 = vmatprep.subr.bf16.mxu0 0
      %1926 = vmatpush2.bf16.msra.mxu0 0
      %1927 = vmatprep.subr.bf16.mxu0 0
      %1928 = vmatpush2.bf16.msra.mxu0 0
      %1929 = vmatprep.subr.bf16.mxu0 0
      %1930 = vmatpush2.bf16.msra.mxu0 0
      %1931 = vmatprep.mubr.bf16.mxu0 0
      %1932 = vmatmul.mubr.bf16.gmra.mxu0 %v1885
      %v1933 = vpop.f32.mrf.mxu0
      %v1934 = vadd.f32 0.0, %v1933
      %v1935 = vpop.f32.mrf.mxu0
      %v1936 = vpop.f32.mrf.mxu0
      %v1937 = vadd.f32 0.0, %v1936
      %v1938 = vpop.f32.mrf.mxu0
      %1939 = vmatprep.mubr.bf16.mxu0 0
      %1940 = vmatmul.mubr.bf16.gmra.mxu0 %v1888
      %v1941 = vpop.f32.mrf.mxu0
      %v1942 = vadd.f32 0.0, %v1941
      %v1943 = vpop.f32.mrf.mxu0
      %v1944 = vpop.f32.mrf.mxu0
      %v1945 = vadd.f32 0.0, %v1944
      %v1946 = vpop.f32.mrf.mxu0
      %1947 = vmatprep.mubr.bf16.mxu0 0
      %1948 = vmatmul.mubr.bf16.gmra.mxu0 %v1891
      %v1949 = vpop.f32.mrf.mxu0
      %v1950 = vadd.f32 0.0, %v1949
      %v1951 = vpop.f32.mrf.mxu0
      %v1952 = vpop.f32.mrf.mxu0
      %v1953 = vadd.f32 0.0, %v1952
      %v1954 = vpop.f32.mrf.mxu0
      %1955 = vmatprep.mubr.bf16.mxu0 0
      %1956 = vmatmul.mubr.bf16.gmra.mxu0 %v1894
      %v1957 = vpop.f32.mrf.mxu0
      %v1958 = vadd.f32 0.0, %v1957
      %v1959 = vpop.f32.mrf.mxu0
      %v1960 = vpop.f32.mrf.mxu0
      %v1961 = vadd.f32 0.0, %v1960
      %v1962 = vpop.f32.mrf.mxu0
      %1963 = vdwg.mxu0
      %v1964 = vadd.f32 %v1734, %v1934
      %v1965 = vadd.f32 %v1735, %v1937
      %v1966 = vadd.f32 %v1736, %v1942
      %v1967 = vadd.f32 %v1737, %v1945
      %v1968 = vadd.f32 %v1738, %v1950
      %v1969 = vadd.f32 %v1739, %v1953
      %v1970 = vadd.f32 %v1740, %v1958
      %v1971 = vadd.f32 %v1741, %v1961
      %v1972 = vld [vmem:[%s1623] sm:$0xe]
      %v1973 = vld [vmem:[%s1623 + $0x8] sm:$0xe]
      %v1974 = vld [vmem:[%s1623 + $0x10] sm:$0xe]
      %v1975 = vld [vmem:[%s1623 + $0x18] sm:$0xe]
      %v1976 = vld [vmem:[%s1623 + $0x20] sm:$0xe]
      %v1977 = vld [vmem:[%s1623 + $0x28] sm:$0xe]
      %v1978 = vld [vmem:[%s1623 + $0x30] sm:$0xe]
      %v1979 = vld [vmem:[%s1623 + $0x38] sm:$0xe]
      %v1996 = vrot.slane %v1972, 5
      %v1997 = vrot.slane %v1996, 4
      %v1998 = vrot.slane %v1743, 5
      %v1999 = vsel %vm981, %v1997, %v1998
      %v2000 = vrot.slane %v1973, 5
      %v2001 = vrot.slane %v2000, 4
      %v2002 = vrot.slane %v1745, 5
      %v2003 = vsel %vm981, %v2001, %v2002
      %v2004 = vrot.slane %v1974, 5
      %v2005 = vrot.slane %v2004, 4
      %v2006 = vrot.slane %v1747, 5
      %v2007 = vsel %vm981, %v2005, %v2006
      %v2008 = vrot.slane %v1975, 5
      %v2009 = vrot.slane %v2008, 4
      %v2010 = vrot.slane %v1749, 5
      %v2011 = vsel %vm981, %v2009, %v2010
      %v2012 = vrot.slane %v1976, 5
      %v2013 = vrot.slane %v2012, 4
      %v2014 = vrot.slane %v1751, 5
      %v2015 = vsel %vm981, %v2013, %v2014
      %v2016 = vrot.slane %v1977, 5
      %v2017 = vrot.slane %v2016, 4
      %v2018 = vrot.slane %v1753, 5
      %v2019 = vsel %vm981, %v2017, %v2018
      %v2020 = vrot.slane %v1978, 5
      %v2021 = vrot.slane %v2020, 4
      %v2022 = vrot.slane %v1755, 5
      %v2023 = vsel %vm981, %v2021, %v2022
      %v2024 = vrot.slane %v1979, 5
      %v2025 = vrot.slane %v2024, 4
      %v2026 = vrot.slane %v1757, 5
      %v2027 = vsel %vm981, %v2025, %v2026
      %s2028 = scalar_lea.vmem %s276, 32
      %v2029 = vld [vmem:[%s2028] sm:$0xf]
      %v2030 = vunpack.c.l.b16 %v1999
      %v2031 = vunpack.c.l.b16 %v2003
      %v2032 = vunpack.c.l.b16 %v2007
      %v2033 = vunpack.c.l.b16 %v2011
      %v2034 = vunpack.c.l.b16 %v2015
      %v2035 = vunpack.c.l.b16 %v2019
      %v2036 = vunpack.c.l.b16 %v2023
      %v2037 = vunpack.c.l.b16 %v2027
      %v2038 = vpack.c.b16 %v2031, %v2030
      %v2039 = vpack.c.b16 %v2033, %v2032
      %v2040 = vpack.c.b16 %v2035, %v2034
      %v2041 = vpack.c.b16 %v2037, %v2036
      %v2043 = vsel %vm632, %v2038, 0
      %v2046 = vsel %vm632, %v2039, 0
      %v2049 = vsel %vm632, %v2040, 0
      %v2052 = vsel %vm632, %v2041, 0
      %v2055 = vsel %vm645, %v2029, 0
      %2057 = vmatprep.subr.bf16.mxu0 0
      %2058 = vmatpush1.bf16.msra.mxu0 0
      %2059 = vmatprep.subr.bf16.mxu0 0
      %2060 = vmatpush1.bf16.msra.mxu0 0
      %2061 = vmatprep.subr.bf16.mxu0 0
      %2062 = vmatpush1.bf16.msra.mxu0 0
      %2063 = vmatprep.subr.bf16.mxu0 0
      %2064 = vmatpush1.bf16.msra.mxu0 0
      %2065 = vmatprep.subr.bf16.mxu0 0
      %2066 = vmatpush1.bf16.msra.mxu0 0
      %2067 = vmatprep.subr.bf16.mxu0 0
      %2068 = vmatpush1.bf16.msra.mxu0 0
      %2069 = vmatprep.subr.bf16.mxu0 0
      %2070 = vmatpush1.bf16.msra.mxu0 0
      %2071 = vmatprep.subr.bf16.mxu0 0
      %2072 = vmatpush1.bf16.msra.mxu0 %v2055
      %2073 = vmatprep.subr.bf16.mxu0 0
      %2074 = vmatpush2.bf16.msra.mxu0 0
      %2075 = vmatprep.subr.bf16.mxu0 0
      %2076 = vmatpush2.bf16.msra.mxu0 0
      %2077 = vmatprep.subr.bf16.mxu0 0
      %2078 = vmatpush2.bf16.msra.mxu0 0
      %2079 = vmatprep.subr.bf16.mxu0 0
      %2080 = vmatpush2.bf16.msra.mxu0 0
      %2081 = vmatprep.subr.bf16.mxu0 0
      %2082 = vmatpush2.bf16.msra.mxu0 0
      %2083 = vmatprep.subr.bf16.mxu0 0
      %2084 = vmatpush2.bf16.msra.mxu0 0
      %2085 = vmatprep.subr.bf16.mxu0 0
      %2086 = vmatpush2.bf16.msra.mxu0 0
      %2087 = vmatprep.subr.bf16.mxu0 0
      %2088 = vmatpush2.bf16.msra.mxu0 0
      %2089 = vmatprep.mubr.bf16.mxu0 0
      %2090 = vmatmul.mubr.bf16.gmra.mxu0 %v2043
      %v2091 = vpop.f32.mrf.mxu0
      %v2092 = vadd.f32 0.0, %v2091
      %v2093 = vpop.f32.mrf.mxu0
      %v2094 = vpop.f32.mrf.mxu0
      %v2095 = vadd.f32 0.0, %v2094
      %v2096 = vpop.f32.mrf.mxu0
      %2097 = vmatprep.mubr.bf16.mxu0 0
      %2098 = vmatmul.mubr.bf16.gmra.mxu0 %v2046
      %v2099 = vpop.f32.mrf.mxu0
      %v2100 = vadd.f32 0.0, %v2099
      %v2101 = vpop.f32.mrf.mxu0
      %v2102 = vpop.f32.mrf.mxu0
      %v2103 = vadd.f32 0.0, %v2102
      %v2104 = vpop.f32.mrf.mxu0
      %2105 = vmatprep.mubr.bf16.mxu0 0
      %2106 = vmatmul.mubr.bf16.gmra.mxu0 %v2049
      %v2107 = vpop.f32.mrf.mxu0
      %v2108 = vadd.f32 0.0, %v2107
      %v2109 = vpop.f32.mrf.mxu0
      %v2110 = vpop.f32.mrf.mxu0
      %v2111 = vadd.f32 0.0, %v2110
      %v2112 = vpop.f32.mrf.mxu0
      %2113 = vmatprep.mubr.bf16.mxu0 0
      %2114 = vmatmul.mubr.bf16.gmra.mxu0 %v2052
      %v2115 = vpop.f32.mrf.mxu0
      %v2116 = vadd.f32 0.0, %v2115
      %v2117 = vpop.f32.mrf.mxu0
      %v2118 = vpop.f32.mrf.mxu0
      %v2119 = vadd.f32 0.0, %v2118
      %v2120 = vpop.f32.mrf.mxu0
      %2121 = vdwg.mxu0
      %v2122 = vadd.f32 %v1964, %v2092
      %v2123 = vadd.f32 %v1965, %v2095
      %v2124 = vadd.f32 %v1966, %v2100
      %v2125 = vadd.f32 %v1967, %v2103
      %v2126 = vadd.f32 %v1968, %v2108
      %v2127 = vadd.f32 %v1969, %v2111
      %v2128 = vadd.f32 %v1970, %v2116
      %v2129 = vadd.f32 %v1971, %v2119
      %v2130 = vpack.c.bf16 %v2123, %v2122
      %v2131 = vpack.c.bf16 %v2125, %v2124
      %v2132 = vpack.c.bf16 %v2127, %v2126
      %v2133 = vpack.c.bf16 %v2129, %v2128
      %v2138 = vunpack.c.l.b16 %v2130
      %v2139 = vunpack.c.h.b16 %v2130
      %v2140 = vunpack.c.l.b16 %v2131
      %v2141 = vunpack.c.h.b16 %v2131
      %v2142 = vunpack.c.l.b16 %v2132
      %v2143 = vunpack.c.h.b16 %v2132
      %v2144 = vunpack.c.l.b16 %v2133
      %v2145 = vunpack.c.h.b16 %v2133
      %v2146 = vpack.c.b16 %v2138, %v2138
      %v2147 = vpack.c.b16 %v2139, %v2139
      %v2148 = vpack.c.b16 %v2140, %v2140
      %v2149 = vpack.c.b16 %v2141, %v2141
      %v2150 = vpack.c.b16 %v2142, %v2142
      %v2151 = vpack.c.b16 %v2143, %v2143
      %v2152 = vpack.c.b16 %v2144, %v2144
      %v2153 = vpack.c.b16 %v2145, %v2145
      %vm2162 = vcmask 60416
      %2163 = vst.msk [vmem:[%s292] sm:$0xf] %vm2162, %v2146
      %2164 = vst.msk [vmem:[%s292 + $0x4] sm:$0xf] %vm2162, %v2147
      %2165 = vst.msk [vmem:[%s292 + $0x8] sm:$0xf] %vm2162, %v2148
      %2166 = vst.msk [vmem:[%s292 + $0xc] sm:$0xf] %vm2162, %v2149
      %2167 = vst.msk [vmem:[%s292 + $0x10] sm:$0xf] %vm2162, %v2150
      %2168 = vst.msk [vmem:[%s292 + $0x14] sm:$0xf] %vm2162, %v2151
      %2169 = vst.msk [vmem:[%s292 + $0x18] sm:$0xf] %vm2162, %v2152
      %2170 = vst.msk [vmem:[%s292 + $0x1c] sm:$0xf] %vm2162, %v2153
      %p2171 = scmp.lt.s32.totalorder %s20, 1
      %s2172 = scalar_select %p2171, %s20, 1
      %p2173 = scmp.lt.s32.totalorder %s21, 0
      %s2174 = scalar_select %p2173, %s21, 0
      %s2175 = smul.addr %s2172, 8
      %s2176 = sadd.s32 %s2174, %s2175
      %s2177 = smul.addr %s2176, 4
      %s2178 = scalar_lea.vmem %s5, %s2177
      // Predicated region
      $region45: #{network_block_forward.5} parent=39 // pred_check
        %p2179 = pneg %p170
      $region46: #{network_block_forward.5} parent=39 // pred_check_branch
        %2181 = sbr.rel (%p2179) target = $region48
      $region47: #{network_block_forward.5} parent=39 // pred_region
        _
      $region48: #{network_block_forward.5} parent=39 // pred_fallthru
        _
    $region40: #{network_block_forward.5} parent=5 // pred_fallthru
      _
    %p2182 = scmp.le.s32.totalorder 2, %s11
    // Predicated region
    $region49: #{network_block_forward.5} parent=5 // pred_check
      %p2183 = pneg %p2182
    $region50: #{network_block_forward.5} parent=5 // pred_check_branch
      %2185 = sbr.rel (%p2183) target = $region52
    $region51: #{network_block_forward.5} parent=5 // pred_region
      %s2186 = ssub.s32 %s11, 2
      // Predicated region
      $region53: #{network_block_forward.5} parent=51 // pred_check
        %p2187 = pneg %p176
      $region54: #{network_block_forward.5} parent=51 // pred_check_branch
        %2189 = sbr.rel (%p2187) target = $region56
      $region55: #{network_block_forward.5} parent=51 // pred_region
        %p2190 = scmp.lt.s32.totalorder %s22, 1
        %s2191 = scalar_select %p2190, %s22, 1
        %p2192 = scmp.lt.s32.totalorder %s23, 0
        %s2193 = scalar_select %p2192, %s23, 0
        %s2194 = smul.addr %s2191, 8
        %s2195 = sadd.s32 %s2193, %s2194
        %s2196 = smul.addr %s2195, 4
        %s2197 = scalar_lea.vmem %s5, %s2196
      $region56: #{network_block_forward.5} parent=51 // pred_fallthru
        _
    $region52: #{network_block_forward.5} parent=5 // pred_fallthru
      _
  $region6: #{network_block_forward.5} parent=0 // loop_footer
    %s15 = sadd.s32 1, %s11
  $region7: #{network_block_forward.5} parent=0 // loop_footer_branch
    %10 = sbr.rel target = $region3
  $region8: #{network_block_forward.5} parent=0 // loop_exit
    _

// kernel: network_block_forward.4
$region0: #{network_block_forward.4}
  #allocation0 [shape = 'u32[]', space=smem, size = 0x4, offset = 0x4, fixed_abs, tag = 'smem constant byte address 0x4 - core index']
  #allocation1 [shape = 'u32[144,128]{1,0:T(1,128)}', space=vmem, size = 0x12000, scoped, tag = 'internal scratch']
  #allocation2 [shape = 'bf16[2,2,9,9,4]{4,3,2,1,0:T(8,128)(2,1)}', space=vmem, size = 0x24000, scoped, tag = 'scratch operand']
  %s0 = inlined_call_operand.vmem [shape: f32[2,8,8,4], index: 0, kind: input, shape index: {}]
  %s1 = inlined_call_operand.vmem [shape: f32[2,8,8,4], index: 1, kind: input, shape index: {}]
  %s2 = inlined_call_operand.vmem [shape: f32[2,8,8,4], index: 2, kind: input, shape index: {}]
  %s3 = inlined_call_operand.vmem [shape: f32[2,8,8,4], index: 3, kind: input, shape index: {}]
  %s4 = inlined_call_operand.vmem [shape: f32[1,4], index: 4, kind: input, shape index: {}]
  %s5 = inlined_call_operand.vmem [shape: f32[1,4], index: 5, kind: input, shape index: {}]
  %s6 = inlined_call_operand.vmem [shape: bf16[3,3,4,8], index: 6, kind: input, shape index: {}]
  %s7 = inlined_call_operand.vmem [shape: bf16[4,8], index: 7, kind: input, shape index: {}]
  %s8 = inlined_call_operand.vmem [shape: bf16[2,64,8], index: 8, kind: output, shape index: {0}]
  %s9 = inlined_call_operand.vmem [shape: bf16[2,64,8], index: 9, kind: output, shape index: {1}]
  %10 = xla_tuple %s8, %s9
  %s11 = sld [smem:[#allocation0]]
  $region77: #{network_block_forward.4} parent=0
    _
  %s13 = ssub.s32 1, %s11
  %s14 = scalar_select 0, %s13, %s11
  loop: start=0, step=1, limit=4
  $region2: #{network_block_forward.4} parent=0 // loop_pre_header
    _
  $region3: #{network_block_forward.4} parent=0 // loop_header
    %s16 = sphi 0, %s20
    %p17 = scmp.ge.s32.totalorder %s16, 4
    %s23 = sphi 0, %s35
    %s24 = sphi 0, %s31
    %s25 = sphi 0, %s23
    %s26 = sphi 0, %s24
    %s27 = sphi 0, %s25
    %s28 = sphi 0, %s26
    %s38 = sphi 0, %s40
    %s41 = sphi 0, %s38
    %s42 = sphi 0, %s41
    %s58 = sphi 0, %s42
    %s64 = sphi 0, %s66
    %s67 = sphi 0, %s64
    %s68 = sphi 0, %s67
    %s84 = sphi 0, %s68
    %s90 = sphi 0, %s92
    %s93 = sphi 0, %s90
    %s94 = sphi 0, %s93
    %s110 = sphi 0, %s94
    %s116 = sphi 0, %s118
    %s119 = sphi 0, %s116
    %s120 = sphi 0, %s119
    %s136 = sphi 0, %s120
    %s140 = sphi 0, %s140
    %s142 = sphi 0, %s140
    %s143 = sphi 0, %s142
    %s157 = sphi 0, %s143
    %s161 = sphi 0, %s161
    %s163 = sphi 0, %s161
    %s164 = sphi 0, %s163
    %s178 = sphi 0, %s164
    %s184 = sphi 0, %s186
    %s187 = sphi 0, %s184
    %s188 = sphi 0, %s187
    %s204 = sphi 0, %s188
    %s210 = sphi 0, %s212
    %s213 = sphi 0, %s210
    %s214 = sphi 0, %s213
    %s230 = sphi 0, %s214
    %s238 = sphi 0, %s240
    %s241 = sphi 0, %s238
    %s242 = sphi 0, %s241
    %s258 = sphi 0, %s242
    %s266 = sphi 0, %s268
    %s269 = sphi 0, %s266
    %s270 = sphi 0, %s269
    %s286 = sphi 0, %s270
  $region4: #{network_block_forward.4} parent=0 // loop_header_branch
    %19 = sbr.rel (%p17) target = $region8
  $region5: #{network_block_forward.4} parent=0 // loop_body
    %s21 = ssub.s32 %s16, 1
    %s22 = ssub.s32 %s16, 2
    %s29 = sadd.s32 1, %s24
    %p30 = scmp.ge.s32.totalorder %s29, 1
    %s31 = scalar_select %p30, 0, %s29
    %s32 = sadd.s32 1, %s23
    %s33 = scalar_select %p30, %s32, %s23
    %p34 = scmp.ge.s32.totalorder %s33, 2
    %s35 = scalar_select %p34, 0, %s33
    %s36 = ssub.s32 %s23, %s35
    %p37 = scmp.eq.s32.totalorder %s36, 0
    %s39 = sadd.s32 %s38, 1
    %s40 = scalar_select %p37, %s38, %s39
    %p43 = pneg %p37
    %p44 = scmp.eq.s32.totalorder %s16, 1
    %p45 = por %p43, %p44
    %p46 = scmp.ne.s32.totalorder %s38, %s41
    %p47 = scmp.eq.s32.totalorder %s16, 0
    %p48 = por %p46, %p47
    %p49 = scmp.ne.s32.totalorder %s38, %s41
    %p50 = scmp.eq.s32.totalorder %s21, 1
    %p51 = por %p49, %p50
    %p52 = scmp.ne.s32.totalorder %s41, %s42
    %p53 = scmp.eq.s32.totalorder %s21, 0
    %p54 = por %p52, %p53
    %p55 = scmp.ne.s32.totalorder %s41, %s42
    %p56 = scmp.eq.s32.totalorder %s22, 1
    %p57 = por %p55, %p56
    %p59 = scmp.ne.s32.totalorder %s42, %s58
    %p60 = scmp.eq.s32.totalorder %s22, 0
    %p61 = por %p59, %p60
    %s62 = ssub.s32 %s23, %s35
    %p63 = scmp.eq.s32.totalorder %s62, 0
    %s65 = sadd.s32 %s64, 1
    %s66 = scalar_select %p63, %s64, %s65
    %p69 = pneg %p63
    %p70 = scmp.eq.s32.totalorder %s16, 1
    %p71 = por %p69, %p70
    %p72 = scmp.ne.s32.totalorder %s64, %s67
    %p73 = scmp.eq.s32.totalorder %s16, 0
    %p74 = por %p72, %p73
    %p75 = scmp.ne.s32.totalorder %s64, %s67
    %p76 = scmp.eq.s32.totalorder %s21, 1
    %p77 = por %p75, %p76
    %p78 = scmp.ne.s32.totalorder %s67, %s68
    %p79 = scmp.eq.s32.totalorder %s21, 0
    %p80 = por %p78, %p79
    %p81 = scmp.ne.s32.totalorder %s67, %s68
    %p82 = scmp.eq.s32.totalorder %s22, 1
    %p83 = por %p81, %p82
    %p85 = scmp.ne.s32.totalorder %s68, %s84
    %p86 = scmp.eq.s32.totalorder %s22, 0
    %p87 = por %p85, %p86
    %s88 = ssub.s32 %s23, %s35
    %p89 = scmp.eq.s32.totalorder %s88, 0
    %s91 = sadd.s32 %s90, 1
    %s92 = scalar_select %p89, %s90, %s91
    %p95 = pneg %p89
    %p96 = scmp.eq.s32.totalorder %s16, 1
    %p97 = por %p95, %p96
    %p98 = scmp.ne.s32.totalorder %s90, %s93
    %p99 = scmp.eq.s32.totalorder %s16, 0
    %p100 = por %p98, %p99
    %p101 = scmp.ne.s32.totalorder %s90, %s93
    %p102 = scmp.eq.s32.totalorder %s21, 1
    %p103 = por %p101, %p102
    %p104 = scmp.ne.s32.totalorder %s93, %s94
    %p105 = scmp.eq.s32.totalorder %s21, 0
    %p106 = por %p104, %p105
    %p107 = scmp.ne.s32.totalorder %s93, %s94
    %p108 = scmp.eq.s32.totalorder %s22, 1
    %p109 = por %p107, %p108
    %p111 = scmp.ne.s32.totalorder %s94, %s110
    %p112 = scmp.eq.s32.totalorder %s22, 0
    %p113 = por %p111, %p112
    %s114 = ssub.s32 %s23, %s35
    %p115 = scmp.eq.s32.totalorder %s114, 0
    %s117 = sadd.s32 %s116, 1
    %s118 = scalar_select %p115, %s116, %s117
    %p121 = pneg %p115
    %p122 = scmp.eq.s32.totalorder %s16, 1
    %p123 = por %p121, %p122
    %p124 = scmp.ne.s32.totalorder %s116, %s119
    %p125 = scmp.eq.s32.totalorder %s16, 0
    %p126 = por %p124, %p125
    %p127 = scmp.ne.s32.totalorder %s116, %s119
    %p128 = scmp.eq.s32.totalorder %s21, 1
    %p129 = por %p127, %p128
    %p130 = scmp.ne.s32.totalorder %s119, %s120
    %p131 = scmp.eq.s32.totalorder %s21, 0
    %p132 = por %p130, %p131
    %p133 = scmp.ne.s32.totalorder %s119, %s120
    %p134 = scmp.eq.s32.totalorder %s22, 1
    %p135 = por %p133, %p134
    %p137 = scmp.ne.s32.totalorder %s120, %s136
    %p138 = scmp.eq.s32.totalorder %s22, 0
    %p139 = por %p137, %p138
    %s141 = sadd.s32 %s140, 1
    %p144 = scmp.eq.s32.totalorder %s16, 1
    %p145 = scmp.ne.s32.totalorder %s140, %s142
    %p146 = scmp.eq.s32.totalorder %s16, 0
    %p147 = por %p145, %p146
    %p148 = scmp.ne.s32.totalorder %s140, %s142
    %p149 = scmp.eq.s32.totalorder %s21, 1
    %p150 = por %p148, %p149
    %p151 = scmp.ne.s32.totalorder %s142, %s143
    %p152 = scmp.eq.s32.totalorder %s21, 0
    %p153 = por %p151, %p152
    %p154 = scmp.ne.s32.totalorder %s142, %s143
    %p155 = scmp.eq.s32.totalorder %s22, 1
    %p156 = por %p154, %p155
    %p158 = scmp.ne.s32.totalorder %s143, %s157
    %p159 = scmp.eq.s32.totalorder %s22, 0
    %p160 = por %p158, %p159
    %s162 = sadd.s32 %s161, 1
    %p165 = scmp.eq.s32.totalorder %s16, 1
    %p166 = scmp.ne.s32.totalorder %s161, %s163
    %p167 = scmp.eq.s32.totalorder %s16, 0
    %p168 = por %p166, %p167
    %p169 = scmp.ne.s32.totalorder %s161, %s163
    %p170 = scmp.eq.s32.totalorder %s21, 1
    %p171 = por %p169, %p170
    %p172 = scmp.ne.s32.totalorder %s163, %s164
    %p173 = scmp.eq.s32.totalorder %s21, 0
    %p174 = por %p172, %p173
    %p175 = scmp.ne.s32.totalorder %s163, %s164
    %p176 = scmp.eq.s32.totalorder %s22, 1
    %p177 = por %p175, %p176
    %p179 = scmp.ne.s32.totalorder %s164, %s178
    %p180 = scmp.eq.s32.totalorder %s22, 0
    %p181 = por %p179, %p180
    %s182 = ssub.s32 %s24, %s31
    %p183 = scmp.eq.s32.totalorder %s182, 0
    %s185 = sadd.s32 %s184, 1
    %s186 = scalar_select %p183, %s184, %s185
    %p189 = pneg %p183
    %p190 = scmp.eq.s32.totalorder %s16, 1
    %p191 = por %p189, %p190
    %p192 = scmp.ne.s32.totalorder %s184, %s187
    %p193 = scmp.eq.s32.totalorder %s16, 0
    %p194 = por %p192, %p193
    %p195 = scmp.ne.s32.totalorder %s184, %s187
    %p196 = scmp.eq.s32.totalorder %s21, 1
    %p197 = por %p195, %p196
    %p198 = scmp.ne.s32.totalorder %s187, %s188
    %p199 = scmp.eq.s32.totalorder %s21, 0
    %p200 = por %p198, %p199
    %p201 = scmp.ne.s32.totalorder %s187, %s188
    %p202 = scmp.eq.s32.totalorder %s22, 1
    %p203 = por %p201, %p202
    %p205 = scmp.ne.s32.totalorder %s188, %s204
    %p206 = scmp.eq.s32.totalorder %s22, 0
    %p207 = por %p205, %p206
    %s208 = ssub.s32 %s24, %s31
    %p209 = scmp.eq.s32.totalorder %s208, 0
    %s211 = sadd.s32 %s210, 1
    %s212 = scalar_select %p209, %s210, %s211
    %p215 = pneg %p209
    %p216 = scmp.eq.s32.totalorder %s16, 1
    %p217 = por %p215, %p216
    %p218 = scmp.ne.s32.totalorder %s210, %s213
    %p219 = scmp.eq.s32.totalorder %s16, 0
    %p220 = por %p218, %p219
    %p221 = scmp.ne.s32.totalorder %s210, %s213
    %p222 = scmp.eq.s32.totalorder %s21, 1
    %p223 = por %p221, %p222
    %p224 = scmp.ne.s32.totalorder %s213, %s214
    %p225 = scmp.eq.s32.totalorder %s21, 0
    %p226 = por %p224, %p225
    %p227 = scmp.ne.s32.totalorder %s213, %s214
    %p228 = scmp.eq.s32.totalorder %s22, 1
    %p229 = por %p227, %p228
    %p231 = scmp.ne.s32.totalorder %s214, %s230
    %p232 = scmp.eq.s32.totalorder %s22, 0
    %p233 = por %p231, %p232
    %s234 = ssub.s32 %s23, %s35
    %s235 = ssub.s32 %s24, %s31
    %s236 = sor.u32 %s234, %s235
    %p237 = scmp.eq.s32.totalorder %s236, 0
    %s239 = sadd.s32 %s238, 1
    %s240 = scalar_select %p237, %s238, %s239
    %p243 = pneg %p237
    %p244 = scmp.eq.s32.totalorder %s16, 1
    %p245 = por %p243, %p244
    %p246 = scmp.ne.s32.totalorder %s238, %s241
    %p247 = scmp.eq.s32.totalorder %s16, 0
    %p248 = por %p246, %p247
    %p249 = scmp.ne.s32.totalorder %s238, %s241
    %p250 = scmp.eq.s32.totalorder %s21, 1
    %p251 = por %p249, %p250
    %p252 = scmp.ne.s32.totalorder %s241, %s242
    %p253 = scmp.eq.s32.totalorder %s21, 0
    %p254 = por %p252, %p253
    %p255 = scmp.ne.s32.totalorder %s241, %s242
    %p256 = scmp.eq.s32.totalorder %s22, 1
    %p257 = por %p255, %p256
    %p259 = scmp.ne.s32.totalorder %s242, %s258
    %p260 = scmp.eq.s32.totalorder %s22, 0
    %p261 = por %p259, %p260
    %s262 = ssub.s32 %s23, %s35
    %s263 = ssub.s32 %s24, %s31
    %s264 = sor.u32 %s262, %s263
    %p265 = scmp.eq.s32.totalorder %s264, 0
    %s267 = sadd.s32 %s266, 1
    %s268 = scalar_select %p265, %s266, %s267
    %p271 = pneg %p265
    %p272 = scmp.eq.s32.totalorder %s16, 1
    %p273 = por %p271, %p272
    %p274 = scmp.ne.s32.totalorder %s266, %s269
    %p275 = scmp.eq.s32.totalorder %s16, 0
    %p276 = por %p274, %p275
    %p277 = scmp.ne.s32.totalorder %s266, %s269
    %p278 = scmp.eq.s32.totalorder %s21, 1
    %p279 = por %p277, %p278
    %p280 = scmp.ne.s32.totalorder %s269, %s270
    %p281 = scmp.eq.s32.totalorder %s21, 0
    %p282 = por %p280, %p281
    %p283 = scmp.ne.s32.totalorder %s269, %s270
    %p284 = scmp.eq.s32.totalorder %s22, 1
    %p285 = por %p283, %p284
    %p287 = scmp.ne.s32.totalorder %s270, %s286
    %p288 = scmp.eq.s32.totalorder %s22, 0
    %p289 = por %p287, %p288
    %p290 = scmp.le.s32.totalorder 1, %s16
    %p291 = scmp.lt.s32.totalorder %s16, 3
    %p292 = pnand %p290, %p291
    %p293 = pneg %p292
    // Predicated region
    $region9: #{network_block_forward.4} parent=5 // pred_check
      _
    $region10: #{network_block_forward.4} parent=5 // pred_check_branch
      %295 = sbr.rel (%p292) target = $region12
    $region11: #{network_block_forward.4} parent=5 // pred_region
      %s296 = ssub.s32 %s16, 1
      // Predicated region
      $region13: #{network_block_forward.4} parent=11 // pred_check
        %p297 = pneg %p153
      $region14: #{network_block_forward.4} parent=11 // pred_check_branch
        %299 = sbr.rel (%p297) target = $region16
      $region15: #{network_block_forward.4} parent=11 // pred_region
        _
      $region16: #{network_block_forward.4} parent=11 // pred_fallthru
        _
      // Predicated region
      $region17: #{network_block_forward.4} parent=11 // pred_check
        %p300 = pneg %p174
      $region18: #{network_block_forward.4} parent=11 // pred_check_branch
        %302 = sbr.rel (%p300) target = $region20
      $region19: #{network_block_forward.4} parent=11 // pred_region
        _
      $region20: #{network_block_forward.4} parent=11 // pred_fallthru
        _
      // Predicated region
      $region21: #{network_block_forward.4} parent=11 // pred_check
        %p303 = pneg %p200
      $region22: #{network_block_forward.4} parent=11 // pred_check_branch
        %305 = sbr.rel (%p303) target = $region24
      $region23: #{network_block_forward.4} parent=11 // pred_region
        %p306 = scmp.lt.s32.totalorder %s26, 0
        %s307 = scalar_select %p306, %s26, 0
        %s308 = smul.addr %s307, 2
        %s309 = scalar_lea.vmem %s6, %s308
      $region24: #{network_block_forward.4} parent=11 // pred_fallthru
        _
      // Predicated region
      $region25: #{network_block_forward.4} parent=11 // pred_check
        %p310 = pneg %p226
      $region26: #{network_block_forward.4} parent=11 // pred_check_branch
        %312 = sbr.rel (%p310) target = $region28
      $region27: #{network_block_forward.4} parent=11 // pred_region
        %p313 = scmp.lt.s32.totalorder %s26, 0
        %s314 = scalar_select %p313, %s26, 0
        %s315 = smul.addr %s314, 2
        %s316 = scalar_lea.vmem %s7, %s315
      $region28: #{network_block_forward.4} parent=11 // pred_fallthru
        _
    $region12: #{network_block_forward.4} parent=5 // pred_fallthru
      _
    %p317 = scmp.lt.s32.totalorder %s16, 2
    // Predicated region
    $region29: #{network_block_forward.4} parent=5 // pred_check
      %p318 = pneg %p317
    $region30: #{network_block_forward.4} parent=5 // pred_check_branch
      %320 = sbr.rel (%p318) target = $region32
    $region31: #{network_block_forward.4} parent=5 // pred_region
      // Predicated region
      $region33: #{network_block_forward.4} parent=31 // pred_check
        %p321 = pneg %p48
      $region34: #{network_block_forward.4} parent=31 // pred_check_branch
        %323 = sbr.rel (%p321) target = $region36
      $region35: #{network_block_forward.4} parent=31 // pred_region
        %p324 = scmp.lt.s32.totalorder %s23, 1
        %s325 = scalar_select %p324, %s23, 1
        %s326 = smul.addr %s325, 8
        %s327 = smul.addr %s326, 8
        %s328 = scalar_lea.vmem %s0, %s327
      $region36: #{network_block_forward.4} parent=31 // pred_fallthru
        _
      // Predicated region
      $region37: #{network_block_forward.4} parent=31 // pred_check
        %p329 = pneg %p74
      $region38: #{network_block_forward.4} parent=31 // pred_check_branch
        %331 = sbr.rel (%p329) target = $region40
      $region39: #{network_block_forward.4} parent=31 // pred_region
        %p332 = scmp.lt.s32.totalorder %s23, 1
        %s333 = scalar_select %p332, %s23, 1
        %s334 = smul.addr %s333, 8
        %s335 = smul.addr %s334, 8
        %s336 = scalar_lea.vmem %s1, %s335
      $region40: #{network_block_forward.4} parent=31 // pred_fallthru
        _
      // Predicated region
      $region41: #{network_block_forward.4} parent=31 // pred_check
        %p337 = pneg %p100
      $region42: #{network_block_forward.4} parent=31 // pred_check_branch
        %339 = sbr.rel (%p337) target = $region44
      $region43: #{network_block_forward.4} parent=31 // pred_region
        %p340 = scmp.lt.s32.totalorder %s23, 1
        %s341 = scalar_select %p340, %s23, 1
        %s342 = smul.addr %s341, 8
        %s343 = smul.addr %s342, 8
        %s344 = scalar_lea.vmem %s2, %s343
      $region44: #{network_block_forward.4} parent=31 // pred_fallthru
        _
      // Predicated region
      $region45: #{network_block_forward.4} parent=31 // pred_check
        %p345 = pneg %p126
      $region46: #{network_block_forward.4} parent=31 // pred_check_branch
        %347 = sbr.rel (%p345) target = $region48
      $region47: #{network_block_forward.4} parent=31 // pred_region
        %p348 = scmp.lt.s32.totalorder %s23, 1
        %s349 = scalar_select %p348, %s23, 1
        %s350 = smul.addr %s349, 8
        %s351 = smul.addr %s350, 8
        %s352 = scalar_lea.vmem %s3, %s351
      $region48: #{network_block_forward.4} parent=31 // pred_fallthru
        _
    $region32: #{network_block_forward.4} parent=5 // pred_fallthru
      _
    %p353 = scmp.le.s32.totalorder 1, %s16
    %p354 = scmp.lt.s32.totalorder %s16, 3
    %p355 = pnand %p353, %p354
    %p356 = pneg %p355
    // Predicated region
    $region49: #{network_block_forward.4} parent=5 // pred_check
      _
    $region50: #{network_block_forward.4} parent=5 // pred_check_branch
      %358 = sbr.rel (%p355) target = $region52
    $region51: #{network_block_forward.4} parent=5 // pred_region
      %s359 = ssub.s32 %s16, 1
      %p360 = scmp.lt.s32.totalorder %s25, 1
      %s361 = scalar_select %p360, %s25, 1
      %s362 = smul.addr %s361, 8
      %s363 = smul.addr %s362, 8
      %s364 = scalar_lea.vmem %s0, %s363
      %p365 = pneg %p54
      %p366 = pneg %p51
      %p367 = scmp.lt.s32.totalorder %s25, 1
      %s368 = scalar_select %p367, %s25, 1
      %s369 = smul.addr %s368, 8
      %s370 = smul.addr %s369, 8
      %s371 = scalar_lea.vmem %s1, %s370
      %p372 = pneg %p80
      %p373 = pneg %p77
      %p374 = scmp.lt.s32.totalorder %s25, 1
      %s375 = scalar_select %p374, %s25, 1
      %s376 = smul.addr %s375, 8
      %s377 = smul.addr %s376, 8
      %s378 = scalar_lea.vmem %s2, %s377
      %p379 = pneg %p106
      %p380 = pneg %p103
      %p381 = scmp.lt.s32.totalorder %s25, 1
      %s382 = scalar_select %p381, %s25, 1
      %s383 = smul.addr %s382, 8
      %s384 = smul.addr %s383, 8
      %s385 = scalar_lea.vmem %s3, %s384
      %p386 = pneg %p132
      %p387 = pneg %p129
      %p388 = pneg %p153
      %p389 = pneg %p150
      %p390 = pneg %p174
      %p391 = pneg %p171
      %p392 = scmp.lt.s32.totalorder %s26, 0
      %s393 = scalar_select %p392, %s26, 0
      %s394 = smul.addr %s393, 2
      %s395 = scalar_lea.vmem %s6, %s394
      %p396 = pneg %p200
      %p397 = pneg %p197
      %p398 = scmp.lt.s32.totalorder %s26, 0
      %s399 = scalar_select %p398, %s26, 0
      %s400 = smul.addr %s399, 2
      %s401 = scalar_lea.vmem %s7, %s400
      %p402 = pneg %p226
      %p403 = pneg %p223
      %p404 = pneg %p254
      %p405 = pneg %p251
      %p406 = scmp.lt.s32.totalorder %s25, 1
      %s407 = scalar_select %p406, %s25, 1
      %p408 = scmp.lt.s32.totalorder %s26, 0
      %s409 = scalar_select %p408, %s26, 0
      %s410 = smul.addr %s407, 8
      %s411 = sadd.s32 %s409, %s410
      %s412 = smul.addr %s411, 4
      %s413 = scalar_lea.vmem %s8, %s412
      %p414 = pneg %p282
      %p415 = pneg %p279
      %p416 = scmp.lt.s32.totalorder %s25, 1
      %s417 = scalar_select %p416, %s25, 1
      %p418 = scmp.lt.s32.totalorder %s26, 0
      %s419 = scalar_select %p418, %s26, 0
      %s420 = smul.addr %s417, 8
      %s421 = sadd.s32 %s419, %s420
      %s422 = smul.addr %s421, 4
      %s423 = scalar_lea.vmem %s9, %s422
      %p424 = scmp.lt.s32.totalorder %s25, 1
      %s425 = scalar_select %p424, %s25, 1
      %s426 = smul.addr %s425, 8
      %s427 = smul.addr %s426, 8
      %s428 = scalar_lea.vmem %s0, %s427
      %p429 = scmp.lt.s32.totalorder %s25, 1
      %s430 = scalar_select %p429, %s25, 1
      %s431 = smul.addr %s430, 8
      %s432 = smul.addr %s431, 8
      %s433 = scalar_lea.vmem %s1, %s432
      %p434 = scmp.lt.s32.totalorder %s25, 1
      %s435 = scalar_select %p434, %s25, 1
      %s436 = smul.addr %s435, 8
      %s437 = smul.addr %s436, 8
      %s438 = scalar_lea.vmem %s2, %s437
      %p439 = scmp.lt.s32.totalorder %s25, 1
      %s440 = scalar_select %p439, %s25, 1
      %s441 = smul.addr %s440, 8
      %s442 = smul.addr %s441, 8
      %s443 = scalar_lea.vmem %s3, %s442
      %p444 = scmp.lt.s32.totalorder %s26, 0
      %s445 = scalar_select %p444, %s26, 0
      %s446 = smul.addr %s445, 2
      %s447 = scalar_lea.vmem %s6, %s446
      %p448 = scmp.lt.s32.totalorder %s26, 0
      %s449 = scalar_select %p448, %s26, 0
      %s450 = smul.addr %s449, 2
      %s451 = scalar_lea.vmem %s7, %s450
      %p452 = scmp.lt.s32.totalorder %s25, 1
      %s453 = scalar_select %p452, %s25, 1
      %p454 = scmp.lt.s32.totalorder %s26, 0
      %s455 = scalar_select %p454, %s26, 0
      %s456 = smul.addr %s453, 8
      %s457 = sadd.s32 %s455, %s456
      %s458 = smul.addr %s457, 4
      %s459 = scalar_lea.vmem %s8, %s458
      %p460 = scmp.lt.s32.totalorder %s25, 1
      %s461 = scalar_select %p460, %s25, 1
      %p462 = scmp.lt.s32.totalorder %s26, 0
      %s463 = scalar_select %p462, %s26, 0
      %s464 = smul.addr %s461, 8
      %s465 = sadd.s32 %s463, %s464
      %s466 = smul.addr %s465, 4
      %s467 = scalar_lea.vmem %s9, %s466
      %p469 = scmp.eq.s32.totalorder %s26, 0
      // Predicated region
      $region53: #{network_block_forward.4} parent=51 // pred_check
        %p470 = pneg %p469
      $region54: #{network_block_forward.4} parent=51 // pred_check_branch
        %472 = sbr.rel (%p470) target = $region56
      $region55: #{network_block_forward.4} parent=51 // pred_region
        %vm473 = vcmask 27648
        %474 = vst.msk [vmem:[#allocation2] sm:$0xf] %vm473, 0
        %vm475 = vcmask 24576
        %vm476 = vsmask.f32 256
        %vm477 = vmand %vm475, %vm476
        %v478 = vld [vmem:[#allocation2 + $0x4] sm:$0x1]
        %v479 = vsel %vm477, 0, %v478
        %480 = vst [vmem:[#allocation2 + $0x4] sm:$0x1] %v479
        %481 = vst.msk [vmem:[#allocation2 + $0x8] sm:$0xf] %vm473, 0
        %v482 = vld [vmem:[#allocation2 + $0xc] sm:$0x1]
        %v483 = vsel %vm477, 0, %v482
        %484 = vst [vmem:[#allocation2 + $0xc] sm:$0x1] %v483
        %485 = vst.msk [vmem:[#allocation2 + $0x10] sm:$0xf] %vm473, 0
        %v486 = vld [vmem:[#allocation2 + $0x14] sm:$0x1]
        %v487 = vsel %vm477, 0, %v486
        %488 = vst [vmem:[#allocation2 + $0x14] sm:$0x1] %v487
        %489 = vst.msk [vmem:[#allocation2 + $0x18] sm:$0xf] %vm473, 0
        %v490 = vld [vmem:[#allocation2 + $0x1c] sm:$0x1]
        %v491 = vsel %vm477, 0, %v490
        %492 = vst [vmem:[#allocation2 + $0x1c] sm:$0x1] %v491
        %493 = vst.msk [vmem:[#allocation2 + $0x20] sm:$0xf] %vm473, 0
        %v494 = vld [vmem:[#allocation2 + $0x24] sm:$0x1]
        %v495 = vsel %vm477, 0, %v494
        %496 = vst [vmem:[#allocation2 + $0x24] sm:$0x1] %v495
        %497 = vst.msk [vmem:[#allocation2 + $0x28] sm:$0xf] %vm473, 0
        %v498 = vld [vmem:[#allocation2 + $0x2c] sm:$0x1]
        %v499 = vsel %vm477, 0, %v498
        %500 = vst [vmem:[#allocation2 + $0x2c] sm:$0x1] %v499
        %501 = vst.msk [vmem:[#allocation2 + $0x30] sm:$0xf] %vm473, 0
        %v502 = vld [vmem:[#allocation2 + $0x34] sm:$0x1]
        %v503 = vsel %vm477, 0, %v502
        %504 = vst [vmem:[#allocation2 + $0x34] sm:$0x1] %v503
        %505 = vst.msk [vmem:[#allocation2 + $0x38] sm:$0xf] %vm473, 0
        %v506 = vld [vmem:[#allocation2 + $0x3c] sm:$0x1]
        %v507 = vsel %vm477, 0, %v506
        %508 = vst [vmem:[#allocation2 + $0x3c] sm:$0x1] %v507
        %509 = vst.msk [vmem:[#allocation2 + $0x40] sm:$0xf] %vm473, 0
        %v510 = vld [vmem:[#allocation2 + $0x44] sm:$0x1]
        %v511 = vsel %vm477, 0, %v510
        %512 = vst [vmem:[#allocation2 + $0x44] sm:$0x1] %v511
        %513 = vst.msk [vmem:[#allocation2 + $0x48] sm:$0xf] %vm473, 0
        %v514 = vld [vmem:[#allocation2 + $0x4c] sm:$0x1]
        %v515 = vsel %vm477, 0, %v514
        %516 = vst [vmem:[#allocation2 + $0x4c] sm:$0x1] %v515
        %517 = vst.msk [vmem:[#allocation2 + $0x50] sm:$0xf] %vm473, 0
        %v518 = vld [vmem:[#allocation2 + $0x54] sm:$0x1]
        %v519 = vsel %vm477, 0, %v518
        %520 = vst [vmem:[#allocation2 + $0x54] sm:$0x1] %v519
        %521 = vst.msk [vmem:[#allocation2 + $0x58] sm:$0xf] %vm473, 0
        %v522 = vld [vmem:[#allocation2 + $0x5c] sm:$0x1]
        %v523 = vsel %vm477, 0, %v522
        %524 = vst [vmem:[#allocation2 + $0x5c] sm:$0x1] %v523
        %525 = vst.msk [vmem:[#allocation2 + $0x60] sm:$0xf] %vm473, 0
        %v526 = vld [vmem:[#allocation2 + $0x64] sm:$0x1]
        %v527 = vsel %vm477, 0, %v526
        %528 = vst [vmem:[#allocation2 + $0x64] sm:$0x1] %v527
        %529 = vst.msk [vmem:[#allocation2 + $0x68] sm:$0xf] %vm473, 0
        %v530 = vld [vmem:[#allocation2 + $0x6c] sm:$0x1]
        %v531 = vsel %vm477, 0, %v530
        %532 = vst [vmem:[#allocation2 + $0x6c] sm:$0x1] %v531
        %533 = vst.msk [vmem:[#allocation2 + $0x70] sm:$0xf] %vm473, 0
        %v534 = vld [vmem:[#allocation2 + $0x74] sm:$0x1]
        %v535 = vsel %vm477, 0, %v534
        %536 = vst [vmem:[#allocation2 + $0x74] sm:$0x1] %v535
        %537 = vst.msk [vmem:[#allocation2 + $0x78] sm:$0xf] %vm473, 0
        %v538 = vld [vmem:[#allocation2 + $0x7c] sm:$0x1]
        %v539 = vsel %vm477, 0, %v538
        %540 = vst [vmem:[#allocation2 + $0x7c] sm:$0x1] %v539
        %541 = vst.msk [vmem:[#allocation2 + $0x80] sm:$0xf] %vm473, 0
        %v542 = vld [vmem:[#allocation2 + $0x84] sm:$0x1]
        %v543 = vsel %vm477, 0, %v542
        %544 = vst [vmem:[#allocation2 + $0x84] sm:$0x1] %v543
        %545 = vst.msk [vmem:[#allocation2 + $0x88] sm:$0xf] %vm473, 0
        %v546 = vld [vmem:[#allocation2 + $0x8c] sm:$0x1]
        %v547 = vsel %vm477, 0, %v546
        %548 = vst [vmem:[#allocation2 + $0x8c] sm:$0x1] %v547
        %549 = vst.msk [vmem:[#allocation2 + $0x90] sm:$0xf] %vm473, 0
        %v550 = vld [vmem:[#allocation2 + $0x94] sm:$0x1]
        %v551 = vsel %vm477, 0, %v550
        %552 = vst [vmem:[#allocation2 + $0x94] sm:$0x1] %v551
        %553 = vst.msk [vmem:[#allocation2 + $0x98] sm:$0xf] %vm473, 0
        %v554 = vld [vmem:[#allocation2 + $0x9c] sm:$0x1]
        %v555 = vsel %vm477, 0, %v554
        %556 = vst [vmem:[#allocation2 + $0x9c] sm:$0x1] %v555
        %557 = vst.msk [vmem:[#allocation2 + $0xa0] sm:$0xf] %vm473, 0
        %v558 = vld [vmem:[#allocation2 + $0xa4] sm:$0x1]
        %v559 = vsel %vm477, 0, %v558
        %560 = vst [vmem:[#allocation2 + $0xa4] sm:$0x1] %v559
        %561 = vst.msk [vmem:[#allocation2 + $0xa8] sm:$0xf] %vm473, 0
        %v562 = vld [vmem:[#allocation2 + $0xac] sm:$0x1]
        %v563 = vsel %vm477, 0, %v562
        %564 = vst [vmem:[#allocation2 + $0xac] sm:$0x1] %v563
        %565 = vst.msk [vmem:[#allocation2 + $0xb0] sm:$0xf] %vm473, 0
        %v566 = vld [vmem:[#allocation2 + $0xb4] sm:$0x1]
        %v567 = vsel %vm477, 0, %v566
        %568 = vst [vmem:[#allocation2 + $0xb4] sm:$0x1] %v567
        %569 = vst.msk [vmem:[#allocation2 + $0xb8] sm:$0xf] %vm473, 0
        %v570 = vld [vmem:[#allocation2 + $0xbc] sm:$0x1]
        %v571 = vsel %vm477, 0, %v570
        %572 = vst [vmem:[#allocation2 + $0xbc] sm:$0x1] %v571
        %573 = vst.msk [vmem:[#allocation2 + $0xc0] sm:$0xf] %vm473, 0
        %v574 = vld [vmem:[#allocation2 + $0xc4] sm:$0x1]
        %v575 = vsel %vm477, 0, %v574
        %576 = vst [vmem:[#allocation2 + $0xc4] sm:$0x1] %v575
        %577 = vst.msk [vmem:[#allocation2 + $0xc8] sm:$0xf] %vm473, 0
        %v578 = vld [vmem:[#allocation2 + $0xcc] sm:$0x1]
        %v579 = vsel %vm477, 0, %v578
        %580 = vst [vmem:[#allocation2 + $0xcc] sm:$0x1] %v579
        %581 = vst.msk [vmem:[#allocation2 + $0xd0] sm:$0xf] %vm473, 0
        %v582 = vld [vmem:[#allocation2 + $0xd4] sm:$0x1]
        %v583 = vsel %vm477, 0, %v582
        %584 = vst [vmem:[#allocation2 + $0xd4] sm:$0x1] %v583
        %585 = vst.msk [vmem:[#allocation2 + $0xd8] sm:$0xf] %vm473, 0
        %v586 = vld [vmem:[#allocation2 + $0xdc] sm:$0x1]
        %v587 = vsel %vm477, 0, %v586
        %588 = vst [vmem:[#allocation2 + $0xdc] sm:$0x1] %v587
        %589 = vst.msk [vmem:[#allocation2 + $0xe0] sm:$0xf] %vm473, 0
        %v590 = vld [vmem:[#allocation2 + $0xe4] sm:$0x1]
        %v591 = vsel %vm477, 0, %v590
        %592 = vst [vmem:[#allocation2 + $0xe4] sm:$0x1] %v591
        %593 = vst.msk [vmem:[#allocation2 + $0xe8] sm:$0xf] %vm473, 0
        %v594 = vld [vmem:[#allocation2 + $0xec] sm:$0x1]
        %v595 = vsel %vm477, 0, %v594
        %596 = vst [vmem:[#allocation2 + $0xec] sm:$0x1] %v595
        %597 = vst.msk [vmem:[#allocation2 + $0xf0] sm:$0xf] %vm473, 0
        %v598 = vld [vmem:[#allocation2 + $0xf4] sm:$0x1]
        %v599 = vsel %vm477, 0, %v598
        %600 = vst [vmem:[#allocation2 + $0xf4] sm:$0x1] %v599
        %601 = vst.msk [vmem:[#allocation2 + $0xf8] sm:$0xf] %vm473, 0
        %v602 = vld [vmem:[#allocation2 + $0xfc] sm:$0x1]
        %v603 = vsel %vm477, 0, %v602
        %604 = vst [vmem:[#allocation2 + $0xfc] sm:$0x1] %v603
        %605 = vst.msk [vmem:[#allocation2 + $0x100] sm:$0xf] %vm473, 0
        %v606 = vld [vmem:[#allocation2 + $0x104] sm:$0x1]
        %v607 = vsel %vm477, 0, %v606
        %608 = vst [vmem:[#allocation2 + $0x104] sm:$0x1] %v607
        %609 = vst.msk [vmem:[#allocation2 + $0x108] sm:$0xf] %vm473, 0
        %v610 = vld [vmem:[#allocation2 + $0x10c] sm:$0x1]
        %v611 = vsel %vm477, 0, %v610
        %612 = vst [vmem:[#allocation2 + $0x10c] sm:$0x1] %v611
        %613 = vst.msk [vmem:[#allocation2 + $0x110] sm:$0xf] %vm473, 0
        %v614 = vld [vmem:[#allocation2 + $0x114] sm:$0x1]
        %v615 = vsel %vm477, 0, %v614
        %616 = vst [vmem:[#allocation2 + $0x114] sm:$0x1] %v615
        %617 = vst.msk [vmem:[#allocation2 + $0x118] sm:$0xf] %vm473, 0
        %v618 = vld [vmem:[#allocation2 + $0x11c] sm:$0x1]
        %v619 = vsel %vm477, 0, %v618
        %620 = vst [vmem:[#allocation2 + $0x11c] sm:$0x1] %v619
        %v621 = vld [vmem:[%s4] sm:$0x1]
        %v622 = vld [vmem:[%s5] sm:$0x1]
        %v623 = vld [vmem:[%s428] sm:$0xff]
        %v624 = vld [vmem:[%s428 + $0x8] sm:$0xff]
        %v625 = vld [vmem:[%s428 + $0x10] sm:$0xff]
        %v626 = vld [vmem:[%s428 + $0x18] sm:$0xff]
        %v627 = vld [vmem:[%s428 + $0x20] sm:$0xff]
        %v628 = vld [vmem:[%s428 + $0x28] sm:$0xff]
        %v629 = vld [vmem:[%s428 + $0x30] sm:$0xff]
        %v630 = vld [vmem:[%s428 + $0x38] sm:$0xff]
        %v632 = vlaneseq
        %v633 = vshrl.u32 %v632, 7
        %v634 = vsub.s32 0, %v633
        %v635 = vrot.slane %v621, %v634
        %v637 = vmul.f32 %v623, %v635
        %v638 = vmul.f32 %v624, %v635
        %v639 = vmul.f32 %v625, %v635
        %v640 = vmul.f32 %v626, %v635
        %v641 = vmul.f32 %v627, %v635
        %v642 = vmul.f32 %v628, %v635
        %v643 = vmul.f32 %v629, %v635
        %v644 = vmul.f32 %v630, %v635
        %v646 = vlaneseq
        %v647 = vshrl.u32 %v646, 7
        %v648 = vsub.s32 0, %v647
        %v649 = vrot.slane %v622, %v648
        %v651 = vadd.f32 %v637, %v649
        %v652 = vadd.f32 %v638, %v649
        %v653 = vadd.f32 %v639, %v649
        %v654 = vadd.f32 %v640, %v649
        %v655 = vadd.f32 %v641, %v649
        %v656 = vadd.f32 %v642, %v649
        %v657 = vadd.f32 %v643, %v649
        %v658 = vadd.f32 %v644, %v649
        %v659 = vmax.f32 %v651, 0.0
        %v660 = vmax.f32 %v652, 0.0
        %v661 = vmax.f32 %v653, 0.0
        %v662 = vmax.f32 %v654, 0.0
        %v663 = vmax.f32 %v655, 0.0
        %v664 = vmax.f32 %v656, 0.0
        %v665 = vmax.f32 %v657, 0.0
        %v666 = vmax.f32 %v658, 0.0
        %v667 = vpack.c.bf16 %v659, %v659
        %v668 = vpack.c.bf16 %v660, %v660
        %v669 = vpack.c.bf16 %v661, %v661
        %v670 = vpack.c.bf16 %v662, %v662
        %v671 = vpack.c.bf16 %v663, %v663
        %v672 = vpack.c.bf16 %v664, %v664
        %v673 = vpack.c.bf16 %v665, %v665
        %v674 = vpack.c.bf16 %v666, %v666
        %675 = vst.msk [vmem:[#allocation2] sm:$0xf] %vm473, %v667
        %676 = vst.msk [vmem:[#allocation2 + $0x8] sm:$0xf] %vm473, %v668
        %677 = vst.msk [vmem:[#allocation2 + $0x10] sm:$0xf] %vm473, %v669
        %678 = vst.msk [vmem:[#allocation2 + $0x18] sm:$0xf] %vm473, %v670
        %679 = vst.msk [vmem:[#allocation2 + $0x20] sm:$0xf] %vm473, %v671
        %680 = vst.msk [vmem:[#allocation2 + $0x28] sm:$0xf] %vm473, %v672
        %681 = vst.msk [vmem:[#allocation2 + $0x30] sm:$0xf] %vm473, %v673
        %682 = vst.msk [vmem:[#allocation2 + $0x38] sm:$0xf] %vm473, %v674
        %v683 = vld [vmem:[%s433] sm:$0xff]
        %v684 = vld [vmem:[%s433 + $0x8] sm:$0xff]
        %v685 = vld [vmem:[%s433 + $0x10] sm:$0xff]
        %v686 = vld [vmem:[%s433 + $0x18] sm:$0xff]
        %v687 = vld [vmem:[%s433 + $0x20] sm:$0xff]
        %v688 = vld [vmem:[%s433 + $0x28] sm:$0xff]
        %v689 = vld [vmem:[%s433 + $0x30] sm:$0xff]
        %v690 = vld [vmem:[%s433 + $0x38] sm:$0xff]
        %v691 = vmul.f32 %v683, %v635
        %v692 = vmul.f32 %v684, %v635
        %v693 = vmul.f32 %v685, %v635
        %v694 = vmul.f32 %v686, %v635
        %v695 = vmul.f32 %v687, %v635
        %v696 = vmul.f32 %v688, %v635
        %v697 = vmul.f32 %v689, %v635
        %v698 = vmul.f32 %v690, %v635
        %v699 = vadd.f32 %v691, %v649
        %v700 = vadd.f32 %v692, %v649
        %v701 = vadd.f32 %v693, %v649
        %v702 = vadd.f32 %v694, %v649
        %v703 = vadd.f32 %v695, %v649
        %v704 = vadd.f32 %v696, %v649
        %v705 = vadd.f32 %v697, %v649
        %v706 = vadd.f32 %v698, %v649
        %v707 = vmax.f32 %v699, 0.0
        %v708 = vmax.f32 %v700, 0.0
        %v709 = vmax.f32 %v701, 0.0
        %v710 = vmax.f32 %v702, 0.0
        %v711 = vmax.f32 %v703, 0.0
        %v712 = vmax.f32 %v704, 0.0
        %v713 = vmax.f32 %v705, 0.0
        %v714 = vmax.f32 %v706, 0.0
        %v715 = vpack.c.bf16 %v707, %v707
        %v716 = vpack.c.bf16 %v708, %v708
        %v717 = vpack.c.bf16 %v709, %v709
        %v718 = vpack.c.bf16 %v710, %v710
        %v719 = vpack.c.bf16 %v711, %v711
        %v720 = vpack.c.bf16 %v712, %v712
        %v721 = vpack.c.bf16 %v713, %v713
        %v722 = vpack.c.bf16 %v714, %v714
        %v731 = vunpack.c.l.b16 %v715
        %v732 = vunpack.c.l.b16 %v716
        %v733 = vunpack.c.l.b16 %v717
        %v734 = vunpack.c.l.b16 %v718
        %v735 = vunpack.c.l.b16 %v719
        %v736 = vunpack.c.l.b16 %v720
        %v737 = vunpack.c.l.b16 %v721
        %v738 = vunpack.c.l.b16 %v722
        %v739 = vpack.c.b16 %v731, %v731
        %v740 = vpack.c.b16 %v732, %v732
        %v741 = vpack.c.b16 %v733, %v733
        %v742 = vpack.c.b16 %v734, %v734
        %v743 = vpack.c.b16 %v735, %v735
        %v744 = vpack.c.b16 %v736, %v736
        %v745 = vpack.c.b16 %v737, %v737
        %v746 = vpack.c.b16 %v738, %v738
        %v748 = vshrl.u32 %v739, 16
        %v750 = vrot.slane %v748, 7
        %v751 = vshll.u32 %v739, 16
        %v753 = vor.u32 %v750, %v751
        %v754 = vrot.slane %v750, 4
        %v756 = vshrl.u32 %v740, 16
        %v758 = vrot.slane %v756, 7
        %v759 = vshll.u32 %v740, 16
        %v761 = vor.u32 %v758, %v759
        %v762 = vrot.slane %v758, 4
        %v764 = vshrl.u32 %v741, 16
        %v766 = vrot.slane %v764, 7
        %v767 = vshll.u32 %v741, 16
        %v769 = vor.u32 %v766, %v767
        %v770 = vrot.slane %v766, 4
        %v772 = vshrl.u32 %v742, 16
        %v774 = vrot.slane %v772, 7
        %v775 = vshll.u32 %v742, 16
        %v777 = vor.u32 %v774, %v775
        %v778 = vrot.slane %v774, 4
        %v780 = vshrl.u32 %v743, 16
        %v782 = vrot.slane %v780, 7
        %v783 = vshll.u32 %v743, 16
        %v785 = vor.u32 %v782, %v783
        %v786 = vrot.slane %v782, 4
        %v788 = vshrl.u32 %v744, 16
        %v790 = vrot.slane %v788, 7
        %v791 = vshll.u32 %v744, 16
        %v793 = vor.u32 %v790, %v791
        %v794 = vrot.slane %v790, 4
        %v796 = vshrl.u32 %v745, 16
        %v798 = vrot.slane %v796, 7
        %v799 = vshll.u32 %v745, 16
        %v801 = vor.u32 %v798, %v799
        %v802 = vrot.slane %v798, 4
        %v804 = vshrl.u32 %v746, 16
        %v806 = vrot.slane %v804, 7
        %v807 = vshll.u32 %v746, 16
        %v809 = vor.u32 %v806, %v807
        %v810 = vrot.slane %v806, 4
        %s827 = scalar_lea.vmem [#allocation2], 72
        %vm828 = vcmask 27648
        %vm829 = vsmask.f32 7938
        %vm830 = vmand %vm828, %vm829
        %v831 = vld [vmem:[%s827] sm:$0xf]
        %v832 = vsel %vm830, %v753, %v831
        %833 = vst [vmem:[%s827] sm:$0xf] %v832
        %v834 = vld [vmem:[%s827 + $0x4] sm:$0x1]
        %v835 = vsel %vm477, %v754, %v834
        %836 = vst [vmem:[%s827 + $0x4] sm:$0x1] %v835
        %v837 = vld [vmem:[%s827 + $0x8] sm:$0xf]
        %v838 = vsel %vm830, %v761, %v837
        %839 = vst [vmem:[%s827 + $0x8] sm:$0xf] %v838
        %v840 = vld [vmem:[%s827 + $0xc] sm:$0x1]
        %v841 = vsel %vm477, %v762, %v840
        %842 = vst [vmem:[%s827 + $0xc] sm:$0x1] %v841
        %v843 = vld [vmem:[%s827 + $0x10] sm:$0xf]
        %v844 = vsel %vm830, %v769, %v843
        %845 = vst [vmem:[%s827 + $0x10] sm:$0xf] %v844
        %v846 = vld [vmem:[%s827 + $0x14] sm:$0x1]
        %v847 = vsel %vm477, %v770, %v846
        %848 = vst [vmem:[%s827 + $0x14] sm:$0x1] %v847
        %v849 = vld [vmem:[%s827 + $0x18] sm:$0xf]
        %v850 = vsel %vm830, %v777, %v849
        %851 = vst [vmem:[%s827 + $0x18] sm:$0xf] %v850
        %v852 = vld [vmem:[%s827 + $0x1c] sm:$0x1]
        %v853 = vsel %vm477, %v778, %v852
        %854 = vst [vmem:[%s827 + $0x1c] sm:$0x1] %v853
        %v855 = vld [vmem:[%s827 + $0x20] sm:$0xf]
        %v856 = vsel %vm830, %v785, %v855
        %857 = vst [vmem:[%s827 + $0x20] sm:$0xf] %v856
        %v858 = vld [vmem:[%s827 + $0x24] sm:$0x1]
        %v859 = vsel %vm477, %v786, %v858
        %860 = vst [vmem:[%s827 + $0x24] sm:$0x1] %v859
        %v861 = vld [vmem:[%s827 + $0x28] sm:$0xf]
        %v862 = vsel %vm830, %v793, %v861
        %863 = vst [vmem:[%s827 + $0x28] sm:$0xf] %v862
        %v864 = vld [vmem:[%s827 + $0x2c] sm:$0x1]
        %v865 = vsel %vm477, %v794, %v864
        %866 = vst [vmem:[%s827 + $0x2c] sm:$0x1] %v865
        %v867 = vld [vmem:[%s827 + $0x30] sm:$0xf]
        %v868 = vsel %vm830, %v801, %v867
        %869 = vst [vmem:[%s827 + $0x30] sm:$0xf] %v868
        %v870 = vld [vmem:[%s827 + $0x34] sm:$0x1]
        %v871 = vsel %vm477, %v802, %v870
        %872 = vst [vmem:[%s827 + $0x34] sm:$0x1] %v871
        %v873 = vld [vmem:[%s827 + $0x38] sm:$0xf]
        %v874 = vsel %vm830, %v809, %v873
        %875 = vst [vmem:[%s827 + $0x38] sm:$0xf] %v874
        %v876 = vld [vmem:[%s827 + $0x3c] sm:$0x1]
        %v877 = vsel %vm477, %v810, %v876
        %878 = vst [vmem:[%s827 + $0x3c] sm:$0x1] %v877
        %v879 = vld [vmem:[%s438] sm:$0xff]
        %v880 = vld [vmem:[%s438 + $0x8] sm:$0xff]
        %v881 = vld [vmem:[%s438 + $0x10] sm:$0xff]
        %v882 = vld [vmem:[%s438 + $0x18] sm:$0xff]
        %v883 = vld [vmem:[%s438 + $0x20] sm:$0xff]
        %v884 = vld [vmem:[%s438 + $0x28] sm:$0xff]
        %v885 = vld [vmem:[%s438 + $0x30] sm:$0xff]
        %v886 = vld [vmem:[%s438 + $0x38] sm:$0xff]
        %v887 = vmul.f32 %v879, %v635
        %v888 = vmul.f32 %v880, %v635
        %v889 = vmul.f32 %v881, %v635
        %v890 = vmul.f32 %v882, %v635
        %v891 = vmul.f32 %v883, %v635
        %v892 = vmul.f32 %v884, %v635
        %v893 = vmul.f32 %v885, %v635
        %v894 = vmul.f32 %v886, %v635
        %v895 = vadd.f32 %v887, %v649
        %v896 = vadd.f32 %v888, %v649
        %v897 = vadd.f32 %v889, %v649
        %v898 = vadd.f32 %v890, %v649
        %v899 = vadd.f32 %v891, %v649
        %v900 = vadd.f32 %v892, %v649
        %v901 = vadd.f32 %v893, %v649
        %v902 = vadd.f32 %v894, %v649
        %v903 = vmax.f32 %v895, 0.0
        %v904 = vmax.f32 %v896, 0.0
        %v905 = vmax.f32 %v897, 0.0
        %v906 = vmax.f32 %v898, 0.0
        %v907 = vmax.f32 %v899, 0.0
        %v908 = vmax.f32 %v900, 0.0
        %v909 = vmax.f32 %v901, 0.0
        %v910 = vmax.f32 %v902, 0.0
        %v911 = vpack.c.bf16 %v903, %v903
        %v912 = vpack.c.bf16 %v904, %v904
        %v913 = vpack.c.bf16 %v905, %v905
        %v914 = vpack.c.bf16 %v906, %v906
        %v915 = vpack.c.bf16 %v907, %v907
        %v916 = vpack.c.bf16 %v908, %v908
        %v917 = vpack.c.bf16 %v909, %v909
        %v918 = vpack.c.bf16 %v910, %v910
        %s919 = scalar_lea.vmem [#allocation2], 152
        %920 = vst.msk [vmem:[%s919] sm:$0xf] %vm473, %v911
        %921 = vst.msk [vmem:[%s919 + $0x8] sm:$0xf] %vm473, %v912
        %922 = vst.msk [vmem:[%s919 + $0x10] sm:$0xf] %vm473, %v913
        %923 = vst.msk [vmem:[%s919 + $0x18] sm:$0xf] %vm473, %v914
        %924 = vst.msk [vmem:[%s919 + $0x20] sm:$0xf] %vm473, %v915
        %925 = vst.msk [vmem:[%s919 + $0x28] sm:$0xf] %vm473, %v916
        %926 = vst.msk [vmem:[%s919 + $0x30] sm:$0xf] %vm473, %v917
        %927 = vst.msk [vmem:[%s919 + $0x38] sm:$0xf] %vm473, %v918
        %v928 = vld [vmem:[%s443] sm:$0xff]
        %v929 = vld [vmem:[%s443 + $0x8] sm:$0xff]
        %v930 = vld [vmem:[%s443 + $0x10] sm:$0xff]
        %v931 = vld [vmem:[%s443 + $0x18] sm:$0xff]
        %v932 = vld [vmem:[%s443 + $0x20] sm:$0xff]
        %v933 = vld [vmem:[%s443 + $0x28] sm:$0xff]
        %v934 = vld [vmem:[%s443 + $0x30] sm:$0xff]
        %v935 = vld [vmem:[%s443 + $0x38] sm:$0xff]
        %v936 = vmul.f32 %v928, %v635
        %v937 = vmul.f32 %v929, %v635
        %v938 = vmul.f32 %v930, %v635
        %v939 = vmul.f32 %v931, %v635
        %v940 = vmul.f32 %v932, %v635
        %v941 = vmul.f32 %v933, %v635
        %v942 = vmul.f32 %v934, %v635
        %v943 = vmul.f32 %v935, %v635
        %v944 = vadd.f32 %v936, %v649
        %v945 = vadd.f32 %v937, %v649
        %v946 = vadd.f32 %v938, %v649
        %v947 = vadd.f32 %v939, %v649
        %v948 = vadd.f32 %v940, %v649
        %v949 = vadd.f32 %v941, %v649
        %v950 = vadd.f32 %v942, %v649
        %v951 = vadd.f32 %v943, %v649
        %v952 = vmax.f32 %v944, 0.0
        %v953 = vmax.f32 %v945, 0.0
        %v954 = vmax.f32 %v946, 0.0
        %v955 = vmax.f32 %v947, 0.0
        %v956 = vmax.f32 %v948, 0.0
        %v957 = vmax.f32 %v949, 0.0
        %v958 = vmax.f32 %v950, 0.0
        %v959 = vmax.f32 %v951, 0.0
        %v960 = vpack.c.bf16 %v952, %v952
        %v961 = vpack.c.bf16 %v953, %v953
        %v962 = vpack.c.bf16 %v954, %v954
        %v963 = vpack.c.bf16 %v955, %v955
        %v964 = vpack.c.bf16 %v956, %v956
        %v965 = vpack.c.bf16 %v957, %v957
        %v966 = vpack.c.bf16 %v958, %v958
        %v967 = vpack.c.bf16 %v959, %v959
        %v976 = vunpack.c.l.b16 %v960
        %v977 = vunpack.c.l.b16 %v961
        %v978 = vunpack.c.l.b16 %v962
        %v979 = vunpack.c.l.b16 %v963
        %v980 = vunpack.c.l.b16 %v964
        %v981 = vunpack.c.l.b16 %v965
        %v982 = vunpack.c.l.b16 %v966
        %v983 = vunpack.c.l.b16 %v967
        %v984 = vpack.c.b16 %v976, %v976
        %v985 = vpack.c.b16 %v977, %v977
        %v986 = vpack.c.b16 %v978, %v978
        %v987 = vpack.c.b16 %v979, %v979
        %v988 = vpack.c.b16 %v980, %v980
        %v989 = vpack.c.b16 %v981, %v981
        %v990 = vpack.c.b16 %v982, %v982
        %v991 = vpack.c.b16 %v983, %v983
        %v993 = vshrl.u32 %v984, 16
        %v995 = vrot.slane %v993, 7
        %v996 = vshll.u32 %v984, 16
        %v998 = vor.u32 %v995, %v996
        %v999 = vrot.slane %v995, 4
        %v1001 = vshrl.u32 %v985, 16
        %v1003 = vrot.slane %v1001, 7
        %v1004 = vshll.u32 %v985, 16
        %v1006 = vor.u32 %v1003, %v1004
        %v1007 = vrot.slane %v1003, 4
        %v1009 = vshrl.u32 %v986, 16
        %v1011 = vrot.slane %v1009, 7
        %v1012 = vshll.u32 %v986, 16
        %v1014 = vor.u32 %v1011, %v1012
        %v1015 = vrot.slane %v1011, 4
        %v1017 = vshrl.u32 %v987, 16
        %v1019 = vrot.slane %v1017, 7
        %v1020 = vshll.u32 %v987, 16
        %v1022 = vor.u32 %v1019, %v1020
        %v1023 = vrot.slane %v1019, 4
        %v1025 = vshrl.u32 %v988, 16
        %v1027 = vrot.slane %v1025, 7
        %v1028 = vshll.u32 %v988, 16
        %v1030 = vor.u32 %v1027, %v1028
        %v1031 = vrot.slane %v1027, 4
        %v1033 = vshrl.u32 %v989, 16
        %v1035 = vrot.slane %v1033, 7
        %v1036 = vshll.u32 %v989, 16
        %v1038 = vor.u32 %v1035, %v1036
        %v1039 = vrot.slane %v1035, 4
        %v1041 = vshrl.u32 %v990, 16
        %v1043 = vrot.slane %v1041, 7
        %v1044 = vshll.u32 %v990, 16
        %v1046 = vor.u32 %v1043, %v1044
        %v1047 = vrot.slane %v1043, 4
        %v1049 = vshrl.u32 %v991, 16
        %v1051 = vrot.slane %v1049, 7
        %v1052 = vshll.u32 %v991, 16
        %v1054 = vor.u32 %v1051, %v1052
        %v1055 = vrot.slane %v1051, 4
        %s1072 = scalar_lea.vmem [#allocation2], 224
        %v1073 = vld [vmem:[%s1072] sm:$0xf]
        %v1074 = vsel %vm830, %v998, %v1073
        %1075 = vst [vmem:[%s1072] sm:$0xf] %v1074
        %v1076 = vld [vmem:[%s1072 + $0x4] sm:$0x1]
        %v1077 = vsel %vm477, %v999, %v1076
        %1078 = vst [vmem:[%s1072 + $0x4] sm:$0x1] %v1077
        %v1079 = vld [vmem:[%s1072 + $0x8] sm:$0xf]
        %v1080 = vsel %vm830, %v1006, %v1079
        %1081 = vst [vmem:[%s1072 + $0x8] sm:$0xf] %v1080
        %v1082 = vld [vmem:[%s1072 + $0xc] sm:$0x1]
        %v1083 = vsel %vm477, %v1007, %v1082
        %1084 = vst [vmem:[%s1072 + $0xc] sm:$0x1] %v1083
        %v1085 = vld [vmem:[%s1072 + $0x10] sm:$0xf]
        %v1086 = vsel %vm830, %v1014, %v1085
        %1087 = vst [vmem:[%s1072 + $0x10] sm:$0xf] %v1086
        %v1088 = vld [vmem:[%s1072 + $0x14] sm:$0x1]
        %v1089 = vsel %vm477, %v1015, %v1088
        %1090 = vst [vmem:[%s1072 + $0x14] sm:$0x1] %v1089
        %v1091 = vld [vmem:[%s1072 + $0x18] sm:$0xf]
        %v1092 = vsel %vm830, %v1022, %v1091
        %1093 = vst [vmem:[%s1072 + $0x18] sm:$0xf] %v1092
        %v1094 = vld [vmem:[%s1072 + $0x1c] sm:$0x1]
        %v1095 = vsel %vm477, %v1023, %v1094
        %1096 = vst [vmem:[%s1072 + $0x1c] sm:$0x1] %v1095
        %v1097 = vld [vmem:[%s1072 + $0x20] sm:$0xf]
        %v1098 = vsel %vm830, %v1030, %v1097
        %1099 = vst [vmem:[%s1072 + $0x20] sm:$0xf] %v1098
        %v1100 = vld [vmem:[%s1072 + $0x24] sm:$0x1]
        %v1101 = vsel %vm477, %v1031, %v1100
        %1102 = vst [vmem:[%s1072 + $0x24] sm:$0x1] %v1101
        %v1103 = vld [vmem:[%s1072 + $0x28] sm:$0xf]
        %v1104 = vsel %vm830, %v1038, %v1103
        %1105 = vst [vmem:[%s1072 + $0x28] sm:$0xf] %v1104
        %v1106 = vld [vmem:[%s1072 + $0x2c] sm:$0x1]
        %v1107 = vsel %vm477, %v1039, %v1106
        %1108 = vst [vmem:[%s1072 + $0x2c] sm:$0x1] %v1107
        %v1109 = vld [vmem:[%s1072 + $0x30] sm:$0xf]
        %v1110 = vsel %vm830, %v1046, %v1109
        %1111 = vst [vmem:[%s1072 + $0x30] sm:$0xf] %v1110
        %v1112 = vld [vmem:[%s1072 + $0x34] sm:$0x1]
        %v1113 = vsel %vm477, %v1047, %v1112
        %1114 = vst [vmem:[%s1072 + $0x34] sm:$0x1] %v1113
        %v1115 = vld [vmem:[%s1072 + $0x38] sm:$0xf]
        %v1116 = vsel %vm830, %v1054, %v1115
        %1117 = vst [vmem:[%s1072 + $0x38] sm:$0xf] %v1116
        %v1118 = vld [vmem:[%s1072 + $0x3c] sm:$0x1]
        %v1119 = vsel %vm477, %v1055, %v1118
        %1120 = vst [vmem:[%s1072 + $0x3c] sm:$0x1] %v1119
      $region56: #{network_block_forward.4} parent=51 // pred_fallthru
        _
      %s1121 = scalar_lea.vmem [#allocation2], 216
      %v1122 = vld [vmem:[%s1121] sm:$0xf]
      %v1123 = vld [vmem:[%s1121 + $0x8] sm:$0xf]
      %v1124 = vld [vmem:[%s1121 + $0x10] sm:$0xf]
      %v1125 = vld [vmem:[%s1121 + $0x18] sm:$0xf]
      %v1126 = vld [vmem:[%s1121 + $0x20] sm:$0xf]
      %v1127 = vld [vmem:[%s1121 + $0x28] sm:$0xf]
      %v1128 = vld [vmem:[%s1121 + $0x30] sm:$0xf]
      %v1129 = vld [vmem:[%s1121 + $0x38] sm:$0xf]
      %v1130 = vld [vmem:[%s447] sm:$0x3]
      %s1131 = scalar_lea.vmem [#allocation2], 144
      %v1132 = vld [vmem:[%s1131] sm:$0xf]
      %v1133 = vld [vmem:[%s1131 + $0x8] sm:$0xf]
      %v1134 = vld [vmem:[%s1131 + $0x10] sm:$0xf]
      %v1135 = vld [vmem:[%s1131 + $0x18] sm:$0xf]
      %v1136 = vld [vmem:[%s1131 + $0x20] sm:$0xf]
      %v1137 = vld [vmem:[%s1131 + $0x28] sm:$0xf]
      %v1138 = vld [vmem:[%s1131 + $0x30] sm:$0xf]
      %v1139 = vld [vmem:[%s1131 + $0x38] sm:$0xf]
      %s1140 = scalar_lea.vmem %s447, 2
      %v1141 = vld [vmem:[%s1140] sm:$0x3]
      %v1150 = vunpack.c.l.b16 %v1132
      %v1151 = vunpack.c.l.b16 %v1133
      %v1152 = vunpack.c.l.b16 %v1134
      %v1153 = vunpack.c.l.b16 %v1135
      %v1154 = vunpack.c.l.b16 %v1136
      %v1155 = vunpack.c.l.b16 %v1137
      %v1156 = vunpack.c.l.b16 %v1138
      %v1157 = vunpack.c.l.b16 %v1139
      %v1158 = vpack.c.b16 %v1151, %v1150
      %v1159 = vpack.c.b16 %v1153, %v1152
      %v1160 = vpack.c.b16 %v1155, %v1154
      %v1161 = vpack.c.b16 %v1157, %v1156
      %vm1162 = vcmask 31744
      %v1164 = vsel %vm1162, %v1158, 0
      %v1167 = vsel %vm1162, %v1159, 0
      %v1170 = vsel %vm1162, %v1160, 0
      %v1173 = vsel %vm1162, %v1161, 0
      %vm1175 = vcmask 1041408
      %v1177 = vsel %vm1175, %v1141, 0
      %1179 = vmatprep.subr.bf16.mxu0 0
      %1180 = vmatpush1.bf16.msra.mxu0 0
      %1181 = vmatprep.subr.bf16.mxu0 0
      %1182 = vmatpush1.bf16.msra.mxu0 0
      %1183 = vmatprep.subr.bf16.mxu0 0
      %1184 = vmatpush1.bf16.msra.mxu0 0
      %1185 = vmatprep.subr.bf16.mxu0 0
      %1186 = vmatpush1.bf16.msra.mxu0 0
      %1187 = vmatprep.subr.bf16.mxu0 0
      %1188 = vmatpush1.bf16.msra.mxu0 0
      %1189 = vmatprep.subr.bf16.mxu0 0
      %1190 = vmatpush1.bf16.msra.mxu0 0
      %1191 = vmatprep.subr.bf16.mxu0 0
      %1192 = vmatpush1.bf16.msra.mxu0 0
      %1193 = vmatprep.subr.bf16.mxu0 0
      %1194 = vmatpush1.bf16.msra.mxu0 %v1177
      %1195 = vmatprep.subr.bf16.mxu0 0
      %1196 = vmatpush2.bf16.msra.mxu0 0
      %1197 = vmatprep.subr.bf16.mxu0 0
      %1198 = vmatpush2.bf16.msra.mxu0 0
      %1199 = vmatprep.subr.bf16.mxu0 0
      %1200 = vmatpush2.bf16.msra.mxu0 0
      %1201 = vmatprep.subr.bf16.mxu0 0
      %1202 = vmatpush2.bf16.msra.mxu0 0
      %1203 = vmatprep.subr.bf16.mxu0 0
      %1204 = vmatpush2.bf16.msra.mxu0 0
      %1205 = vmatprep.subr.bf16.mxu0 0
      %1206 = vmatpush2.bf16.msra.mxu0 0
      %1207 = vmatprep.subr.bf16.mxu0 0
      %1208 = vmatpush2.bf16.msra.mxu0 0
      %1209 = vmatprep.subr.bf16.mxu0 0
      %1210 = vmatpush2.bf16.msra.mxu0 0
      %1211 = vmatprep.mubr.bf16.mxu0 0
      %1212 = vmatmul.mubr.bf16.gmra.mxu0 %v1164
      %v1213 = vpop.f32.mrf.mxu0
      %v1214 = vadd.f32 0.0, %v1213
      %v1215 = vpop.f32.mrf.mxu0
      %v1216 = vpop.f32.mrf.mxu0
      %v1217 = vadd.f32 0.0, %v1216
      %v1218 = vpop.f32.mrf.mxu0
      %1219 = vmatprep.mubr.bf16.mxu0 0
      %1220 = vmatmul.mubr.bf16.gmra.mxu0 %v1167
      %v1221 = vpop.f32.mrf.mxu0
      %v1222 = vadd.f32 0.0, %v1221
      %v1223 = vpop.f32.mrf.mxu0
      %v1224 = vpop.f32.mrf.mxu0
      %v1225 = vadd.f32 0.0, %v1224
      %v1226 = vpop.f32.mrf.mxu0
      %1227 = vmatprep.mubr.bf16.mxu0 0
      %1228 = vmatmul.mubr.bf16.gmra.mxu0 %v1170
      %v1229 = vpop.f32.mrf.mxu0
      %v1230 = vadd.f32 0.0, %v1229
      %v1231 = vpop.f32.mrf.mxu0
      %v1232 = vpop.f32.mrf.mxu0
      %v1233 = vadd.f32 0.0, %v1232
      %v1234 = vpop.f32.mrf.mxu0
      %1235 = vmatprep.mubr.bf16.mxu0 0
      %1236 = vmatmul.mubr.bf16.gmra.mxu0 %v1173
      %v1237 = vpop.f32.mrf.mxu0
      %v1238 = vadd.f32 0.0, %v1237
      %v1239 = vpop.f32.mrf.mxu0
      %v1240 = vpop.f32.mrf.mxu0
      %v1241 = vadd.f32 0.0, %v1240
      %v1242 = vpop.f32.mrf.mxu0
      %1243 = vdwg.mxu0
      %v1252 = vunpack.c.l.b16 %v1122
      %v1253 = vunpack.c.l.b16 %v1123
      %v1254 = vunpack.c.l.b16 %v1124
      %v1255 = vunpack.c.l.b16 %v1125
      %v1256 = vunpack.c.l.b16 %v1126
      %v1257 = vunpack.c.l.b16 %v1127
      %v1258 = vunpack.c.l.b16 %v1128
      %v1259 = vunpack.c.l.b16 %v1129
      %v1260 = vpack.c.b16 %v1253, %v1252
      %v1261 = vpack.c.b16 %v1255, %v1254
      %v1262 = vpack.c.b16 %v1257, %v1256
      %v1263 = vpack.c.b16 %v1259, %v1258
      %v1265 = vsel %vm1162, %v1260, 0
      %v1268 = vsel %vm1162, %v1261, 0
      %v1271 = vsel %vm1162, %v1262, 0
      %v1274 = vsel %vm1162, %v1263, 0
      %v1277 = vsel %vm1175, %v1130, 0
      %1279 = vmatprep.subr.bf16.mxu0 0
      %1280 = vmatpush1.bf16.msra.mxu0 0
      %1281 = vmatprep.subr.bf16.mxu0 0
      %1282 = vmatpush1.bf16.msra.mxu0 0
      %1283 = vmatprep.subr.bf16.mxu0 0
      %1284 = vmatpush1.bf16.msra.mxu0 0
      %1285 = vmatprep.subr.bf16.mxu0 0
      %1286 = vmatpush1.bf16.msra.mxu0 0
      %1287 = vmatprep.subr.bf16.mxu0 0
      %1288 = vmatpush1.bf16.msra.mxu0 0
      %1289 = vmatprep.subr.bf16.mxu0 0
      %1290 = vmatpush1.bf16.msra.mxu0 0
      %1291 = vmatprep.subr.bf16.mxu0 0
      %1292 = vmatpush1.bf16.msra.mxu0 0
      %1293 = vmatprep.subr.bf16.mxu0 0
      %1294 = vmatpush1.bf16.msra.mxu0 %v1277
      %1295 = vmatprep.subr.bf16.mxu0 0
      %1296 = vmatpush2.bf16.msra.mxu0 0
      %1297 = vmatprep.subr.bf16.mxu0 0
      %1298 = vmatpush2.bf16.msra.mxu0 0
      %1299 = vmatprep.subr.bf16.mxu0 0
      %1300 = vmatpush2.bf16.msra.mxu0 0
      %1301 = vmatprep.subr.bf16.mxu0 0
      %1302 = vmatpush2.bf16.msra.mxu0 0
      %1303 = vmatprep.subr.bf16.mxu0 0
      %1304 = vmatpush2.bf16.msra.mxu0 0
      %1305 = vmatprep.subr.bf16.mxu0 0
      %1306 = vmatpush2.bf16.msra.mxu0 0
      %1307 = vmatprep.subr.bf16.mxu0 0
      %1308 = vmatpush2.bf16.msra.mxu0 0
      %1309 = vmatprep.subr.bf16.mxu0 0
      %1310 = vmatpush2.bf16.msra.mxu0 0
      %1311 = vmatprep.mubr.bf16.mxu0 0
      %1312 = vmatmul.mubr.bf16.gmra.mxu0 %v1265
      %v1313 = vpop.f32.mrf.mxu0
      %v1314 = vadd.f32 %v1214, %v1313
      %v1315 = vpop.f32.mrf.mxu0
      %v1316 = vpop.f32.mrf.mxu0
      %v1317 = vadd.f32 %v1217, %v1316
      %v1318 = vpop.f32.mrf.mxu0
      %1319 = vmatprep.mubr.bf16.mxu0 0
      %1320 = vmatmul.mubr.bf16.gmra.mxu0 %v1268
      %v1321 = vpop.f32.mrf.mxu0
      %v1322 = vadd.f32 %v1222, %v1321
      %v1323 = vpop.f32.mrf.mxu0
      %v1324 = vpop.f32.mrf.mxu0
      %v1325 = vadd.f32 %v1225, %v1324
      %v1326 = vpop.f32.mrf.mxu0
      %1327 = vmatprep.mubr.bf16.mxu0 0
      %1328 = vmatmul.mubr.bf16.gmra.mxu0 %v1271
      %v1329 = vpop.f32.mrf.mxu0
      %v1330 = vadd.f32 %v1230, %v1329
      %v1331 = vpop.f32.mrf.mxu0
      %v1332 = vpop.f32.mrf.mxu0
      %v1333 = vadd.f32 %v1233, %v1332
      %v1334 = vpop.f32.mrf.mxu0
      %1335 = vmatprep.mubr.bf16.mxu0 0
      %1336 = vmatmul.mubr.bf16.gmra.mxu0 %v1274
      %v1337 = vpop.f32.mrf.mxu0
      %v1338 = vadd.f32 %v1238, %v1337
      %v1339 = vpop.f32.mrf.mxu0
      %v1340 = vpop.f32.mrf.mxu0
      %v1341 = vadd.f32 %v1241, %v1340
      %v1342 = vpop.f32.mrf.mxu0
      %1343 = vdwg.mxu0
      %v1344 = vld [vmem:[%s1121] sm:$0xf]
      %v1345 = vld [vmem:[%s1121 + $0x4] sm:$0x1]
      %v1346 = vld [vmem:[%s1121 + $0x8] sm:$0xf]
      %v1347 = vld [vmem:[%s1121 + $0xc] sm:$0x1]
      %v1348 = vld [vmem:[%s1121 + $0x10] sm:$0xf]
      %v1349 = vld [vmem:[%s1121 + $0x14] sm:$0x1]
      %v1350 = vld [vmem:[%s1121 + $0x18] sm:$0xf]
      %v1351 = vld [vmem:[%s1121 + $0x1c] sm:$0x1]
      %v1352 = vld [vmem:[%s1121 + $0x20] sm:$0xf]
      %v1353 = vld [vmem:[%s1121 + $0x24] sm:$0x1]
      %v1354 = vld [vmem:[%s1121 + $0x28] sm:$0xf]
      %v1355 = vld [vmem:[%s1121 + $0x2c] sm:$0x1]
      %v1356 = vld [vmem:[%s1121 + $0x30] sm:$0xf]
      %v1357 = vld [vmem:[%s1121 + $0x34] sm:$0x1]
      %v1358 = vld [vmem:[%s1121 + $0x38] sm:$0xf]
      %v1359 = vld [vmem:[%s1121 + $0x3c] sm:$0x1]
      %vm1360 = vsmask.f32 3328
      %vm1361 = vsmask.f32 7440
      %vm1362 = vmor %vm1360, %vm1361
      %v1364 = vshrl.u32 %v1344, 16
      %v1366 = vrot.slane %v1364, 4
      %v1367 = vshll.u32 %v1344, 16
      %v1369 = vrot.slane %v1367, 5
      %v1370 = vor.u32 %v1366, %v1369
      %v1371 = vrot.slane %v1370, 4
      %v1373 = vshll.u32 %v1345, 16
      %v1375 = vrot.slane %v1373, 5
      %v1376 = vsel %vm1362, %v1371, %v1375
      %v1378 = vshrl.u32 %v1346, 16
      %v1380 = vrot.slane %v1378, 4
      %v1381 = vshll.u32 %v1346, 16
      %v1383 = vrot.slane %v1381, 5
      %v1384 = vor.u32 %v1380, %v1383
      %v1385 = vrot.slane %v1384, 4
      %v1387 = vshll.u32 %v1347, 16
      %v1389 = vrot.slane %v1387, 5
      %v1390 = vsel %vm1362, %v1385, %v1389
      %v1392 = vshrl.u32 %v1348, 16
      %v1394 = vrot.slane %v1392, 4
      %v1395 = vshll.u32 %v1348, 16
      %v1397 = vrot.slane %v1395, 5
      %v1398 = vor.u32 %v1394, %v1397
      %v1399 = vrot.slane %v1398, 4
      %v1401 = vshll.u32 %v1349, 16
      %v1403 = vrot.slane %v1401, 5
      %v1404 = vsel %vm1362, %v1399, %v1403
      %v1406 = vshrl.u32 %v1350, 16
      %v1408 = vrot.slane %v1406, 4
      %v1409 = vshll.u32 %v1350, 16
      %v1411 = vrot.slane %v1409, 5
      %v1412 = vor.u32 %v1408, %v1411
      %v1413 = vrot.slane %v1412, 4
      %v1415 = vshll.u32 %v1351, 16
      %v1417 = vrot.slane %v1415, 5
      %v1418 = vsel %vm1362, %v1413, %v1417
      %v1420 = vshrl.u32 %v1352, 16
      %v1422 = vrot.slane %v1420, 4
      %v1423 = vshll.u32 %v1352, 16
      %v1425 = vrot.slane %v1423, 5
      %v1426 = vor.u32 %v1422, %v1425
      %v1427 = vrot.slane %v1426, 4
      %v1429 = vshll.u32 %v1353, 16
      %v1431 = vrot.slane %v1429, 5
      %v1432 = vsel %vm1362, %v1427, %v1431
      %v1434 = vshrl.u32 %v1354, 16
      %v1436 = vrot.slane %v1434, 4
      %v1437 = vshll.u32 %v1354, 16
      %v1439 = vrot.slane %v1437, 5
      %v1440 = vor.u32 %v1436, %v1439
      %v1441 = vrot.slane %v1440, 4
      %v1443 = vshll.u32 %v1355, 16
      %v1445 = vrot.slane %v1443, 5
      %v1446 = vsel %vm1362, %v1441, %v1445
      %v1448 = vshrl.u32 %v1356, 16
      %v1450 = vrot.slane %v1448, 4
      %v1451 = vshll.u32 %v1356, 16
      %v1453 = vrot.slane %v1451, 5
      %v1454 = vor.u32 %v1450, %v1453
      %v1455 = vrot.slane %v1454, 4
      %v1457 = vshll.u32 %v1357, 16
      %v1459 = vrot.slane %v1457, 5
      %v1460 = vsel %vm1362, %v1455, %v1459
      %v1462 = vshrl.u32 %v1358, 16
      %v1464 = vrot.slane %v1462, 4
      %v1465 = vshll.u32 %v1358, 16
      %v1467 = vrot.slane %v1465, 5
      %v1468 = vor.u32 %v1464, %v1467
      %v1469 = vrot.slane %v1468, 4
      %v1471 = vshll.u32 %v1359, 16
      %v1473 = vrot.slane %v1471, 5
      %v1474 = vsel %vm1362, %v1469, %v1473
      %s1475 = scalar_lea.vmem %s447, 4
      %v1476 = vld [vmem:[%s1475] sm:$0x3]
      %v1477 = vunpack.c.l.b16 %v1376
      %v1478 = vunpack.c.l.b16 %v1390
      %v1479 = vunpack.c.l.b16 %v1404
      %v1480 = vunpack.c.l.b16 %v1418
      %v1481 = vunpack.c.l.b16 %v1432
      %v1482 = vunpack.c.l.b16 %v1446
      %v1483 = vunpack.c.l.b16 %v1460
      %v1484 = vunpack.c.l.b16 %v1474
      %v1485 = vpack.c.b16 %v1478, %v1477
      %v1486 = vpack.c.b16 %v1480, %v1479
      %v1487 = vpack.c.b16 %v1482, %v1481
      %v1488 = vpack.c.b16 %v1484, %v1483
      %v1490 = vsel %vm1162, %v1485, 0
      %v1493 = vsel %vm1162, %v1486, 0
      %v1496 = vsel %vm1162, %v1487, 0
      %v1499 = vsel %vm1162, %v1488, 0
      %v1502 = vsel %vm1175, %v1476, 0
      %1504 = vmatprep.subr.bf16.mxu0 0
      %1505 = vmatpush1.bf16.msra.mxu0 0
      %1506 = vmatprep.subr.bf16.mxu0 0
      %1507 = vmatpush1.bf16.msra.mxu0 0
      %1508 = vmatprep.subr.bf16.mxu0 0
      %1509 = vmatpush1.bf16.msra.mxu0 0
      %1510 = vmatprep.subr.bf16.mxu0 0
      %1511 = vmatpush1.bf16.msra.mxu0 0
      %1512 = vmatprep.subr.bf16.mxu0 0
      %1513 = vmatpush1.bf16.msra.mxu0 0
      %1514 = vmatprep.subr.bf16.mxu0 0
      %1515 = vmatpush1.bf16.msra.mxu0 0
      %1516 = vmatprep.subr.bf16.mxu0 0
      %1517 = vmatpush1.bf16.msra.mxu0 0
      %1518 = vmatprep.subr.bf16.mxu0 0
      %1519 = vmatpush1.bf16.msra.mxu0 %v1502
      %1520 = vmatprep.subr.bf16.mxu0 0
      %1521 = vmatpush2.bf16.msra.mxu0 0
      %1522 = vmatprep.subr.bf16.mxu0 0
      %1523 = vmatpush2.bf16.msra.mxu0 0
      %1524 = vmatprep.subr.bf16.mxu0 0
      %1525 = vmatpush2.bf16.msra.mxu0 0
      %1526 = vmatprep.subr.bf16.mxu0 0
      %1527 = vmatpush2.bf16.msra.mxu0 0
      %1528 = vmatprep.subr.bf16.mxu0 0
      %1529 = vmatpush2.bf16.msra.mxu0 0
      %1530 = vmatprep.subr.bf16.mxu0 0
      %1531 = vmatpush2.bf16.msra.mxu0 0
      %1532 = vmatprep.subr.bf16.mxu0 0
      %1533 = vmatpush2.bf16.msra.mxu0 0
      %1534 = vmatprep.subr.bf16.mxu0 0
      %1535 = vmatpush2.bf16.msra.mxu0 0
      %1536 = vmatprep.mubr.bf16.mxu0 0
      %1537 = vmatmul.mubr.bf16.gmra.mxu0 %v1490
      %v1538 = vpop.f32.mrf.mxu0
      %v1539 = vadd.f32 0.0, %v1538
      %v1540 = vpop.f32.mrf.mxu0
      %v1541 = vpop.f32.mrf.mxu0
      %v1542 = vadd.f32 0.0, %v1541
      %v1543 = vpop.f32.mrf.mxu0
      %1544 = vmatprep.mubr.bf16.mxu0 0
      %1545 = vmatmul.mubr.bf16.gmra.mxu0 %v1493
      %v1546 = vpop.f32.mrf.mxu0
      %v1547 = vadd.f32 0.0, %v1546
      %v1548 = vpop.f32.mrf.mxu0
      %v1549 = vpop.f32.mrf.mxu0
      %v1550 = vadd.f32 0.0, %v1549
      %v1551 = vpop.f32.mrf.mxu0
      %1552 = vmatprep.mubr.bf16.mxu0 0
      %1553 = vmatmul.mubr.bf16.gmra.mxu0 %v1496
      %v1554 = vpop.f32.mrf.mxu0
      %v1555 = vadd.f32 0.0, %v1554
      %v1556 = vpop.f32.mrf.mxu0
      %v1557 = vpop.f32.mrf.mxu0
      %v1558 = vadd.f32 0.0, %v1557
      %v1559 = vpop.f32.mrf.mxu0
      %1560 = vmatprep.mubr.bf16.mxu0 0
      %1561 = vmatmul.mubr.bf16.gmra.mxu0 %v1499
      %v1562 = vpop.f32.mrf.mxu0
      %v1563 = vadd.f32 0.0, %v1562
      %v1564 = vpop.f32.mrf.mxu0
      %v1565 = vpop.f32.mrf.mxu0
      %v1566 = vadd.f32 0.0, %v1565
      %v1567 = vpop.f32.mrf.mxu0
      %1568 = vdwg.mxu0
      %v1569 = vadd.f32 %v1314, %v1539
      %v1570 = vadd.f32 %v1317, %v1542
      %v1571 = vadd.f32 %v1322, %v1547
      %v1572 = vadd.f32 %v1325, %v1550
      %v1573 = vadd.f32 %v1330, %v1555
      %v1574 = vadd.f32 %v1333, %v1558
      %v1575 = vadd.f32 %v1338, %v1563
      %v1576 = vadd.f32 %v1341, %v1566
      %s1577 = scalar_lea.vmem [#allocation2], 72
      %v1578 = vld [vmem:[%s1577] sm:$0xf]
      %v1579 = vld [vmem:[%s1577 + $0x8] sm:$0xf]
      %v1580 = vld [vmem:[%s1577 + $0x10] sm:$0xf]
      %v1581 = vld [vmem:[%s1577 + $0x18] sm:$0xf]
      %v1582 = vld [vmem:[%s1577 + $0x20] sm:$0xf]
      %v1583 = vld [vmem:[%s1577 + $0x28] sm:$0xf]
      %v1584 = vld [vmem:[%s1577 + $0x30] sm:$0xf]
      %v1585 = vld [vmem:[%s1577 + $0x38] sm:$0xf]
      %s1586 = scalar_lea.vmem %s447, 6
      %v1587 = vld [vmem:[%s1586] sm:$0x3]
      %v1596 = vunpack.c.l.b16 %v1578
      %v1597 = vunpack.c.l.b16 %v1579
      %v1598 = vunpack.c.l.b16 %v1580
      %v1599 = vunpack.c.l.b16 %v1581
      %v1600 = vunpack.c.l.b16 %v1582
      %v1601 = vunpack.c.l.b16 %v1583
      %v1602 = vunpack.c.l.b16 %v1584
      %v1603 = vunpack.c.l.b16 %v1585
      %v1604 = vpack.c.b16 %v1597, %v1596
      %v1605 = vpack.c.b16 %v1599, %v1598
      %v1606 = vpack.c.b16 %v1601, %v1600
      %v1607 = vpack.c.b16 %v1603, %v1602
      %v1609 = vsel %vm1162, %v1604, 0
      %v1612 = vsel %vm1162, %v1605, 0
      %v1615 = vsel %vm1162, %v1606, 0
      %v1618 = vsel %vm1162, %v1607, 0
      %v1621 = vsel %vm1175, %v1587, 0
      %1623 = vmatprep.subr.bf16.mxu0 0
      %1624 = vmatpush1.bf16.msra.mxu0 0
      %1625 = vmatprep.subr.bf16.mxu0 0
      %1626 = vmatpush1.bf16.msra.mxu0 0
      %1627 = vmatprep.subr.bf16.mxu0 0
      %1628 = vmatpush1.bf16.msra.mxu0 0
      %1629 = vmatprep.subr.bf16.mxu0 0
      %1630 = vmatpush1.bf16.msra.mxu0 0
      %1631 = vmatprep.subr.bf16.mxu0 0
      %1632 = vmatpush1.bf16.msra.mxu0 0
      %1633 = vmatprep.subr.bf16.mxu0 0
      %1634 = vmatpush1.bf16.msra.mxu0 0
      %1635 = vmatprep.subr.bf16.mxu0 0
      %1636 = vmatpush1.bf16.msra.mxu0 0
      %1637 = vmatprep.subr.bf16.mxu0 0
      %1638 = vmatpush1.bf16.msra.mxu0 %v1621
      %1639 = vmatprep.subr.bf16.mxu0 0
      %1640 = vmatpush2.bf16.msra.mxu0 0
      %1641 = vmatprep.subr.bf16.mxu0 0
      %1642 = vmatpush2.bf16.msra.mxu0 0
      %1643 = vmatprep.subr.bf16.mxu0 0
      %1644 = vmatpush2.bf16.msra.mxu0 0
      %1645 = vmatprep.subr.bf16.mxu0 0
      %1646 = vmatpush2.bf16.msra.mxu0 0
      %1647 = vmatprep.subr.bf16.mxu0 0
      %1648 = vmatpush2.bf16.msra.mxu0 0
      %1649 = vmatprep.subr.bf16.mxu0 0
      %1650 = vmatpush2.bf16.msra.mxu0 0
      %1651 = vmatprep.subr.bf16.mxu0 0
      %1652 = vmatpush2.bf16.msra.mxu0 0
      %1653 = vmatprep.subr.bf16.mxu0 0
      %1654 = vmatpush2.bf16.msra.mxu0 0
      %1655 = vmatprep.mubr.bf16.mxu0 0
      %1656 = vmatmul.mubr.bf16.gmra.mxu0 %v1609
      %v1657 = vpop.f32.mrf.mxu0
      %v1658 = vadd.f32 0.0, %v1657
      %v1659 = vpop.f32.mrf.mxu0
      %v1660 = vpop.f32.mrf.mxu0
      %v1661 = vadd.f32 0.0, %v1660
      %v1662 = vpop.f32.mrf.mxu0
      %1663 = vmatprep.mubr.bf16.mxu0 0
      %1664 = vmatmul.mubr.bf16.gmra.mxu0 %v1612
      %v1665 = vpop.f32.mrf.mxu0
      %v1666 = vadd.f32 0.0, %v1665
      %v1667 = vpop.f32.mrf.mxu0
      %v1668 = vpop.f32.mrf.mxu0
      %v1669 = vadd.f32 0.0, %v1668
      %v1670 = vpop.f32.mrf.mxu0
      %1671 = vmatprep.mubr.bf16.mxu0 0
      %1672 = vmatmul.mubr.bf16.gmra.mxu0 %v1615
      %v1673 = vpop.f32.mrf.mxu0
      %v1674 = vadd.f32 0.0, %v1673
      %v1675 = vpop.f32.mrf.mxu0
      %v1676 = vpop.f32.mrf.mxu0
      %v1677 = vadd.f32 0.0, %v1676
      %v1678 = vpop.f32.mrf.mxu0
      %1679 = vmatprep.mubr.bf16.mxu0 0
      %1680 = vmatmul.mubr.bf16.gmra.mxu0 %v1618
      %v1681 = vpop.f32.mrf.mxu0
      %v1682 = vadd.f32 0.0, %v1681
      %v1683 = vpop.f32.mrf.mxu0
      %v1684 = vpop.f32.mrf.mxu0
      %v1685 = vadd.f32 0.0, %v1684
      %v1686 = vpop.f32.mrf.mxu0
      %1687 = vdwg.mxu0
      %v1688 = vadd.f32 %v1569, %v1658
      %v1689 = vadd.f32 %v1570, %v1661
      %v1690 = vadd.f32 %v1571, %v1666
      %v1691 = vadd.f32 %v1572, %v1669
      %v1692 = vadd.f32 %v1573, %v1674
      %v1693 = vadd.f32 %v1574, %v1677
      %v1694 = vadd.f32 %v1575, %v1682
      %v1695 = vadd.f32 %v1576, %v1685
      %v1696 = vld [vmem:[#allocation2] sm:$0xf]
      %v1697 = vld [vmem:[#allocation2 + $0x8] sm:$0xf]
      %v1698 = vld [vmem:[#allocation2 + $0x10] sm:$0xf]
      %v1699 = vld [vmem:[#allocation2 + $0x18] sm:$0xf]
      %v1700 = vld [vmem:[#allocation2 + $0x20] sm:$0xf]
      %v1701 = vld [vmem:[#allocation2 + $0x28] sm:$0xf]
      %v1702 = vld [vmem:[#allocation2 + $0x30] sm:$0xf]
      %v1703 = vld [vmem:[#allocation2 + $0x38] sm:$0xf]
      %s1704 = scalar_lea.vmem %s447, 8
      %v1705 = vld [vmem:[%s1704] sm:$0x3]
      %v1714 = vunpack.c.l.b16 %v1696
      %v1715 = vunpack.c.l.b16 %v1697
      %v1716 = vunpack.c.l.b16 %v1698
      %v1717 = vunpack.c.l.b16 %v1699
      %v1718 = vunpack.c.l.b16 %v1700
      %v1719 = vunpack.c.l.b16 %v1701
      %v1720 = vunpack.c.l.b16 %v1702
      %v1721 = vunpack.c.l.b16 %v1703
      %v1722 = vpack.c.b16 %v1715, %v1714
      %v1723 = vpack.c.b16 %v1717, %v1716
      %v1724 = vpack.c.b16 %v1719, %v1718
      %v1725 = vpack.c.b16 %v1721, %v1720
      %v1727 = vsel %vm1162, %v1722, 0
      %v1730 = vsel %vm1162, %v1723, 0
      %v1733 = vsel %vm1162, %v1724, 0
      %v1736 = vsel %vm1162, %v1725, 0
      %v1739 = vsel %vm1175, %v1705, 0
      %1741 = vmatprep.subr.bf16.mxu0 0
      %1742 = vmatpush1.bf16.msra.mxu0 0
      %1743 = vmatprep.subr.bf16.mxu0 0
      %1744 = vmatpush1.bf16.msra.mxu0 0
      %1745 = vmatprep.subr.bf16.mxu0 0
      %1746 = vmatpush1.bf16.msra.mxu0 0
      %1747 = vmatprep.subr.bf16.mxu0 0
      %1748 = vmatpush1.bf16.msra.mxu0 0
      %1749 = vmatprep.subr.bf16.mxu0 0
      %1750 = vmatpush1.bf16.msra.mxu0 0
      %1751 = vmatprep.subr.bf16.mxu0 0
      %1752 = vmatpush1.bf16.msra.mxu0 0
      %1753 = vmatprep.subr.bf16.mxu0 0
      %1754 = vmatpush1.bf16.msra.mxu0 0
      %1755 = vmatprep.subr.bf16.mxu0 0
      %1756 = vmatpush1.bf16.msra.mxu0 %v1739
      %1757 = vmatprep.subr.bf16.mxu0 0
      %1758 = vmatpush2.bf16.msra.mxu0 0
      %1759 = vmatprep.subr.bf16.mxu0 0
      %1760 = vmatpush2.bf16.msra.mxu0 0
      %1761 = vmatprep.subr.bf16.mxu0 0
      %1762 = vmatpush2.bf16.msra.mxu0 0
      %1763 = vmatprep.subr.bf16.mxu0 0
      %1764 = vmatpush2.bf16.msra.mxu0 0
      %1765 = vmatprep.subr.bf16.mxu0 0
      %1766 = vmatpush2.bf16.msra.mxu0 0
      %1767 = vmatprep.subr.bf16.mxu0 0
      %1768 = vmatpush2.bf16.msra.mxu0 0
      %1769 = vmatprep.subr.bf16.mxu0 0
      %1770 = vmatpush2.bf16.msra.mxu0 0
      %1771 = vmatprep.subr.bf16.mxu0 0
      %1772 = vmatpush2.bf16.msra.mxu0 0
      %1773 = vmatprep.mubr.bf16.mxu0 0
      %1774 = vmatmul.mubr.bf16.gmra.mxu0 %v1727
      %v1775 = vpop.f32.mrf.mxu0
      %v1776 = vadd.f32 0.0, %v1775
      %v1777 = vpop.f32.mrf.mxu0
      %v1778 = vpop.f32.mrf.mxu0
      %v1779 = vadd.f32 0.0, %v1778
      %v1780 = vpop.f32.mrf.mxu0
      %1781 = vmatprep.mubr.bf16.mxu0 0
      %1782 = vmatmul.mubr.bf16.gmra.mxu0 %v1730
      %v1783 = vpop.f32.mrf.mxu0
      %v1784 = vadd.f32 0.0, %v1783
      %v1785 = vpop.f32.mrf.mxu0
      %v1786 = vpop.f32.mrf.mxu0
      %v1787 = vadd.f32 0.0, %v1786
      %v1788 = vpop.f32.mrf.mxu0
      %1789 = vmatprep.mubr.bf16.mxu0 0
      %1790 = vmatmul.mubr.bf16.gmra.mxu0 %v1733
      %v1791 = vpop.f32.mrf.mxu0
      %v1792 = vadd.f32 0.0, %v1791
      %v1793 = vpop.f32.mrf.mxu0
      %v1794 = vpop.f32.mrf.mxu0
      %v1795 = vadd.f32 0.0, %v1794
      %v1796 = vpop.f32.mrf.mxu0
      %1797 = vmatprep.mubr.bf16.mxu0 0
      %1798 = vmatmul.mubr.bf16.gmra.mxu0 %v1736
      %v1799 = vpop.f32.mrf.mxu0
      %v1800 = vadd.f32 0.0, %v1799
      %v1801 = vpop.f32.mrf.mxu0
      %v1802 = vpop.f32.mrf.mxu0
      %v1803 = vadd.f32 0.0, %v1802
      %v1804 = vpop.f32.mrf.mxu0
      %1805 = vdwg.mxu0
      %v1806 = vadd.f32 %v1688, %v1776
      %v1807 = vadd.f32 %v1689, %v1779
      %v1808 = vadd.f32 %v1690, %v1784
      %v1809 = vadd.f32 %v1691, %v1787
      %v1810 = vadd.f32 %v1692, %v1792
      %v1811 = vadd.f32 %v1693, %v1795
      %v1812 = vadd.f32 %v1694, %v1800
      %v1813 = vadd.f32 %v1695, %v1803
      %v1814 = vld [vmem:[%s1577] sm:$0xf]
      %v1815 = vld [vmem:[%s1577 + $0x4] sm:$0x1]
      %v1816 = vld [vmem:[%s1577 + $0x8] sm:$0xf]
      %v1817 = vld [vmem:[%s1577 + $0xc] sm:$0x1]
      %v1818 = vld [vmem:[%s1577 + $0x10] sm:$0xf]
      %v1819 = vld [vmem:[%s1577 + $0x14] sm:$0x1]
      %v1820 = vld [vmem:[%s1577 + $0x18] sm:$0xf]
      %v1821 = vld [vmem:[%s1577 + $0x1c] sm:$0x1]
      %v1822 = vld [vmem:[%s1577 + $0x20] sm:$0xf]
      %v1823 = vld [vmem:[%s1577 + $0x24] sm:$0x1]
      %v1824 = vld [vmem:[%s1577 + $0x28] sm:$0xf]
      %v1825 = vld [vmem:[%s1577 + $0x2c] sm:$0x1]
      %v1826 = vld [vmem:[%s1577 + $0x30] sm:$0xf]
      %v1827 = vld [vmem:[%s1577 + $0x34] sm:$0x1]
      %v1828 = vld [vmem:[%s1577 + $0x38] sm:$0xf]
      %v1829 = vld [vmem:[%s1577 + $0x3c] sm:$0x1]
      %v1831 = vshrl.u32 %v1814, 16
      %v1833 = vrot.slane %v1831, 4
      %v1834 = vshll.u32 %v1814, 16
      %v1836 = vrot.slane %v1834, 5
      %v1837 = vor.u32 %v1833, %v1836
      %v1838 = vrot.slane %v1837, 4
      %v1840 = vshll.u32 %v1815, 16
      %v1842 = vrot.slane %v1840, 5
      %v1843 = vsel %vm1362, %v1838, %v1842
      %v1845 = vshrl.u32 %v1816, 16
      %v1847 = vrot.slane %v1845, 4
      %v1848 = vshll.u32 %v1816, 16
      %v1850 = vrot.slane %v1848, 5
      %v1851 = vor.u32 %v1847, %v1850
      %v1852 = vrot.slane %v1851, 4
      %v1854 = vshll.u32 %v1817, 16
      %v1856 = vrot.slane %v1854, 5
      %v1857 = vsel %vm1362, %v1852, %v1856
      %v1859 = vshrl.u32 %v1818, 16
      %v1861 = vrot.slane %v1859, 4
      %v1862 = vshll.u32 %v1818, 16
      %v1864 = vrot.slane %v1862, 5
      %v1865 = vor.u32 %v1861, %v1864
      %v1866 = vrot.slane %v1865, 4
      %v1868 = vshll.u32 %v1819, 16
      %v1870 = vrot.slane %v1868, 5
      %v1871 = vsel %vm1362, %v1866, %v1870
      %v1873 = vshrl.u32 %v1820, 16
      %v1875 = vrot.slane %v1873, 4
      %v1876 = vshll.u32 %v1820, 16
      %v1878 = vrot.slane %v1876, 5
      %v1879 = vor.u32 %v1875, %v1878
      %v1880 = vrot.slane %v1879, 4
      %v1882 = vshll.u32 %v1821, 16
      %v1884 = vrot.slane %v1882, 5
      %v1885 = vsel %vm1362, %v1880, %v1884
      %v1887 = vshrl.u32 %v1822, 16
      %v1889 = vrot.slane %v1887, 4
      %v1890 = vshll.u32 %v1822, 16
      %v1892 = vrot.slane %v1890, 5
      %v1893 = vor.u32 %v1889, %v1892
      %v1894 = vrot.slane %v1893, 4
      %v1896 = vshll.u32 %v1823, 16
      %v1898 = vrot.slane %v1896, 5
      %v1899 = vsel %vm1362, %v1894, %v1898
      %v1901 = vshrl.u32 %v1824, 16
      %v1903 = vrot.slane %v1901, 4
      %v1904 = vshll.u32 %v1824, 16
      %v1906 = vrot.slane %v1904, 5
      %v1907 = vor.u32 %v1903, %v1906
      %v1908 = vrot.slane %v1907, 4
      %v1910 = vshll.u32 %v1825, 16
      %v1912 = vrot.slane %v1910, 5
      %v1913 = vsel %vm1362, %v1908, %v1912
      %v1915 = vshrl.u32 %v1826, 16
      %v1917 = vrot.slane %v1915, 4
      %v1918 = vshll.u32 %v1826, 16
      %v1920 = vrot.slane %v1918, 5
      %v1921 = vor.u32 %v1917, %v1920
      %v1922 = vrot.slane %v1921, 4
      %v1924 = vshll.u32 %v1827, 16
      %v1926 = vrot.slane %v1924, 5
      %v1927 = vsel %vm1362, %v1922, %v1926
      %v1929 = vshrl.u32 %v1828, 16
      %v1931 = vrot.slane %v1929, 4
      %v1932 = vshll.u32 %v1828, 16
      %v1934 = vrot.slane %v1932, 5
      %v1935 = vor.u32 %v1931, %v1934
      %v1936 = vrot.slane %v1935, 4
      %v1938 = vshll.u32 %v1829, 16
      %v1940 = vrot.slane %v1938, 5
      %v1941 = vsel %vm1362, %v1936, %v1940
      %s1942 = scalar_lea.vmem %s447, 10
      %v1943 = vld [vmem:[%s1942] sm:$0x3]
      %v1944 = vunpack.c.l.b16 %v1843
      %v1945 = vunpack.c.l.b16 %v1857
      %v1946 = vunpack.c.l.b16 %v1871
      %v1947 = vunpack.c.l.b16 %v1885
      %v1948 = vunpack.c.l.b16 %v1899
      %v1949 = vunpack.c.l.b16 %v1913
      %v1950 = vunpack.c.l.b16 %v1927
      %v1951 = vunpack.c.l.b16 %v1941
      %v1952 = vpack.c.b16 %v1945, %v1944
      %v1953 = vpack.c.b16 %v1947, %v1946
      %v1954 = vpack.c.b16 %v1949, %v1948
      %v1955 = vpack.c.b16 %v1951, %v1950
      %v1957 = vsel %vm1162, %v1952, 0
      %v1960 = vsel %vm1162, %v1953, 0
      %v1963 = vsel %vm1162, %v1954, 0
      %v1966 = vsel %vm1162, %v1955, 0
      %v1969 = vsel %vm1175, %v1943, 0
      %1971 = vmatprep.subr.bf16.mxu0 0
      %1972 = vmatpush1.bf16.msra.mxu0 0
      %1973 = vmatprep.subr.bf16.mxu0 0
      %1974 = vmatpush1.bf16.msra.mxu0 0
      %1975 = vmatprep.subr.bf16.mxu0 0
      %1976 = vmatpush1.bf16.msra.mxu0 0
      %1977 = vmatprep.subr.bf16.mxu0 0
      %1978 = vmatpush1.bf16.msra.mxu0 0
      %1979 = vmatprep.subr.bf16.mxu0 0
      %1980 = vmatpush1.bf16.msra.mxu0 0
      %1981 = vmatprep.subr.bf16.mxu0 0
      %1982 = vmatpush1.bf16.msra.mxu0 0
      %1983 = vmatprep.subr.bf16.mxu0 0
      %1984 = vmatpush1.bf16.msra.mxu0 0
      %1985 = vmatprep.subr.bf16.mxu0 0
      %1986 = vmatpush1.bf16.msra.mxu0 %v1969
      %1987 = vmatprep.subr.bf16.mxu0 0
      %1988 = vmatpush2.bf16.msra.mxu0 0
      %1989 = vmatprep.subr.bf16.mxu0 0
      %1990 = vmatpush2.bf16.msra.mxu0 0
      %1991 = vmatprep.subr.bf16.mxu0 0
      %1992 = vmatpush2.bf16.msra.mxu0 0
      %1993 = vmatprep.subr.bf16.mxu0 0
      %1994 = vmatpush2.bf16.msra.mxu0 0
      %1995 = vmatprep.subr.bf16.mxu0 0
      %1996 = vmatpush2.bf16.msra.mxu0 0
      %1997 = vmatprep.subr.bf16.mxu0 0
      %1998 = vmatpush2.bf16.msra.mxu0 0
      %1999 = vmatprep.subr.bf16.mxu0 0
      %2000 = vmatpush2.bf16.msra.mxu0 0
      %2001 = vmatprep.subr.bf16.mxu0 0
      %2002 = vmatpush2.bf16.msra.mxu0 0
      %2003 = vmatprep.mubr.bf16.mxu0 0
      %2004 = vmatmul.mubr.bf16.gmra.mxu0 %v1957
      %v2005 = vpop.f32.mrf.mxu0
      %v2006 = vadd.f32 0.0, %v2005
      %v2007 = vpop.f32.mrf.mxu0
      %v2008 = vpop.f32.mrf.mxu0
      %v2009 = vadd.f32 0.0, %v2008
      %v2010 = vpop.f32.mrf.mxu0
      %2011 = vmatprep.mubr.bf16.mxu0 0
      %2012 = vmatmul.mubr.bf16.gmra.mxu0 %v1960
      %v2013 = vpop.f32.mrf.mxu0
      %v2014 = vadd.f32 0.0, %v2013
      %v2015 = vpop.f32.mrf.mxu0
      %v2016 = vpop.f32.mrf.mxu0
      %v2017 = vadd.f32 0.0, %v2016
      %v2018 = vpop.f32.mrf.mxu0
      %2019 = vmatprep.mubr.bf16.mxu0 0
      %2020 = vmatmul.mubr.bf16.gmra.mxu0 %v1963
      %v2021 = vpop.f32.mrf.mxu0
      %v2022 = vadd.f32 0.0, %v2021
      %v2023 = vpop.f32.mrf.mxu0
      %v2024 = vpop.f32.mrf.mxu0
      %v2025 = vadd.f32 0.0, %v2024
      %v2026 = vpop.f32.mrf.mxu0
      %2027 = vmatprep.mubr.bf16.mxu0 0
      %2028 = vmatmul.mubr.bf16.gmra.mxu0 %v1966
      %v2029 = vpop.f32.mrf.mxu0
      %v2030 = vadd.f32 0.0, %v2029
      %v2031 = vpop.f32.mrf.mxu0
      %v2032 = vpop.f32.mrf.mxu0
      %v2033 = vadd.f32 0.0, %v2032
      %v2034 = vpop.f32.mrf.mxu0
      %2035 = vdwg.mxu0
      %v2036 = vadd.f32 %v1806, %v2006
      %v2037 = vadd.f32 %v1807, %v2009
      %v2038 = vadd.f32 %v1808, %v2014
      %v2039 = vadd.f32 %v1809, %v2017
      %v2040 = vadd.f32 %v1810, %v2022
      %v2041 = vadd.f32 %v1811, %v2025
      %v2042 = vadd.f32 %v1812, %v2030
      %v2043 = vadd.f32 %v1813, %v2033
      %s2044 = scalar_lea.vmem [#allocation2], 224
      %v2045 = vld [vmem:[%s2044] sm:$0xf]
      %v2046 = vld [vmem:[%s2044 + $0x8] sm:$0xf]
      %v2047 = vld [vmem:[%s2044 + $0x10] sm:$0xf]
      %v2048 = vld [vmem:[%s2044 + $0x18] sm:$0xf]
      %v2049 = vld [vmem:[%s2044 + $0x20] sm:$0xf]
      %v2050 = vld [vmem:[%s2044 + $0x28] sm:$0xf]
      %v2051 = vld [vmem:[%s2044 + $0x30] sm:$0xf]
      %v2052 = vld [vmem:[%s2044 + $0x38] sm:$0xf]
      %s2053 = scalar_lea.vmem %s447, 12
      %v2054 = vld [vmem:[%s2053] sm:$0x3]
      %v2063 = vunpack.c.l.b16 %v2045
      %v2064 = vunpack.c.l.b16 %v2046
      %v2065 = vunpack.c.l.b16 %v2047
      %v2066 = vunpack.c.l.b16 %v2048
      %v2067 = vunpack.c.l.b16 %v2049
      %v2068 = vunpack.c.l.b16 %v2050
      %v2069 = vunpack.c.l.b16 %v2051
      %v2070 = vunpack.c.l.b16 %v2052
      %v2071 = vpack.c.b16 %v2064, %v2063
      %v2072 = vpack.c.b16 %v2066, %v2065
      %v2073 = vpack.c.b16 %v2068, %v2067
      %v2074 = vpack.c.b16 %v2070, %v2069
      %v2076 = vsel %vm1162, %v2071, 0
      %v2079 = vsel %vm1162, %v2072, 0
      %v2082 = vsel %vm1162, %v2073, 0
      %v2085 = vsel %vm1162, %v2074, 0
      %v2088 = vsel %vm1175, %v2054, 0
      %2090 = vmatprep.subr.bf16.mxu0 0
      %2091 = vmatpush1.bf16.msra.mxu0 0
      %2092 = vmatprep.subr.bf16.mxu0 0
      %2093 = vmatpush1.bf16.msra.mxu0 0
      %2094 = vmatprep.subr.bf16.mxu0 0
      %2095 = vmatpush1.bf16.msra.mxu0 0
      %2096 = vmatprep.subr.bf16.mxu0 0
      %2097 = vmatpush1.bf16.msra.mxu0 0
      %2098 = vmatprep.subr.bf16.mxu0 0
      %2099 = vmatpush1.bf16.msra.mxu0 0
      %2100 = vmatprep.subr.bf16.mxu0 0
      %2101 = vmatpush1.bf16.msra.mxu0 0
      %2102 = vmatprep.subr.bf16.mxu0 0
      %2103 = vmatpush1.bf16.msra.mxu0 0
      %2104 = vmatprep.subr.bf16.mxu0 0
      %2105 = vmatpush1.bf16.msra.mxu0 %v2088
      %2106 = vmatprep.subr.bf16.mxu0 0
      %2107 = vmatpush2.bf16.msra.mxu0 0
      %2108 = vmatprep.subr.bf16.mxu0 0
      %2109 = vmatpush2.bf16.msra.mxu0 0
      %2110 = vmatprep.subr.bf16.mxu0 0
      %2111 = vmatpush2.bf16.msra.mxu0 0
      %2112 = vmatprep.subr.bf16.mxu0 0
      %2113 = vmatpush2.bf16.msra.mxu0 0
      %2114 = vmatprep.subr.bf16.mxu0 0
      %2115 = vmatpush2.bf16.msra.mxu0 0
      %2116 = vmatprep.subr.bf16.mxu0 0
      %2117 = vmatpush2.bf16.msra.mxu0 0
      %2118 = vmatprep.subr.bf16.mxu0 0
      %2119 = vmatpush2.bf16.msra.mxu0 0
      %2120 = vmatprep.subr.bf16.mxu0 0
      %2121 = vmatpush2.bf16.msra.mxu0 0
      %2122 = vmatprep.mubr.bf16.mxu0 0
      %2123 = vmatmul.mubr.bf16.gmra.mxu0 %v2076
      %v2124 = vpop.f32.mrf.mxu0
      %v2125 = vadd.f32 0.0, %v2124
      %v2126 = vpop.f32.mrf.mxu0
      %v2127 = vpop.f32.mrf.mxu0
      %v2128 = vadd.f32 0.0, %v2127
      %v2129 = vpop.f32.mrf.mxu0
      %2130 = vmatprep.mubr.bf16.mxu0 0
      %2131 = vmatmul.mubr.bf16.gmra.mxu0 %v2079
      %v2132 = vpop.f32.mrf.mxu0
      %v2133 = vadd.f32 0.0, %v2132
      %v2134 = vpop.f32.mrf.mxu0
      %v2135 = vpop.f32.mrf.mxu0
      %v2136 = vadd.f32 0.0, %v2135
      %v2137 = vpop.f32.mrf.mxu0
      %2138 = vmatprep.mubr.bf16.mxu0 0
      %2139 = vmatmul.mubr.bf16.gmra.mxu0 %v2082
      %v2140 = vpop.f32.mrf.mxu0
      %v2141 = vadd.f32 0.0, %v2140
      %v2142 = vpop.f32.mrf.mxu0
      %v2143 = vpop.f32.mrf.mxu0
      %v2144 = vadd.f32 0.0, %v2143
      %v2145 = vpop.f32.mrf.mxu0
      %2146 = vmatprep.mubr.bf16.mxu0 0
      %2147 = vmatmul.mubr.bf16.gmra.mxu0 %v2085
      %v2148 = vpop.f32.mrf.mxu0
      %v2149 = vadd.f32 0.0, %v2148
      %v2150 = vpop.f32.mrf.mxu0
      %v2151 = vpop.f32.mrf.mxu0
      %v2152 = vadd.f32 0.0, %v2151
      %v2153 = vpop.f32.mrf.mxu0
      %2154 = vdwg.mxu0
      %v2155 = vadd.f32 %v2036, %v2125
      %v2156 = vadd.f32 %v2037, %v2128
      %v2157 = vadd.f32 %v2038, %v2133
      %v2158 = vadd.f32 %v2039, %v2136
      %v2159 = vadd.f32 %v2040, %v2141
      %v2160 = vadd.f32 %v2041, %v2144
      %v2161 = vadd.f32 %v2042, %v2149
      %v2162 = vadd.f32 %v2043, %v2152
      %s2163 = scalar_lea.vmem [#allocation2], 152
      %v2164 = vld [vmem:[%s2163] sm:$0xf]
      %v2165 = vld [vmem:[%s2163 + $0x8] sm:$0xf]
      %v2166 = vld [vmem:[%s2163 + $0x10] sm:$0xf]
      %v2167 = vld [vmem:[%s2163 + $0x18] sm:$0xf]
      %v2168 = vld [vmem:[%s2163 + $0x20] sm:$0xf]
      %v2169 = vld [vmem:[%s2163 + $0x28] sm:$0xf]
      %v2170 = vld [vmem:[%s2163 + $0x30] sm:$0xf]
      %v2171 = vld [vmem:[%s2163 + $0x38] sm:$0xf]
      %s2172 = scalar_lea.vmem %s447, 14
      %v2173 = vld [vmem:[%s2172] sm:$0x3]
      %v2182 = vunpack.c.l.b16 %v2164
      %v2183 = vunpack.c.l.b16 %v2165
      %v2184 = vunpack.c.l.b16 %v2166
      %v2185 = vunpack.c.l.b16 %v2167
      %v2186 = vunpack.c.l.b16 %v2168
      %v2187 = vunpack.c.l.b16 %v2169
      %v2188 = vunpack.c.l.b16 %v2170
      %v2189 = vunpack.c.l.b16 %v2171
      %v2190 = vpack.c.b16 %v2183, %v2182
      %v2191 = vpack.c.b16 %v2185, %v2184
      %v2192 = vpack.c.b16 %v2187, %v2186
      %v2193 = vpack.c.b16 %v2189, %v2188
      %v2195 = vsel %vm1162, %v2190, 0
      %v2198 = vsel %vm1162, %v2191, 0
      %v2201 = vsel %vm1162, %v2192, 0
      %v2204 = vsel %vm1162, %v2193, 0
      %v2207 = vsel %vm1175, %v2173, 0
      %2209 = vmatprep.subr.bf16.mxu0 0
      %2210 = vmatpush1.bf16.msra.mxu0 0
      %2211 = vmatprep.subr.bf16.mxu0 0
      %2212 = vmatpush1.bf16.msra.mxu0 0
      %2213 = vmatprep.subr.bf16.mxu0 0
      %2214 = vmatpush1.bf16.msra.mxu0 0
      %2215 = vmatprep.subr.bf16.mxu0 0
      %2216 = vmatpush1.bf16.msra.mxu0 0
      %2217 = vmatprep.subr.bf16.mxu0 0
      %2218 = vmatpush1.bf16.msra.mxu0 0
      %2219 = vmatprep.subr.bf16.mxu0 0
      %2220 = vmatpush1.bf16.msra.mxu0 0
      %2221 = vmatprep.subr.bf16.mxu0 0
      %2222 = vmatpush1.bf16.msra.mxu0 0
      %2223 = vmatprep.subr.bf16.mxu0 0
      %2224 = vmatpush1.bf16.msra.mxu0 %v2207
      %2225 = vmatprep.subr.bf16.mxu0 0
      %2226 = vmatpush2.bf16.msra.mxu0 0
      %2227 = vmatprep.subr.bf16.mxu0 0
      %2228 = vmatpush2.bf16.msra.mxu0 0
      %2229 = vmatprep.subr.bf16.mxu0 0
      %2230 = vmatpush2.bf16.msra.mxu0 0
      %2231 = vmatprep.subr.bf16.mxu0 0
      %2232 = vmatpush2.bf16.msra.mxu0 0
      %2233 = vmatprep.subr.bf16.mxu0 0
      %2234 = vmatpush2.bf16.msra.mxu0 0
      %2235 = vmatprep.subr.bf16.mxu0 0
      %2236 = vmatpush2.bf16.msra.mxu0 0
      %2237 = vmatprep.subr.bf16.mxu0 0
      %2238 = vmatpush2.bf16.msra.mxu0 0
      %2239 = vmatprep.subr.bf16.mxu0 0
      %2240 = vmatpush2.bf16.msra.mxu0 0
      %2241 = vmatprep.mubr.bf16.mxu0 0
      %2242 = vmatmul.mubr.bf16.gmra.mxu0 %v2195
      %v2243 = vpop.f32.mrf.mxu0
      %v2244 = vadd.f32 0.0, %v2243
      %v2245 = vpop.f32.mrf.mxu0
      %v2246 = vpop.f32.mrf.mxu0
      %v2247 = vadd.f32 0.0, %v2246
      %v2248 = vpop.f32.mrf.mxu0
      %2249 = vmatprep.mubr.bf16.mxu0 0
      %2250 = vmatmul.mubr.bf16.gmra.mxu0 %v2198
      %v2251 = vpop.f32.mrf.mxu0
      %v2252 = vadd.f32 0.0, %v2251
      %v2253 = vpop.f32.mrf.mxu0
      %v2254 = vpop.f32.mrf.mxu0
      %v2255 = vadd.f32 0.0, %v2254
      %v2256 = vpop.f32.mrf.mxu0
      %2257 = vmatprep.mubr.bf16.mxu0 0
      %2258 = vmatmul.mubr.bf16.gmra.mxu0 %v2201
      %v2259 = vpop.f32.mrf.mxu0
      %v2260 = vadd.f32 0.0, %v2259
      %v2261 = vpop.f32.mrf.mxu0
      %v2262 = vpop.f32.mrf.mxu0
      %v2263 = vadd.f32 0.0, %v2262
      %v2264 = vpop.f32.mrf.mxu0
      %2265 = vmatprep.mubr.bf16.mxu0 0
      %2266 = vmatmul.mubr.bf16.gmra.mxu0 %v2204
      %v2267 = vpop.f32.mrf.mxu0
      %v2268 = vadd.f32 0.0, %v2267
      %v2269 = vpop.f32.mrf.mxu0
      %v2270 = vpop.f32.mrf.mxu0
      %v2271 = vadd.f32 0.0, %v2270
      %v2272 = vpop.f32.mrf.mxu0
      %2273 = vdwg.mxu0
      %v2274 = vadd.f32 %v2155, %v2244
      %v2275 = vadd.f32 %v2156, %v2247
      %v2276 = vadd.f32 %v2157, %v2252
      %v2277 = vadd.f32 %v2158, %v2255
      %v2278 = vadd.f32 %v2159, %v2260
      %v2279 = vadd.f32 %v2160, %v2263
      %v2280 = vadd.f32 %v2161, %v2268
      %v2281 = vadd.f32 %v2162, %v2271
      %v2282 = vld [vmem:[%s2044] sm:$0xf]
      %v2283 = vld [vmem:[%s2044 + $0x4] sm:$0x1]
      %v2284 = vld [vmem:[%s2044 + $0x8] sm:$0xf]
      %v2285 = vld [vmem:[%s2044 + $0xc] sm:$0x1]
      %v2286 = vld [vmem:[%s2044 + $0x10] sm:$0xf]
      %v2287 = vld [vmem:[%s2044 + $0x14] sm:$0x1]
      %v2288 = vld [vmem:[%s2044 + $0x18] sm:$0xf]
      %v2289 = vld [vmem:[%s2044 + $0x1c] sm:$0x1]
      %v2290 = vld [vmem:[%s2044 + $0x20] sm:$0xf]
      %v2291 = vld [vmem:[%s2044 + $0x24] sm:$0x1]
      %v2292 = vld [vmem:[%s2044 + $0x28] sm:$0xf]
      %v2293 = vld [vmem:[%s2044 + $0x2c] sm:$0x1]
      %v2294 = vld [vmem:[%s2044 + $0x30] sm:$0xf]
      %v2295 = vld [vmem:[%s2044 + $0x34] sm:$0x1]
      %v2296 = vld [vmem:[%s2044 + $0x38] sm:$0xf]
      %v2297 = vld [vmem:[%s2044 + $0x3c] sm:$0x1]
      %v2299 = vshrl.u32 %v2282, 16
      %v2301 = vrot.slane %v2299, 4
      %v2302 = vshll.u32 %v2282, 16
      %v2304 = vrot.slane %v2302, 5
      %v2305 = vor.u32 %v2301, %v2304
      %v2306 = vrot.slane %v2305, 4
      %v2308 = vshll.u32 %v2283, 16
      %v2310 = vrot.slane %v2308, 5
      %v2311 = vsel %vm1362, %v2306, %v2310
      %v2313 = vshrl.u32 %v2284, 16
      %v2315 = vrot.slane %v2313, 4
      %v2316 = vshll.u32 %v2284, 16
      %v2318 = vrot.slane %v2316, 5
      %v2319 = vor.u32 %v2315, %v2318
      %v2320 = vrot.slane %v2319, 4
      %v2322 = vshll.u32 %v2285, 16
      %v2324 = vrot.slane %v2322, 5
      %v2325 = vsel %vm1362, %v2320, %v2324
      %v2327 = vshrl.u32 %v2286, 16
      %v2329 = vrot.slane %v2327, 4
      %v2330 = vshll.u32 %v2286, 16
      %v2332 = vrot.slane %v2330, 5
      %v2333 = vor.u32 %v2329, %v2332
      %v2334 = vrot.slane %v2333, 4
      %v2336 = vshll.u32 %v2287, 16
      %v2338 = vrot.slane %v2336, 5
      %v2339 = vsel %vm1362, %v2334, %v2338
      %v2341 = vshrl.u32 %v2288, 16
      %v2343 = vrot.slane %v2341, 4
      %v2344 = vshll.u32 %v2288, 16
      %v2346 = vrot.slane %v2344, 5
      %v2347 = vor.u32 %v2343, %v2346
      %v2348 = vrot.slane %v2347, 4
      %v2350 = vshll.u32 %v2289, 16
      %v2352 = vrot.slane %v2350, 5
      %v2353 = vsel %vm1362, %v2348, %v2352
      %v2355 = vshrl.u32 %v2290, 16
      %v2357 = vrot.slane %v2355, 4
      %v2358 = vshll.u32 %v2290, 16
      %v2360 = vrot.slane %v2358, 5
      %v2361 = vor.u32 %v2357, %v2360
      %v2362 = vrot.slane %v2361, 4
      %v2364 = vshll.u32 %v2291, 16
      %v2366 = vrot.slane %v2364, 5
      %v2367 = vsel %vm1362, %v2362, %v2366
      %v2369 = vshrl.u32 %v2292, 16
      %v2371 = vrot.slane %v2369, 4
      %v2372 = vshll.u32 %v2292, 16
      %v2374 = vrot.slane %v2372, 5
      %v2375 = vor.u32 %v2371, %v2374
      %v2376 = vrot.slane %v2375, 4
      %v2378 = vshll.u32 %v2293, 16
      %v2380 = vrot.slane %v2378, 5
      %v2381 = vsel %vm1362, %v2376, %v2380
      %v2383 = vshrl.u32 %v2294, 16
      %v2385 = vrot.slane %v2383, 4
      %v2386 = vshll.u32 %v2294, 16
      %v2388 = vrot.slane %v2386, 5
      %v2389 = vor.u32 %v2385, %v2388
      %v2390 = vrot.slane %v2389, 4
      %v2392 = vshll.u32 %v2295, 16
      %v2394 = vrot.slane %v2392, 5
      %v2395 = vsel %vm1362, %v2390, %v2394
      %v2397 = vshrl.u32 %v2296, 16
      %v2399 = vrot.slane %v2397, 4
      %v2400 = vshll.u32 %v2296, 16
      %v2402 = vrot.slane %v2400, 5
      %v2403 = vor.u32 %v2399, %v2402
      %v2404 = vrot.slane %v2403, 4
      %v2406 = vshll.u32 %v2297, 16
      %v2408 = vrot.slane %v2406, 5
      %v2409 = vsel %vm1362, %v2404, %v2408
      %s2410 = scalar_lea.vmem %s447, 16
      %v2411 = vld [vmem:[%s2410] sm:$0x3]
      %v2412 = vunpack.c.l.b16 %v2311
      %v2413 = vunpack.c.l.b16 %v2325
      %v2414 = vunpack.c.l.b16 %v2339
      %v2415 = vunpack.c.l.b16 %v2353
      %v2416 = vunpack.c.l.b16 %v2367
      %v2417 = vunpack.c.l.b16 %v2381
      %v2418 = vunpack.c.l.b16 %v2395
      %v2419 = vunpack.c.l.b16 %v2409
      %v2420 = vpack.c.b16 %v2413, %v2412
      %v2421 = vpack.c.b16 %v2415, %v2414
      %v2422 = vpack.c.b16 %v2417, %v2416
      %v2423 = vpack.c.b16 %v2419, %v2418
      %v2425 = vsel %vm1162, %v2420, 0
      %v2428 = vsel %vm1162, %v2421, 0
      %v2431 = vsel %vm1162, %v2422, 0
      %v2434 = vsel %vm1162, %v2423, 0
      %v2437 = vsel %vm1175, %v2411, 0
      %2439 = vmatprep.subr.bf16.mxu0 0
      %2440 = vmatpush1.bf16.msra.mxu0 0
      %2441 = vmatprep.subr.bf16.mxu0 0
      %2442 = vmatpush1.bf16.msra.mxu0 0
      %2443 = vmatprep.subr.bf16.mxu0 0
      %2444 = vmatpush1.bf16.msra.mxu0 0
      %2445 = vmatprep.subr.bf16.mxu0 0
      %2446 = vmatpush1.bf16.msra.mxu0 0
      %2447 = vmatprep.subr.bf16.mxu0 0
      %2448 = vmatpush1.bf16.msra.mxu0 0
      %2449 = vmatprep.subr.bf16.mxu0 0
      %2450 = vmatpush1.bf16.msra.mxu0 0
      %2451 = vmatprep.subr.bf16.mxu0 0
      %2452 = vmatpush1.bf16.msra.mxu0 0
      %2453 = vmatprep.subr.bf16.mxu0 0
      %2454 = vmatpush1.bf16.msra.mxu0 %v2437
      %2455 = vmatprep.subr.bf16.mxu0 0
      %2456 = vmatpush2.bf16.msra.mxu0 0
      %2457 = vmatprep.subr.bf16.mxu0 0
      %2458 = vmatpush2.bf16.msra.mxu0 0
      %2459 = vmatprep.subr.bf16.mxu0 0
      %2460 = vmatpush2.bf16.msra.mxu0 0
      %2461 = vmatprep.subr.bf16.mxu0 0
      %2462 = vmatpush2.bf16.msra.mxu0 0
      %2463 = vmatprep.subr.bf16.mxu0 0
      %2464 = vmatpush2.bf16.msra.mxu0 0
      %2465 = vmatprep.subr.bf16.mxu0 0
      %2466 = vmatpush2.bf16.msra.mxu0 0
      %2467 = vmatprep.subr.bf16.mxu0 0
      %2468 = vmatpush2.bf16.msra.mxu0 0
      %2469 = vmatprep.subr.bf16.mxu0 0
      %2470 = vmatpush2.bf16.msra.mxu0 0
      %2471 = vmatprep.mubr.bf16.mxu0 0
      %2472 = vmatmul.mubr.bf16.gmra.mxu0 %v2425
      %v2473 = vpop.f32.mrf.mxu0
      %v2474 = vadd.f32 0.0, %v2473
      %v2475 = vpop.f32.mrf.mxu0
      %v2476 = vpop.f32.mrf.mxu0
      %v2477 = vadd.f32 0.0, %v2476
      %v2478 = vpop.f32.mrf.mxu0
      %2479 = vmatprep.mubr.bf16.mxu0 0
      %2480 = vmatmul.mubr.bf16.gmra.mxu0 %v2428
      %v2481 = vpop.f32.mrf.mxu0
      %v2482 = vadd.f32 0.0, %v2481
      %v2483 = vpop.f32.mrf.mxu0
      %v2484 = vpop.f32.mrf.mxu0
      %v2485 = vadd.f32 0.0, %v2484
      %v2486 = vpop.f32.mrf.mxu0
      %2487 = vmatprep.mubr.bf16.mxu0 0
      %2488 = vmatmul.mubr.bf16.gmra.mxu0 %v2431
      %v2489 = vpop.f32.mrf.mxu0
      %v2490 = vadd.f32 0.0, %v2489
      %v2491 = vpop.f32.mrf.mxu0
      %v2492 = vpop.f32.mrf.mxu0
      %v2493 = vadd.f32 0.0, %v2492
      %v2494 = vpop.f32.mrf.mxu0
      %2495 = vmatprep.mubr.bf16.mxu0 0
      %2496 = vmatmul.mubr.bf16.gmra.mxu0 %v2434
      %v2497 = vpop.f32.mrf.mxu0
      %v2498 = vadd.f32 0.0, %v2497
      %v2499 = vpop.f32.mrf.mxu0
      %v2500 = vpop.f32.mrf.mxu0
      %v2501 = vadd.f32 0.0, %v2500
      %v2502 = vpop.f32.mrf.mxu0
      %2503 = vdwg.mxu0
      %v2504 = vadd.f32 %v2274, %v2474
      %v2505 = vadd.f32 %v2275, %v2477
      %v2506 = vadd.f32 %v2276, %v2482
      %v2507 = vadd.f32 %v2277, %v2485
      %v2508 = vadd.f32 %v2278, %v2490
      %v2509 = vadd.f32 %v2279, %v2493
      %v2510 = vadd.f32 %v2280, %v2498
      %v2511 = vadd.f32 %v2281, %v2501
      %v2512 = vpack.c.bf16 %v2505, %v2504
      %v2513 = vpack.c.bf16 %v2507, %v2506
      %v2514 = vpack.c.bf16 %v2509, %v2508
      %v2515 = vpack.c.bf16 %v2511, %v2510
      %v2520 = vunpack.c.l.b16 %v2512
      %v2521 = vunpack.c.h.b16 %v2512
      %v2522 = vunpack.c.l.b16 %v2513
      %v2523 = vunpack.c.h.b16 %v2513
      %v2524 = vunpack.c.l.b16 %v2514
      %v2525 = vunpack.c.h.b16 %v2514
      %v2526 = vunpack.c.l.b16 %v2515
      %v2527 = vunpack.c.h.b16 %v2515
      %v2528 = vpack.c.b16 %v2520, %v2520
      %v2529 = vpack.c.b16 %v2521, %v2521
      %v2530 = vpack.c.b16 %v2522, %v2522
      %v2531 = vpack.c.b16 %v2523, %v2523
      %v2532 = vpack.c.b16 %v2524, %v2524
      %v2533 = vpack.c.b16 %v2525, %v2525
      %v2534 = vpack.c.b16 %v2526, %v2526
      %v2535 = vpack.c.b16 %v2527, %v2527
      %vm2544 = vcmask 60416
      %2545 = vst.msk [vmem:[%s459] sm:$0xf] %vm2544, %v2528
      %2546 = vst.msk [vmem:[%s459 + $0x4] sm:$0xf] %vm2544, %v2529
      %2547 = vst.msk [vmem:[%s459 + $0x8] sm:$0xf] %vm2544, %v2530
      %2548 = vst.msk [vmem:[%s459 + $0xc] sm:$0xf] %vm2544, %v2531
      %2549 = vst.msk [vmem:[%s459 + $0x10] sm:$0xf] %vm2544, %v2532
      %2550 = vst.msk [vmem:[%s459 + $0x14] sm:$0xf] %vm2544, %v2533
      %2551 = vst.msk [vmem:[%s459 + $0x18] sm:$0xf] %vm2544, %v2534
      %2552 = vst.msk [vmem:[%s459 + $0x1c] sm:$0xf] %vm2544, %v2535
      %v2553 = vld [vmem:[#allocation2] sm:$0xf]
      %v2554 = vld [vmem:[#allocation2 + $0x8] sm:$0xf]
      %v2555 = vld [vmem:[#allocation2 + $0x10] sm:$0xf]
      %v2556 = vld [vmem:[#allocation2 + $0x18] sm:$0xf]
      %v2557 = vld [vmem:[#allocation2 + $0x20] sm:$0xf]
      %v2558 = vld [vmem:[#allocation2 + $0x28] sm:$0xf]
      %v2559 = vld [vmem:[#allocation2 + $0x30] sm:$0xf]
      %v2560 = vld [vmem:[#allocation2 + $0x38] sm:$0xf]
      %v2561 = vld [vmem:[%s451] sm:$0x3]
      %v2570 = vunpack.c.l.b16 %v2553
      %v2571 = vunpack.c.l.b16 %v2554
      %v2572 = vunpack.c.l.b16 %v2555
      %v2573 = vunpack.c.l.b16 %v2556
      %v2574 = vunpack.c.l.b16 %v2557
      %v2575 = vunpack.c.l.b16 %v2558
      %v2576 = vunpack.c.l.b16 %v2559
      %v2577 = vunpack.c.l.b16 %v2560
      %v2578 = vpack.c.b16 %v2571, %v2570
      %v2579 = vpack.c.b16 %v2573, %v2572
      %v2580 = vpack.c.b16 %v2575, %v2574
      %v2581 = vpack.c.b16 %v2577, %v2576
      %v2583 = vsel %vm1162, %v2578, 0
      %v2586 = vsel %vm1162, %v2579, 0
      %v2589 = vsel %vm1162, %v2580, 0
      %v2592 = vsel %vm1162, %v2581, 0
      %v2595 = vsel %vm1175, %v2561, 0
      %2597 = vmatprep.subr.bf16.mxu0 0
      %2598 = vmatpush1.bf16.msra.mxu0 0
      %2599 = vmatprep.subr.bf16.mxu0 0
      %2600 = vmatpush1.bf16.msra.mxu0 0
      %2601 = vmatprep.subr.bf16.mxu0 0
      %2602 = vmatpush1.bf16.msra.mxu0 0
      %2603 = vmatprep.subr.bf16.mxu0 0
      %2604 = vmatpush1.bf16.msra.mxu0 0
      %2605 = vmatprep.subr.bf16.mxu0 0
      %2606 = vmatpush1.bf16.msra.mxu0 0
      %2607 = vmatprep.subr.bf16.mxu0 0
      %2608 = vmatpush1.bf16.msra.mxu0 0
      %2609 = vmatprep.subr.bf16.mxu0 0
      %2610 = vmatpush1.bf16.msra.mxu0 0
      %2611 = vmatprep.subr.bf16.mxu0 0
      %2612 = vmatpush1.bf16.msra.mxu0 %v2595
      %2613 = vmatprep.subr.bf16.mxu0 0
      %2614 = vmatpush2.bf16.msra.mxu0 0
      %2615 = vmatprep.subr.bf16.mxu0 0
      %2616 = vmatpush2.bf16.msra.mxu0 0
      %2617 = vmatprep.subr.bf16.mxu0 0
      %2618 = vmatpush2.bf16.msra.mxu0 0
      %2619 = vmatprep.subr.bf16.mxu0 0
      %2620 = vmatpush2.bf16.msra.mxu0 0
      %2621 = vmatprep.subr.bf16.mxu0 0
      %2622 = vmatpush2.bf16.msra.mxu0 0
      %2623 = vmatprep.subr.bf16.mxu0 0
      %2624 = vmatpush2.bf16.msra.mxu0 0
      %2625 = vmatprep.subr.bf16.mxu0 0
      %2626 = vmatpush2.bf16.msra.mxu0 0
      %2627 = vmatprep.subr.bf16.mxu0 0
      %2628 = vmatpush2.bf16.msra.mxu0 0
      %2629 = vmatprep.mubr.bf16.mxu0 0
      %2630 = vmatmul.mubr.bf16.gmra.mxu0 %v2583
      %v2631 = vpop.f32.mrf.mxu0
      %v2632 = vadd.f32 0.0, %v2631
      %v2633 = vpop.f32.mrf.mxu0
      %v2634 = vpop.f32.mrf.mxu0
      %v2635 = vadd.f32 0.0, %v2634
      %v2636 = vpop.f32.mrf.mxu0
      %2637 = vmatprep.mubr.bf16.mxu0 0
      %2638 = vmatmul.mubr.bf16.gmra.mxu0 %v2586
      %v2639 = vpop.f32.mrf.mxu0
      %v2640 = vadd.f32 0.0, %v2639
      %v2641 = vpop.f32.mrf.mxu0
      %v2642 = vpop.f32.mrf.mxu0
      %v2643 = vadd.f32 0.0, %v2642
      %v2644 = vpop.f32.mrf.mxu0
      %2645 = vmatprep.mubr.bf16.mxu0 0
      %2646 = vmatmul.mubr.bf16.gmra.mxu0 %v2589
      %v2647 = vpop.f32.mrf.mxu0
      %v2648 = vadd.f32 0.0, %v2647
      %v2649 = vpop.f32.mrf.mxu0
      %v2650 = vpop.f32.mrf.mxu0
      %v2651 = vadd.f32 0.0, %v2650
      %v2652 = vpop.f32.mrf.mxu0
      %2653 = vmatprep.mubr.bf16.mxu0 0
      %2654 = vmatmul.mubr.bf16.gmra.mxu0 %v2592
      %v2655 = vpop.f32.mrf.mxu0
      %v2656 = vadd.f32 0.0, %v2655
      %v2657 = vpop.f32.mrf.mxu0
      %v2658 = vpop.f32.mrf.mxu0
      %v2659 = vadd.f32 0.0, %v2658
      %v2660 = vpop.f32.mrf.mxu0
      %2661 = vdwg.mxu0
      %v2662 = vpack.c.bf16 %v2635, %v2632
      %v2663 = vpack.c.bf16 %v2643, %v2640
      %v2664 = vpack.c.bf16 %v2651, %v2648
      %v2665 = vpack.c.bf16 %v2659, %v2656
      %v2670 = vunpack.c.l.b16 %v2662
      %v2671 = vunpack.c.h.b16 %v2662
      %v2672 = vunpack.c.l.b16 %v2663
      %v2673 = vunpack.c.h.b16 %v2663
      %v2674 = vunpack.c.l.b16 %v2664
      %v2675 = vunpack.c.h.b16 %v2664
      %v2676 = vunpack.c.l.b16 %v2665
      %v2677 = vunpack.c.h.b16 %v2665
      %v2678 = vpack.c.b16 %v2670, %v2670
      %v2679 = vpack.c.b16 %v2671, %v2671
      %v2680 = vpack.c.b16 %v2672, %v2672
      %v2681 = vpack.c.b16 %v2673, %v2673
      %v2682 = vpack.c.b16 %v2674, %v2674
      %v2683 = vpack.c.b16 %v2675, %v2675
      %v2684 = vpack.c.b16 %v2676, %v2676
      %v2685 = vpack.c.b16 %v2677, %v2677
      %2694 = vst.msk [vmem:[%s467] sm:$0xf] %vm2544, %v2678
      %2695 = vst.msk [vmem:[%s467 + $0x4] sm:$0xf] %vm2544, %v2679
      %2696 = vst.msk [vmem:[%s467 + $0x8] sm:$0xf] %vm2544, %v2680
      %2697 = vst.msk [vmem:[%s467 + $0xc] sm:$0xf] %vm2544, %v2681
      %2698 = vst.msk [vmem:[%s467 + $0x10] sm:$0xf] %vm2544, %v2682
      %2699 = vst.msk [vmem:[%s467 + $0x14] sm:$0xf] %vm2544, %v2683
      %2700 = vst.msk [vmem:[%s467 + $0x18] sm:$0xf] %vm2544, %v2684
      %2701 = vst.msk [vmem:[%s467 + $0x1c] sm:$0xf] %vm2544, %v2685
      %p2702 = scmp.lt.s32.totalorder %s25, 1
      %s2703 = scalar_select %p2702, %s25, 1
      %p2704 = scmp.lt.s32.totalorder %s26, 0
      %s2705 = scalar_select %p2704, %s26, 0
      %s2706 = smul.addr %s2703, 8
      %s2707 = sadd.s32 %s2705, %s2706
      %s2708 = smul.addr %s2707, 4
      %s2709 = scalar_lea.vmem %s8, %s2708
      %p2710 = scmp.lt.s32.totalorder %s25, 1
      %s2711 = scalar_select %p2710, %s25, 1
      %p2712 = scmp.lt.s32.totalorder %s26, 0
      %s2713 = scalar_select %p2712, %s26, 0
      %s2714 = smul.addr %s2711, 8
      %s2715 = sadd.s32 %s2713, %s2714
      %s2716 = smul.addr %s2715, 4
      %s2717 = scalar_lea.vmem %s9, %s2716
      // Predicated region
      $region57: #{network_block_forward.4} parent=51 // pred_check
        %p2718 = pneg %p251
      $region58: #{network_block_forward.4} parent=51 // pred_check_branch
        %2720 = sbr.rel (%p2718) target = $region60
      $region59: #{network_block_forward.4} parent=51 // pred_region
        _
      $region60: #{network_block_forward.4} parent=51 // pred_fallthru
        _
      // Predicated region
      $region61: #{network_block_forward.4} parent=51 // pred_check
        %p2721 = pneg %p279
      $region62: #{network_block_forward.4} parent=51 // pred_check_branch
        %2723 = sbr.rel (%p2721) target = $region64
      $region63: #{network_block_forward.4} parent=51 // pred_region
        _
      $region64: #{network_block_forward.4} parent=51 // pred_fallthru
        _
    $region52: #{network_block_forward.4} parent=5 // pred_fallthru
      _
    %p2724 = scmp.le.s32.totalorder 2, %s16
    // Predicated region
    $region65: #{network_block_forward.4} parent=5 // pred_check
      %p2725 = pneg %p2724
    $region66: #{network_block_forward.4} parent=5 // pred_check_branch
      %2727 = sbr.rel (%p2725) target = $region68
    $region67: #{network_block_forward.4} parent=5 // pred_region
      %s2728 = ssub.s32 %s16, 2
      // Predicated region
      $region69: #{network_block_forward.4} parent=67 // pred_check
        %p2729 = pneg %p257
      $region70: #{network_block_forward.4} parent=67 // pred_check_branch
        %2731 = sbr.rel (%p2729) target = $region72
      $region71: #{network_block_forward.4} parent=67 // pred_region
        %p2732 = scmp.lt.s32.totalorder %s27, 1
        %s2733 = scalar_select %p2732, %s27, 1
        %p2734 = scmp.lt.s32.totalorder %s28, 0
        %s2735 = scalar_select %p2734, %s28, 0
        %s2736 = smul.addr %s2733, 8
        %s2737 = sadd.s32 %s2735, %s2736
        %s2738 = smul.addr %s2737, 4
        %s2739 = scalar_lea.vmem %s8, %s2738
      $region72: #{network_block_forward.4} parent=67 // pred_fallthru
        _
      // Predicated region
      $region73: #{network_block_forward.4} parent=67 // pred_check
        %p2740 = pneg %p285
      $region74: #{network_block_forward.4} parent=67 // pred_check_branch
        %2742 = sbr.rel (%p2740) target = $region76
      $region75: #{network_block_forward.4} parent=67 // pred_region
        %p2743 = scmp.lt.s32.totalorder %s27, 1
        %s2744 = scalar_select %p2743, %s27, 1
        %p2745 = scmp.lt.s32.totalorder %s28, 0
        %s2746 = scalar_select %p2745, %s28, 0
        %s2747 = smul.addr %s2744, 8
        %s2748 = sadd.s32 %s2746, %s2747
        %s2749 = smul.addr %s2748, 4
        %s2750 = scalar_lea.vmem %s9, %s2749
      $region76: #{network_block_forward.4} parent=67 // pred_fallthru
        _
    $region68: #{network_block_forward.4} parent=5 // pred_fallthru
      _
  $region6: #{network_block_forward.4} parent=0 // loop_footer
    %s20 = sadd.s32 1, %s16
  $region7: #{network_block_forward.4} parent=0 // loop_footer_branch
    %15 = sbr.rel target = $region3
  $region8: #{network_block_forward.4} parent=0 // loop_exit
    _

// kernel: network_block_forward.6
$region0: #{network_block_forward.6}
  #allocation0 [shape = 'u32[]', space=smem, size = 0x4, offset = 0x4, fixed_abs, tag = 'smem constant byte address 0x4 - core index']
  #allocation1 [shape = 'u32[144,128]{1,0:T(1,128)}', space=vmem, size = 0x12000, scoped, tag = 'internal scratch']
  #allocation2 [shape = 'bf16[10,10,8]{2,1,0:T(8,128)(2,1)}', space=vmem, size = 0xa000, scoped, tag = 'scratch operand']
  %s0 = inlined_call_operand.vmem [shape: bf16[2,8,8,8], index: 0, kind: input, shape index: {}]
  %s1 = inlined_call_operand.vmem [shape: f32[1,8], index: 1, kind: input, shape index: {}]
  %s2 = inlined_call_operand.vmem [shape: f32[1,8], index: 2, kind: input, shape index: {}]
  %s3 = inlined_call_operand.vmem [shape: bf16[3,3,8,8], index: 3, kind: input, shape index: {}]
  %s4 = inlined_call_operand.vmem [shape: bf16[2,64,8], index: 4, kind: output, shape index: {}]
  %s5 = sld [smem:[#allocation0]]
  $region53: #{network_block_forward.6} parent=0
    _
  %s7 = ssub.s32 1, %s5
  %s8 = scalar_select 0, %s7, %s5
  loop: start=0, step=1, limit=4
  $region2: #{network_block_forward.6} parent=0 // loop_pre_header
    _
  $region3: #{network_block_forward.6} parent=0 // loop_header
    %s10 = sphi 0, %s14
    %p11 = scmp.ge.s32.totalorder %s10, 4
    %s17 = sphi 0, %s29
    %s18 = sphi 0, %s25
    %s19 = sphi 0, %s17
    %s20 = sphi 0, %s18
    %s21 = sphi 0, %s19
    %s22 = sphi 0, %s20
    %s32 = sphi 0, %s34
    %s35 = sphi 0, %s32
    %s36 = sphi 0, %s35
    %s52 = sphi 0, %s36
    %s56 = sphi 0, %s56
    %s58 = sphi 0, %s56
    %s59 = sphi 0, %s58
    %s73 = sphi 0, %s59
    %s77 = sphi 0, %s77
    %s79 = sphi 0, %s77
    %s80 = sphi 0, %s79
    %s94 = sphi 0, %s80
    %s100 = sphi 0, %s102
    %s103 = sphi 0, %s100
    %s104 = sphi 0, %s103
    %s120 = sphi 0, %s104
    %s128 = sphi 0, %s130
    %s131 = sphi 0, %s128
    %s132 = sphi 0, %s131
    %s148 = sphi 0, %s132
  $region4: #{network_block_forward.6} parent=0 // loop_header_branch
    %13 = sbr.rel (%p11) target = $region8
  $region5: #{network_block_forward.6} parent=0 // loop_body
    %s15 = ssub.s32 %s10, 1
    %s16 = ssub.s32 %s10, 2
    %s23 = sadd.s32 1, %s18
    %p24 = scmp.ge.s32.totalorder %s23, 1
    %s25 = scalar_select %p24, 0, %s23
    %s26 = sadd.s32 1, %s17
    %s27 = scalar_select %p24, %s26, %s17
    %p28 = scmp.ge.s32.totalorder %s27, 2
    %s29 = scalar_select %p28, 0, %s27
    %s30 = ssub.s32 %s17, %s29
    %p31 = scmp.eq.s32.totalorder %s30, 0
    %s33 = sadd.s32 %s32, 1
    %s34 = scalar_select %p31, %s32, %s33
    %p37 = pneg %p31
    %p38 = scmp.eq.s32.totalorder %s10, 1
    %p39 = por %p37, %p38
    %p40 = scmp.ne.s32.totalorder %s32, %s35
    %p41 = scmp.eq.s32.totalorder %s10, 0
    %p42 = por %p40, %p41
    %p43 = scmp.ne.s32.totalorder %s32, %s35
    %p44 = scmp.eq.s32.totalorder %s15, 1
    %p45 = por %p43, %p44
    %p46 = scmp.ne.s32.totalorder %s35, %s36
    %p47 = scmp.eq.s32.totalorder %s15, 0
    %p48 = por %p46, %p47
    %p49 = scmp.ne.s32.totalorder %s35, %s36
    %p50 = scmp.eq.s32.totalorder %s16, 1
    %p51 = por %p49, %p50
    %p53 = scmp.ne.s32.totalorder %s36, %s52
    %p54 = scmp.eq.s32.totalorder %s16, 0
    %p55 = por %p53, %p54
    %s57 = sadd.s32 %s56, 1
    %p60 = scmp.eq.s32.totalorder %s10, 1
    %p61 = scmp.ne.s32.totalorder %s56, %s58
    %p62 = scmp.eq.s32.totalorder %s10, 0
    %p63 = por %p61, %p62
    %p64 = scmp.ne.s32.totalorder %s56, %s58
    %p65 = scmp.eq.s32.totalorder %s15, 1
    %p66 = por %p64, %p65
    %p67 = scmp.ne.s32.totalorder %s58, %s59
    %p68 = scmp.eq.s32.totalorder %s15, 0
    %p69 = por %p67, %p68
    %p70 = scmp.ne.s32.totalorder %s58, %s59
    %p71 = scmp.eq.s32.totalorder %s16, 1
    %p72 = por %p70, %p71
    %p74 = scmp.ne.s32.totalorder %s59, %s73
    %p75 = scmp.eq.s32.totalorder %s16, 0
    %p76 = por %p74, %p75
    %s78 = sadd.s32 %s77, 1
    %p81 = scmp.eq.s32.totalorder %s10, 1
    %p82 = scmp.ne.s32.totalorder %s77, %s79
    %p83 = scmp.eq.s32.totalorder %s10, 0
    %p84 = por %p82, %p83
    %p85 = scmp.ne.s32.totalorder %s77, %s79
    %p86 = scmp.eq.s32.totalorder %s15, 1
    %p87 = por %p85, %p86
    %p88 = scmp.ne.s32.totalorder %s79, %s80
    %p89 = scmp.eq.s32.totalorder %s15, 0
    %p90 = por %p88, %p89
    %p91 = scmp.ne.s32.totalorder %s79, %s80
    %p92 = scmp.eq.s32.totalorder %s16, 1
    %p93 = por %p91, %p92
    %p95 = scmp.ne.s32.totalorder %s80, %s94
    %p96 = scmp.eq.s32.totalorder %s16, 0
    %p97 = por %p95, %p96
    %s98 = ssub.s32 %s18, %s25
    %p99 = scmp.eq.s32.totalorder %s98, 0
    %s101 = sadd.s32 %s100, 1
    %s102 = scalar_select %p99, %s100, %s101
    %p105 = pneg %p99
    %p106 = scmp.eq.s32.totalorder %s10, 1
    %p107 = por %p105, %p106
    %p108 = scmp.ne.s32.totalorder %s100, %s103
    %p109 = scmp.eq.s32.totalorder %s10, 0
    %p110 = por %p108, %p109
    %p111 = scmp.ne.s32.totalorder %s100, %s103
    %p112 = scmp.eq.s32.totalorder %s15, 1
    %p113 = por %p111, %p112
    %p114 = scmp.ne.s32.totalorder %s103, %s104
    %p115 = scmp.eq.s32.totalorder %s15, 0
    %p116 = por %p114, %p115
    %p117 = scmp.ne.s32.totalorder %s103, %s104
    %p118 = scmp.eq.s32.totalorder %s16, 1
    %p119 = por %p117, %p118
    %p121 = scmp.ne.s32.totalorder %s104, %s120
    %p122 = scmp.eq.s32.totalorder %s16, 0
    %p123 = por %p121, %p122
    %s124 = ssub.s32 %s17, %s29
    %s125 = ssub.s32 %s18, %s25
    %s126 = sor.u32 %s124, %s125
    %p127 = scmp.eq.s32.totalorder %s126, 0
    %s129 = sadd.s32 %s128, 1
    %s130 = scalar_select %p127, %s128, %s129
    %p133 = pneg %p127
    %p134 = scmp.eq.s32.totalorder %s10, 1
    %p135 = por %p133, %p134
    %p136 = scmp.ne.s32.totalorder %s128, %s131
    %p137 = scmp.eq.s32.totalorder %s10, 0
    %p138 = por %p136, %p137
    %p139 = scmp.ne.s32.totalorder %s128, %s131
    %p140 = scmp.eq.s32.totalorder %s15, 1
    %p141 = por %p139, %p140
    %p142 = scmp.ne.s32.totalorder %s131, %s132
    %p143 = scmp.eq.s32.totalorder %s15, 0
    %p144 = por %p142, %p143
    %p145 = scmp.ne.s32.totalorder %s131, %s132
    %p146 = scmp.eq.s32.totalorder %s16, 1
    %p147 = por %p145, %p146
    %p149 = scmp.ne.s32.totalorder %s132, %s148
    %p150 = scmp.eq.s32.totalorder %s16, 0
    %p151 = por %p149, %p150
    %p152 = scmp.le.s32.totalorder 1, %s10
    %p153 = scmp.lt.s32.totalorder %s10, 3
    %p154 = pnand %p152, %p153
    %p155 = pneg %p154
    // Predicated region
    $region9: #{network_block_forward.6} parent=5 // pred_check
      _
    $region10: #{network_block_forward.6} parent=5 // pred_check_branch
      %157 = sbr.rel (%p154) target = $region12
    $region11: #{network_block_forward.6} parent=5 // pred_region
      %s158 = ssub.s32 %s10, 1
      // Predicated region
      $region13: #{network_block_forward.6} parent=11 // pred_check
        %p159 = pneg %p69
      $region14: #{network_block_forward.6} parent=11 // pred_check_branch
        %161 = sbr.rel (%p159) target = $region16
      $region15: #{network_block_forward.6} parent=11 // pred_region
        _
      $region16: #{network_block_forward.6} parent=11 // pred_fallthru
        _
      // Predicated region
      $region17: #{network_block_forward.6} parent=11 // pred_check
        %p162 = pneg %p90
      $region18: #{network_block_forward.6} parent=11 // pred_check_branch
        %164 = sbr.rel (%p162) target = $region20
      $region19: #{network_block_forward.6} parent=11 // pred_region
        _
      $region20: #{network_block_forward.6} parent=11 // pred_fallthru
        _
      // Predicated region
      $region21: #{network_block_forward.6} parent=11 // pred_check
        %p165 = pneg %p116
      $region22: #{network_block_forward.6} parent=11 // pred_check_branch
        %167 = sbr.rel (%p165) target = $region24
      $region23: #{network_block_forward.6} parent=11 // pred_region
        %p168 = scmp.lt.s32.totalorder %s20, 0
        %s169 = scalar_select %p168, %s20, 0
        %s170 = smul.addr %s169, 4
        %s171 = scalar_lea.vmem %s3, %s170
      $region24: #{network_block_forward.6} parent=11 // pred_fallthru
        _
    $region12: #{network_block_forward.6} parent=5 // pred_fallthru
      _
    %p172 = scmp.lt.s32.totalorder %s10, 2
    // Predicated region
    $region25: #{network_block_forward.6} parent=5 // pred_check
      %p173 = pneg %p172
    $region26: #{network_block_forward.6} parent=5 // pred_check_branch
      %175 = sbr.rel (%p173) target = $region28
    $region27: #{network_block_forward.6} parent=5 // pred_region
      // Predicated region
      $region29: #{network_block_forward.6} parent=27 // pred_check
        %p176 = pneg %p42
      $region30: #{network_block_forward.6} parent=27 // pred_check_branch
        %178 = sbr.rel (%p176) target = $region32
      $region31: #{network_block_forward.6} parent=27 // pred_region
        %p179 = scmp.lt.s32.totalorder %s17, 1
        %s180 = scalar_select %p179, %s17, 1
        %s181 = smul.addr %s180, 8
        %s182 = smul.addr %s181, 4
        %s183 = scalar_lea.vmem %s0, %s182
      $region32: #{network_block_forward.6} parent=27 // pred_fallthru
        _
    $region28: #{network_block_forward.6} parent=5 // pred_fallthru
      _
    %p184 = scmp.le.s32.totalorder 1, %s10
    %p185 = scmp.lt.s32.totalorder %s10, 3
    %p186 = pnand %p184, %p185
    %p187 = pneg %p186
    // Predicated region
    $region33: #{network_block_forward.6} parent=5 // pred_check
      _
    $region34: #{network_block_forward.6} parent=5 // pred_check_branch
      %189 = sbr.rel (%p186) target = $region36
    $region35: #{network_block_forward.6} parent=5 // pred_region
      %s190 = ssub.s32 %s10, 1
      %p191 = scmp.lt.s32.totalorder %s19, 1
      %s192 = scalar_select %p191, %s19, 1
      %s193 = smul.addr %s192, 8
      %s194 = smul.addr %s193, 4
      %s195 = scalar_lea.vmem %s0, %s194
      %p196 = pneg %p48
      %p197 = pneg %p45
      %p198 = pneg %p69
      %p199 = pneg %p66
      %p200 = pneg %p90
      %p201 = pneg %p87
      %p202 = scmp.lt.s32.totalorder %s20, 0
      %s203 = scalar_select %p202, %s20, 0
      %s204 = smul.addr %s203, 4
      %s205 = scalar_lea.vmem %s3, %s204
      %p206 = pneg %p116
      %p207 = pneg %p113
      %p208 = pneg %p144
      %p209 = pneg %p141
      %p210 = scmp.lt.s32.totalorder %s19, 1
      %s211 = scalar_select %p210, %s19, 1
      %p212 = scmp.lt.s32.totalorder %s20, 0
      %s213 = scalar_select %p212, %s20, 0
      %s214 = smul.addr %s211, 8
      %s215 = sadd.s32 %s213, %s214
      %s216 = smul.addr %s215, 4
      %s217 = scalar_lea.vmem %s4, %s216
      %p218 = scmp.lt.s32.totalorder %s19, 1
      %s219 = scalar_select %p218, %s19, 1
      %s220 = smul.addr %s219, 8
      %s221 = smul.addr %s220, 4
      %s222 = scalar_lea.vmem %s0, %s221
      %p223 = scmp.lt.s32.totalorder %s20, 0
      %s224 = scalar_select %p223, %s20, 0
      %s225 = smul.addr %s224, 4
      %s226 = scalar_lea.vmem %s3, %s225
      %p227 = scmp.lt.s32.totalorder %s19, 1
      %s228 = scalar_select %p227, %s19, 1
      %p229 = scmp.lt.s32.totalorder %s20, 0
      %s230 = scalar_select %p229, %s20, 0
      %s231 = smul.addr %s228, 8
      %s232 = sadd.s32 %s230, %s231
      %s233 = smul.addr %s232, 4
      %s234 = scalar_lea.vmem %s4, %s233
      %p236 = scmp.eq.s32.totalorder %s20, 0
      // Predicated region
      $region37: #{network_block_forward.6} parent=35 // pred_check
        %p237 = pneg %p236
      $region38: #{network_block_forward.6} parent=35 // pred_check_branch
        %239 = sbr.rel (%p237) target = $region40
      $region39: #{network_block_forward.6} parent=35 // pred_region
        %vm240 = vcmask 60416
        %241 = vst.msk [vmem:[#allocation2] sm:$0xf] %vm240, 0
        %vm242 = vcmask 57344
        %243 = vst.msk [vmem:[#allocation2 + $0x4] sm:$0x1] %vm242, 0
        %s244 = scalar_lea.vmem [#allocation2], 72
        %245 = vst.msk [vmem:[%s244] sm:$0xf] %vm240, 0
        %246 = vst.msk [vmem:[%s244 + $0x4] sm:$0x1] %vm242, 0
        %vm247 = vcmask 57344
        %vm248 = vsmask.f32 256
        %vm249 = vmand %vm247, %vm248
        %v250 = vld [vmem:[#allocation2] sm:$0x1]
        %v251 = vsel %vm249, 0, %v250
        %252 = vst [vmem:[#allocation2] sm:$0x1] %v251
        %v253 = vld [vmem:[#allocation2 + $0x8] sm:$0x1]
        %v254 = vsel %vm249, 0, %v253
        %255 = vst [vmem:[#allocation2 + $0x8] sm:$0x1] %v254
        %v256 = vld [vmem:[#allocation2 + $0x10] sm:$0x1]
        %v257 = vsel %vm249, 0, %v256
        %258 = vst [vmem:[#allocation2 + $0x10] sm:$0x1] %v257
        %v259 = vld [vmem:[#allocation2 + $0x18] sm:$0x1]
        %v260 = vsel %vm249, 0, %v259
        %261 = vst [vmem:[#allocation2 + $0x18] sm:$0x1] %v260
        %v262 = vld [vmem:[#allocation2 + $0x20] sm:$0x1]
        %v263 = vsel %vm249, 0, %v262
        %264 = vst [vmem:[#allocation2 + $0x20] sm:$0x1] %v263
        %v265 = vld [vmem:[#allocation2 + $0x28] sm:$0x1]
        %v266 = vsel %vm249, 0, %v265
        %267 = vst [vmem:[#allocation2 + $0x28] sm:$0x1] %v266
        %v268 = vld [vmem:[#allocation2 + $0x30] sm:$0x1]
        %v269 = vsel %vm249, 0, %v268
        %270 = vst [vmem:[#allocation2 + $0x30] sm:$0x1] %v269
        %v271 = vld [vmem:[#allocation2 + $0x38] sm:$0x1]
        %v272 = vsel %vm249, 0, %v271
        %273 = vst [vmem:[#allocation2 + $0x38] sm:$0x1] %v272
        %v274 = vld [vmem:[#allocation2 + $0x40] sm:$0x1]
        %v275 = vsel %vm249, 0, %v274
        %276 = vst [vmem:[#allocation2 + $0x40] sm:$0x1] %v275
        %v277 = vld [vmem:[#allocation2 + $0x48] sm:$0x1]
        %v278 = vsel %vm249, 0, %v277
        %279 = vst [vmem:[#allocation2 + $0x48] sm:$0x1] %v278
        %vm280 = vsmask.f32 7938
        %vm281 = vmand %vm247, %vm280
        %v282 = vld [vmem:[#allocation2 + $0x4] sm:$0x1]
        %v283 = vsel %vm281, 0, %v282
        %284 = vst [vmem:[#allocation2 + $0x4] sm:$0x1] %v283
        %v285 = vld [vmem:[#allocation2 + $0xc] sm:$0x1]
        %v286 = vsel %vm281, 0, %v285
        %287 = vst [vmem:[#allocation2 + $0xc] sm:$0x1] %v286
        %v288 = vld [vmem:[#allocation2 + $0x14] sm:$0x1]
        %v289 = vsel %vm281, 0, %v288
        %290 = vst [vmem:[#allocation2 + $0x14] sm:$0x1] %v289
        %v291 = vld [vmem:[#allocation2 + $0x1c] sm:$0x1]
        %v292 = vsel %vm281, 0, %v291
        %293 = vst [vmem:[#allocation2 + $0x1c] sm:$0x1] %v292
        %v294 = vld [vmem:[#allocation2 + $0x24] sm:$0x1]
        %v295 = vsel %vm281, 0, %v294
        %296 = vst [vmem:[#allocation2 + $0x24] sm:$0x1] %v295
        %v297 = vld [vmem:[#allocation2 + $0x2c] sm:$0x1]
        %v298 = vsel %vm281, 0, %v297
        %299 = vst [vmem:[#allocation2 + $0x2c] sm:$0x1] %v298
        %v300 = vld [vmem:[#allocation2 + $0x34] sm:$0x1]
        %v301 = vsel %vm281, 0, %v300
        %302 = vst [vmem:[#allocation2 + $0x34] sm:$0x1] %v301
        %v303 = vld [vmem:[#allocation2 + $0x3c] sm:$0x1]
        %v304 = vsel %vm281, 0, %v303
        %305 = vst [vmem:[#allocation2 + $0x3c] sm:$0x1] %v304
        %v306 = vld [vmem:[#allocation2 + $0x44] sm:$0x1]
        %v307 = vsel %vm281, 0, %v306
        %308 = vst [vmem:[#allocation2 + $0x44] sm:$0x1] %v307
        %v309 = vld [vmem:[#allocation2 + $0x4c] sm:$0x1]
        %v310 = vsel %vm281, 0, %v309
        %311 = vst [vmem:[#allocation2 + $0x4c] sm:$0x1] %v310
        %v312 = vld [vmem:[%s1] sm:$0x1]
        %v313 = vld [vmem:[%s2] sm:$0x1]
        %v314 = vld [vmem:[%s222] sm:$0xf]
        %v315 = vld [vmem:[%s222 + $0x4] sm:$0xf]
        %v316 = vld [vmem:[%s222 + $0x8] sm:$0xf]
        %v317 = vld [vmem:[%s222 + $0xc] sm:$0xf]
        %v318 = vld [vmem:[%s222 + $0x10] sm:$0xf]
        %v319 = vld [vmem:[%s222 + $0x14] sm:$0xf]
        %v320 = vld [vmem:[%s222 + $0x18] sm:$0xf]
        %v321 = vld [vmem:[%s222 + $0x1c] sm:$0xf]
        %v322 = vunpack.c.l.bf16 %v314
        %v323 = vunpack.c.l.bf16 %v315
        %v324 = vunpack.c.l.bf16 %v316
        %v325 = vunpack.c.l.bf16 %v317
        %v326 = vunpack.c.l.bf16 %v318
        %v327 = vunpack.c.l.bf16 %v319
        %v328 = vunpack.c.l.bf16 %v320
        %v329 = vunpack.c.l.bf16 %v321
        %v331 = vlaneseq
        %v332 = vshrl.u32 %v331, 7
        %v333 = vsub.s32 0, %v332
        %v334 = vrot.slane %v312, %v333
        %v336 = vmul.f32 %v322, %v334
        %v337 = vmul.f32 %v323, %v334
        %v338 = vmul.f32 %v324, %v334
        %v339 = vmul.f32 %v325, %v334
        %v340 = vmul.f32 %v326, %v334
        %v341 = vmul.f32 %v327, %v334
        %v342 = vmul.f32 %v328, %v334
        %v343 = vmul.f32 %v329, %v334
        %v345 = vlaneseq
        %v346 = vshrl.u32 %v345, 7
        %v347 = vsub.s32 0, %v346
        %v348 = vrot.slane %v313, %v347
        %v350 = vadd.f32 %v336, %v348
        %v351 = vadd.f32 %v337, %v348
        %v352 = vadd.f32 %v338, %v348
        %v353 = vadd.f32 %v339, %v348
        %v354 = vadd.f32 %v340, %v348
        %v355 = vadd.f32 %v341, %v348
        %v356 = vadd.f32 %v342, %v348
        %v357 = vadd.f32 %v343, %v348
        %v358 = vmax.f32 %v350, 0.0
        %v359 = vmax.f32 %v351, 0.0
        %v360 = vmax.f32 %v352, 0.0
        %v361 = vmax.f32 %v353, 0.0
        %v362 = vmax.f32 %v354, 0.0
        %v363 = vmax.f32 %v355, 0.0
        %v364 = vmax.f32 %v356, 0.0
        %v365 = vmax.f32 %v357, 0.0
        %v366 = vpack.c.bf16 %v358, %v358
        %v367 = vpack.c.bf16 %v359, %v359
        %v368 = vpack.c.bf16 %v360, %v360
        %v369 = vpack.c.bf16 %v361, %v361
        %v370 = vpack.c.bf16 %v362, %v362
        %v371 = vpack.c.bf16 %v363, %v363
        %v372 = vpack.c.bf16 %v364, %v364
        %v373 = vpack.c.bf16 %v365, %v365
        %v382 = vunpack.c.l.b16 %v366
        %v383 = vunpack.c.l.b16 %v367
        %v384 = vunpack.c.l.b16 %v368
        %v385 = vunpack.c.l.b16 %v369
        %v386 = vunpack.c.l.b16 %v370
        %v387 = vunpack.c.l.b16 %v371
        %v388 = vunpack.c.l.b16 %v372
        %v389 = vunpack.c.l.b16 %v373
        %v390 = vpack.c.b16 %v382, %v382
        %v391 = vpack.c.b16 %v383, %v383
        %v392 = vpack.c.b16 %v384, %v384
        %v393 = vpack.c.b16 %v385, %v385
        %v394 = vpack.c.b16 %v386, %v386
        %v395 = vpack.c.b16 %v387, %v387
        %v396 = vpack.c.b16 %v388, %v388
        %v397 = vpack.c.b16 %v389, %v389
        %v399 = vshrl.u32 %v390, 16
        %v401 = vrot.slane %v399, 7
        %v402 = vshll.u32 %v390, 16
        %v404 = vor.u32 %v401, %v402
        %v405 = vrot.slane %v401, 4
        %v407 = vshrl.u32 %v391, 16
        %v409 = vrot.slane %v407, 7
        %v410 = vshll.u32 %v391, 16
        %v412 = vor.u32 %v409, %v410
        %v413 = vrot.slane %v409, 4
        %v415 = vshrl.u32 %v392, 16
        %v417 = vrot.slane %v415, 7
        %v418 = vshll.u32 %v392, 16
        %v420 = vor.u32 %v417, %v418
        %v421 = vrot.slane %v417, 4
        %v423 = vshrl.u32 %v393, 16
        %v425 = vrot.slane %v423, 7
        %v426 = vshll.u32 %v393, 16
        %v428 = vor.u32 %v425, %v426
        %v429 = vrot.slane %v425, 4
        %v431 = vshrl.u32 %v394, 16
        %v433 = vrot.slane %v431, 7
        %v434 = vshll.u32 %v394, 16
        %v436 = vor.u32 %v433, %v434
        %v437 = vrot.slane %v433, 4
        %v439 = vshrl.u32 %v395, 16
        %v441 = vrot.slane %v439, 7
        %v442 = vshll.u32 %v395, 16
        %v444 = vor.u32 %v441, %v442
        %v445 = vrot.slane %v441, 4
        %v447 = vshrl.u32 %v396, 16
        %v449 = vrot.slane %v447, 7
        %v450 = vshll.u32 %v396, 16
        %v452 = vor.u32 %v449, %v450
        %v453 = vrot.slane %v449, 4
        %v455 = vshrl.u32 %v397, 16
        %v457 = vrot.slane %v455, 7
        %v458 = vshll.u32 %v397, 16
        %v460 = vor.u32 %v457, %v458
        %v461 = vrot.slane %v457, 4
        %s478 = scalar_lea.vmem [#allocation2], 8
        %vm479 = vcmask 60416
        %vm480 = vmand %vm479, %vm280
        %v481 = vld [vmem:[%s478] sm:$0xf]
        %v482 = vsel %vm480, %v404, %v481
        %483 = vst [vmem:[%s478] sm:$0xf] %v482
        %v484 = vld [vmem:[%s478 + $0x4] sm:$0x1]
        %v485 = vsel %vm249, %v405, %v484
        %486 = vst [vmem:[%s478 + $0x4] sm:$0x1] %v485
        %v487 = vld [vmem:[%s478 + $0x8] sm:$0xf]
        %v488 = vsel %vm480, %v412, %v487
        %489 = vst [vmem:[%s478 + $0x8] sm:$0xf] %v488
        %v490 = vld [vmem:[%s478 + $0xc] sm:$0x1]
        %v491 = vsel %vm249, %v413, %v490
        %492 = vst [vmem:[%s478 + $0xc] sm:$0x1] %v491
        %v493 = vld [vmem:[%s478 + $0x10] sm:$0xf]
        %v494 = vsel %vm480, %v420, %v493
        %495 = vst [vmem:[%s478 + $0x10] sm:$0xf] %v494
        %v496 = vld [vmem:[%s478 + $0x14] sm:$0x1]
        %v497 = vsel %vm249, %v421, %v496
        %498 = vst [vmem:[%s478 + $0x14] sm:$0x1] %v497
        %v499 = vld [vmem:[%s478 + $0x18] sm:$0xf]
        %v500 = vsel %vm480, %v428, %v499
        %501 = vst [vmem:[%s478 + $0x18] sm:$0xf] %v500
        %v502 = vld [vmem:[%s478 + $0x1c] sm:$0x1]
        %v503 = vsel %vm249, %v429, %v502
        %504 = vst [vmem:[%s478 + $0x1c] sm:$0x1] %v503
        %v505 = vld [vmem:[%s478 + $0x20] sm:$0xf]
        %v506 = vsel %vm480, %v436, %v505
        %507 = vst [vmem:[%s478 + $0x20] sm:$0xf] %v506
        %v508 = vld [vmem:[%s478 + $0x24] sm:$0x1]
        %v509 = vsel %vm249, %v437, %v508
        %510 = vst [vmem:[%s478 + $0x24] sm:$0x1] %v509
        %v511 = vld [vmem:[%s478 + $0x28] sm:$0xf]
        %v512 = vsel %vm480, %v444, %v511
        %513 = vst [vmem:[%s478 + $0x28] sm:$0xf] %v512
        %v514 = vld [vmem:[%s478 + $0x2c] sm:$0x1]
        %v515 = vsel %vm249, %v445, %v514
        %516 = vst [vmem:[%s478 + $0x2c] sm:$0x1] %v515
        %v517 = vld [vmem:[%s478 + $0x30] sm:$0xf]
        %v518 = vsel %vm480, %v452, %v517
        %519 = vst [vmem:[%s478 + $0x30] sm:$0xf] %v518
        %v520 = vld [vmem:[%s478 + $0x34] sm:$0x1]
        %v521 = vsel %vm249, %v453, %v520
        %522 = vst [vmem:[%s478 + $0x34] sm:$0x1] %v521
        %v523 = vld [vmem:[%s478 + $0x38] sm:$0xf]
        %v524 = vsel %vm480, %v460, %v523
        %525 = vst [vmem:[%s478 + $0x38] sm:$0xf] %v524
        %v526 = vld [vmem:[%s478 + $0x3c] sm:$0x1]
        %v527 = vsel %vm249, %v461, %v526
        %528 = vst [vmem:[%s478 + $0x3c] sm:$0x1] %v527
      $region40: #{network_block_forward.6} parent=35 // pred_fallthru
        _
      %v529 = vld [vmem:[#allocation2] sm:$0xf]
      %v530 = vld [vmem:[#allocation2 + $0x8] sm:$0xf]
      %v531 = vld [vmem:[#allocation2 + $0x10] sm:$0xf]
      %v532 = vld [vmem:[#allocation2 + $0x18] sm:$0xf]
      %v533 = vld [vmem:[#allocation2 + $0x20] sm:$0xf]
      %v534 = vld [vmem:[#allocation2 + $0x28] sm:$0xf]
      %v535 = vld [vmem:[#allocation2 + $0x30] sm:$0xf]
      %v536 = vld [vmem:[#allocation2 + $0x38] sm:$0xf]
      %v537 = vld [vmem:[%s226] sm:$0xf]
      %v538 = vld [vmem:[#allocation2 + $0x4] sm:$0x1]
      %v539 = vld [vmem:[#allocation2 + $0xc] sm:$0x1]
      %v540 = vld [vmem:[#allocation2 + $0x14] sm:$0x1]
      %v541 = vld [vmem:[#allocation2 + $0x1c] sm:$0x1]
      %v542 = vld [vmem:[#allocation2 + $0x24] sm:$0x1]
      %v543 = vld [vmem:[#allocation2 + $0x2c] sm:$0x1]
      %v544 = vld [vmem:[#allocation2 + $0x34] sm:$0x1]
      %v545 = vld [vmem:[#allocation2 + $0x3c] sm:$0x1]
      %vm546 = vsmask.f32 3328
      %vm547 = vsmask.f32 7440
      %vm548 = vmor %vm546, %vm547
      %v550 = vshrl.u32 %v529, 16
      %v552 = vrot.slane %v550, 4
      %v553 = vshll.u32 %v529, 16
      %v555 = vrot.slane %v553, 5
      %v556 = vor.u32 %v552, %v555
      %v557 = vrot.slane %v556, 4
      %v559 = vshll.u32 %v538, 16
      %v561 = vrot.slane %v559, 5
      %v562 = vsel %vm548, %v557, %v561
      %v564 = vshrl.u32 %v530, 16
      %v566 = vrot.slane %v564, 4
      %v567 = vshll.u32 %v530, 16
      %v569 = vrot.slane %v567, 5
      %v570 = vor.u32 %v566, %v569
      %v571 = vrot.slane %v570, 4
      %v573 = vshll.u32 %v539, 16
      %v575 = vrot.slane %v573, 5
      %v576 = vsel %vm548, %v571, %v575
      %v578 = vshrl.u32 %v531, 16
      %v580 = vrot.slane %v578, 4
      %v581 = vshll.u32 %v531, 16
      %v583 = vrot.slane %v581, 5
      %v584 = vor.u32 %v580, %v583
      %v585 = vrot.slane %v584, 4
      %v587 = vshll.u32 %v540, 16
      %v589 = vrot.slane %v587, 5
      %v590 = vsel %vm548, %v585, %v589
      %v592 = vshrl.u32 %v532, 16
      %v594 = vrot.slane %v592, 4
      %v595 = vshll.u32 %v532, 16
      %v597 = vrot.slane %v595, 5
      %v598 = vor.u32 %v594, %v597
      %v599 = vrot.slane %v598, 4
      %v601 = vshll.u32 %v541, 16
      %v603 = vrot.slane %v601, 5
      %v604 = vsel %vm548, %v599, %v603
      %v606 = vshrl.u32 %v533, 16
      %v608 = vrot.slane %v606, 4
      %v609 = vshll.u32 %v533, 16
      %v611 = vrot.slane %v609, 5
      %v612 = vor.u32 %v608, %v611
      %v613 = vrot.slane %v612, 4
      %v615 = vshll.u32 %v542, 16
      %v617 = vrot.slane %v615, 5
      %v618 = vsel %vm548, %v613, %v617
      %v620 = vshrl.u32 %v534, 16
      %v622 = vrot.slane %v620, 4
      %v623 = vshll.u32 %v534, 16
      %v625 = vrot.slane %v623, 5
      %v626 = vor.u32 %v622, %v625
      %v627 = vrot.slane %v626, 4
      %v629 = vshll.u32 %v543, 16
      %v631 = vrot.slane %v629, 5
      %v632 = vsel %vm548, %v627, %v631
      %v634 = vshrl.u32 %v535, 16
      %v636 = vrot.slane %v634, 4
      %v637 = vshll.u32 %v535, 16
      %v639 = vrot.slane %v637, 5
      %v640 = vor.u32 %v636, %v639
      %v641 = vrot.slane %v640, 4
      %v643 = vshll.u32 %v544, 16
      %v645 = vrot.slane %v643, 5
      %v646 = vsel %vm548, %v641, %v645
      %v648 = vshrl.u32 %v536, 16
      %v650 = vrot.slane %v648, 4
      %v651 = vshll.u32 %v536, 16
      %v653 = vrot.slane %v651, 5
      %v654 = vor.u32 %v650, %v653
      %v655 = vrot.slane %v654, 4
      %v657 = vshll.u32 %v545, 16
      %v659 = vrot.slane %v657, 5
      %v660 = vsel %vm548, %v655, %v659
      %s661 = scalar_lea.vmem %s226, 4
      %v662 = vld [vmem:[%s661] sm:$0xf]
      %v663 = vunpack.c.l.b16 %v562
      %v664 = vunpack.c.l.b16 %v576
      %v665 = vunpack.c.l.b16 %v590
      %v666 = vunpack.c.l.b16 %v604
      %v667 = vunpack.c.l.b16 %v618
      %v668 = vunpack.c.l.b16 %v632
      %v669 = vunpack.c.l.b16 %v646
      %v670 = vunpack.c.l.b16 %v660
      %v671 = vpack.c.b16 %v664, %v663
      %v672 = vpack.c.b16 %v666, %v665
      %v673 = vpack.c.b16 %v668, %v667
      %v674 = vpack.c.b16 %v670, %v669
      %vm675 = vcmask 64512
      %v677 = vsel %vm675, %v671, 0
      %v680 = vsel %vm675, %v672, 0
      %v683 = vsel %vm675, %v673, 0
      %v686 = vsel %vm675, %v674, 0
      %vm688 = vcmask 1043456
      %v690 = vsel %vm688, %v662, 0
      %692 = vmatprep.subr.bf16.mxu0 0
      %693 = vmatpush1.bf16.msra.mxu0 0
      %694 = vmatprep.subr.bf16.mxu0 0
      %695 = vmatpush1.bf16.msra.mxu0 0
      %696 = vmatprep.subr.bf16.mxu0 0
      %697 = vmatpush1.bf16.msra.mxu0 0
      %698 = vmatprep.subr.bf16.mxu0 0
      %699 = vmatpush1.bf16.msra.mxu0 0
      %700 = vmatprep.subr.bf16.mxu0 0
      %701 = vmatpush1.bf16.msra.mxu0 0
      %702 = vmatprep.subr.bf16.mxu0 0
      %703 = vmatpush1.bf16.msra.mxu0 0
      %704 = vmatprep.subr.bf16.mxu0 0
      %705 = vmatpush1.bf16.msra.mxu0 0
      %706 = vmatprep.subr.bf16.mxu0 0
      %707 = vmatpush1.bf16.msra.mxu0 %v690
      %708 = vmatprep.subr.bf16.mxu0 0
      %709 = vmatpush2.bf16.msra.mxu0 0
      %710 = vmatprep.subr.bf16.mxu0 0
      %711 = vmatpush2.bf16.msra.mxu0 0
      %712 = vmatprep.subr.bf16.mxu0 0
      %713 = vmatpush2.bf16.msra.mxu0 0
      %714 = vmatprep.subr.bf16.mxu0 0
      %715 = vmatpush2.bf16.msra.mxu0 0
      %716 = vmatprep.subr.bf16.mxu0 0
      %717 = vmatpush2.bf16.msra.mxu0 0
      %718 = vmatprep.subr.bf16.mxu0 0
      %719 = vmatpush2.bf16.msra.mxu0 0
      %720 = vmatprep.subr.bf16.mxu0 0
      %721 = vmatpush2.bf16.msra.mxu0 0
      %722 = vmatprep.subr.bf16.mxu0 0
      %723 = vmatpush2.bf16.msra.mxu0 0
      %724 = vmatprep.mubr.bf16.mxu0 0
      %725 = vmatmul.mubr.bf16.gmra.mxu0 %v677
      %v726 = vpop.f32.mrf.mxu0
      %v727 = vadd.f32 0.0, %v726
      %v728 = vpop.f32.mrf.mxu0
      %v729 = vpop.f32.mrf.mxu0
      %v730 = vadd.f32 0.0, %v729
      %v731 = vpop.f32.mrf.mxu0
      %732 = vmatprep.mubr.bf16.mxu0 0
      %733 = vmatmul.mubr.bf16.gmra.mxu0 %v680
      %v734 = vpop.f32.mrf.mxu0
      %v735 = vadd.f32 0.0, %v734
      %v736 = vpop.f32.mrf.mxu0
      %v737 = vpop.f32.mrf.mxu0
      %v738 = vadd.f32 0.0, %v737
      %v739 = vpop.f32.mrf.mxu0
      %740 = vmatprep.mubr.bf16.mxu0 0
      %741 = vmatmul.mubr.bf16.gmra.mxu0 %v683
      %v742 = vpop.f32.mrf.mxu0
      %v743 = vadd.f32 0.0, %v742
      %v744 = vpop.f32.mrf.mxu0
      %v745 = vpop.f32.mrf.mxu0
      %v746 = vadd.f32 0.0, %v745
      %v747 = vpop.f32.mrf.mxu0
      %748 = vmatprep.mubr.bf16.mxu0 0
      %749 = vmatmul.mubr.bf16.gmra.mxu0 %v686
      %v750 = vpop.f32.mrf.mxu0
      %v751 = vadd.f32 0.0, %v750
      %v752 = vpop.f32.mrf.mxu0
      %v753 = vpop.f32.mrf.mxu0
      %v754 = vadd.f32 0.0, %v753
      %v755 = vpop.f32.mrf.mxu0
      %756 = vdwg.mxu0
      %v765 = vunpack.c.l.b16 %v529
      %v766 = vunpack.c.l.b16 %v530
      %v767 = vunpack.c.l.b16 %v531
      %v768 = vunpack.c.l.b16 %v532
      %v769 = vunpack.c.l.b16 %v533
      %v770 = vunpack.c.l.b16 %v534
      %v771 = vunpack.c.l.b16 %v535
      %v772 = vunpack.c.l.b16 %v536
      %v773 = vpack.c.b16 %v766, %v765
      %v774 = vpack.c.b16 %v768, %v767
      %v775 = vpack.c.b16 %v770, %v769
      %v776 = vpack.c.b16 %v772, %v771
      %v778 = vsel %vm675, %v773, 0
      %v781 = vsel %vm675, %v774, 0
      %v784 = vsel %vm675, %v775, 0
      %v787 = vsel %vm675, %v776, 0
      %v790 = vsel %vm688, %v537, 0
      %792 = vmatprep.subr.bf16.mxu0 0
      %793 = vmatpush1.bf16.msra.mxu0 0
      %794 = vmatprep.subr.bf16.mxu0 0
      %795 = vmatpush1.bf16.msra.mxu0 0
      %796 = vmatprep.subr.bf16.mxu0 0
      %797 = vmatpush1.bf16.msra.mxu0 0
      %798 = vmatprep.subr.bf16.mxu0 0
      %799 = vmatpush1.bf16.msra.mxu0 0
      %800 = vmatprep.subr.bf16.mxu0 0
      %801 = vmatpush1.bf16.msra.mxu0 0
      %802 = vmatprep.subr.bf16.mxu0 0
      %803 = vmatpush1.bf16.msra.mxu0 0
      %804 = vmatprep.subr.bf16.mxu0 0
      %805 = vmatpush1.bf16.msra.mxu0 0
      %806 = vmatprep.subr.bf16.mxu0 0
      %807 = vmatpush1.bf16.msra.mxu0 %v790
      %808 = vmatprep.subr.bf16.mxu0 0
      %809 = vmatpush2.bf16.msra.mxu0 0
      %810 = vmatprep.subr.bf16.mxu0 0
      %811 = vmatpush2.bf16.msra.mxu0 0
      %812 = vmatprep.subr.bf16.mxu0 0
      %813 = vmatpush2.bf16.msra.mxu0 0
      %814 = vmatprep.subr.bf16.mxu0 0
      %815 = vmatpush2.bf16.msra.mxu0 0
      %816 = vmatprep.subr.bf16.mxu0 0
      %817 = vmatpush2.bf16.msra.mxu0 0
      %818 = vmatprep.subr.bf16.mxu0 0
      %819 = vmatpush2.bf16.msra.mxu0 0
      %820 = vmatprep.subr.bf16.mxu0 0
      %821 = vmatpush2.bf16.msra.mxu0 0
      %822 = vmatprep.subr.bf16.mxu0 0
      %823 = vmatpush2.bf16.msra.mxu0 0
      %824 = vmatprep.mubr.bf16.mxu0 0
      %825 = vmatmul.mubr.bf16.gmra.mxu0 %v778
      %v826 = vpop.f32.mrf.mxu0
      %v827 = vadd.f32 %v727, %v826
      %v828 = vpop.f32.mrf.mxu0
      %v829 = vpop.f32.mrf.mxu0
      %v830 = vadd.f32 %v730, %v829
      %v831 = vpop.f32.mrf.mxu0
      %832 = vmatprep.mubr.bf16.mxu0 0
      %833 = vmatmul.mubr.bf16.gmra.mxu0 %v781
      %v834 = vpop.f32.mrf.mxu0
      %v835 = vadd.f32 %v735, %v834
      %v836 = vpop.f32.mrf.mxu0
      %v837 = vpop.f32.mrf.mxu0
      %v838 = vadd.f32 %v738, %v837
      %v839 = vpop.f32.mrf.mxu0
      %840 = vmatprep.mubr.bf16.mxu0 0
      %841 = vmatmul.mubr.bf16.gmra.mxu0 %v784
      %v842 = vpop.f32.mrf.mxu0
      %v843 = vadd.f32 %v743, %v842
      %v844 = vpop.f32.mrf.mxu0
      %v845 = vpop.f32.mrf.mxu0
      %v846 = vadd.f32 %v746, %v845
      %v847 = vpop.f32.mrf.mxu0
      %848 = vmatprep.mubr.bf16.mxu0 0
      %849 = vmatmul.mubr.bf16.gmra.mxu0 %v787
      %v850 = vpop.f32.mrf.mxu0
      %v851 = vadd.f32 %v751, %v850
      %v852 = vpop.f32.mrf.mxu0
      %v853 = vpop.f32.mrf.mxu0
      %v854 = vadd.f32 %v754, %v853
      %v855 = vpop.f32.mrf.mxu0
      %856 = vdwg.mxu0
      %v857 = vld [vmem:[#allocation2] sm:$0xe]
      %v858 = vld [vmem:[#allocation2 + $0x8] sm:$0xe]
      %v859 = vld [vmem:[#allocation2 + $0x10] sm:$0xe]
      %v860 = vld [vmem:[#allocation2 + $0x18] sm:$0xe]
      %v861 = vld [vmem:[#allocation2 + $0x20] sm:$0xe]
      %v862 = vld [vmem:[#allocation2 + $0x28] sm:$0xe]
      %v863 = vld [vmem:[#allocation2 + $0x30] sm:$0xe]
      %v864 = vld [vmem:[#allocation2 + $0x38] sm:$0xe]
      %vm881 = vcmask 1042432
      %vm882 = vcmask 1046532
      %vm883 = vmor %vm881, %vm882
      %v884 = vrot.slane %v857, 5
      %v885 = vrot.slane %v884, 4
      %v886 = vrot.slane %v538, 5
      %v887 = vsel %vm883, %v885, %v886
      %v888 = vrot.slane %v858, 5
      %v889 = vrot.slane %v888, 4
      %v890 = vrot.slane %v539, 5
      %v891 = vsel %vm883, %v889, %v890
      %v892 = vrot.slane %v859, 5
      %v893 = vrot.slane %v892, 4
      %v894 = vrot.slane %v540, 5
      %v895 = vsel %vm883, %v893, %v894
      %v896 = vrot.slane %v860, 5
      %v897 = vrot.slane %v896, 4
      %v898 = vrot.slane %v541, 5
      %v899 = vsel %vm883, %v897, %v898
      %v900 = vrot.slane %v861, 5
      %v901 = vrot.slane %v900, 4
      %v902 = vrot.slane %v542, 5
      %v903 = vsel %vm883, %v901, %v902
      %v904 = vrot.slane %v862, 5
      %v905 = vrot.slane %v904, 4
      %v906 = vrot.slane %v543, 5
      %v907 = vsel %vm883, %v905, %v906
      %v908 = vrot.slane %v863, 5
      %v909 = vrot.slane %v908, 4
      %v910 = vrot.slane %v544, 5
      %v911 = vsel %vm883, %v909, %v910
      %v912 = vrot.slane %v864, 5
      %v913 = vrot.slane %v912, 4
      %v914 = vrot.slane %v545, 5
      %v915 = vsel %vm883, %v913, %v914
      %s916 = scalar_lea.vmem %s226, 8
      %v917 = vld [vmem:[%s916] sm:$0xf]
      %v918 = vunpack.c.l.b16 %v887
      %v919 = vunpack.c.l.b16 %v891
      %v920 = vunpack.c.l.b16 %v895
      %v921 = vunpack.c.l.b16 %v899
      %v922 = vunpack.c.l.b16 %v903
      %v923 = vunpack.c.l.b16 %v907
      %v924 = vunpack.c.l.b16 %v911
      %v925 = vunpack.c.l.b16 %v915
      %v926 = vpack.c.b16 %v919, %v918
      %v927 = vpack.c.b16 %v921, %v920
      %v928 = vpack.c.b16 %v923, %v922
      %v929 = vpack.c.b16 %v925, %v924
      %v931 = vsel %vm675, %v926, 0
      %v934 = vsel %vm675, %v927, 0
      %v937 = vsel %vm675, %v928, 0
      %v940 = vsel %vm675, %v929, 0
      %v943 = vsel %vm688, %v917, 0
      %945 = vmatprep.subr.bf16.mxu0 0
      %946 = vmatpush1.bf16.msra.mxu0 0
      %947 = vmatprep.subr.bf16.mxu0 0
      %948 = vmatpush1.bf16.msra.mxu0 0
      %949 = vmatprep.subr.bf16.mxu0 0
      %950 = vmatpush1.bf16.msra.mxu0 0
      %951 = vmatprep.subr.bf16.mxu0 0
      %952 = vmatpush1.bf16.msra.mxu0 0
      %953 = vmatprep.subr.bf16.mxu0 0
      %954 = vmatpush1.bf16.msra.mxu0 0
      %955 = vmatprep.subr.bf16.mxu0 0
      %956 = vmatpush1.bf16.msra.mxu0 0
      %957 = vmatprep.subr.bf16.mxu0 0
      %958 = vmatpush1.bf16.msra.mxu0 0
      %959 = vmatprep.subr.bf16.mxu0 0
      %960 = vmatpush1.bf16.msra.mxu0 %v943
      %961 = vmatprep.subr.bf16.mxu0 0
      %962 = vmatpush2.bf16.msra.mxu0 0
      %963 = vmatprep.subr.bf16.mxu0 0
      %964 = vmatpush2.bf16.msra.mxu0 0
      %965 = vmatprep.subr.bf16.mxu0 0
      %966 = vmatpush2.bf16.msra.mxu0 0
      %967 = vmatprep.subr.bf16.mxu0 0
      %968 = vmatpush2.bf16.msra.mxu0 0
      %969 = vmatprep.subr.bf16.mxu0 0
      %970 = vmatpush2.bf16.msra.mxu0 0
      %971 = vmatprep.subr.bf16.mxu0 0
      %972 = vmatpush2.bf16.msra.mxu0 0
      %973 = vmatprep.subr.bf16.mxu0 0
      %974 = vmatpush2.bf16.msra.mxu0 0
      %975 = vmatprep.subr.bf16.mxu0 0
      %976 = vmatpush2.bf16.msra.mxu0 0
      %977 = vmatprep.mubr.bf16.mxu0 0
      %978 = vmatmul.mubr.bf16.gmra.mxu0 %v931
      %v979 = vpop.f32.mrf.mxu0
      %v980 = vadd.f32 0.0, %v979
      %v981 = vpop.f32.mrf.mxu0
      %v982 = vpop.f32.mrf.mxu0
      %v983 = vadd.f32 0.0, %v982
      %v984 = vpop.f32.mrf.mxu0
      %985 = vmatprep.mubr.bf16.mxu0 0
      %986 = vmatmul.mubr.bf16.gmra.mxu0 %v934
      %v987 = vpop.f32.mrf.mxu0
      %v988 = vadd.f32 0.0, %v987
      %v989 = vpop.f32.mrf.mxu0
      %v990 = vpop.f32.mrf.mxu0
      %v991 = vadd.f32 0.0, %v990
      %v992 = vpop.f32.mrf.mxu0
      %993 = vmatprep.mubr.bf16.mxu0 0
      %994 = vmatmul.mubr.bf16.gmra.mxu0 %v937
      %v995 = vpop.f32.mrf.mxu0
      %v996 = vadd.f32 0.0, %v995
      %v997 = vpop.f32.mrf.mxu0
      %v998 = vpop.f32.mrf.mxu0
      %v999 = vadd.f32 0.0, %v998
      %v1000 = vpop.f32.mrf.mxu0
      %1001 = vmatprep.mubr.bf16.mxu0 0
      %1002 = vmatmul.mubr.bf16.gmra.mxu0 %v940
      %v1003 = vpop.f32.mrf.mxu0
      %v1004 = vadd.f32 0.0, %v1003
      %v1005 = vpop.f32.mrf.mxu0
      %v1006 = vpop.f32.mrf.mxu0
      %v1007 = vadd.f32 0.0, %v1006
      %v1008 = vpop.f32.mrf.mxu0
      %1009 = vdwg.mxu0
      %v1010 = vadd.f32 %v827, %v980
      %v1011 = vadd.f32 %v830, %v983
      %v1012 = vadd.f32 %v835, %v988
      %v1013 = vadd.f32 %v838, %v991
      %v1014 = vadd.f32 %v843, %v996
      %v1015 = vadd.f32 %v846, %v999
      %v1016 = vadd.f32 %v851, %v1004
      %v1017 = vadd.f32 %v854, %v1007
      %s1018 = scalar_lea.vmem [#allocation2], 8
      %v1019 = vld [vmem:[%s1018] sm:$0xf]
      %v1020 = vld [vmem:[%s1018 + $0x8] sm:$0xf]
      %v1021 = vld [vmem:[%s1018 + $0x10] sm:$0xf]
      %v1022 = vld [vmem:[%s1018 + $0x18] sm:$0xf]
      %v1023 = vld [vmem:[%s1018 + $0x20] sm:$0xf]
      %v1024 = vld [vmem:[%s1018 + $0x28] sm:$0xf]
      %v1025 = vld [vmem:[%s1018 + $0x30] sm:$0xf]
      %v1026 = vld [vmem:[%s1018 + $0x38] sm:$0xf]
      %s1027 = scalar_lea.vmem %s226, 12
      %v1028 = vld [vmem:[%s1027] sm:$0xf]
      %v1037 = vunpack.c.l.b16 %v1019
      %v1038 = vunpack.c.l.b16 %v1020
      %v1039 = vunpack.c.l.b16 %v1021
      %v1040 = vunpack.c.l.b16 %v1022
      %v1041 = vunpack.c.l.b16 %v1023
      %v1042 = vunpack.c.l.b16 %v1024
      %v1043 = vunpack.c.l.b16 %v1025
      %v1044 = vunpack.c.l.b16 %v1026
      %v1045 = vpack.c.b16 %v1038, %v1037
      %v1046 = vpack.c.b16 %v1040, %v1039
      %v1047 = vpack.c.b16 %v1042, %v1041
      %v1048 = vpack.c.b16 %v1044, %v1043
      %v1050 = vsel %vm675, %v1045, 0
      %v1053 = vsel %vm675, %v1046, 0
      %v1056 = vsel %vm675, %v1047, 0
      %v1059 = vsel %vm675, %v1048, 0
      %v1062 = vsel %vm688, %v1028, 0
      %1064 = vmatprep.subr.bf16.mxu0 0
      %1065 = vmatpush1.bf16.msra.mxu0 0
      %1066 = vmatprep.subr.bf16.mxu0 0
      %1067 = vmatpush1.bf16.msra.mxu0 0
      %1068 = vmatprep.subr.bf16.mxu0 0
      %1069 = vmatpush1.bf16.msra.mxu0 0
      %1070 = vmatprep.subr.bf16.mxu0 0
      %1071 = vmatpush1.bf16.msra.mxu0 0
      %1072 = vmatprep.subr.bf16.mxu0 0
      %1073 = vmatpush1.bf16.msra.mxu0 0
      %1074 = vmatprep.subr.bf16.mxu0 0
      %1075 = vmatpush1.bf16.msra.mxu0 0
      %1076 = vmatprep.subr.bf16.mxu0 0
      %1077 = vmatpush1.bf16.msra.mxu0 0
      %1078 = vmatprep.subr.bf16.mxu0 0
      %1079 = vmatpush1.bf16.msra.mxu0 %v1062
      %1080 = vmatprep.subr.bf16.mxu0 0
      %1081 = vmatpush2.bf16.msra.mxu0 0
      %1082 = vmatprep.subr.bf16.mxu0 0
      %1083 = vmatpush2.bf16.msra.mxu0 0
      %1084 = vmatprep.subr.bf16.mxu0 0
      %1085 = vmatpush2.bf16.msra.mxu0 0
      %1086 = vmatprep.subr.bf16.mxu0 0
      %1087 = vmatpush2.bf16.msra.mxu0 0
      %1088 = vmatprep.subr.bf16.mxu0 0
      %1089 = vmatpush2.bf16.msra.mxu0 0
      %1090 = vmatprep.subr.bf16.mxu0 0
      %1091 = vmatpush2.bf16.msra.mxu0 0
      %1092 = vmatprep.subr.bf16.mxu0 0
      %1093 = vmatpush2.bf16.msra.mxu0 0
      %1094 = vmatprep.subr.bf16.mxu0 0
      %1095 = vmatpush2.bf16.msra.mxu0 0
      %1096 = vmatprep.mubr.bf16.mxu0 0
      %1097 = vmatmul.mubr.bf16.gmra.mxu0 %v1050
      %v1098 = vpop.f32.mrf.mxu0
      %v1099 = vadd.f32 0.0, %v1098
      %v1100 = vpop.f32.mrf.mxu0
      %v1101 = vpop.f32.mrf.mxu0
      %v1102 = vadd.f32 0.0, %v1101
      %v1103 = vpop.f32.mrf.mxu0
      %1104 = vmatprep.mubr.bf16.mxu0 0
      %1105 = vmatmul.mubr.bf16.gmra.mxu0 %v1053
      %v1106 = vpop.f32.mrf.mxu0
      %v1107 = vadd.f32 0.0, %v1106
      %v1108 = vpop.f32.mrf.mxu0
      %v1109 = vpop.f32.mrf.mxu0
      %v1110 = vadd.f32 0.0, %v1109
      %v1111 = vpop.f32.mrf.mxu0
      %1112 = vmatprep.mubr.bf16.mxu0 0
      %1113 = vmatmul.mubr.bf16.gmra.mxu0 %v1056
      %v1114 = vpop.f32.mrf.mxu0
      %v1115 = vadd.f32 0.0, %v1114
      %v1116 = vpop.f32.mrf.mxu0
      %v1117 = vpop.f32.mrf.mxu0
      %v1118 = vadd.f32 0.0, %v1117
      %v1119 = vpop.f32.mrf.mxu0
      %1120 = vmatprep.mubr.bf16.mxu0 0
      %1121 = vmatmul.mubr.bf16.gmra.mxu0 %v1059
      %v1122 = vpop.f32.mrf.mxu0
      %v1123 = vadd.f32 0.0, %v1122
      %v1124 = vpop.f32.mrf.mxu0
      %v1125 = vpop.f32.mrf.mxu0
      %v1126 = vadd.f32 0.0, %v1125
      %v1127 = vpop.f32.mrf.mxu0
      %1128 = vdwg.mxu0
      %v1129 = vadd.f32 %v1010, %v1099
      %v1130 = vadd.f32 %v1011, %v1102
      %v1131 = vadd.f32 %v1012, %v1107
      %v1132 = vadd.f32 %v1013, %v1110
      %v1133 = vadd.f32 %v1014, %v1115
      %v1134 = vadd.f32 %v1015, %v1118
      %v1135 = vadd.f32 %v1016, %v1123
      %v1136 = vadd.f32 %v1017, %v1126
      %v1137 = vld [vmem:[%s1018] sm:$0xf]
      %v1138 = vld [vmem:[%s1018 + $0x4] sm:$0x1]
      %v1139 = vld [vmem:[%s1018 + $0x8] sm:$0xf]
      %v1140 = vld [vmem:[%s1018 + $0xc] sm:$0x1]
      %v1141 = vld [vmem:[%s1018 + $0x10] sm:$0xf]
      %v1142 = vld [vmem:[%s1018 + $0x14] sm:$0x1]
      %v1143 = vld [vmem:[%s1018 + $0x18] sm:$0xf]
      %v1144 = vld [vmem:[%s1018 + $0x1c] sm:$0x1]
      %v1145 = vld [vmem:[%s1018 + $0x20] sm:$0xf]
      %v1146 = vld [vmem:[%s1018 + $0x24] sm:$0x1]
      %v1147 = vld [vmem:[%s1018 + $0x28] sm:$0xf]
      %v1148 = vld [vmem:[%s1018 + $0x2c] sm:$0x1]
      %v1149 = vld [vmem:[%s1018 + $0x30] sm:$0xf]
      %v1150 = vld [vmem:[%s1018 + $0x34] sm:$0x1]
      %v1151 = vld [vmem:[%s1018 + $0x38] sm:$0xf]
      %v1152 = vld [vmem:[%s1018 + $0x3c] sm:$0x1]
      %v1154 = vshrl.u32 %v1137, 16
      %v1156 = vrot.slane %v1154, 4
      %v1157 = vshll.u32 %v1137, 16
      %v1159 = vrot.slane %v1157, 5
      %v1160 = vor.u32 %v1156, %v1159
      %v1161 = vrot.slane %v1160, 4
      %v1163 = vshll.u32 %v1138, 16
      %v1165 = vrot.slane %v1163, 5
      %v1166 = vsel %vm548, %v1161, %v1165
      %v1168 = vshrl.u32 %v1139, 16
      %v1170 = vrot.slane %v1168, 4
      %v1171 = vshll.u32 %v1139, 16
      %v1173 = vrot.slane %v1171, 5
      %v1174 = vor.u32 %v1170, %v1173
      %v1175 = vrot.slane %v1174, 4
      %v1177 = vshll.u32 %v1140, 16
      %v1179 = vrot.slane %v1177, 5
      %v1180 = vsel %vm548, %v1175, %v1179
      %v1182 = vshrl.u32 %v1141, 16
      %v1184 = vrot.slane %v1182, 4
      %v1185 = vshll.u32 %v1141, 16
      %v1187 = vrot.slane %v1185, 5
      %v1188 = vor.u32 %v1184, %v1187
      %v1189 = vrot.slane %v1188, 4
      %v1191 = vshll.u32 %v1142, 16
      %v1193 = vrot.slane %v1191, 5
      %v1194 = vsel %vm548, %v1189, %v1193
      %v1196 = vshrl.u32 %v1143, 16
      %v1198 = vrot.slane %v1196, 4
      %v1199 = vshll.u32 %v1143, 16
      %v1201 = vrot.slane %v1199, 5
      %v1202 = vor.u32 %v1198, %v1201
      %v1203 = vrot.slane %v1202, 4
      %v1205 = vshll.u32 %v1144, 16
      %v1207 = vrot.slane %v1205, 5
      %v1208 = vsel %vm548, %v1203, %v1207
      %v1210 = vshrl.u32 %v1145, 16
      %v1212 = vrot.slane %v1210, 4
      %v1213 = vshll.u32 %v1145, 16
      %v1215 = vrot.slane %v1213, 5
      %v1216 = vor.u32 %v1212, %v1215
      %v1217 = vrot.slane %v1216, 4
      %v1219 = vshll.u32 %v1146, 16
      %v1221 = vrot.slane %v1219, 5
      %v1222 = vsel %vm548, %v1217, %v1221
      %v1224 = vshrl.u32 %v1147, 16
      %v1226 = vrot.slane %v1224, 4
      %v1227 = vshll.u32 %v1147, 16
      %v1229 = vrot.slane %v1227, 5
      %v1230 = vor.u32 %v1226, %v1229
      %v1231 = vrot.slane %v1230, 4
      %v1233 = vshll.u32 %v1148, 16
      %v1235 = vrot.slane %v1233, 5
      %v1236 = vsel %vm548, %v1231, %v1235
      %v1238 = vshrl.u32 %v1149, 16
      %v1240 = vrot.slane %v1238, 4
      %v1241 = vshll.u32 %v1149, 16
      %v1243 = vrot.slane %v1241, 5
      %v1244 = vor.u32 %v1240, %v1243
      %v1245 = vrot.slane %v1244, 4
      %v1247 = vshll.u32 %v1150, 16
      %v1249 = vrot.slane %v1247, 5
      %v1250 = vsel %vm548, %v1245, %v1249
      %v1252 = vshrl.u32 %v1151, 16
      %v1254 = vrot.slane %v1252, 4
      %v1255 = vshll.u32 %v1151, 16
      %v1257 = vrot.slane %v1255, 5
      %v1258 = vor.u32 %v1254, %v1257
      %v1259 = vrot.slane %v1258, 4
      %v1261 = vshll.u32 %v1152, 16
      %v1263 = vrot.slane %v1261, 5
      %v1264 = vsel %vm548, %v1259, %v1263
      %s1265 = scalar_lea.vmem %s226, 16
      %v1266 = vld [vmem:[%s1265] sm:$0xf]
      %v1267 = vunpack.c.l.b16 %v1166
      %v1268 = vunpack.c.l.b16 %v1180
      %v1269 = vunpack.c.l.b16 %v1194
      %v1270 = vunpack.c.l.b16 %v1208
      %v1271 = vunpack.c.l.b16 %v1222
      %v1272 = vunpack.c.l.b16 %v1236
      %v1273 = vunpack.c.l.b16 %v1250
      %v1274 = vunpack.c.l.b16 %v1264
      %v1275 = vpack.c.b16 %v1268, %v1267
      %v1276 = vpack.c.b16 %v1270, %v1269
      %v1277 = vpack.c.b16 %v1272, %v1271
      %v1278 = vpack.c.b16 %v1274, %v1273
      %v1280 = vsel %vm675, %v1275, 0
      %v1283 = vsel %vm675, %v1276, 0
      %v1286 = vsel %vm675, %v1277, 0
      %v1289 = vsel %vm675, %v1278, 0
      %v1292 = vsel %vm688, %v1266, 0
      %1294 = vmatprep.subr.bf16.mxu0 0
      %1295 = vmatpush1.bf16.msra.mxu0 0
      %1296 = vmatprep.subr.bf16.mxu0 0
      %1297 = vmatpush1.bf16.msra.mxu0 0
      %1298 = vmatprep.subr.bf16.mxu0 0
      %1299 = vmatpush1.bf16.msra.mxu0 0
      %1300 = vmatprep.subr.bf16.mxu0 0
      %1301 = vmatpush1.bf16.msra.mxu0 0
      %1302 = vmatprep.subr.bf16.mxu0 0
      %1303 = vmatpush1.bf16.msra.mxu0 0
      %1304 = vmatprep.subr.bf16.mxu0 0
      %1305 = vmatpush1.bf16.msra.mxu0 0
      %1306 = vmatprep.subr.bf16.mxu0 0
      %1307 = vmatpush1.bf16.msra.mxu0 0
      %1308 = vmatprep.subr.bf16.mxu0 0
      %1309 = vmatpush1.bf16.msra.mxu0 %v1292
      %1310 = vmatprep.subr.bf16.mxu0 0
      %1311 = vmatpush2.bf16.msra.mxu0 0
      %1312 = vmatprep.subr.bf16.mxu0 0
      %1313 = vmatpush2.bf16.msra.mxu0 0
      %1314 = vmatprep.subr.bf16.mxu0 0
      %1315 = vmatpush2.bf16.msra.mxu0 0
      %1316 = vmatprep.subr.bf16.mxu0 0
      %1317 = vmatpush2.bf16.msra.mxu0 0
      %1318 = vmatprep.subr.bf16.mxu0 0
      %1319 = vmatpush2.bf16.msra.mxu0 0
      %1320 = vmatprep.subr.bf16.mxu0 0
      %1321 = vmatpush2.bf16.msra.mxu0 0
      %1322 = vmatprep.subr.bf16.mxu0 0
      %1323 = vmatpush2.bf16.msra.mxu0 0
      %1324 = vmatprep.subr.bf16.mxu0 0
      %1325 = vmatpush2.bf16.msra.mxu0 0
      %1326 = vmatprep.mubr.bf16.mxu0 0
      %1327 = vmatmul.mubr.bf16.gmra.mxu0 %v1280
      %v1328 = vpop.f32.mrf.mxu0
      %v1329 = vadd.f32 0.0, %v1328
      %v1330 = vpop.f32.mrf.mxu0
      %v1331 = vpop.f32.mrf.mxu0
      %v1332 = vadd.f32 0.0, %v1331
      %v1333 = vpop.f32.mrf.mxu0
      %1334 = vmatprep.mubr.bf16.mxu0 0
      %1335 = vmatmul.mubr.bf16.gmra.mxu0 %v1283
      %v1336 = vpop.f32.mrf.mxu0
      %v1337 = vadd.f32 0.0, %v1336
      %v1338 = vpop.f32.mrf.mxu0
      %v1339 = vpop.f32.mrf.mxu0
      %v1340 = vadd.f32 0.0, %v1339
      %v1341 = vpop.f32.mrf.mxu0
      %1342 = vmatprep.mubr.bf16.mxu0 0
      %1343 = vmatmul.mubr.bf16.gmra.mxu0 %v1286
      %v1344 = vpop.f32.mrf.mxu0
      %v1345 = vadd.f32 0.0, %v1344
      %v1346 = vpop.f32.mrf.mxu0
      %v1347 = vpop.f32.mrf.mxu0
      %v1348 = vadd.f32 0.0, %v1347
      %v1349 = vpop.f32.mrf.mxu0
      %1350 = vmatprep.mubr.bf16.mxu0 0
      %1351 = vmatmul.mubr.bf16.gmra.mxu0 %v1289
      %v1352 = vpop.f32.mrf.mxu0
      %v1353 = vadd.f32 0.0, %v1352
      %v1354 = vpop.f32.mrf.mxu0
      %v1355 = vpop.f32.mrf.mxu0
      %v1356 = vadd.f32 0.0, %v1355
      %v1357 = vpop.f32.mrf.mxu0
      %1358 = vdwg.mxu0
      %v1359 = vadd.f32 %v1129, %v1329
      %v1360 = vadd.f32 %v1130, %v1332
      %v1361 = vadd.f32 %v1131, %v1337
      %v1362 = vadd.f32 %v1132, %v1340
      %v1363 = vadd.f32 %v1133, %v1345
      %v1364 = vadd.f32 %v1134, %v1348
      %v1365 = vadd.f32 %v1135, %v1353
      %v1366 = vadd.f32 %v1136, %v1356
      %v1367 = vld [vmem:[%s1018] sm:$0xe]
      %v1368 = vld [vmem:[%s1018 + $0x8] sm:$0xe]
      %v1369 = vld [vmem:[%s1018 + $0x10] sm:$0xe]
      %v1370 = vld [vmem:[%s1018 + $0x18] sm:$0xe]
      %v1371 = vld [vmem:[%s1018 + $0x20] sm:$0xe]
      %v1372 = vld [vmem:[%s1018 + $0x28] sm:$0xe]
      %v1373 = vld [vmem:[%s1018 + $0x30] sm:$0xe]
      %v1374 = vld [vmem:[%s1018 + $0x38] sm:$0xe]
      %v1391 = vrot.slane %v1367, 5
      %v1392 = vrot.slane %v1391, 4
      %v1393 = vrot.slane %v1138, 5
      %v1394 = vsel %vm883, %v1392, %v1393
      %v1395 = vrot.slane %v1368, 5
      %v1396 = vrot.slane %v1395, 4
      %v1397 = vrot.slane %v1140, 5
      %v1398 = vsel %vm883, %v1396, %v1397
      %v1399 = vrot.slane %v1369, 5
      %v1400 = vrot.slane %v1399, 4
      %v1401 = vrot.slane %v1142, 5
      %v1402 = vsel %vm883, %v1400, %v1401
      %v1403 = vrot.slane %v1370, 5
      %v1404 = vrot.slane %v1403, 4
      %v1405 = vrot.slane %v1144, 5
      %v1406 = vsel %vm883, %v1404, %v1405
      %v1407 = vrot.slane %v1371, 5
      %v1408 = vrot.slane %v1407, 4
      %v1409 = vrot.slane %v1146, 5
      %v1410 = vsel %vm883, %v1408, %v1409
      %v1411 = vrot.slane %v1372, 5
      %v1412 = vrot.slane %v1411, 4
      %v1413 = vrot.slane %v1148, 5
      %v1414 = vsel %vm883, %v1412, %v1413
      %v1415 = vrot.slane %v1373, 5
      %v1416 = vrot.slane %v1415, 4
      %v1417 = vrot.slane %v1150, 5
      %v1418 = vsel %vm883, %v1416, %v1417
      %v1419 = vrot.slane %v1374, 5
      %v1420 = vrot.slane %v1419, 4
      %v1421 = vrot.slane %v1152, 5
      %v1422 = vsel %vm883, %v1420, %v1421
      %s1423 = scalar_lea.vmem %s226, 20
      %v1424 = vld [vmem:[%s1423] sm:$0xf]
      %v1425 = vunpack.c.l.b16 %v1394
      %v1426 = vunpack.c.l.b16 %v1398
      %v1427 = vunpack.c.l.b16 %v1402
      %v1428 = vunpack.c.l.b16 %v1406
      %v1429 = vunpack.c.l.b16 %v1410
      %v1430 = vunpack.c.l.b16 %v1414
      %v1431 = vunpack.c.l.b16 %v1418
      %v1432 = vunpack.c.l.b16 %v1422
      %v1433 = vpack.c.b16 %v1426, %v1425
      %v1434 = vpack.c.b16 %v1428, %v1427
      %v1435 = vpack.c.b16 %v1430, %v1429
      %v1436 = vpack.c.b16 %v1432, %v1431
      %v1438 = vsel %vm675, %v1433, 0
      %v1441 = vsel %vm675, %v1434, 0
      %v1444 = vsel %vm675, %v1435, 0
      %v1447 = vsel %vm675, %v1436, 0
      %v1450 = vsel %vm688, %v1424, 0
      %1452 = vmatprep.subr.bf16.mxu0 0
      %1453 = vmatpush1.bf16.msra.mxu0 0
      %1454 = vmatprep.subr.bf16.mxu0 0
      %1455 = vmatpush1.bf16.msra.mxu0 0
      %1456 = vmatprep.subr.bf16.mxu0 0
      %1457 = vmatpush1.bf16.msra.mxu0 0
      %1458 = vmatprep.subr.bf16.mxu0 0
      %1459 = vmatpush1.bf16.msra.mxu0 0
      %1460 = vmatprep.subr.bf16.mxu0 0
      %1461 = vmatpush1.bf16.msra.mxu0 0
      %1462 = vmatprep.subr.bf16.mxu0 0
      %1463 = vmatpush1.bf16.msra.mxu0 0
      %1464 = vmatprep.subr.bf16.mxu0 0
      %1465 = vmatpush1.bf16.msra.mxu0 0
      %1466 = vmatprep.subr.bf16.mxu0 0
      %1467 = vmatpush1.bf16.msra.mxu0 %v1450
      %1468 = vmatprep.subr.bf16.mxu0 0
      %1469 = vmatpush2.bf16.msra.mxu0 0
      %1470 = vmatprep.subr.bf16.mxu0 0
      %1471 = vmatpush2.bf16.msra.mxu0 0
      %1472 = vmatprep.subr.bf16.mxu0 0
      %1473 = vmatpush2.bf16.msra.mxu0 0
      %1474 = vmatprep.subr.bf16.mxu0 0
      %1475 = vmatpush2.bf16.msra.mxu0 0
      %1476 = vmatprep.subr.bf16.mxu0 0
      %1477 = vmatpush2.bf16.msra.mxu0 0
      %1478 = vmatprep.subr.bf16.mxu0 0
      %1479 = vmatpush2.bf16.msra.mxu0 0
      %1480 = vmatprep.subr.bf16.mxu0 0
      %1481 = vmatpush2.bf16.msra.mxu0 0
      %1482 = vmatprep.subr.bf16.mxu0 0
      %1483 = vmatpush2.bf16.msra.mxu0 0
      %1484 = vmatprep.mubr.bf16.mxu0 0
      %1485 = vmatmul.mubr.bf16.gmra.mxu0 %v1438
      %v1486 = vpop.f32.mrf.mxu0
      %v1487 = vadd.f32 0.0, %v1486
      %v1488 = vpop.f32.mrf.mxu0
      %v1489 = vpop.f32.mrf.mxu0
      %v1490 = vadd.f32 0.0, %v1489
      %v1491 = vpop.f32.mrf.mxu0
      %1492 = vmatprep.mubr.bf16.mxu0 0
      %1493 = vmatmul.mubr.bf16.gmra.mxu0 %v1441
      %v1494 = vpop.f32.mrf.mxu0
      %v1495 = vadd.f32 0.0, %v1494
      %v1496 = vpop.f32.mrf.mxu0
      %v1497 = vpop.f32.mrf.mxu0
      %v1498 = vadd.f32 0.0, %v1497
      %v1499 = vpop.f32.mrf.mxu0
      %1500 = vmatprep.mubr.bf16.mxu0 0
      %1501 = vmatmul.mubr.bf16.gmra.mxu0 %v1444
      %v1502 = vpop.f32.mrf.mxu0
      %v1503 = vadd.f32 0.0, %v1502
      %v1504 = vpop.f32.mrf.mxu0
      %v1505 = vpop.f32.mrf.mxu0
      %v1506 = vadd.f32 0.0, %v1505
      %v1507 = vpop.f32.mrf.mxu0
      %1508 = vmatprep.mubr.bf16.mxu0 0
      %1509 = vmatmul.mubr.bf16.gmra.mxu0 %v1447
      %v1510 = vpop.f32.mrf.mxu0
      %v1511 = vadd.f32 0.0, %v1510
      %v1512 = vpop.f32.mrf.mxu0
      %v1513 = vpop.f32.mrf.mxu0
      %v1514 = vadd.f32 0.0, %v1513
      %v1515 = vpop.f32.mrf.mxu0
      %1516 = vdwg.mxu0
      %v1517 = vadd.f32 %v1359, %v1487
      %v1518 = vadd.f32 %v1360, %v1490
      %v1519 = vadd.f32 %v1361, %v1495
      %v1520 = vadd.f32 %v1362, %v1498
      %v1521 = vadd.f32 %v1363, %v1503
      %v1522 = vadd.f32 %v1364, %v1506
      %v1523 = vadd.f32 %v1365, %v1511
      %v1524 = vadd.f32 %v1366, %v1514
      %s1525 = scalar_lea.vmem [#allocation2], 16
      %v1526 = vld [vmem:[%s1525] sm:$0xf]
      %v1527 = vld [vmem:[%s1525 + $0x8] sm:$0xf]
      %v1528 = vld [vmem:[%s1525 + $0x10] sm:$0xf]
      %v1529 = vld [vmem:[%s1525 + $0x18] sm:$0xf]
      %v1530 = vld [vmem:[%s1525 + $0x20] sm:$0xf]
      %v1531 = vld [vmem:[%s1525 + $0x28] sm:$0xf]
      %v1532 = vld [vmem:[%s1525 + $0x30] sm:$0xf]
      %v1533 = vld [vmem:[%s1525 + $0x38] sm:$0xf]
      %s1534 = scalar_lea.vmem %s226, 24
      %v1535 = vld [vmem:[%s1534] sm:$0xf]
      %v1544 = vunpack.c.l.b16 %v1526
      %v1545 = vunpack.c.l.b16 %v1527
      %v1546 = vunpack.c.l.b16 %v1528
      %v1547 = vunpack.c.l.b16 %v1529
      %v1548 = vunpack.c.l.b16 %v1530
      %v1549 = vunpack.c.l.b16 %v1531
      %v1550 = vunpack.c.l.b16 %v1532
      %v1551 = vunpack.c.l.b16 %v1533
      %v1552 = vpack.c.b16 %v1545, %v1544
      %v1553 = vpack.c.b16 %v1547, %v1546
      %v1554 = vpack.c.b16 %v1549, %v1548
      %v1555 = vpack.c.b16 %v1551, %v1550
      %v1557 = vsel %vm675, %v1552, 0
      %v1560 = vsel %vm675, %v1553, 0
      %v1563 = vsel %vm675, %v1554, 0
      %v1566 = vsel %vm675, %v1555, 0
      %v1569 = vsel %vm688, %v1535, 0
      %1571 = vmatprep.subr.bf16.mxu0 0
      %1572 = vmatpush1.bf16.msra.mxu0 0
      %1573 = vmatprep.subr.bf16.mxu0 0
      %1574 = vmatpush1.bf16.msra.mxu0 0
      %1575 = vmatprep.subr.bf16.mxu0 0
      %1576 = vmatpush1.bf16.msra.mxu0 0
      %1577 = vmatprep.subr.bf16.mxu0 0
      %1578 = vmatpush1.bf16.msra.mxu0 0
      %1579 = vmatprep.subr.bf16.mxu0 0
      %1580 = vmatpush1.bf16.msra.mxu0 0
      %1581 = vmatprep.subr.bf16.mxu0 0
      %1582 = vmatpush1.bf16.msra.mxu0 0
      %1583 = vmatprep.subr.bf16.mxu0 0
      %1584 = vmatpush1.bf16.msra.mxu0 0
      %1585 = vmatprep.subr.bf16.mxu0 0
      %1586 = vmatpush1.bf16.msra.mxu0 %v1569
      %1587 = vmatprep.subr.bf16.mxu0 0
      %1588 = vmatpush2.bf16.msra.mxu0 0
      %1589 = vmatprep.subr.bf16.mxu0 0
      %1590 = vmatpush2.bf16.msra.mxu0 0
      %1591 = vmatprep.subr.bf16.mxu0 0
      %1592 = vmatpush2.bf16.msra.mxu0 0
      %1593 = vmatprep.subr.bf16.mxu0 0
      %1594 = vmatpush2.bf16.msra.mxu0 0
      %1595 = vmatprep.subr.bf16.mxu0 0
      %1596 = vmatpush2.bf16.msra.mxu0 0
      %1597 = vmatprep.subr.bf16.mxu0 0
      %1598 = vmatpush2.bf16.msra.mxu0 0
      %1599 = vmatprep.subr.bf16.mxu0 0
      %1600 = vmatpush2.bf16.msra.mxu0 0
      %1601 = vmatprep.subr.bf16.mxu0 0
      %1602 = vmatpush2.bf16.msra.mxu0 0
      %1603 = vmatprep.mubr.bf16.mxu0 0
      %1604 = vmatmul.mubr.bf16.gmra.mxu0 %v1557
      %v1605 = vpop.f32.mrf.mxu0
      %v1606 = vadd.f32 0.0, %v1605
      %v1607 = vpop.f32.mrf.mxu0
      %v1608 = vpop.f32.mrf.mxu0
      %v1609 = vadd.f32 0.0, %v1608
      %v1610 = vpop.f32.mrf.mxu0
      %1611 = vmatprep.mubr.bf16.mxu0 0
      %1612 = vmatmul.mubr.bf16.gmra.mxu0 %v1560
      %v1613 = vpop.f32.mrf.mxu0
      %v1614 = vadd.f32 0.0, %v1613
      %v1615 = vpop.f32.mrf.mxu0
      %v1616 = vpop.f32.mrf.mxu0
      %v1617 = vadd.f32 0.0, %v1616
      %v1618 = vpop.f32.mrf.mxu0
      %1619 = vmatprep.mubr.bf16.mxu0 0
      %1620 = vmatmul.mubr.bf16.gmra.mxu0 %v1563
      %v1621 = vpop.f32.mrf.mxu0
      %v1622 = vadd.f32 0.0, %v1621
      %v1623 = vpop.f32.mrf.mxu0
      %v1624 = vpop.f32.mrf.mxu0
      %v1625 = vadd.f32 0.0, %v1624
      %v1626 = vpop.f32.mrf.mxu0
      %1627 = vmatprep.mubr.bf16.mxu0 0
      %1628 = vmatmul.mubr.bf16.gmra.mxu0 %v1566
      %v1629 = vpop.f32.mrf.mxu0
      %v1630 = vadd.f32 0.0, %v1629
      %v1631 = vpop.f32.mrf.mxu0
      %v1632 = vpop.f32.mrf.mxu0
      %v1633 = vadd.f32 0.0, %v1632
      %v1634 = vpop.f32.mrf.mxu0
      %1635 = vdwg.mxu0
      %v1636 = vadd.f32 %v1517, %v1606
      %v1637 = vadd.f32 %v1518, %v1609
      %v1638 = vadd.f32 %v1519, %v1614
      %v1639 = vadd.f32 %v1520, %v1617
      %v1640 = vadd.f32 %v1521, %v1622
      %v1641 = vadd.f32 %v1522, %v1625
      %v1642 = vadd.f32 %v1523, %v1630
      %v1643 = vadd.f32 %v1524, %v1633
      %v1644 = vld [vmem:[%s1525] sm:$0xf]
      %v1645 = vld [vmem:[%s1525 + $0x4] sm:$0x1]
      %v1646 = vld [vmem:[%s1525 + $0x8] sm:$0xf]
      %v1647 = vld [vmem:[%s1525 + $0xc] sm:$0x1]
      %v1648 = vld [vmem:[%s1525 + $0x10] sm:$0xf]
      %v1649 = vld [vmem:[%s1525 + $0x14] sm:$0x1]
      %v1650 = vld [vmem:[%s1525 + $0x18] sm:$0xf]
      %v1651 = vld [vmem:[%s1525 + $0x1c] sm:$0x1]
      %v1652 = vld [vmem:[%s1525 + $0x20] sm:$0xf]
      %v1653 = vld [vmem:[%s1525 + $0x24] sm:$0x1]
      %v1654 = vld [vmem:[%s1525 + $0x28] sm:$0xf]
      %v1655 = vld [vmem:[%s1525 + $0x2c] sm:$0x1]
      %v1656 = vld [vmem:[%s1525 + $0x30] sm:$0xf]
      %v1657 = vld [vmem:[%s1525 + $0x34] sm:$0x1]
      %v1658 = vld [vmem:[%s1525 + $0x38] sm:$0xf]
      %v1659 = vld [vmem:[%s1525 + $0x3c] sm:$0x1]
      %v1661 = vshrl.u32 %v1644, 16
      %v1663 = vrot.slane %v1661, 4
      %v1664 = vshll.u32 %v1644, 16
      %v1666 = vrot.slane %v1664, 5
      %v1667 = vor.u32 %v1663, %v1666
      %v1668 = vrot.slane %v1667, 4
      %v1670 = vshll.u32 %v1645, 16
      %v1672 = vrot.slane %v1670, 5
      %v1673 = vsel %vm548, %v1668, %v1672
      %v1675 = vshrl.u32 %v1646, 16
      %v1677 = vrot.slane %v1675, 4
      %v1678 = vshll.u32 %v1646, 16
      %v1680 = vrot.slane %v1678, 5
      %v1681 = vor.u32 %v1677, %v1680
      %v1682 = vrot.slane %v1681, 4
      %v1684 = vshll.u32 %v1647, 16
      %v1686 = vrot.slane %v1684, 5
      %v1687 = vsel %vm548, %v1682, %v1686
      %v1689 = vshrl.u32 %v1648, 16
      %v1691 = vrot.slane %v1689, 4
      %v1692 = vshll.u32 %v1648, 16
      %v1694 = vrot.slane %v1692, 5
      %v1695 = vor.u32 %v1691, %v1694
      %v1696 = vrot.slane %v1695, 4
      %v1698 = vshll.u32 %v1649, 16
      %v1700 = vrot.slane %v1698, 5
      %v1701 = vsel %vm548, %v1696, %v1700
      %v1703 = vshrl.u32 %v1650, 16
      %v1705 = vrot.slane %v1703, 4
      %v1706 = vshll.u32 %v1650, 16
      %v1708 = vrot.slane %v1706, 5
      %v1709 = vor.u32 %v1705, %v1708
      %v1710 = vrot.slane %v1709, 4
      %v1712 = vshll.u32 %v1651, 16
      %v1714 = vrot.slane %v1712, 5
      %v1715 = vsel %vm548, %v1710, %v1714
      %v1717 = vshrl.u32 %v1652, 16
      %v1719 = vrot.slane %v1717, 4
      %v1720 = vshll.u32 %v1652, 16
      %v1722 = vrot.slane %v1720, 5
      %v1723 = vor.u32 %v1719, %v1722
      %v1724 = vrot.slane %v1723, 4
      %v1726 = vshll.u32 %v1653, 16
      %v1728 = vrot.slane %v1726, 5
      %v1729 = vsel %vm548, %v1724, %v1728
      %v1731 = vshrl.u32 %v1654, 16
      %v1733 = vrot.slane %v1731, 4
      %v1734 = vshll.u32 %v1654, 16
      %v1736 = vrot.slane %v1734, 5
      %v1737 = vor.u32 %v1733, %v1736
      %v1738 = vrot.slane %v1737, 4
      %v1740 = vshll.u32 %v1655, 16
      %v1742 = vrot.slane %v1740, 5
      %v1743 = vsel %vm548, %v1738, %v1742
      %v1745 = vshrl.u32 %v1656, 16
      %v1747 = vrot.slane %v1745, 4
      %v1748 = vshll.u32 %v1656, 16
      %v1750 = vrot.slane %v1748, 5
      %v1751 = vor.u32 %v1747, %v1750
      %v1752 = vrot.slane %v1751, 4
      %v1754 = vshll.u32 %v1657, 16
      %v1756 = vrot.slane %v1754, 5
      %v1757 = vsel %vm548, %v1752, %v1756
      %v1759 = vshrl.u32 %v1658, 16
      %v1761 = vrot.slane %v1759, 4
      %v1762 = vshll.u32 %v1658, 16
      %v1764 = vrot.slane %v1762, 5
      %v1765 = vor.u32 %v1761, %v1764
      %v1766 = vrot.slane %v1765, 4
      %v1768 = vshll.u32 %v1659, 16
      %v1770 = vrot.slane %v1768, 5
      %v1771 = vsel %vm548, %v1766, %v1770
      %s1772 = scalar_lea.vmem %s226, 28
      %v1773 = vld [vmem:[%s1772] sm:$0xf]
      %v1774 = vunpack.c.l.b16 %v1673
      %v1775 = vunpack.c.l.b16 %v1687
      %v1776 = vunpack.c.l.b16 %v1701
      %v1777 = vunpack.c.l.b16 %v1715
      %v1778 = vunpack.c.l.b16 %v1729
      %v1779 = vunpack.c.l.b16 %v1743
      %v1780 = vunpack.c.l.b16 %v1757
      %v1781 = vunpack.c.l.b16 %v1771
      %v1782 = vpack.c.b16 %v1775, %v1774
      %v1783 = vpack.c.b16 %v1777, %v1776
      %v1784 = vpack.c.b16 %v1779, %v1778
      %v1785 = vpack.c.b16 %v1781, %v1780
      %v1787 = vsel %vm675, %v1782, 0
      %v1790 = vsel %vm675, %v1783, 0
      %v1793 = vsel %vm675, %v1784, 0
      %v1796 = vsel %vm675, %v1785, 0
      %v1799 = vsel %vm688, %v1773, 0
      %1801 = vmatprep.subr.bf16.mxu0 0
      %1802 = vmatpush1.bf16.msra.mxu0 0
      %1803 = vmatprep.subr.bf16.mxu0 0
      %1804 = vmatpush1.bf16.msra.mxu0 0
      %1805 = vmatprep.subr.bf16.mxu0 0
      %1806 = vmatpush1.bf16.msra.mxu0 0
      %1807 = vmatprep.subr.bf16.mxu0 0
      %1808 = vmatpush1.bf16.msra.mxu0 0
      %1809 = vmatprep.subr.bf16.mxu0 0
      %1810 = vmatpush1.bf16.msra.mxu0 0
      %1811 = vmatprep.subr.bf16.mxu0 0
      %1812 = vmatpush1.bf16.msra.mxu0 0
      %1813 = vmatprep.subr.bf16.mxu0 0
      %1814 = vmatpush1.bf16.msra.mxu0 0
      %1815 = vmatprep.subr.bf16.mxu0 0
      %1816 = vmatpush1.bf16.msra.mxu0 %v1799
      %1817 = vmatprep.subr.bf16.mxu0 0
      %1818 = vmatpush2.bf16.msra.mxu0 0
      %1819 = vmatprep.subr.bf16.mxu0 0
      %1820 = vmatpush2.bf16.msra.mxu0 0
      %1821 = vmatprep.subr.bf16.mxu0 0
      %1822 = vmatpush2.bf16.msra.mxu0 0
      %1823 = vmatprep.subr.bf16.mxu0 0
      %1824 = vmatpush2.bf16.msra.mxu0 0
      %1825 = vmatprep.subr.bf16.mxu0 0
      %1826 = vmatpush2.bf16.msra.mxu0 0
      %1827 = vmatprep.subr.bf16.mxu0 0
      %1828 = vmatpush2.bf16.msra.mxu0 0
      %1829 = vmatprep.subr.bf16.mxu0 0
      %1830 = vmatpush2.bf16.msra.mxu0 0
      %1831 = vmatprep.subr.bf16.mxu0 0
      %1832 = vmatpush2.bf16.msra.mxu0 0
      %1833 = vmatprep.mubr.bf16.mxu0 0
      %1834 = vmatmul.mubr.bf16.gmra.mxu0 %v1787
      %v1835 = vpop.f32.mrf.mxu0
      %v1836 = vadd.f32 0.0, %v1835
      %v1837 = vpop.f32.mrf.mxu0
      %v1838 = vpop.f32.mrf.mxu0
      %v1839 = vadd.f32 0.0, %v1838
      %v1840 = vpop.f32.mrf.mxu0
      %1841 = vmatprep.mubr.bf16.mxu0 0
      %1842 = vmatmul.mubr.bf16.gmra.mxu0 %v1790
      %v1843 = vpop.f32.mrf.mxu0
      %v1844 = vadd.f32 0.0, %v1843
      %v1845 = vpop.f32.mrf.mxu0
      %v1846 = vpop.f32.mrf.mxu0
      %v1847 = vadd.f32 0.0, %v1846
      %v1848 = vpop.f32.mrf.mxu0
      %1849 = vmatprep.mubr.bf16.mxu0 0
      %1850 = vmatmul.mubr.bf16.gmra.mxu0 %v1793
      %v1851 = vpop.f32.mrf.mxu0
      %v1852 = vadd.f32 0.0, %v1851
      %v1853 = vpop.f32.mrf.mxu0
      %v1854 = vpop.f32.mrf.mxu0
      %v1855 = vadd.f32 0.0, %v1854
      %v1856 = vpop.f32.mrf.mxu0
      %1857 = vmatprep.mubr.bf16.mxu0 0
      %1858 = vmatmul.mubr.bf16.gmra.mxu0 %v1796
      %v1859 = vpop.f32.mrf.mxu0
      %v1860 = vadd.f32 0.0, %v1859
      %v1861 = vpop.f32.mrf.mxu0
      %v1862 = vpop.f32.mrf.mxu0
      %v1863 = vadd.f32 0.0, %v1862
      %v1864 = vpop.f32.mrf.mxu0
      %1865 = vdwg.mxu0
      %v1866 = vadd.f32 %v1636, %v1836
      %v1867 = vadd.f32 %v1637, %v1839
      %v1868 = vadd.f32 %v1638, %v1844
      %v1869 = vadd.f32 %v1639, %v1847
      %v1870 = vadd.f32 %v1640, %v1852
      %v1871 = vadd.f32 %v1641, %v1855
      %v1872 = vadd.f32 %v1642, %v1860
      %v1873 = vadd.f32 %v1643, %v1863
      %v1874 = vld [vmem:[%s1525] sm:$0xe]
      %v1875 = vld [vmem:[%s1525 + $0x8] sm:$0xe]
      %v1876 = vld [vmem:[%s1525 + $0x10] sm:$0xe]
      %v1877 = vld [vmem:[%s1525 + $0x18] sm:$0xe]
      %v1878 = vld [vmem:[%s1525 + $0x20] sm:$0xe]
      %v1879 = vld [vmem:[%s1525 + $0x28] sm:$0xe]
      %v1880 = vld [vmem:[%s1525 + $0x30] sm:$0xe]
      %v1881 = vld [vmem:[%s1525 + $0x38] sm:$0xe]
      %v1898 = vrot.slane %v1874, 5
      %v1899 = vrot.slane %v1898, 4
      %v1900 = vrot.slane %v1645, 5
      %v1901 = vsel %vm883, %v1899, %v1900
      %v1902 = vrot.slane %v1875, 5
      %v1903 = vrot.slane %v1902, 4
      %v1904 = vrot.slane %v1647, 5
      %v1905 = vsel %vm883, %v1903, %v1904
      %v1906 = vrot.slane %v1876, 5
      %v1907 = vrot.slane %v1906, 4
      %v1908 = vrot.slane %v1649, 5
      %v1909 = vsel %vm883, %v1907, %v1908
      %v1910 = vrot.slane %v1877, 5
      %v1911 = vrot.slane %v1910, 4
      %v1912 = vrot.slane %v1651, 5
      %v1913 = vsel %vm883, %v1911, %v1912
      %v1914 = vrot.slane %v1878, 5
      %v1915 = vrot.slane %v1914, 4
      %v1916 = vrot.slane %v1653, 5
      %v1917 = vsel %vm883, %v1915, %v1916
      %v1918 = vrot.slane %v1879, 5
      %v1919 = vrot.slane %v1918, 4
      %v1920 = vrot.slane %v1655, 5
      %v1921 = vsel %vm883, %v1919, %v1920
      %v1922 = vrot.slane %v1880, 5
      %v1923 = vrot.slane %v1922, 4
      %v1924 = vrot.slane %v1657, 5
      %v1925 = vsel %vm883, %v1923, %v1924
      %v1926 = vrot.slane %v1881, 5
      %v1927 = vrot.slane %v1926, 4
      %v1928 = vrot.slane %v1659, 5
      %v1929 = vsel %vm883, %v1927, %v1928
      %s1930 = scalar_lea.vmem %s226, 32
      %v1931 = vld [vmem:[%s1930] sm:$0xf]
      %v1932 = vunpack.c.l.b16 %v1901
      %v1933 = vunpack.c.l.b16 %v1905
      %v1934 = vunpack.c.l.b16 %v1909
      %v1935 = vunpack.c.l.b16 %v1913
      %v1936 = vunpack.c.l.b16 %v1917
      %v1937 = vunpack.c.l.b16 %v1921
      %v1938 = vunpack.c.l.b16 %v1925
      %v1939 = vunpack.c.l.b16 %v1929
      %v1940 = vpack.c.b16 %v1933, %v1932
      %v1941 = vpack.c.b16 %v1935, %v1934
      %v1942 = vpack.c.b16 %v1937, %v1936
      %v1943 = vpack.c.b16 %v1939, %v1938
      %v1945 = vsel %vm675, %v1940, 0
      %v1948 = vsel %vm675, %v1941, 0
      %v1951 = vsel %vm675, %v1942, 0
      %v1954 = vsel %vm675, %v1943, 0
      %v1957 = vsel %vm688, %v1931, 0
      %1959 = vmatprep.subr.bf16.mxu0 0
      %1960 = vmatpush1.bf16.msra.mxu0 0
      %1961 = vmatprep.subr.bf16.mxu0 0
      %1962 = vmatpush1.bf16.msra.mxu0 0
      %1963 = vmatprep.subr.bf16.mxu0 0
      %1964 = vmatpush1.bf16.msra.mxu0 0
      %1965 = vmatprep.subr.bf16.mxu0 0
      %1966 = vmatpush1.bf16.msra.mxu0 0
      %1967 = vmatprep.subr.bf16.mxu0 0
      %1968 = vmatpush1.bf16.msra.mxu0 0
      %1969 = vmatprep.subr.bf16.mxu0 0
      %1970 = vmatpush1.bf16.msra.mxu0 0
      %1971 = vmatprep.subr.bf16.mxu0 0
      %1972 = vmatpush1.bf16.msra.mxu0 0
      %1973 = vmatprep.subr.bf16.mxu0 0
      %1974 = vmatpush1.bf16.msra.mxu0 %v1957
      %1975 = vmatprep.subr.bf16.mxu0 0
      %1976 = vmatpush2.bf16.msra.mxu0 0
      %1977 = vmatprep.subr.bf16.mxu0 0
      %1978 = vmatpush2.bf16.msra.mxu0 0
      %1979 = vmatprep.subr.bf16.mxu0 0
      %1980 = vmatpush2.bf16.msra.mxu0 0
      %1981 = vmatprep.subr.bf16.mxu0 0
      %1982 = vmatpush2.bf16.msra.mxu0 0
      %1983 = vmatprep.subr.bf16.mxu0 0
      %1984 = vmatpush2.bf16.msra.mxu0 0
      %1985 = vmatprep.subr.bf16.mxu0 0
      %1986 = vmatpush2.bf16.msra.mxu0 0
      %1987 = vmatprep.subr.bf16.mxu0 0
      %1988 = vmatpush2.bf16.msra.mxu0 0
      %1989 = vmatprep.subr.bf16.mxu0 0
      %1990 = vmatpush2.bf16.msra.mxu0 0
      %1991 = vmatprep.mubr.bf16.mxu0 0
      %1992 = vmatmul.mubr.bf16.gmra.mxu0 %v1945
      %v1993 = vpop.f32.mrf.mxu0
      %v1994 = vadd.f32 0.0, %v1993
      %v1995 = vpop.f32.mrf.mxu0
      %v1996 = vpop.f32.mrf.mxu0
      %v1997 = vadd.f32 0.0, %v1996
      %v1998 = vpop.f32.mrf.mxu0
      %1999 = vmatprep.mubr.bf16.mxu0 0
      %2000 = vmatmul.mubr.bf16.gmra.mxu0 %v1948
      %v2001 = vpop.f32.mrf.mxu0
      %v2002 = vadd.f32 0.0, %v2001
      %v2003 = vpop.f32.mrf.mxu0
      %v2004 = vpop.f32.mrf.mxu0
      %v2005 = vadd.f32 0.0, %v2004
      %v2006 = vpop.f32.mrf.mxu0
      %2007 = vmatprep.mubr.bf16.mxu0 0
      %2008 = vmatmul.mubr.bf16.gmra.mxu0 %v1951
      %v2009 = vpop.f32.mrf.mxu0
      %v2010 = vadd.f32 0.0, %v2009
      %v2011 = vpop.f32.mrf.mxu0
      %v2012 = vpop.f32.mrf.mxu0
      %v2013 = vadd.f32 0.0, %v2012
      %v2014 = vpop.f32.mrf.mxu0
      %2015 = vmatprep.mubr.bf16.mxu0 0
      %2016 = vmatmul.mubr.bf16.gmra.mxu0 %v1954
      %v2017 = vpop.f32.mrf.mxu0
      %v2018 = vadd.f32 0.0, %v2017
      %v2019 = vpop.f32.mrf.mxu0
      %v2020 = vpop.f32.mrf.mxu0
      %v2021 = vadd.f32 0.0, %v2020
      %v2022 = vpop.f32.mrf.mxu0
      %2023 = vdwg.mxu0
      %v2024 = vadd.f32 %v1866, %v1994
      %v2025 = vadd.f32 %v1867, %v1997
      %v2026 = vadd.f32 %v1868, %v2002
      %v2027 = vadd.f32 %v1869, %v2005
      %v2028 = vadd.f32 %v1870, %v2010
      %v2029 = vadd.f32 %v1871, %v2013
      %v2030 = vadd.f32 %v1872, %v2018
      %v2031 = vadd.f32 %v1873, %v2021
      %v2032 = vpack.c.bf16 %v2025, %v2024
      %v2033 = vpack.c.bf16 %v2027, %v2026
      %v2034 = vpack.c.bf16 %v2029, %v2028
      %v2035 = vpack.c.bf16 %v2031, %v2030
      %v2040 = vunpack.c.l.b16 %v2032
      %v2041 = vunpack.c.h.b16 %v2032
      %v2042 = vunpack.c.l.b16 %v2033
      %v2043 = vunpack.c.h.b16 %v2033
      %v2044 = vunpack.c.l.b16 %v2034
      %v2045 = vunpack.c.h.b16 %v2034
      %v2046 = vunpack.c.l.b16 %v2035
      %v2047 = vunpack.c.h.b16 %v2035
      %v2048 = vpack.c.b16 %v2040, %v2040
      %v2049 = vpack.c.b16 %v2041, %v2041
      %v2050 = vpack.c.b16 %v2042, %v2042
      %v2051 = vpack.c.b16 %v2043, %v2043
      %v2052 = vpack.c.b16 %v2044, %v2044
      %v2053 = vpack.c.b16 %v2045, %v2045
      %v2054 = vpack.c.b16 %v2046, %v2046
      %v2055 = vpack.c.b16 %v2047, %v2047
      %vm2064 = vcmask 60416
      %2065 = vst.msk [vmem:[%s234] sm:$0xf] %vm2064, %v2048
      %2066 = vst.msk [vmem:[%s234 + $0x4] sm:$0xf] %vm2064, %v2049
      %2067 = vst.msk [vmem:[%s234 + $0x8] sm:$0xf] %vm2064, %v2050
      %2068 = vst.msk [vmem:[%s234 + $0xc] sm:$0xf] %vm2064, %v2051
      %2069 = vst.msk [vmem:[%s234 + $0x10] sm:$0xf] %vm2064, %v2052
      %2070 = vst.msk [vmem:[%s234 + $0x14] sm:$0xf] %vm2064, %v2053
      %2071 = vst.msk [vmem:[%s234 + $0x18] sm:$0xf] %vm2064, %v2054
      %2072 = vst.msk [vmem:[%s234 + $0x1c] sm:$0xf] %vm2064, %v2055
      %p2073 = scmp.lt.s32.totalorder %s19, 1
      %s2074 = scalar_select %p2073, %s19, 1
      %p2075 = scmp.lt.s32.totalorder %s20, 0
      %s2076 = scalar_select %p2075, %s20, 0
      %s2077 = smul.addr %s2074, 8
      %s2078 = sadd.s32 %s2076, %s2077
      %s2079 = smul.addr %s2078, 4
      %s2080 = scalar_lea.vmem %s4, %s2079
      // Predicated region
      $region41: #{network_block_forward.6} parent=35 // pred_check
        %p2081 = pneg %p141
      $region42: #{network_block_forward.6} parent=35 // pred_check_branch
        %2083 = sbr.rel (%p2081) target = $region44
      $region43: #{network_block_forward.6} parent=35 // pred_region
        _
      $region44: #{network_block_forward.6} parent=35 // pred_fallthru
        _
    $region36: #{network_block_forward.6} parent=5 // pred_fallthru
      _
    %p2084 = scmp.le.s32.totalorder 2, %s10
    // Predicated region
    $region45: #{network_block_forward.6} parent=5 // pred_check
      %p2085 = pneg %p2084
    $region46: #{network_block_forward.6} parent=5 // pred_check_branch
      %2087 = sbr.rel (%p2085) target = $region48
    $region47: #{network_block_forward.6} parent=5 // pred_region
      %s2088 = ssub.s32 %s10, 2
      // Predicated region
      $region49: #{network_block_forward.6} parent=47 // pred_check
        %p2089 = pneg %p147
      $region50: #{network_block_forward.6} parent=47 // pred_check_branch
        %2091 = sbr.rel (%p2089) target = $region52
      $region51: #{network_block_forward.6} parent=47 // pred_region
        %p2092 = scmp.lt.s32.totalorder %s21, 1
        %s2093 = scalar_select %p2092, %s21, 1
        %p2094 = scmp.lt.s32.totalorder %s22, 0
        %s2095 = scalar_select %p2094, %s22, 0
        %s2096 = smul.addr %s2093, 8
        %s2097 = sadd.s32 %s2095, %s2096
        %s2098 = smul.addr %s2097, 4
        %s2099 = scalar_lea.vmem %s4, %s2098
      $region52: #{network_block_forward.6} parent=47 // pred_fallthru
        _
    $region48: #{network_block_forward.6} parent=5 // pred_fallthru
      _
  $region6: #{network_block_forward.6} parent=0 // loop_footer
    %s14 = sadd.s32 1, %s10
  $region7: #{network_block_forward.6} parent=0 // loop_footer_branch
    %9 = sbr.rel target = $region3
  $region8: #{network_block_forward.6} parent=0 // loop_exit
    _

</llo_original>
